<compile_context>
chip_gen: v7x
topology: tpu7x:2x2x1
jax: 0.10.0
libtpu: 0.0.40
codegen_flags: <defaults>
</compile_context>

<pallas_src>
import functools

import jax
import jax.numpy as jnp
from jax import lax
from jax.experimental import pallas as pl
from jax.experimental.pallas import tpu as pltpu

_LANE = 128


def _pad_to(n, m=_LANE):
    return ((n + m - 1) // m) * m


def _residual_block_kernel(H, W, Bt,
                           x_ref, w1_ref, b1_ref,
                           w2_ref, b2_ref,
                           wcd_ref, bcd_ref,
                           out_ref):
    HW = H * W
    M = Bt * HW
    Cp = x_ref.shape[-1]
    x = x_ref[...].reshape(M, Cp)                               # (M, Cp) bf16

    # ---- conv1: 1x1 conv (BN scale folded into w1) + bias + ReLU ---------
    y1 = jnp.dot(x, w1_ref[...], preferred_element_type=jnp.float32)
    y1 = jnp.maximum(y1 + b1_ref[...], 0.0)                     # (M, Cmp) f32

    # ---- conv2: 3x3, stride 1, padding 1, as 3 deep-K matmuls ------------
    # out[m] += W[dy,dx] * y1[m + dy*W + dx]   (zero outside each image).
    # Masks are computed modulo HW so rolls that wrap across image (batch)
    # boundaries are always masked out.
    m = lax.broadcasted_iota(jnp.int32, (M, 1), 0)
    r = m % HW                                  # position within one image
    col = r % W
    left_ok = col >= 1                          # col - 1 >= 0
    right_ok = col <= W - 2                     # col + 1 <= W - 1
    top_ok = r >= W                             # row - 1 >= 0
    bot_ok = r < (H - 1) * W                    # row + 1 <= H - 1

    # dx-shifted, column-masked taps laid side by side: (M, 3*Cmp)
    t_m1 = jnp.where(left_ok, pltpu.roll(y1, 1, axis=0), 0.0)        # y1[m-1]
    t_p1 = jnp.where(right_ok, pltpu.roll(y1, M - 1, axis=0), 0.0)   # y1[m+1]
    taps = jnp.concatenate([t_m1, y1, t_p1], axis=1)

    # row shifts via sublane roll + row-validity masks, one matmul per dy
    up = jnp.where(top_ok, pltpu.roll(taps, W, axis=0), 0.0)         # row - 1
    dn = jnp.where(bot_ok, pltpu.roll(taps, M - W, axis=0), 0.0)     # row + 1
    acc = jnp.dot(up.astype(jnp.bfloat16), w2_ref[0],
                  preferred_element_type=jnp.float32)
    acc = acc + jnp.dot(taps.astype(jnp.bfloat16), w2_ref[1],
                        preferred_element_type=jnp.float32)
    acc = acc + jnp.dot(dn.astype(jnp.bfloat16), w2_ref[2],
                        preferred_element_type=jnp.float32)
    y2 = jnp.maximum(acc + b2_ref[...], 0.0)                    # (M, Cp) f32

    # ---- conv3 (+bias,+BN) fused with downsample (+bias,+BN) -------------
    # [y2, x] @ [w3*s3 ; wd*sd] + (b3 + bd), then residual ReLU.
    z = jnp.concatenate([y2.astype(jnp.bfloat16), x], axis=1)   # (M, 2*Cp)
    y = jnp.dot(z, wcd_ref[...], preferred_element_type=jnp.float32)
    y = jnp.maximum(y + bcd_ref[...], 0.0)
    out_ref[...] = y.astype(out_ref.dtype).reshape(Bt, HW, out_ref.shape[-1])


def _pick_bt(N, HW, Cmp):
    """Largest divisor of N whose flattened block keeps the biggest f32
    conv2 temporary (rows x 3*Cmp) under ~4 MiB; bigger batch blocks
    amortize per-step overhead and give the MXU a larger M for small images."""
    target_rows = max(HW, min(4096, (4 * 1024 * 1024) // (4 * 3 * max(Cmp, 1))))
    bt = 1
    for d in range(1, N + 1):
        if N % d == 0 and d * HW <= target_rows:
            bt = d
    return bt


def _vmem_limit_bytes(M, Cp, Cmp, C2p):
    """Estimate the per-step VMEM need (double-buffered bf16 blocks, weights,
    f32/bf16 temporaries) with 50% headroom, clamped to 3/4 of device VMEM."""
    blocks = 2 * (M * Cp * 2 + M * C2p * 2)                       # x / out, x2
    weights = 2 * 2 * (Cp * Cmp + 9 * Cmp * Cp + 2 * Cp * C2p + Cmp + Cp + C2p)
    temps = 4 * M * (Cmp + 3 * 3 * Cmp + 2 * Cp + C2p) + 2 * M * 2 * Cp
    want = int(1.5 * (blocks + weights + temps))
    try:
        cap = int(getattr(pltpu.get_tpu_info(), "vmem_capacity_bytes",
                          64 * 1024 * 1024))
    except Exception:  # pragma: no cover - conservative fallback
        cap = 64 * 1024 * 1024
    return max(32 * 1024 * 1024, min(want, (cap * 3) // 4))


@functools.partial(jax.jit, static_argnums=(2,))
def _forward(x_nchw, kp, dims):
    N, Cin, H, W = x_nchw.shape
    C, Cp, Cmp, C2, C2p = dims
    assert Cin == C, (Cin, C)
    HW = H * W
    Bt = _pick_bt(N, HW, Cmp)

    # NCHW -> NHWC -> (N, HW, C); pad channels to a lane multiple; cast bf16.
    # Jitted, so these layout passes fuse into one pass around the kernel.
    x = jnp.transpose(x_nchw, (0, 2, 3, 1)).reshape(N, HW, C)
    x = jnp.pad(x, ((0, 0), (0, 0), (0, Cp - C))).astype(jnp.bfloat16)

    kernel = functools.partial(_residual_block_kernel, H, W, Bt)

    def full(shape):
        return pl.BlockSpec(shape, lambda n, _d=len(shape): (0,) * _d)

    grid_spec = pltpu.PrefetchScalarGridSpec(
        num_scalar_prefetch=0,
        grid=(N // Bt,),
        in_specs=[
            pl.BlockSpec((Bt, HW, Cp), lambda n: (n, 0, 0)),
            full((Cp, Cmp)), full((1, Cmp)),
            full((3, 3 * Cmp, Cp)), full((1, Cp)),
            full((2 * Cp, C2p)), full((1, C2p)),
        ],
        out_specs=pl.BlockSpec((Bt, HW, C2p), lambda n: (n, 0, 0)),
    )
    out = pl.pallas_call(
        kernel,
        out_shape=jax.ShapeDtypeStruct((N, HW, C2p), jnp.bfloat16),
        grid_spec=grid_spec,
        compiler_params=pltpu.CompilerParams(
            dimension_semantics=("parallel",),
            vmem_limit_bytes=_vmem_limit_bytes(Bt * HW, Cp, Cmp, C2p),
        ),
    )(x, kp['w1'], kp['b1'], kp['w2'], kp['b2'], kp['wcd'], kp['bcd'])

    # Epilogue stays bf16: half the bytes through slice/reshape/transpose.
    out = out[:, :, :C2].reshape(N, H, W, C2)
    return jnp.transpose(out, (0, 3, 1, 2))                      # NCHW, bf16


def residual_block_forward(x_nchw, kp):
    arrays = {k: v for k, v in kp.items() if k != 'dims'}
    return _forward(x_nchw, arrays, kp['dims'])


def pack_params(p, C):
    """Pack raw f32 params into padded (lane-dense) bf16/f32 kernel operands.
    All BN scales are folded into the weight columns; only biases remain."""
    Cm, C2 = C // 2, 2 * C
    Cp, Cmp, C2p = _pad_to(C), _pad_to(Cm), _pad_to(C2)

    # conv1: fold BN scale into the weight columns.
    w1 = jnp.zeros((Cp, Cmp), jnp.float32).at[:C, :Cm].set(
        p['w1'] * p['s1'][None, :])
    b1 = jnp.zeros((1, Cmp), jnp.float32).at[0, :Cm].set(p['b1'])

    # conv2 packed per dy; each dy block stacks the dx = -1/0/+1 taps along K;
    # BN scale folded into the output columns.
    w2s = p['w2'] * p['s2'][None, None, None, :]
    w2 = jnp.zeros((3, 3 * Cmp, Cp), jnp.float32)
    for s in range(3):
        for t in range(3):
            w2 = w2.at[s, t * Cmp:t * Cmp + Cm, :C].set(w2s[s, t])
    b2 = jnp.zeros((1, Cp), jnp.float32).at[0, :C].set(p['b2'])

    # conv3 / downsample: fold BN scales into the weight columns, stack along K.
    wcd = jnp.zeros((2 * Cp, C2p), jnp.float32)
    wcd = wcd.at[:C, :C2].set(p['w3'] * p['s3'][None, :])
    wcd = wcd.at[Cp:Cp + C, :C2].set(p['wd'] * p['sd'][None, :])
    bcd = jnp.zeros((1, C2p), jnp.float32).at[0, :C2].set(p['b3'] + p['bd'])

    bf = lambda a: a.astype(jnp.bfloat16)
    return dict(w1=bf(w1), b1=b1,
                w2=bf(w2), b2=b2,
                wcd=bf(wcd), bcd=bcd,
                dims=(C, Cp, Cmp, C2, C2p))


def init_params(key, C):
    Cm, C2, eps = C // 2, 2 * C, 1e-5
    ks = iter(jax.random.split(key, 32))

    def bn_fold(ch, conv_bias=None):
        gamma = jax.random.uniform(next(ks), (ch,), jnp.float32, 0.5, 1.5)
        beta = 0.1 * jax.random.normal(next(ks), (ch,), jnp.float32)
        mean = 0.1 * jax.random.normal(next(ks), (ch,), jnp.float32)
        var = jax.random.uniform(next(ks), (ch,), jnp.float32, 0.5, 1.5)
        scale = gamma / jnp.sqrt(var + eps)
        bias = beta - mean * scale
        if conv_bias is not None:
            bias = bias + conv_bias * scale
        return scale, bias

    w1 = jax.random.normal(next(ks), (C, Cm), jnp.float32) / jnp.sqrt(C)
    s1, b1 = bn_fold(Cm)
    w2 = jax.random.normal(next(ks), (3, 3, Cm, C), jnp.float32) / jnp.sqrt(9 * Cm)
    s2, b2 = bn_fold(C)
    w3 = jax.random.normal(next(ks), (C, C2), jnp.float32) / jnp.sqrt(C)
    b3conv = 0.1 * jax.random.normal(next(ks), (C2,), jnp.float32)
    s3, b3 = bn_fold(C2, b3conv)
    wd = jax.random.normal(next(ks), (C, C2), jnp.float32) / jnp.sqrt(C)
    bdconv = 0.1 * jax.random.normal(next(ks), (C2,), jnp.float32)
    sd, bd = bn_fold(C2, bdconv)
    return dict(w1=w1, s1=s1, b1=b1, w2=w2, s2=s2, b2=b2,
                w3=w3, s3=s3, b3=b3, wd=wd, sd=sd, bd=bd)


def ref_forward(x_nchw, p):
    """Pure-JAX reference (eval-mode BN).  Matmul operands (with BN scales
    folded, as in the kernel) are rounded to bf16 at the same points as the
    kernel so only f32 accumulation order and the final bf16 output rounding
    remain in the comparison."""
    bf = lambda a: a.astype(jnp.bfloat16).astype(jnp.float32)
    x = bf(jnp.transpose(x_nchw, (0, 2, 3, 1)).astype(jnp.float32))   # NHWC
    y1 = jnp.maximum(jnp.einsum('nhwc,cd->nhwd', x,
                                bf(p['w1'] * p['s1'][None, :])) + p['b1'], 0.0)
    y2c = lax.conv_general_dilated(bf(y1), bf(p['w2'] * p['s2']), (1, 1), 'SAME',
                                   dimension_numbers=('NHWC', 'HWIO', 'NHWC'))
    y2 = jnp.maximum(y2c + p['b2'], 0.0)
    y3 = jnp.einsum('nhwc,cd->nhwd', bf(y2), bf(p['w3'] * p['s3'][None, :]))
    idn = jnp.einsum('nhwc,cd->nhwd', x, bf(p['wd'] * p['sd'][None, :]))
    out = jnp.maximum(y3 + idn + p['b3'] + p['bd'], 0.0)
    return jnp.transpose(out, (0, 3, 1, 2))                           # NCHW


if __name__ == "__main__":
    key = jax.random.PRNGKey(0)
    kx, kparam = jax.random.split(key)
    N, C, H, W = 2, 4, 16, 16
    x = jax.random.normal(kx, (N, C, H, W), jnp.float32)
    params = init_params(kparam, C)
    packed = pack_params(params, C)

    out = residual_block_forward(x, packed)
    out = jax.block_until_ready(out)
    assert out.shape == (N, 2 * C, H, W), out.shape

    ref = ref_forward(x, params)
    # Kernel output is bf16; compare with a relative metric that covers the
    # final bf16 rounding (<= 2^-9 rel) plus f32 accumulation-order slack.
    err = float(jnp.max(jnp.abs(out.astype(jnp.float32) - ref)
                        / (1.0 + jnp.abs(ref))))
    assert err < 5e-3, err
    print("KERNEL_OK")
</pallas_src>

<mosaic_0001>
module attributes {stable_mosaic.version = 11 : i64} {
  func.func @_residual_block_kernel(%arg0: i32, %arg1: memref<2x256x128xbf16, #tpu.memory_space<vmem>>, %arg2: memref<128x128xbf16, #tpu.memory_space<vmem>>, %arg3: memref<1x128xf32, #tpu.memory_space<vmem>>, %arg4: memref<3x384x128xbf16, #tpu.memory_space<vmem>>, %arg5: memref<1x128xf32, #tpu.memory_space<vmem>>, %arg6: memref<256x128xbf16, #tpu.memory_space<vmem>>, %arg7: memref<1x128xf32, #tpu.memory_space<vmem>>, %arg8: memref<2x256x128xbf16, #tpu.memory_space<vmem>>) attributes {dimension_semantics = [#tpu.dimension_semantics<parallel>], iteration_bounds = array<i64: 1>, scalar_prefetch = 0 : i64, scratch_operands = 0 : i64, tpu.core_type = #tpu.core_type<tc>, window_params = [{transform_indices = @transform_0, window_bounds = array<i64: 2, 256, 128>}, {pipeline_mode = #tpu.pipeline_mode<synchronous>, transform_indices = @transform_1, window_bounds = array<i64: 128, 128>}, {pipeline_mode = #tpu.pipeline_mode<synchronous>, transform_indices = @transform_2, window_bounds = array<i64: 1, 128>}, {pipeline_mode = #tpu.pipeline_mode<synchronous>, transform_indices = @transform_3, window_bounds = array<i64: 3, 384, 128>}, {pipeline_mode = #tpu.pipeline_mode<synchronous>, transform_indices = @transform_4, window_bounds = array<i64: 1, 128>}, {pipeline_mode = #tpu.pipeline_mode<synchronous>, transform_indices = @transform_5, window_bounds = array<i64: 256, 128>}, {pipeline_mode = #tpu.pipeline_mode<synchronous>, transform_indices = @transform_6, window_bounds = array<i64: 1, 128>}, {transform_indices = @transform_7, window_bounds = array<i64: 2, 256, 128>}]} {
    %c0 = arith.constant 0 : index
    %c0_0 = arith.constant 0 : index
    %c0_1 = arith.constant 0 : index
    %0 = vector.load %arg1[%c0, %c0_0, %c0_1] : memref<2x256x128xbf16, #tpu.memory_space<vmem>>, vector<2x256x128xbf16>
    %1 = vector.shape_cast %0 : vector<2x256x128xbf16> to vector<512x128xbf16>
    %c0_2 = arith.constant 0 : index
    %c0_3 = arith.constant 0 : index
    %2 = vector.load %arg2[%c0_2, %c0_3] : memref<128x128xbf16, #tpu.memory_space<vmem>>, vector<128x128xbf16>
    %cst = arith.constant dense<0.000000e+00> : vector<512x128xf32>
    %3 = tpu.matmul %1, %2, %cst {dimension_numbers = #tpu.dot_dimension_numbers<[1], [0], [0], [1], [0, 0, 1, 1], [], []>} : vector<512x128xbf16>, vector<128x128xbf16>, vector<512x128xf32> -> vector<512x128xf32>
    %c0_4 = arith.constant 0 : index
    %c0_5 = arith.constant 0 : index
    %4 = vector.load %arg3[%c0_4, %c0_5] : memref<1x128xf32, #tpu.memory_space<vmem>>, vector<1x128xf32>
    %5 = vector.broadcast %4 : vector<1x128xf32> to vector<512x128xf32>
    %6 = arith.addf %3, %5 : vector<512x128xf32>
    %cst_6 = arith.constant 0.000000e+00 : f32
    %7 = vector.broadcast %cst_6 : f32 to vector<512x128xf32>
    %8 = arith.maximumf %6, %7 : vector<512x128xf32>
    %9 = tpu.iota {dimensions = array<i32: 0>} : vector<512x1xi32>
    %c256_i32 = arith.constant 256 : i32
    %c0_i32 = arith.constant 0 : i32
    %10 = arith.cmpi eq, %c256_i32, %c0_i32 : i32
    %c1_i32 = arith.constant 1 : i32
    %11 = arith.select %10, %c1_i32, %c256_i32 : i32
    %12 = vector.broadcast %11 : i32 to vector<512x1xi32>
    %13 = arith.remsi %9, %12 : vector<512x1xi32>
    %c0_i32_7 = arith.constant 0 : i32
    %14 = vector.broadcast %c0_i32_7 : i32 to vector<512x1xi32>
    %15 = arith.cmpi ne, %13, %14 : vector<512x1xi32>
    %c0_i32_8 = arith.constant 0 : i32
    %16 = vector.broadcast %c0_i32_8 : i32 to vector<512x1xi32>
    %17 = arith.cmpi slt, %13, %16 : vector<512x1xi32>
    %c0_i32_9 = arith.constant 0 : i32
    %18 = arith.cmpi slt, %11, %c0_i32_9 : i32
    %19 = vector.broadcast %18 : i1 to vector<512x1xi1>
    %20 = vector.broadcast %19 : vector<512x1xi1> to vector<512x1xi1>
    %21 = arith.xori %17, %20 : vector<512x1xi1>
    %22 = arith.andi %21, %15 : vector<512x1xi1>
    %23 = vector.broadcast %11 : i32 to vector<512x1xi32>
    %24 = arith.addi %13, %23 : vector<512x1xi32>
    %25 = arith.select %22, %24, %13 : vector<512x1xi1>, vector<512x1xi32>
    %c16_i32 = arith.constant 16 : i32
    %c0_i32_10 = arith.constant 0 : i32
    %26 = arith.cmpi eq, %c16_i32, %c0_i32_10 : i32
    %c1_i32_11 = arith.constant 1 : i32
    %27 = arith.select %26, %c1_i32_11, %c16_i32 : i32
    %28 = vector.broadcast %27 : i32 to vector<512x1xi32>
    %29 = arith.remsi %25, %28 : vector<512x1xi32>
    %c0_i32_12 = arith.constant 0 : i32
    %30 = vector.broadcast %c0_i32_12 : i32 to vector<512x1xi32>
    %31 = arith.cmpi ne, %29, %30 : vector<512x1xi32>
    %c0_i32_13 = arith.constant 0 : i32
    %32 = vector.broadcast %c0_i32_13 : i32 to vector<512x1xi32>
    %33 = arith.cmpi slt, %29, %32 : vector<512x1xi32>
    %c0_i32_14 = arith.constant 0 : i32
    %34 = arith.cmpi slt, %27, %c0_i32_14 : i32
    %35 = vector.broadcast %34 : i1 to vector<512x1xi1>
    %36 = vector.broadcast %35 : vector<512x1xi1> to vector<512x1xi1>
    %37 = arith.xori %33, %36 : vector<512x1xi1>
    %38 = arith.andi %37, %31 : vector<512x1xi1>
    %39 = vector.broadcast %27 : i32 to vector<512x1xi32>
    %40 = arith.addi %29, %39 : vector<512x1xi32>
    %41 = arith.select %38, %40, %29 : vector<512x1xi1>, vector<512x1xi32>
    %c1_i32_15 = arith.constant 1 : i32
    %42 = vector.broadcast %c1_i32_15 : i32 to vector<512x1xi32>
    %43 = arith.cmpi sge, %41, %42 : vector<512x1xi32>
    %c14_i32 = arith.constant 14 : i32
    %44 = vector.broadcast %c14_i32 : i32 to vector<512x1xi32>
    %45 = arith.cmpi sle, %41, %44 : vector<512x1xi32>
    %c16_i32_16 = arith.constant 16 : i32
    %46 = vector.broadcast %c16_i32_16 : i32 to vector<512x1xi32>
    %47 = arith.cmpi sge, %25, %46 : vector<512x1xi32>
    %c240_i32 = arith.constant 240 : i32
    %48 = vector.broadcast %c240_i32 : i32 to vector<512x1xi32>
    %49 = arith.cmpi slt, %25, %48 : vector<512x1xi32>
    %c1_i32_17 = arith.constant 1 : i32
    %50 = tpu.dynamic_rotate %8 by %c1_i32_17 dim 0 : vector<512x128xf32>, i32 -> vector<512x128xf32>
    %cst_18 = arith.constant 0.000000e+00 : f32
    %51 = vector.shape_cast %43 : vector<512x1xi1> to vector<512x1xi1>
    %52 = vector.broadcast %51 : vector<512x1xi1> to vector<512x128xi1>
    %53 = vector.broadcast %cst_18 : f32 to vector<512x128xf32>
    %54 = arith.select %52, %50, %53 : vector<512x128xi1>, vector<512x128xf32>
    %c511_i32 = arith.constant 511 : i32
    %55 = tpu.dynamic_rotate %8 by %c511_i32 dim 0 : vector<512x128xf32>, i32 -> vector<512x128xf32>
    %cst_19 = arith.constant 0.000000e+00 : f32
    %56 = vector.shape_cast %45 : vector<512x1xi1> to vector<512x1xi1>
    %57 = vector.broadcast %56 : vector<512x1xi1> to vector<512x128xi1>
    %58 = vector.broadcast %cst_19 : f32 to vector<512x128xf32>
    %59 = arith.select %57, %55, %58 : vector<512x128xi1>, vector<512x128xf32>
    %60 = tpu.concatenate %54, %8, %59 in 1 : vector<512x128xf32>, vector<512x128xf32>, vector<512x128xf32> -> vector<512x384xf32>
    %c16_i32_20 = arith.constant 16 : i32
    %61 = tpu.dynamic_rotate %60 by %c16_i32_20 dim 0 : vector<512x384xf32>, i32 -> vector<512x384xf32>
    %cst_21 = arith.constant 0.000000e+00 : f32
    %62 = vector.shape_cast %47 : vector<512x1xi1> to vector<512x1xi1>
    %63 = vector.broadcast %62 : vector<512x1xi1> to vector<512x384xi1>
    %64 = vector.broadcast %cst_21 : f32 to vector<512x384xf32>
    %65 = arith.select %63, %61, %64 : vector<512x384xi1>, vector<512x384xf32>
    %c496_i32 = arith.constant 496 : i32
    %66 = tpu.dynamic_rotate %60 by %c496_i32 dim 0 : vector<512x384xf32>, i32 -> vector<512x384xf32>
    %cst_22 = arith.constant 0.000000e+00 : f32
    %67 = vector.shape_cast %49 : vector<512x1xi1> to vector<512x1xi1>
    %68 = vector.broadcast %67 : vector<512x1xi1> to vector<512x384xi1>
    %69 = vector.broadcast %cst_22 : f32 to vector<512x384xf32>
    %70 = arith.select %68, %66, %69 : vector<512x384xi1>, vector<512x384xf32>
    %71 = arith.truncf %65 : vector<512x384xf32> to vector<512x384xbf16>
    %c0_23 = arith.constant 0 : index
    %c0_24 = arith.constant 0 : index
    %c0_25 = arith.constant 0 : index
    %72 = vector.load %arg4[%c0_23, %c0_24, %c0_25] : memref<3x384x128xbf16, #tpu.memory_space<vmem>>, vector<1x384x128xbf16>
    %73 = vector.shape_cast %72 : vector<1x384x128xbf16> to vector<384x128xbf16>
    %cst_26 = arith.constant dense<0.000000e+00> : vector<512x128xf32>
    %74 = tpu.matmul %71, %73, %cst_26 {dimension_numbers = #tpu.dot_dimension_numbers<[1], [0], [0], [1], [0, 0, 1, 1], [], []>} : vector<512x384xbf16>, vector<384x128xbf16>, vector<512x128xf32> -> vector<512x128xf32>
    %75 = arith.truncf %60 : vector<512x384xf32> to vector<512x384xbf16>
    %c1 = arith.constant 1 : index
    %c0_27 = arith.constant 0 : index
    %c0_28 = arith.constant 0 : index
    %76 = vector.load %arg4[%c1, %c0_27, %c0_28] : memref<3x384x128xbf16, #tpu.memory_space<vmem>>, vector<1x384x128xbf16>
    %77 = vector.shape_cast %76 : vector<1x384x128xbf16> to vector<384x128xbf16>
    %cst_29 = arith.constant dense<0.000000e+00> : vector<512x128xf32>
    %78 = tpu.matmul %75, %77, %cst_29 {dimension_numbers = #tpu.dot_dimension_numbers<[1], [0], [0], [1], [0, 0, 1, 1], [], []>} : vector<512x384xbf16>, vector<384x128xbf16>, vector<512x128xf32> -> vector<512x128xf32>
    %79 = arith.addf %74, %78 : vector<512x128xf32>
    %80 = arith.truncf %70 : vector<512x384xf32> to vector<512x384xbf16>
    %c2 = arith.constant 2 : index
    %c0_30 = arith.constant 0 : index
    %c0_31 = arith.constant 0 : index
    %81 = vector.load %arg4[%c2, %c0_30, %c0_31] : memref<3x384x128xbf16, #tpu.memory_space<vmem>>, vector<1x384x128xbf16>
    %82 = vector.shape_cast %81 : vector<1x384x128xbf16> to vector<384x128xbf16>
    %cst_32 = arith.constant dense<0.000000e+00> : vector<512x128xf32>
    %83 = tpu.matmul %80, %82, %cst_32 {dimension_numbers = #tpu.dot_dimension_numbers<[1], [0], [0], [1], [0, 0, 1, 1], [], []>} : vector<512x384xbf16>, vector<384x128xbf16>, vector<512x128xf32> -> vector<512x128xf32>
    %84 = arith.addf %79, %83 : vector<512x128xf32>
    %c0_33 = arith.constant 0 : index
    %c0_34 = arith.constant 0 : index
    %85 = vector.load %arg5[%c0_33, %c0_34] : memref<1x128xf32, #tpu.memory_space<vmem>>, vector<1x128xf32>
    %86 = vector.broadcast %85 : vector<1x128xf32> to vector<512x128xf32>
    %87 = arith.addf %84, %86 : vector<512x128xf32>
    %cst_35 = arith.constant 0.000000e+00 : f32
    %88 = vector.broadcast %cst_35 : f32 to vector<512x128xf32>
    %89 = arith.maximumf %87, %88 : vector<512x128xf32>
    %90 = arith.truncf %89 : vector<512x128xf32> to vector<512x128xbf16>
    %91 = tpu.concatenate %90, %1 in 1 : vector<512x128xbf16>, vector<512x128xbf16> -> vector<512x256xbf16>
    %c0_36 = arith.constant 0 : index
    %c0_37 = arith.constant 0 : index
    %92 = vector.load %arg6[%c0_36, %c0_37] : memref<256x128xbf16, #tpu.memory_space<vmem>>, vector<256x128xbf16>
    %cst_38 = arith.constant dense<0.000000e+00> : vector<512x128xf32>
    %93 = tpu.matmul %91, %92, %cst_38 {dimension_numbers = #tpu.dot_dimension_numbers<[1], [0], [0], [1], [0, 0, 1, 1], [], []>} : vector<512x256xbf16>, vector<256x128xbf16>, vector<512x128xf32> -> vector<512x128xf32>
    %c0_39 = arith.constant 0 : index
    %c0_40 = arith.constant 0 : index
    %94 = vector.load %arg7[%c0_39, %c0_40] : memref<1x128xf32, #tpu.memory_space<vmem>>, vector<1x128xf32>
    %95 = vector.broadcast %94 : vector<1x128xf32> to vector<512x128xf32>
    %96 = arith.addf %93, %95 : vector<512x128xf32>
    %cst_41 = arith.constant 0.000000e+00 : f32
    %97 = vector.broadcast %cst_41 : f32 to vector<512x128xf32>
    %98 = arith.maximumf %96, %97 : vector<512x128xf32>
    %99 = arith.truncf %98 : vector<512x128xf32> to vector<512x128xbf16>
    %100 = vector.shape_cast %99 : vector<512x128xbf16> to vector<2x256x128xbf16>
    %c0_42 = arith.constant 0 : index
    %c0_43 = arith.constant 0 : index
    %c0_44 = arith.constant 0 : index
    %101 = vector.load %arg8[%c0_42, %c0_43, %c0_44] : memref<2x256x128xbf16, #tpu.memory_space<vmem>>, vector<2x256x128xbf16>
    tpu.vector_store %arg8[%c0_42, %c0_43, %c0_44], %100 {strides = array<i32>} : memref<2x256x128xbf16, #tpu.memory_space<vmem>>, vector<2x256x128xbf16>,
    return
  }
  func.func @transform_0(%arg0: i32) -> (i32, i32, i32) {
    %c0_i32 = arith.constant 0 : i32
    %c0_i32_0 = arith.constant 0 : i32
    %c0_i32_1 = arith.constant 0 : i32
    return %arg0, %c0_i32, %c0_i32_0 : i32, i32, i32
  }
  func.func @transform_1(%arg0: i32) -> (i32, i32) {
    %c0_i32 = arith.constant 0 : i32
    %c0_i32_0 = arith.constant 0 : i32
    %c0_i32_1 = arith.constant 0 : i32
    return %c0_i32, %c0_i32_0 : i32, i32
  }
  func.func @transform_2(%arg0: i32) -> (i32, i32) {
    %c0_i32 = arith.constant 0 : i32
    %c0_i32_0 = arith.constant 0 : i32
    %c0_i32_1 = arith.constant 0 : i32
    return %c0_i32, %c0_i32_0 : i32, i32
  }
  func.func @transform_3(%arg0: i32) -> (i32, i32, i32) {
    %c0_i32 = arith.constant 0 : i32
    %c0_i32_0 = arith.constant 0 : i32
    %c0_i32_1 = arith.constant 0 : i32
    %c0_i32_2 = arith.constant 0 : i32
    return %c0_i32, %c0_i32_0, %c0_i32_1 : i32, i32, i32
  }
  func.func @transform_4(%arg0: i32) -> (i32, i32) {
    %c0_i32 = arith.constant 0 : i32
    %c0_i32_0 = arith.constant 0 : i32
    %c0_i32_1 = arith.constant 0 : i32
    return %c0_i32, %c0_i32_0 : i32, i32
  }
  func.func @transform_5(%arg0: i32) -> (i32, i32) {
    %c0_i32 = arith.constant 0 : i32
    %c0_i32_0 = arith.constant 0 : i32
    %c0_i32_1 = arith.constant 0 : i32
    return %c0_i32, %c0_i32_0 : i32, i32
  }
  func.func @transform_6(%arg0: i32) -> (i32, i32) {
    %c0_i32 = arith.constant 0 : i32
    %c0_i32_0 = arith.constant 0 : i32
    %c0_i32_1 = arith.constant 0 : i32
    return %c0_i32, %c0_i32_0 : i32, i32
  }
  func.func @transform_7(%arg0: i32) -> (i32, i32, i32) {
    %c0_i32 = arith.constant 0 : i32
    %c0_i32_0 = arith.constant 0 : i32
    %c0_i32_1 = arith.constant 0 : i32
    return %arg0, %c0_i32, %c0_i32_0 : i32, i32, i32
  }
}

</mosaic_0001>

<llo_original>
// kernel: _forward.1
$region0: #{_forward.1}
  #allocation0 [shape = 'u32[]', space=smem, size = 0x4, offset = 0x4, fixed_abs, tag = 'smem constant byte address 0x4 - core index']
  #allocation1 [shape = 'u32[144,128]{1,0:T(1,128)}', space=vmem, size = 0x12000, scoped, tag = 'internal scratch']
  %s0 = inlined_call_operand.vmem [shape: bf16[2,256,128], index: 0, kind: input, shape index: {}]
  %s1 = inlined_call_operand.vmem [shape: bf16[128,128], index: 1, kind: input, shape index: {}]
  %s2 = inlined_call_operand.vmem [shape: f32[1,128], index: 2, kind: input, shape index: {}]
  %s3 = inlined_call_operand.vmem [shape: bf16[3,384,128], index: 3, kind: input, shape index: {}]
  %s4 = inlined_call_operand.vmem [shape: f32[1,128], index: 4, kind: input, shape index: {}]
  %s5 = inlined_call_operand.vmem [shape: bf16[256,128], index: 5, kind: input, shape index: {}]
  %s6 = inlined_call_operand.vmem [shape: f32[1,128], index: 6, kind: input, shape index: {}]
  %s7 = inlined_call_operand.vmem [shape: bf16[2,256,128], index: 7, kind: output, shape index: {}]
  %s8 = sld [smem:[#allocation0]]
  $region38: #{_forward.1} parent=0
    _
  %s10 = ssub.s32 1, %s8
  %s11 = scalar_select 0, %s10, %s8
  // Predicated region
  $region2: #{_forward.1} parent=0 // pred_check
    _
  $region3: #{_forward.1} parent=0 // pred_check_branch
    %13 = sbr.rel (0) target = $region5
  $region4: #{_forward.1} parent=0 // pred_region
    _
  $region5: #{_forward.1} parent=0 // pred_fallthru
    _
  // Predicated region
  $region6: #{_forward.1} parent=0 // pred_check
    _
  $region7: #{_forward.1} parent=0 // pred_check_branch
    %15 = sbr.rel (0) target = $region9
  $region8: #{_forward.1} parent=0 // pred_region
    _
  $region9: #{_forward.1} parent=0 // pred_fallthru
    _
  // Predicated region
  $region10: #{_forward.1} parent=0 // pred_check
    _
  $region11: #{_forward.1} parent=0 // pred_check_branch
    %17 = sbr.rel (0) target = $region13
  $region12: #{_forward.1} parent=0 // pred_region
    _
  $region13: #{_forward.1} parent=0 // pred_fallthru
    _
  // Predicated region
  $region14: #{_forward.1} parent=0 // pred_check
    _
  $region15: #{_forward.1} parent=0 // pred_check_branch
    %19 = sbr.rel (0) target = $region17
  $region16: #{_forward.1} parent=0 // pred_region
    _
  $region17: #{_forward.1} parent=0 // pred_fallthru
    _
  // Predicated region
  $region18: #{_forward.1} parent=0 // pred_check
    _
  $region19: #{_forward.1} parent=0 // pred_check_branch
    %21 = sbr.rel (0) target = $region21
  $region20: #{_forward.1} parent=0 // pred_region
    _
  $region21: #{_forward.1} parent=0 // pred_fallthru
    _
  // Predicated region
  $region22: #{_forward.1} parent=0 // pred_check
    _
  $region23: #{_forward.1} parent=0 // pred_check_branch
    %23 = sbr.rel (0) target = $region25
  $region24: #{_forward.1} parent=0 // pred_region
    _
  $region25: #{_forward.1} parent=0 // pred_fallthru
    _
  // Predicated region
  $region26: #{_forward.1} parent=0 // pred_check
    _
  $region27: #{_forward.1} parent=0 // pred_check_branch
    %25 = sbr.rel (0) target = $region29
  $region28: #{_forward.1} parent=0 // pred_region
    _
  $region29: #{_forward.1} parent=0 // pred_fallthru
    _
  %v27 = vld [vmem:[%s0] sm:$0xf]
  %v28 = vld [vmem:[%s0 + $0x4] sm:$0xf]
  %v29 = vld [vmem:[%s0 + $0x8] sm:$0xf]
  %v30 = vld [vmem:[%s0 + $0xc] sm:$0xf]
  %v31 = vld [vmem:[%s0 + $0x10] sm:$0xf]
  %v32 = vld [vmem:[%s0 + $0x14] sm:$0xf]
  %v33 = vld [vmem:[%s0 + $0x18] sm:$0xf]
  %v34 = vld [vmem:[%s0 + $0x1c] sm:$0xf]
  %v35 = vld [vmem:[%s0 + $0x20] sm:$0xf]
  %v36 = vld [vmem:[%s0 + $0x24] sm:$0xf]
  %v37 = vld [vmem:[%s0 + $0x28] sm:$0xf]
  %v38 = vld [vmem:[%s0 + $0x2c] sm:$0xf]
  %v39 = vld [vmem:[%s0 + $0x30] sm:$0xf]
  %v40 = vld [vmem:[%s0 + $0x34] sm:$0xf]
  %v41 = vld [vmem:[%s0 + $0x38] sm:$0xf]
  %v42 = vld [vmem:[%s0 + $0x3c] sm:$0xf]
  %v43 = vld [vmem:[%s0 + $0x40] sm:$0xf]
  %v44 = vld [vmem:[%s0 + $0x44] sm:$0xf]
  %v45 = vld [vmem:[%s0 + $0x48] sm:$0xf]
  %v46 = vld [vmem:[%s0 + $0x4c] sm:$0xf]
  %v47 = vld [vmem:[%s0 + $0x50] sm:$0xf]
  %v48 = vld [vmem:[%s0 + $0x54] sm:$0xf]
  %v49 = vld [vmem:[%s0 + $0x58] sm:$0xf]
  %v50 = vld [vmem:[%s0 + $0x5c] sm:$0xf]
  %v51 = vld [vmem:[%s0 + $0x60] sm:$0xf]
  %v52 = vld [vmem:[%s0 + $0x64] sm:$0xf]
  %v53 = vld [vmem:[%s0 + $0x68] sm:$0xf]
  %v54 = vld [vmem:[%s0 + $0x6c] sm:$0xf]
  %v55 = vld [vmem:[%s0 + $0x70] sm:$0xf]
  %v56 = vld [vmem:[%s0 + $0x74] sm:$0xf]
  %v57 = vld [vmem:[%s0 + $0x78] sm:$0xf]
  %v58 = vld [vmem:[%s0 + $0x7c] sm:$0xf]
  %v59 = vld [vmem:[%s0 + $0x80] sm:$0xf]
  %v60 = vld [vmem:[%s0 + $0x84] sm:$0xf]
  %v61 = vld [vmem:[%s0 + $0x88] sm:$0xf]
  %v62 = vld [vmem:[%s0 + $0x8c] sm:$0xf]
  %v63 = vld [vmem:[%s0 + $0x90] sm:$0xf]
  %v64 = vld [vmem:[%s0 + $0x94] sm:$0xf]
  %v65 = vld [vmem:[%s0 + $0x98] sm:$0xf]
  %v66 = vld [vmem:[%s0 + $0x9c] sm:$0xf]
  %v67 = vld [vmem:[%s0 + $0xa0] sm:$0xf]
  %v68 = vld [vmem:[%s0 + $0xa4] sm:$0xf]
  %v69 = vld [vmem:[%s0 + $0xa8] sm:$0xf]
  %v70 = vld [vmem:[%s0 + $0xac] sm:$0xf]
  %v71 = vld [vmem:[%s0 + $0xb0] sm:$0xf]
  %v72 = vld [vmem:[%s0 + $0xb4] sm:$0xf]
  %v73 = vld [vmem:[%s0 + $0xb8] sm:$0xf]
  %v74 = vld [vmem:[%s0 + $0xbc] sm:$0xf]
  %v75 = vld [vmem:[%s0 + $0xc0] sm:$0xf]
  %v76 = vld [vmem:[%s0 + $0xc4] sm:$0xf]
  %v77 = vld [vmem:[%s0 + $0xc8] sm:$0xf]
  %v78 = vld [vmem:[%s0 + $0xcc] sm:$0xf]
  %v79 = vld [vmem:[%s0 + $0xd0] sm:$0xf]
  %v80 = vld [vmem:[%s0 + $0xd4] sm:$0xf]
  %v81 = vld [vmem:[%s0 + $0xd8] sm:$0xf]
  %v82 = vld [vmem:[%s0 + $0xdc] sm:$0xf]
  %v83 = vld [vmem:[%s0 + $0xe0] sm:$0xf]
  %v84 = vld [vmem:[%s0 + $0xe4] sm:$0xf]
  %v85 = vld [vmem:[%s0 + $0xe8] sm:$0xf]
  %v86 = vld [vmem:[%s0 + $0xec] sm:$0xf]
  %v87 = vld [vmem:[%s0 + $0xf0] sm:$0xf]
  %v88 = vld [vmem:[%s0 + $0xf4] sm:$0xf]
  %v89 = vld [vmem:[%s0 + $0xf8] sm:$0xf]
  %v90 = vld [vmem:[%s0 + $0xfc] sm:$0xf]
  %v91 = vld [vmem:[%s1] sm:$0xf]
  %v92 = vld [vmem:[%s1 + $0x4] sm:$0xf]
  %v93 = vld [vmem:[%s1 + $0x8] sm:$0xf]
  %v94 = vld [vmem:[%s1 + $0xc] sm:$0xf]
  %v95 = vld [vmem:[%s1 + $0x10] sm:$0xf]
  %v96 = vld [vmem:[%s1 + $0x14] sm:$0xf]
  %v97 = vld [vmem:[%s1 + $0x18] sm:$0xf]
  %v98 = vld [vmem:[%s1 + $0x1c] sm:$0xf]
  %v99 = vld [vmem:[%s1 + $0x20] sm:$0xf]
  %v100 = vld [vmem:[%s1 + $0x24] sm:$0xf]
  %v101 = vld [vmem:[%s1 + $0x28] sm:$0xf]
  %v102 = vld [vmem:[%s1 + $0x2c] sm:$0xf]
  %v103 = vld [vmem:[%s1 + $0x30] sm:$0xf]
  %v104 = vld [vmem:[%s1 + $0x34] sm:$0xf]
  %v105 = vld [vmem:[%s1 + $0x38] sm:$0xf]
  %v106 = vld [vmem:[%s1 + $0x3c] sm:$0xf]
  %v107 = vld [vmem:[%s2] sm:$0x1]
  %v109 = vlaneseq
  %v110 = vshrl.u32 %v109, 7
  %v111 = vsub.s32 0, %v110
  %v112 = vrot.slane %v107, %v111
  %v178 = vunpack.c.l.b16 %v27
  %v179 = vunpack.c.l.b16 %v28
  %v180 = vunpack.c.l.b16 %v29
  %v181 = vunpack.c.l.b16 %v30
  %v182 = vunpack.c.l.b16 %v31
  %v183 = vunpack.c.l.b16 %v32
  %v184 = vunpack.c.l.b16 %v33
  %v185 = vunpack.c.l.b16 %v34
  %v186 = vunpack.c.l.b16 %v35
  %v187 = vunpack.c.l.b16 %v36
  %v188 = vunpack.c.l.b16 %v37
  %v189 = vunpack.c.l.b16 %v38
  %v190 = vunpack.c.l.b16 %v39
  %v191 = vunpack.c.l.b16 %v40
  %v192 = vunpack.c.l.b16 %v41
  %v193 = vunpack.c.l.b16 %v42
  %v194 = vunpack.c.l.b16 %v43
  %v195 = vunpack.c.l.b16 %v44
  %v196 = vunpack.c.l.b16 %v45
  %v197 = vunpack.c.l.b16 %v46
  %v198 = vunpack.c.l.b16 %v47
  %v199 = vunpack.c.l.b16 %v48
  %v200 = vunpack.c.l.b16 %v49
  %v201 = vunpack.c.l.b16 %v50
  %v202 = vunpack.c.l.b16 %v51
  %v203 = vunpack.c.l.b16 %v52
  %v204 = vunpack.c.l.b16 %v53
  %v205 = vunpack.c.l.b16 %v54
  %v206 = vunpack.c.l.b16 %v55
  %v207 = vunpack.c.l.b16 %v56
  %v208 = vunpack.c.l.b16 %v57
  %v209 = vunpack.c.l.b16 %v58
  %v210 = vunpack.c.l.b16 %v59
  %v211 = vunpack.c.l.b16 %v60
  %v212 = vunpack.c.l.b16 %v61
  %v213 = vunpack.c.l.b16 %v62
  %v214 = vunpack.c.l.b16 %v63
  %v215 = vunpack.c.l.b16 %v64
  %v216 = vunpack.c.l.b16 %v65
  %v217 = vunpack.c.l.b16 %v66
  %v218 = vunpack.c.l.b16 %v67
  %v219 = vunpack.c.l.b16 %v68
  %v220 = vunpack.c.l.b16 %v69
  %v221 = vunpack.c.l.b16 %v70
  %v222 = vunpack.c.l.b16 %v71
  %v223 = vunpack.c.l.b16 %v72
  %v224 = vunpack.c.l.b16 %v73
  %v225 = vunpack.c.l.b16 %v74
  %v226 = vunpack.c.l.b16 %v75
  %v227 = vunpack.c.l.b16 %v76
  %v228 = vunpack.c.l.b16 %v77
  %v229 = vunpack.c.l.b16 %v78
  %v230 = vunpack.c.l.b16 %v79
  %v231 = vunpack.c.l.b16 %v80
  %v232 = vunpack.c.l.b16 %v81
  %v233 = vunpack.c.l.b16 %v82
  %v234 = vunpack.c.l.b16 %v83
  %v235 = vunpack.c.l.b16 %v84
  %v236 = vunpack.c.l.b16 %v85
  %v237 = vunpack.c.l.b16 %v86
  %v238 = vunpack.c.l.b16 %v87
  %v239 = vunpack.c.l.b16 %v88
  %v240 = vunpack.c.l.b16 %v89
  %v241 = vunpack.c.l.b16 %v90
  %v242 = vpack.c.b16 %v179, %v178
  %v243 = vpack.c.b16 %v181, %v180
  %v244 = vpack.c.b16 %v183, %v182
  %v245 = vpack.c.b16 %v185, %v184
  %v246 = vpack.c.b16 %v187, %v186
  %v247 = vpack.c.b16 %v189, %v188
  %v248 = vpack.c.b16 %v191, %v190
  %v249 = vpack.c.b16 %v193, %v192
  %v250 = vpack.c.b16 %v195, %v194
  %v251 = vpack.c.b16 %v197, %v196
  %v252 = vpack.c.b16 %v199, %v198
  %v253 = vpack.c.b16 %v201, %v200
  %v254 = vpack.c.b16 %v203, %v202
  %v255 = vpack.c.b16 %v205, %v204
  %v256 = vpack.c.b16 %v207, %v206
  %v257 = vpack.c.b16 %v209, %v208
  %v258 = vpack.c.b16 %v211, %v210
  %v259 = vpack.c.b16 %v213, %v212
  %v260 = vpack.c.b16 %v215, %v214
  %v261 = vpack.c.b16 %v217, %v216
  %v262 = vpack.c.b16 %v219, %v218
  %v263 = vpack.c.b16 %v221, %v220
  %v264 = vpack.c.b16 %v223, %v222
  %v265 = vpack.c.b16 %v225, %v224
  %v266 = vpack.c.b16 %v227, %v226
  %v267 = vpack.c.b16 %v229, %v228
  %v268 = vpack.c.b16 %v231, %v230
  %v269 = vpack.c.b16 %v233, %v232
  %v270 = vpack.c.b16 %v235, %v234
  %v271 = vpack.c.b16 %v237, %v236
  %v272 = vpack.c.b16 %v239, %v238
  %v273 = vpack.c.b16 %v241, %v240
  %v322 = vunpack.c.l.b16 %v91
  %v323 = vunpack.c.l.b16 %v92
  %v324 = vunpack.c.l.b16 %v93
  %v325 = vunpack.c.l.b16 %v94
  %v326 = vunpack.c.l.b16 %v95
  %v327 = vunpack.c.l.b16 %v96
  %v328 = vunpack.c.l.b16 %v97
  %v329 = vunpack.c.l.b16 %v98
  %v330 = vunpack.c.l.b16 %v99
  %v331 = vunpack.c.l.b16 %v100
  %v332 = vunpack.c.l.b16 %v101
  %v333 = vunpack.c.l.b16 %v102
  %v334 = vunpack.c.l.b16 %v103
  %v335 = vunpack.c.l.b16 %v104
  %v336 = vunpack.c.l.b16 %v105
  %v337 = vunpack.c.l.b16 %v106
  %v338 = vpack.c.b16 %v323, %v322
  %v339 = vpack.c.b16 %v325, %v324
  %v340 = vpack.c.b16 %v327, %v326
  %v341 = vpack.c.b16 %v329, %v328
  %v342 = vpack.c.b16 %v331, %v330
  %v343 = vpack.c.b16 %v333, %v332
  %v344 = vpack.c.b16 %v335, %v334
  %v345 = vpack.c.b16 %v337, %v336
  %354 = vmatprep.subr.bf16.mxu0 0
  %355 = vmatpush1.bf16.msra.mxu0 %v338
  %356 = vmatprep.subr.bf16.mxu0 0
  %357 = vmatpush1.bf16.msra.mxu0 %v339
  %358 = vmatprep.subr.bf16.mxu0 0
  %359 = vmatpush1.bf16.msra.mxu0 %v340
  %360 = vmatprep.subr.bf16.mxu0 0
  %361 = vmatpush1.bf16.msra.mxu0 %v341
  %362 = vmatprep.subr.bf16.mxu0 0
  %363 = vmatpush1.bf16.msra.mxu0 %v342
  %364 = vmatprep.subr.bf16.mxu0 0
  %365 = vmatpush1.bf16.msra.mxu0 %v343
  %366 = vmatprep.subr.bf16.mxu0 0
  %367 = vmatpush1.bf16.msra.mxu0 %v344
  %368 = vmatprep.subr.bf16.mxu0 0
  %369 = vmatpush1.bf16.msra.mxu0 %v345
  %370 = vmatprep.subr.bf16.mxu0 0
  %371 = vmatpush1.bf16.msra.mxu0 0
  %372 = vmatprep.subr.bf16.mxu0 0
  %373 = vmatpush1.bf16.msra.mxu0 0
  %374 = vmatprep.subr.bf16.mxu0 0
  %375 = vmatpush1.bf16.msra.mxu0 0
  %376 = vmatprep.subr.bf16.mxu0 0
  %377 = vmatpush1.bf16.msra.mxu0 0
  %378 = vmatprep.subr.bf16.mxu0 0
  %379 = vmatpush1.bf16.msra.mxu0 0
  %380 = vmatprep.subr.bf16.mxu0 0
  %381 = vmatpush1.bf16.msra.mxu0 0
  %382 = vmatprep.subr.bf16.mxu0 0
  %383 = vmatpush1.bf16.msra.mxu0 0
  %384 = vmatprep.subr.bf16.mxu0 0
  %385 = vmatpush1.bf16.msra.mxu0 0
  %386 = vmatprep.mubr.bf16.mxu0 0
  %387 = vmatmul.mubr.bf16.gmra.mrb[0].mxu0 %v242
  %v388 = vpop.f32.mrb[0].mxu0
  %v389 = vadd.f32 %v112, %v388
  %v390 = vpop.f32.mrb[0].mxu0
  %v391 = vpop.f32.mrb[0].mxu0
  %v392 = vadd.f32 %v112, %v391
  %v393 = vpop.f32.mrb[0].mxu0
  %394 = vmatprep.mubr.bf16.mxu0 0
  %395 = vmatmul.mubr.bf16.gmra.mrb[0].mxu0 %v243
  %v396 = vpop.f32.mrb[0].mxu0
  %v397 = vadd.f32 %v112, %v396
  %v398 = vpop.f32.mrb[0].mxu0
  %v399 = vpop.f32.mrb[0].mxu0
  %v400 = vadd.f32 %v112, %v399
  %v401 = vpop.f32.mrb[0].mxu0
  %402 = vmatprep.mubr.bf16.mxu0 0
  %403 = vmatmul.mubr.bf16.gmra.mrb[0].mxu0 %v244
  %v404 = vpop.f32.mrb[0].mxu0
  %v405 = vadd.f32 %v112, %v404
  %v406 = vpop.f32.mrb[0].mxu0
  %v407 = vpop.f32.mrb[0].mxu0
  %v408 = vadd.f32 %v112, %v407
  %v409 = vpop.f32.mrb[0].mxu0
  %410 = vmatprep.mubr.bf16.mxu0 0
  %411 = vmatmul.mubr.bf16.gmra.mrb[0].mxu0 %v245
  %v412 = vpop.f32.mrb[0].mxu0
  %v413 = vadd.f32 %v112, %v412
  %v414 = vpop.f32.mrb[0].mxu0
  %v415 = vpop.f32.mrb[0].mxu0
  %v416 = vadd.f32 %v112, %v415
  %v417 = vpop.f32.mrb[0].mxu0
  %418 = vmatprep.mubr.bf16.mxu0 0
  %419 = vmatmul.mubr.bf16.gmra.mrb[0].mxu0 %v246
  %v420 = vpop.f32.mrb[0].mxu0
  %v421 = vadd.f32 %v112, %v420
  %v422 = vpop.f32.mrb[0].mxu0
  %v423 = vpop.f32.mrb[0].mxu0
  %v424 = vadd.f32 %v112, %v423
  %v425 = vpop.f32.mrb[0].mxu0
  %426 = vmatprep.mubr.bf16.mxu0 0
  %427 = vmatmul.mubr.bf16.gmra.mrb[0].mxu0 %v247
  %v428 = vpop.f32.mrb[0].mxu0
  %v429 = vadd.f32 %v112, %v428
  %v430 = vpop.f32.mrb[0].mxu0
  %v431 = vpop.f32.mrb[0].mxu0
  %v432 = vadd.f32 %v112, %v431
  %v433 = vpop.f32.mrb[0].mxu0
  %434 = vmatprep.mubr.bf16.mxu0 0
  %435 = vmatmul.mubr.bf16.gmra.mrb[0].mxu0 %v248
  %v436 = vpop.f32.mrb[0].mxu0
  %v437 = vadd.f32 %v112, %v436
  %v438 = vpop.f32.mrb[0].mxu0
  %v439 = vpop.f32.mrb[0].mxu0
  %v440 = vadd.f32 %v112, %v439
  %v441 = vpop.f32.mrb[0].mxu0
  %442 = vmatprep.mubr.bf16.mxu0 0
  %443 = vmatmul.mubr.bf16.gmra.mrb[0].mxu0 %v249
  %v444 = vpop.f32.mrb[0].mxu0
  %v445 = vadd.f32 %v112, %v444
  %v446 = vpop.f32.mrb[0].mxu0
  %v447 = vpop.f32.mrb[0].mxu0
  %v448 = vadd.f32 %v112, %v447
  %v449 = vpop.f32.mrb[0].mxu0
  %450 = vmatprep.mubr.bf16.mxu0 0
  %451 = vmatmul.mubr.bf16.gmra.mrb[0].mxu0 %v250
  %v452 = vpop.f32.mrb[0].mxu0
  %v453 = vadd.f32 %v112, %v452
  %v454 = vpop.f32.mrb[0].mxu0
  %v455 = vpop.f32.mrb[0].mxu0
  %v456 = vadd.f32 %v112, %v455
  %v457 = vpop.f32.mrb[0].mxu0
  %458 = vmatprep.mubr.bf16.mxu0 0
  %459 = vmatmul.mubr.bf16.gmra.mrb[0].mxu0 %v251
  %v460 = vpop.f32.mrb[0].mxu0
  %v461 = vadd.f32 %v112, %v460
  %v462 = vpop.f32.mrb[0].mxu0
  %v463 = vpop.f32.mrb[0].mxu0
  %v464 = vadd.f32 %v112, %v463
  %v465 = vpop.f32.mrb[0].mxu0
  %466 = vmatprep.mubr.bf16.mxu0 0
  %467 = vmatmul.mubr.bf16.gmra.mrb[0].mxu0 %v252
  %v468 = vpop.f32.mrb[0].mxu0
  %v469 = vadd.f32 %v112, %v468
  %v470 = vpop.f32.mrb[0].mxu0
  %v471 = vpop.f32.mrb[0].mxu0
  %v472 = vadd.f32 %v112, %v471
  %v473 = vpop.f32.mrb[0].mxu0
  %474 = vmatprep.mubr.bf16.mxu0 0
  %475 = vmatmul.mubr.bf16.gmra.mrb[0].mxu0 %v253
  %v476 = vpop.f32.mrb[0].mxu0
  %v477 = vadd.f32 %v112, %v476
  %v478 = vpop.f32.mrb[0].mxu0
  %v479 = vpop.f32.mrb[0].mxu0
  %v480 = vadd.f32 %v112, %v479
  %v481 = vpop.f32.mrb[0].mxu0
  %482 = vmatprep.mubr.bf16.mxu0 0
  %483 = vmatmul.mubr.bf16.gmra.mrb[0].mxu0 %v254
  %v484 = vpop.f32.mrb[0].mxu0
  %v485 = vadd.f32 %v112, %v484
  %v486 = vpop.f32.mrb[0].mxu0
  %v487 = vpop.f32.mrb[0].mxu0
  %v488 = vadd.f32 %v112, %v487
  %v489 = vpop.f32.mrb[0].mxu0
  %490 = vmatprep.mubr.bf16.mxu0 0
  %491 = vmatmul.mubr.bf16.gmra.mrb[0].mxu0 %v255
  %v492 = vpop.f32.mrb[0].mxu0
  %v493 = vadd.f32 %v112, %v492
  %v494 = vpop.f32.mrb[0].mxu0
  %v495 = vpop.f32.mrb[0].mxu0
  %v496 = vadd.f32 %v112, %v495
  %v497 = vpop.f32.mrb[0].mxu0
  %498 = vmatprep.mubr.bf16.mxu0 0
  %499 = vmatmul.mubr.bf16.gmra.mrb[0].mxu0 %v256
  %v500 = vpop.f32.mrb[0].mxu0
  %v501 = vadd.f32 %v112, %v500
  %v502 = vpop.f32.mrb[0].mxu0
  %v503 = vpop.f32.mrb[0].mxu0
  %v504 = vadd.f32 %v112, %v503
  %v505 = vpop.f32.mrb[0].mxu0
  %506 = vmatprep.mubr.bf16.mxu0 0
  %507 = vmatmul.mubr.bf16.gmra.mrb[0].mxu0 %v257
  %v508 = vpop.f32.mrb[0].mxu0
  %v509 = vadd.f32 %v112, %v508
  %v510 = vpop.f32.mrb[0].mxu0
  %v511 = vpop.f32.mrb[0].mxu0
  %v512 = vadd.f32 %v112, %v511
  %v513 = vpop.f32.mrb[0].mxu0
  %514 = vmatprep.mubr.bf16.mxu0 0
  %515 = vmatmul.mubr.bf16.gmra.mrb[0].mxu0 %v258
  %v516 = vpop.f32.mrb[0].mxu0
  %v517 = vadd.f32 %v112, %v516
  %v518 = vpop.f32.mrb[0].mxu0
  %v519 = vpop.f32.mrb[0].mxu0
  %v520 = vadd.f32 %v112, %v519
  %v521 = vpop.f32.mrb[0].mxu0
  %522 = vmatprep.mubr.bf16.mxu0 0
  %523 = vmatmul.mubr.bf16.gmra.mrb[0].mxu0 %v259
  %v524 = vpop.f32.mrb[0].mxu0
  %v525 = vadd.f32 %v112, %v524
  %v526 = vpop.f32.mrb[0].mxu0
  %v527 = vpop.f32.mrb[0].mxu0
  %v528 = vadd.f32 %v112, %v527
  %v529 = vpop.f32.mrb[0].mxu0
  %530 = vmatprep.mubr.bf16.mxu0 0
  %531 = vmatmul.mubr.bf16.gmra.mrb[0].mxu0 %v260
  %v532 = vpop.f32.mrb[0].mxu0
  %v533 = vadd.f32 %v112, %v532
  %v534 = vpop.f32.mrb[0].mxu0
  %v535 = vpop.f32.mrb[0].mxu0
  %v536 = vadd.f32 %v112, %v535
  %v537 = vpop.f32.mrb[0].mxu0
  %538 = vmatprep.mubr.bf16.mxu0 0
  %539 = vmatmul.mubr.bf16.gmra.mrb[0].mxu0 %v261
  %v540 = vpop.f32.mrb[0].mxu0
  %v541 = vadd.f32 %v112, %v540
  %v542 = vpop.f32.mrb[0].mxu0
  %v543 = vpop.f32.mrb[0].mxu0
  %v544 = vadd.f32 %v112, %v543
  %v545 = vpop.f32.mrb[0].mxu0
  %546 = vmatprep.mubr.bf16.mxu0 0
  %547 = vmatmul.mubr.bf16.gmra.mrb[0].mxu0 %v262
  %v548 = vpop.f32.mrb[0].mxu0
  %v549 = vadd.f32 %v112, %v548
  %v550 = vpop.f32.mrb[0].mxu0
  %v551 = vpop.f32.mrb[0].mxu0
  %v552 = vadd.f32 %v112, %v551
  %v553 = vpop.f32.mrb[0].mxu0
  %554 = vmatprep.mubr.bf16.mxu0 0
  %555 = vmatmul.mubr.bf16.gmra.mrb[0].mxu0 %v263
  %v556 = vpop.f32.mrb[0].mxu0
  %v557 = vadd.f32 %v112, %v556
  %v558 = vpop.f32.mrb[0].mxu0
  %v559 = vpop.f32.mrb[0].mxu0
  %v560 = vadd.f32 %v112, %v559
  %v561 = vpop.f32.mrb[0].mxu0
  %562 = vmatprep.mubr.bf16.mxu0 0
  %563 = vmatmul.mubr.bf16.gmra.mrb[0].mxu0 %v264
  %v564 = vpop.f32.mrb[0].mxu0
  %v565 = vadd.f32 %v112, %v564
  %v566 = vpop.f32.mrb[0].mxu0
  %v567 = vpop.f32.mrb[0].mxu0
  %v568 = vadd.f32 %v112, %v567
  %v569 = vpop.f32.mrb[0].mxu0
  %570 = vmatprep.mubr.bf16.mxu0 0
  %571 = vmatmul.mubr.bf16.gmra.mrb[0].mxu0 %v265
  %v572 = vpop.f32.mrb[0].mxu0
  %v573 = vadd.f32 %v112, %v572
  %v574 = vpop.f32.mrb[0].mxu0
  %v575 = vpop.f32.mrb[0].mxu0
  %v576 = vadd.f32 %v112, %v575
  %v577 = vpop.f32.mrb[0].mxu0
  %578 = vmatprep.mubr.bf16.mxu0 0
  %579 = vmatmul.mubr.bf16.gmra.mrb[0].mxu0 %v266
  %v580 = vpop.f32.mrb[0].mxu0
  %v581 = vadd.f32 %v112, %v580
  %v582 = vpop.f32.mrb[0].mxu0
  %v583 = vpop.f32.mrb[0].mxu0
  %v584 = vadd.f32 %v112, %v583
  %v585 = vpop.f32.mrb[0].mxu0
  %586 = vmatprep.mubr.bf16.mxu0 0
  %587 = vmatmul.mubr.bf16.gmra.mrb[0].mxu0 %v267
  %v588 = vpop.f32.mrb[0].mxu0
  %v589 = vadd.f32 %v112, %v588
  %v590 = vpop.f32.mrb[0].mxu0
  %v591 = vpop.f32.mrb[0].mxu0
  %v592 = vadd.f32 %v112, %v591
  %v593 = vpop.f32.mrb[0].mxu0
  %594 = vmatprep.mubr.bf16.mxu0 0
  %595 = vmatmul.mubr.bf16.gmra.mrb[0].mxu0 %v268
  %v596 = vpop.f32.mrb[0].mxu0
  %v597 = vadd.f32 %v112, %v596
  %v598 = vpop.f32.mrb[0].mxu0
  %v599 = vpop.f32.mrb[0].mxu0
  %v600 = vadd.f32 %v112, %v599
  %v601 = vpop.f32.mrb[0].mxu0
  %602 = vmatprep.mubr.bf16.mxu0 0
  %603 = vmatmul.mubr.bf16.gmra.mrb[0].mxu0 %v269
  %v604 = vpop.f32.mrb[0].mxu0
  %v605 = vadd.f32 %v112, %v604
  %v606 = vpop.f32.mrb[0].mxu0
  %v607 = vpop.f32.mrb[0].mxu0
  %v608 = vadd.f32 %v112, %v607
  %v609 = vpop.f32.mrb[0].mxu0
  %610 = vmatprep.mubr.bf16.mxu0 0
  %611 = vmatmul.mubr.bf16.gmra.mrb[0].mxu0 %v270
  %v612 = vpop.f32.mrb[0].mxu0
  %v613 = vadd.f32 %v112, %v612
  %v614 = vpop.f32.mrb[0].mxu0
  %v615 = vpop.f32.mrb[0].mxu0
  %v616 = vadd.f32 %v112, %v615
  %v617 = vpop.f32.mrb[0].mxu0
  %618 = vmatprep.mubr.bf16.mxu0 0
  %619 = vmatmul.mubr.bf16.gmra.mrb[0].mxu0 %v271
  %v620 = vpop.f32.mrb[0].mxu0
  %v621 = vadd.f32 %v112, %v620
  %v622 = vpop.f32.mrb[0].mxu0
  %v623 = vpop.f32.mrb[0].mxu0
  %v624 = vadd.f32 %v112, %v623
  %v625 = vpop.f32.mrb[0].mxu0
  %626 = vmatprep.mubr.bf16.mxu0 0
  %627 = vmatmul.mubr.bf16.gmra.mrb[0].mxu0 %v272
  %v628 = vpop.f32.mrb[0].mxu0
  %v629 = vadd.f32 %v112, %v628
  %v630 = vpop.f32.mrb[0].mxu0
  %v631 = vpop.f32.mrb[0].mxu0
  %v632 = vadd.f32 %v112, %v631
  %v633 = vpop.f32.mrb[0].mxu0
  %634 = vmatprep.mubr.bf16.mxu0 0
  %635 = vmatmul.mubr.bf16.gmra.mrb[0].mxu0 %v273
  %v636 = vpop.f32.mrb[0].mxu0
  %v637 = vadd.f32 %v112, %v636
  %v638 = vpop.f32.mrb[0].mxu0
  %v639 = vpop.f32.mrb[0].mxu0
  %v640 = vadd.f32 %v112, %v639
  %v641 = vpop.f32.mrb[0].mxu0
  %642 = vdwg.mxu0
  %v643 = vmax.f32 %v389, 0.0
  %v644 = vmax.f32 %v392, 0.0
  %v645 = vmax.f32 %v397, 0.0
  %v646 = vmax.f32 %v400, 0.0
  %v647 = vmax.f32 %v405, 0.0
  %v648 = vmax.f32 %v408, 0.0
  %v649 = vmax.f32 %v413, 0.0
  %v650 = vmax.f32 %v416, 0.0
  %v651 = vmax.f32 %v421, 0.0
  %v652 = vmax.f32 %v424, 0.0
  %v653 = vmax.f32 %v429, 0.0
  %v654 = vmax.f32 %v432, 0.0
  %v655 = vmax.f32 %v437, 0.0
  %v656 = vmax.f32 %v440, 0.0
  %v657 = vmax.f32 %v445, 0.0
  %v658 = vmax.f32 %v448, 0.0
  %v659 = vmax.f32 %v453, 0.0
  %v660 = vmax.f32 %v456, 0.0
  %v661 = vmax.f32 %v461, 0.0
  %v662 = vmax.f32 %v464, 0.0
  %v663 = vmax.f32 %v469, 0.0
  %v664 = vmax.f32 %v472, 0.0
  %v665 = vmax.f32 %v477, 0.0
  %v666 = vmax.f32 %v480, 0.0
  %v667 = vmax.f32 %v485, 0.0
  %v668 = vmax.f32 %v488, 0.0
  %v669 = vmax.f32 %v493, 0.0
  %v670 = vmax.f32 %v496, 0.0
  %v671 = vmax.f32 %v501, 0.0
  %v672 = vmax.f32 %v504, 0.0
  %v673 = vmax.f32 %v509, 0.0
  %v674 = vmax.f32 %v512, 0.0
  %v675 = vmax.f32 %v517, 0.0
  %v676 = vmax.f32 %v520, 0.0
  %v677 = vmax.f32 %v525, 0.0
  %v678 = vmax.f32 %v528, 0.0
  %v679 = vmax.f32 %v533, 0.0
  %v680 = vmax.f32 %v536, 0.0
  %v681 = vmax.f32 %v541, 0.0
  %v682 = vmax.f32 %v544, 0.0
  %v683 = vmax.f32 %v549, 0.0
  %v684 = vmax.f32 %v552, 0.0
  %v685 = vmax.f32 %v557, 0.0
  %v686 = vmax.f32 %v560, 0.0
  %v687 = vmax.f32 %v565, 0.0
  %v688 = vmax.f32 %v568, 0.0
  %v689 = vmax.f32 %v573, 0.0
  %v690 = vmax.f32 %v576, 0.0
  %v691 = vmax.f32 %v581, 0.0
  %v692 = vmax.f32 %v584, 0.0
  %v693 = vmax.f32 %v589, 0.0
  %v694 = vmax.f32 %v592, 0.0
  %v695 = vmax.f32 %v597, 0.0
  %v696 = vmax.f32 %v600, 0.0
  %v697 = vmax.f32 %v605, 0.0
  %v698 = vmax.f32 %v608, 0.0
  %v699 = vmax.f32 %v613, 0.0
  %v700 = vmax.f32 %v616, 0.0
  %v701 = vmax.f32 %v621, 0.0
  %v702 = vmax.f32 %v624, 0.0
  %v703 = vmax.f32 %v629, 0.0
  %v704 = vmax.f32 %v632, 0.0
  %v705 = vmax.f32 %v637, 0.0
  %v706 = vmax.f32 %v640, 0.0
  %v707 = vlaneseq
  %v708 = vshrl.u32 %v707, 7
  %v709 = vadd.s32 %v708, 8
  %v710 = vadd.s32 %v708, 16
  %v711 = vadd.s32 %v708, 24
  %v712 = vadd.s32 %v708, 32
  %v713 = vadd.s32 %v708, 40
  %v714 = vadd.s32 %v708, 48
  %v715 = vadd.s32 %v708, 56
  %v716 = vadd.s32 %v708, 64
  %v717 = vadd.s32 %v708, 72
  %v718 = vadd.s32 %v708, 80
  %v719 = vadd.s32 %v708, 88
  %v720 = vadd.s32 %v708, 96
  %v721 = vadd.s32 %v708, 104
  %v722 = vadd.s32 %v708, 112
  %v723 = vadd.s32 %v708, 120
  %v724 = vadd.s32 %v708, 128
  %v725 = vadd.s32 %v708, 136
  %v726 = vadd.s32 %v708, 144
  %v727 = vadd.s32 %v708, 152
  %v728 = vadd.s32 %v708, 160
  %v729 = vadd.s32 %v708, 168
  %v730 = vadd.s32 %v708, 176
  %v731 = vadd.s32 %v708, 184
  %v732 = vadd.s32 %v708, 192
  %v733 = vadd.s32 %v708, 200
  %v734 = vadd.s32 %v708, 208
  %v735 = vadd.s32 %v708, 216
  %v736 = vadd.s32 %v708, 224
  %v737 = vadd.s32 %v708, 232
  %v738 = vadd.s32 %v708, 240
  %v739 = vadd.s32 %v708, 248
  %v740 = vadd.s32 %v708, 256
  %v741 = vadd.s32 %v708, 264
  %v742 = vadd.s32 %v708, 272
  %v743 = vadd.s32 %v708, 280
  %v744 = vadd.s32 %v708, 288
  %v745 = vadd.s32 %v708, 296
  %v746 = vadd.s32 %v708, 304
  %v747 = vadd.s32 %v708, 312
  %v748 = vadd.s32 %v708, 320
  %v749 = vadd.s32 %v708, 328
  %v750 = vadd.s32 %v708, 336
  %v751 = vadd.s32 %v708, 344
  %v752 = vadd.s32 %v708, 352
  %v753 = vadd.s32 %v708, 360
  %v754 = vadd.s32 %v708, 368
  %v755 = vadd.s32 %v708, 376
  %v756 = vadd.s32 %v708, 384
  %v757 = vadd.s32 %v708, 392
  %v758 = vadd.s32 %v708, 400
  %v759 = vadd.s32 %v708, 408
  %v760 = vadd.s32 %v708, 416
  %v761 = vadd.s32 %v708, 424
  %v762 = vadd.s32 %v708, 432
  %v763 = vadd.s32 %v708, 440
  %v764 = vadd.s32 %v708, 448
  %v765 = vadd.s32 %v708, 456
  %v766 = vadd.s32 %v708, 464
  %v767 = vadd.s32 %v708, 472
  %v768 = vadd.s32 %v708, 480
  %v769 = vadd.s32 %v708, 488
  %v770 = vadd.s32 %v708, 496
  %v771 = vadd.s32 %v708, 504
  %vm772 = vcmp.lt.s32.totalorder %v708, 0
  %v773 = vsub.s32 0, %v708
  %v774 = vsel %vm772, %v773, %v708
  %v775 = vshrl.u32 %v774, 8
  %v776 = vand.u32 %v774, 255
  %v777 = vsub.s32 0, %v776
  %v778 = vsel %vm772, %v777, %v776
  %vm779 = vcmp.lt.s32.totalorder %v709, 0
  %v780 = vsub.s32 0, %v709
  %v781 = vsel %vm779, %v780, %v709
  %v782 = vshrl.u32 %v781, 8
  %v783 = vand.u32 %v781, 255
  %v784 = vsub.s32 0, %v783
  %v785 = vsel %vm779, %v784, %v783
  %vm786 = vcmp.lt.s32.totalorder %v710, 0
  %v787 = vsub.s32 0, %v710
  %v788 = vsel %vm786, %v787, %v710
  %v789 = vshrl.u32 %v788, 8
  %v790 = vand.u32 %v788, 255
  %v791 = vsub.s32 0, %v790
  %v792 = vsel %vm786, %v791, %v790
  %vm793 = vcmp.lt.s32.totalorder %v711, 0
  %v794 = vsub.s32 0, %v711
  %v795 = vsel %vm793, %v794, %v711
  %v796 = vshrl.u32 %v795, 8
  %v797 = vand.u32 %v795, 255
  %v798 = vsub.s32 0, %v797
  %v799 = vsel %vm793, %v798, %v797
  %vm800 = vcmp.lt.s32.totalorder %v712, 0
  %v801 = vsub.s32 0, %v712
  %v802 = vsel %vm800, %v801, %v712
  %v803 = vshrl.u32 %v802, 8
  %v804 = vand.u32 %v802, 255
  %v805 = vsub.s32 0, %v804
  %v806 = vsel %vm800, %v805, %v804
  %vm807 = vcmp.lt.s32.totalorder %v713, 0
  %v808 = vsub.s32 0, %v713
  %v809 = vsel %vm807, %v808, %v713
  %v810 = vshrl.u32 %v809, 8
  %v811 = vand.u32 %v809, 255
  %v812 = vsub.s32 0, %v811
  %v813 = vsel %vm807, %v812, %v811
  %vm814 = vcmp.lt.s32.totalorder %v714, 0
  %v815 = vsub.s32 0, %v714
  %v816 = vsel %vm814, %v815, %v714
  %v817 = vshrl.u32 %v816, 8
  %v818 = vand.u32 %v816, 255
  %v819 = vsub.s32 0, %v818
  %v820 = vsel %vm814, %v819, %v818
  %vm821 = vcmp.lt.s32.totalorder %v715, 0
  %v822 = vsub.s32 0, %v715
  %v823 = vsel %vm821, %v822, %v715
  %v824 = vshrl.u32 %v823, 8
  %v825 = vand.u32 %v823, 255
  %v826 = vsub.s32 0, %v825
  %v827 = vsel %vm821, %v826, %v825
  %vm828 = vcmp.lt.s32.totalorder %v716, 0
  %v829 = vsub.s32 0, %v716
  %v830 = vsel %vm828, %v829, %v716
  %v831 = vshrl.u32 %v830, 8
  %v832 = vand.u32 %v830, 255
  %v833 = vsub.s32 0, %v832
  %v834 = vsel %vm828, %v833, %v832
  %vm835 = vcmp.lt.s32.totalorder %v717, 0
  %v836 = vsub.s32 0, %v717
  %v837 = vsel %vm835, %v836, %v717
  %v838 = vshrl.u32 %v837, 8
  %v839 = vand.u32 %v837, 255
  %v840 = vsub.s32 0, %v839
  %v841 = vsel %vm835, %v840, %v839
  %vm842 = vcmp.lt.s32.totalorder %v718, 0
  %v843 = vsub.s32 0, %v718
  %v844 = vsel %vm842, %v843, %v718
  %v845 = vshrl.u32 %v844, 8
  %v846 = vand.u32 %v844, 255
  %v847 = vsub.s32 0, %v846
  %v848 = vsel %vm842, %v847, %v846
  %vm849 = vcmp.lt.s32.totalorder %v719, 0
  %v850 = vsub.s32 0, %v719
  %v851 = vsel %vm849, %v850, %v719
  %v852 = vshrl.u32 %v851, 8
  %v853 = vand.u32 %v851, 255
  %v854 = vsub.s32 0, %v853
  %v855 = vsel %vm849, %v854, %v853
  %vm856 = vcmp.lt.s32.totalorder %v720, 0
  %v857 = vsub.s32 0, %v720
  %v858 = vsel %vm856, %v857, %v720
  %v859 = vshrl.u32 %v858, 8
  %v860 = vand.u32 %v858, 255
  %v861 = vsub.s32 0, %v860
  %v862 = vsel %vm856, %v861, %v860
  %vm863 = vcmp.lt.s32.totalorder %v721, 0
  %v864 = vsub.s32 0, %v721
  %v865 = vsel %vm863, %v864, %v721
  %v866 = vshrl.u32 %v865, 8
  %v867 = vand.u32 %v865, 255
  %v868 = vsub.s32 0, %v867
  %v869 = vsel %vm863, %v868, %v867
  %vm870 = vcmp.lt.s32.totalorder %v722, 0
  %v871 = vsub.s32 0, %v722
  %v872 = vsel %vm870, %v871, %v722
  %v873 = vshrl.u32 %v872, 8
  %v874 = vand.u32 %v872, 255
  %v875 = vsub.s32 0, %v874
  %v876 = vsel %vm870, %v875, %v874
  %vm877 = vcmp.lt.s32.totalorder %v723, 0
  %v878 = vsub.s32 0, %v723
  %v879 = vsel %vm877, %v878, %v723
  %v880 = vshrl.u32 %v879, 8
  %v881 = vand.u32 %v879, 255
  %v882 = vsub.s32 0, %v881
  %v883 = vsel %vm877, %v882, %v881
  %vm884 = vcmp.lt.s32.totalorder %v724, 0
  %v885 = vsub.s32 0, %v724
  %v886 = vsel %vm884, %v885, %v724
  %v887 = vshrl.u32 %v886, 8
  %v888 = vand.u32 %v886, 255
  %v889 = vsub.s32 0, %v888
  %v890 = vsel %vm884, %v889, %v888
  %vm891 = vcmp.lt.s32.totalorder %v725, 0
  %v892 = vsub.s32 0, %v725
  %v893 = vsel %vm891, %v892, %v725
  %v894 = vshrl.u32 %v893, 8
  %v895 = vand.u32 %v893, 255
  %v896 = vsub.s32 0, %v895
  %v897 = vsel %vm891, %v896, %v895
  %vm898 = vcmp.lt.s32.totalorder %v726, 0
  %v899 = vsub.s32 0, %v726
  %v900 = vsel %vm898, %v899, %v726
  %v901 = vshrl.u32 %v900, 8
  %v902 = vand.u32 %v900, 255
  %v903 = vsub.s32 0, %v902
  %v904 = vsel %vm898, %v903, %v902
  %vm905 = vcmp.lt.s32.totalorder %v727, 0
  %v906 = vsub.s32 0, %v727
  %v907 = vsel %vm905, %v906, %v727
  %v908 = vshrl.u32 %v907, 8
  %v909 = vand.u32 %v907, 255
  %v910 = vsub.s32 0, %v909
  %v911 = vsel %vm905, %v910, %v909
  %vm912 = vcmp.lt.s32.totalorder %v728, 0
  %v913 = vsub.s32 0, %v728
  %v914 = vsel %vm912, %v913, %v728
  %v915 = vshrl.u32 %v914, 8
  %v916 = vand.u32 %v914, 255
  %v917 = vsub.s32 0, %v916
  %v918 = vsel %vm912, %v917, %v916
  %vm919 = vcmp.lt.s32.totalorder %v729, 0
  %v920 = vsub.s32 0, %v729
  %v921 = vsel %vm919, %v920, %v729
  %v922 = vshrl.u32 %v921, 8
  %v923 = vand.u32 %v921, 255
  %v924 = vsub.s32 0, %v923
  %v925 = vsel %vm919, %v924, %v923
  %vm926 = vcmp.lt.s32.totalorder %v730, 0
  %v927 = vsub.s32 0, %v730
  %v928 = vsel %vm926, %v927, %v730
  %v929 = vshrl.u32 %v928, 8
  %v930 = vand.u32 %v928, 255
  %v931 = vsub.s32 0, %v930
  %v932 = vsel %vm926, %v931, %v930
  %vm933 = vcmp.lt.s32.totalorder %v731, 0
  %v934 = vsub.s32 0, %v731
  %v935 = vsel %vm933, %v934, %v731
  %v936 = vshrl.u32 %v935, 8
  %v937 = vand.u32 %v935, 255
  %v938 = vsub.s32 0, %v937
  %v939 = vsel %vm933, %v938, %v937
  %vm940 = vcmp.lt.s32.totalorder %v732, 0
  %v941 = vsub.s32 0, %v732
  %v942 = vsel %vm940, %v941, %v732
  %v943 = vshrl.u32 %v942, 8
  %v944 = vand.u32 %v942, 255
  %v945 = vsub.s32 0, %v944
  %v946 = vsel %vm940, %v945, %v944
  %vm947 = vcmp.lt.s32.totalorder %v733, 0
  %v948 = vsub.s32 0, %v733
  %v949 = vsel %vm947, %v948, %v733
  %v950 = vshrl.u32 %v949, 8
  %v951 = vand.u32 %v949, 255
  %v952 = vsub.s32 0, %v951
  %v953 = vsel %vm947, %v952, %v951
  %vm954 = vcmp.lt.s32.totalorder %v734, 0
  %v955 = vsub.s32 0, %v734
  %v956 = vsel %vm954, %v955, %v734
  %v957 = vshrl.u32 %v956, 8
  %v958 = vand.u32 %v956, 255
  %v959 = vsub.s32 0, %v958
  %v960 = vsel %vm954, %v959, %v958
  %vm961 = vcmp.lt.s32.totalorder %v735, 0
  %v962 = vsub.s32 0, %v735
  %v963 = vsel %vm961, %v962, %v735
  %v964 = vshrl.u32 %v963, 8
  %v965 = vand.u32 %v963, 255
  %v966 = vsub.s32 0, %v965
  %v967 = vsel %vm961, %v966, %v965
  %vm968 = vcmp.lt.s32.totalorder %v736, 0
  %v969 = vsub.s32 0, %v736
  %v970 = vsel %vm968, %v969, %v736
  %v971 = vshrl.u32 %v970, 8
  %v972 = vand.u32 %v970, 255
  %v973 = vsub.s32 0, %v972
  %v974 = vsel %vm968, %v973, %v972
  %vm975 = vcmp.lt.s32.totalorder %v737, 0
  %v976 = vsub.s32 0, %v737
  %v977 = vsel %vm975, %v976, %v737
  %v978 = vshrl.u32 %v977, 8
  %v979 = vand.u32 %v977, 255
  %v980 = vsub.s32 0, %v979
  %v981 = vsel %vm975, %v980, %v979
  %vm982 = vcmp.lt.s32.totalorder %v738, 0
  %v983 = vsub.s32 0, %v738
  %v984 = vsel %vm982, %v983, %v738
  %v985 = vshrl.u32 %v984, 8
  %v986 = vand.u32 %v984, 255
  %v987 = vsub.s32 0, %v986
  %v988 = vsel %vm982, %v987, %v986
  %vm989 = vcmp.lt.s32.totalorder %v739, 0
  %v990 = vsub.s32 0, %v739
  %v991 = vsel %vm989, %v990, %v739
  %v992 = vshrl.u32 %v991, 8
  %v993 = vand.u32 %v991, 255
  %v994 = vsub.s32 0, %v993
  %v995 = vsel %vm989, %v994, %v993
  %vm996 = vcmp.lt.s32.totalorder %v740, 0
  %v997 = vsub.s32 0, %v740
  %v998 = vsel %vm996, %v997, %v740
  %v999 = vshrl.u32 %v998, 8
  %v1000 = vand.u32 %v998, 255
  %v1001 = vsub.s32 0, %v1000
  %v1002 = vsel %vm996, %v1001, %v1000
  %vm1003 = vcmp.lt.s32.totalorder %v741, 0
  %v1004 = vsub.s32 0, %v741
  %v1005 = vsel %vm1003, %v1004, %v741
  %v1006 = vshrl.u32 %v1005, 8
  %v1007 = vand.u32 %v1005, 255
  %v1008 = vsub.s32 0, %v1007
  %v1009 = vsel %vm1003, %v1008, %v1007
  %vm1010 = vcmp.lt.s32.totalorder %v742, 0
  %v1011 = vsub.s32 0, %v742
  %v1012 = vsel %vm1010, %v1011, %v742
  %v1013 = vshrl.u32 %v1012, 8
  %v1014 = vand.u32 %v1012, 255
  %v1015 = vsub.s32 0, %v1014
  %v1016 = vsel %vm1010, %v1015, %v1014
  %vm1017 = vcmp.lt.s32.totalorder %v743, 0
  %v1018 = vsub.s32 0, %v743
  %v1019 = vsel %vm1017, %v1018, %v743
  %v1020 = vshrl.u32 %v1019, 8
  %v1021 = vand.u32 %v1019, 255
  %v1022 = vsub.s32 0, %v1021
  %v1023 = vsel %vm1017, %v1022, %v1021
  %vm1024 = vcmp.lt.s32.totalorder %v744, 0
  %v1025 = vsub.s32 0, %v744
  %v1026 = vsel %vm1024, %v1025, %v744
  %v1027 = vshrl.u32 %v1026, 8
  %v1028 = vand.u32 %v1026, 255
  %v1029 = vsub.s32 0, %v1028
  %v1030 = vsel %vm1024, %v1029, %v1028
  %vm1031 = vcmp.lt.s32.totalorder %v745, 0
  %v1032 = vsub.s32 0, %v745
  %v1033 = vsel %vm1031, %v1032, %v745
  %v1034 = vshrl.u32 %v1033, 8
  %v1035 = vand.u32 %v1033, 255
  %v1036 = vsub.s32 0, %v1035
  %v1037 = vsel %vm1031, %v1036, %v1035
  %vm1038 = vcmp.lt.s32.totalorder %v746, 0
  %v1039 = vsub.s32 0, %v746
  %v1040 = vsel %vm1038, %v1039, %v746
  %v1041 = vshrl.u32 %v1040, 8
  %v1042 = vand.u32 %v1040, 255
  %v1043 = vsub.s32 0, %v1042
  %v1044 = vsel %vm1038, %v1043, %v1042
  %vm1045 = vcmp.lt.s32.totalorder %v747, 0
  %v1046 = vsub.s32 0, %v747
  %v1047 = vsel %vm1045, %v1046, %v747
  %v1048 = vshrl.u32 %v1047, 8
  %v1049 = vand.u32 %v1047, 255
  %v1050 = vsub.s32 0, %v1049
  %v1051 = vsel %vm1045, %v1050, %v1049
  %vm1052 = vcmp.lt.s32.totalorder %v748, 0
  %v1053 = vsub.s32 0, %v748
  %v1054 = vsel %vm1052, %v1053, %v748
  %v1055 = vshrl.u32 %v1054, 8
  %v1056 = vand.u32 %v1054, 255
  %v1057 = vsub.s32 0, %v1056
  %v1058 = vsel %vm1052, %v1057, %v1056
  %vm1059 = vcmp.lt.s32.totalorder %v749, 0
  %v1060 = vsub.s32 0, %v749
  %v1061 = vsel %vm1059, %v1060, %v749
  %v1062 = vshrl.u32 %v1061, 8
  %v1063 = vand.u32 %v1061, 255
  %v1064 = vsub.s32 0, %v1063
  %v1065 = vsel %vm1059, %v1064, %v1063
  %vm1066 = vcmp.lt.s32.totalorder %v750, 0
  %v1067 = vsub.s32 0, %v750
  %v1068 = vsel %vm1066, %v1067, %v750
  %v1069 = vshrl.u32 %v1068, 8
  %v1070 = vand.u32 %v1068, 255
  %v1071 = vsub.s32 0, %v1070
  %v1072 = vsel %vm1066, %v1071, %v1070
  %vm1073 = vcmp.lt.s32.totalorder %v751, 0
  %v1074 = vsub.s32 0, %v751
  %v1075 = vsel %vm1073, %v1074, %v751
  %v1076 = vshrl.u32 %v1075, 8
  %v1077 = vand.u32 %v1075, 255
  %v1078 = vsub.s32 0, %v1077
  %v1079 = vsel %vm1073, %v1078, %v1077
  %vm1080 = vcmp.lt.s32.totalorder %v752, 0
  %v1081 = vsub.s32 0, %v752
  %v1082 = vsel %vm1080, %v1081, %v752
  %v1083 = vshrl.u32 %v1082, 8
  %v1084 = vand.u32 %v1082, 255
  %v1085 = vsub.s32 0, %v1084
  %v1086 = vsel %vm1080, %v1085, %v1084
  %vm1087 = vcmp.lt.s32.totalorder %v753, 0
  %v1088 = vsub.s32 0, %v753
  %v1089 = vsel %vm1087, %v1088, %v753
  %v1090 = vshrl.u32 %v1089, 8
  %v1091 = vand.u32 %v1089, 255
  %v1092 = vsub.s32 0, %v1091
  %v1093 = vsel %vm1087, %v1092, %v1091
  %vm1094 = vcmp.lt.s32.totalorder %v754, 0
  %v1095 = vsub.s32 0, %v754
  %v1096 = vsel %vm1094, %v1095, %v754
  %v1097 = vshrl.u32 %v1096, 8
  %v1098 = vand.u32 %v1096, 255
  %v1099 = vsub.s32 0, %v1098
  %v1100 = vsel %vm1094, %v1099, %v1098
  %vm1101 = vcmp.lt.s32.totalorder %v755, 0
  %v1102 = vsub.s32 0, %v755
  %v1103 = vsel %vm1101, %v1102, %v755
  %v1104 = vshrl.u32 %v1103, 8
  %v1105 = vand.u32 %v1103, 255
  %v1106 = vsub.s32 0, %v1105
  %v1107 = vsel %vm1101, %v1106, %v1105
  %vm1108 = vcmp.lt.s32.totalorder %v756, 0
  %v1109 = vsub.s32 0, %v756
  %v1110 = vsel %vm1108, %v1109, %v756
  %v1111 = vshrl.u32 %v1110, 8
  %v1112 = vand.u32 %v1110, 255
  %v1113 = vsub.s32 0, %v1112
  %v1114 = vsel %vm1108, %v1113, %v1112
  %vm1115 = vcmp.lt.s32.totalorder %v757, 0
  %v1116 = vsub.s32 0, %v757
  %v1117 = vsel %vm1115, %v1116, %v757
  %v1118 = vshrl.u32 %v1117, 8
  %v1119 = vand.u32 %v1117, 255
  %v1120 = vsub.s32 0, %v1119
  %v1121 = vsel %vm1115, %v1120, %v1119
  %vm1122 = vcmp.lt.s32.totalorder %v758, 0
  %v1123 = vsub.s32 0, %v758
  %v1124 = vsel %vm1122, %v1123, %v758
  %v1125 = vshrl.u32 %v1124, 8
  %v1126 = vand.u32 %v1124, 255
  %v1127 = vsub.s32 0, %v1126
  %v1128 = vsel %vm1122, %v1127, %v1126
  %vm1129 = vcmp.lt.s32.totalorder %v759, 0
  %v1130 = vsub.s32 0, %v759
  %v1131 = vsel %vm1129, %v1130, %v759
  %v1132 = vshrl.u32 %v1131, 8
  %v1133 = vand.u32 %v1131, 255
  %v1134 = vsub.s32 0, %v1133
  %v1135 = vsel %vm1129, %v1134, %v1133
  %vm1136 = vcmp.lt.s32.totalorder %v760, 0
  %v1137 = vsub.s32 0, %v760
  %v1138 = vsel %vm1136, %v1137, %v760
  %v1139 = vshrl.u32 %v1138, 8
  %v1140 = vand.u32 %v1138, 255
  %v1141 = vsub.s32 0, %v1140
  %v1142 = vsel %vm1136, %v1141, %v1140
  %vm1143 = vcmp.lt.s32.totalorder %v761, 0
  %v1144 = vsub.s32 0, %v761
  %v1145 = vsel %vm1143, %v1144, %v761
  %v1146 = vshrl.u32 %v1145, 8
  %v1147 = vand.u32 %v1145, 255
  %v1148 = vsub.s32 0, %v1147
  %v1149 = vsel %vm1143, %v1148, %v1147
  %vm1150 = vcmp.lt.s32.totalorder %v762, 0
  %v1151 = vsub.s32 0, %v762
  %v1152 = vsel %vm1150, %v1151, %v762
  %v1153 = vshrl.u32 %v1152, 8
  %v1154 = vand.u32 %v1152, 255
  %v1155 = vsub.s32 0, %v1154
  %v1156 = vsel %vm1150, %v1155, %v1154
  %vm1157 = vcmp.lt.s32.totalorder %v763, 0
  %v1158 = vsub.s32 0, %v763
  %v1159 = vsel %vm1157, %v1158, %v763
  %v1160 = vshrl.u32 %v1159, 8
  %v1161 = vand.u32 %v1159, 255
  %v1162 = vsub.s32 0, %v1161
  %v1163 = vsel %vm1157, %v1162, %v1161
  %vm1164 = vcmp.lt.s32.totalorder %v764, 0
  %v1165 = vsub.s32 0, %v764
  %v1166 = vsel %vm1164, %v1165, %v764
  %v1167 = vshrl.u32 %v1166, 8
  %v1168 = vand.u32 %v1166, 255
  %v1169 = vsub.s32 0, %v1168
  %v1170 = vsel %vm1164, %v1169, %v1168
  %vm1171 = vcmp.lt.s32.totalorder %v765, 0
  %v1172 = vsub.s32 0, %v765
  %v1173 = vsel %vm1171, %v1172, %v765
  %v1174 = vshrl.u32 %v1173, 8
  %v1175 = vand.u32 %v1173, 255
  %v1176 = vsub.s32 0, %v1175
  %v1177 = vsel %vm1171, %v1176, %v1175
  %vm1178 = vcmp.lt.s32.totalorder %v766, 0
  %v1179 = vsub.s32 0, %v766
  %v1180 = vsel %vm1178, %v1179, %v766
  %v1181 = vshrl.u32 %v1180, 8
  %v1182 = vand.u32 %v1180, 255
  %v1183 = vsub.s32 0, %v1182
  %v1184 = vsel %vm1178, %v1183, %v1182
  %vm1185 = vcmp.lt.s32.totalorder %v767, 0
  %v1186 = vsub.s32 0, %v767
  %v1187 = vsel %vm1185, %v1186, %v767
  %v1188 = vshrl.u32 %v1187, 8
  %v1189 = vand.u32 %v1187, 255
  %v1190 = vsub.s32 0, %v1189
  %v1191 = vsel %vm1185, %v1190, %v1189
  %vm1192 = vcmp.lt.s32.totalorder %v768, 0
  %v1193 = vsub.s32 0, %v768
  %v1194 = vsel %vm1192, %v1193, %v768
  %v1195 = vshrl.u32 %v1194, 8
  %v1196 = vand.u32 %v1194, 255
  %v1197 = vsub.s32 0, %v1196
  %v1198 = vsel %vm1192, %v1197, %v1196
  %vm1199 = vcmp.lt.s32.totalorder %v769, 0
  %v1200 = vsub.s32 0, %v769
  %v1201 = vsel %vm1199, %v1200, %v769
  %v1202 = vshrl.u32 %v1201, 8
  %v1203 = vand.u32 %v1201, 255
  %v1204 = vsub.s32 0, %v1203
  %v1205 = vsel %vm1199, %v1204, %v1203
  %vm1206 = vcmp.lt.s32.totalorder %v770, 0
  %v1207 = vsub.s32 0, %v770
  %v1208 = vsel %vm1206, %v1207, %v770
  %v1209 = vshrl.u32 %v1208, 8
  %v1210 = vand.u32 %v1208, 255
  %v1211 = vsub.s32 0, %v1210
  %v1212 = vsel %vm1206, %v1211, %v1210
  %vm1213 = vcmp.lt.s32.totalorder %v771, 0
  %v1214 = vsub.s32 0, %v771
  %v1215 = vsel %vm1213, %v1214, %v771
  %v1216 = vshrl.u32 %v1215, 8
  %v1217 = vand.u32 %v1215, 255
  %v1218 = vsub.s32 0, %v1217
  %v1219 = vsel %vm1213, %v1218, %v1217
  %vm1220 = vcmp.ne.s32.totalorder %v778, 0
  %vm1221 = vcmp.ne.s32.totalorder %v785, 0
  %vm1222 = vcmp.ne.s32.totalorder %v792, 0
  %vm1223 = vcmp.ne.s32.totalorder %v799, 0
  %vm1224 = vcmp.ne.s32.totalorder %v806, 0
  %vm1225 = vcmp.ne.s32.totalorder %v813, 0
  %vm1226 = vcmp.ne.s32.totalorder %v820, 0
  %vm1227 = vcmp.ne.s32.totalorder %v827, 0
  %vm1228 = vcmp.ne.s32.totalorder %v834, 0
  %vm1229 = vcmp.ne.s32.totalorder %v841, 0
  %vm1230 = vcmp.ne.s32.totalorder %v848, 0
  %vm1231 = vcmp.ne.s32.totalorder %v855, 0
  %vm1232 = vcmp.ne.s32.totalorder %v862, 0
  %vm1233 = vcmp.ne.s32.totalorder %v869, 0
  %vm1234 = vcmp.ne.s32.totalorder %v876, 0
  %vm1235 = vcmp.ne.s32.totalorder %v883, 0
  %vm1236 = vcmp.ne.s32.totalorder %v890, 0
  %vm1237 = vcmp.ne.s32.totalorder %v897, 0
  %vm1238 = vcmp.ne.s32.totalorder %v904, 0
  %vm1239 = vcmp.ne.s32.totalorder %v911, 0
  %vm1240 = vcmp.ne.s32.totalorder %v918, 0
  %vm1241 = vcmp.ne.s32.totalorder %v925, 0
  %vm1242 = vcmp.ne.s32.totalorder %v932, 0
  %vm1243 = vcmp.ne.s32.totalorder %v939, 0
  %vm1244 = vcmp.ne.s32.totalorder %v946, 0
  %vm1245 = vcmp.ne.s32.totalorder %v953, 0
  %vm1246 = vcmp.ne.s32.totalorder %v960, 0
  %vm1247 = vcmp.ne.s32.totalorder %v967, 0
  %vm1248 = vcmp.ne.s32.totalorder %v974, 0
  %vm1249 = vcmp.ne.s32.totalorder %v981, 0
  %vm1250 = vcmp.ne.s32.totalorder %v988, 0
  %vm1251 = vcmp.ne.s32.totalorder %v995, 0
  %vm1252 = vcmp.ne.s32.totalorder %v1002, 0
  %vm1253 = vcmp.ne.s32.totalorder %v1009, 0
  %vm1254 = vcmp.ne.s32.totalorder %v1016, 0
  %vm1255 = vcmp.ne.s32.totalorder %v1023, 0
  %vm1256 = vcmp.ne.s32.totalorder %v1030, 0
  %vm1257 = vcmp.ne.s32.totalorder %v1037, 0
  %vm1258 = vcmp.ne.s32.totalorder %v1044, 0
  %vm1259 = vcmp.ne.s32.totalorder %v1051, 0
  %vm1260 = vcmp.ne.s32.totalorder %v1058, 0
  %vm1261 = vcmp.ne.s32.totalorder %v1065, 0
  %vm1262 = vcmp.ne.s32.totalorder %v1072, 0
  %vm1263 = vcmp.ne.s32.totalorder %v1079, 0
  %vm1264 = vcmp.ne.s32.totalorder %v1086, 0
  %vm1265 = vcmp.ne.s32.totalorder %v1093, 0
  %vm1266 = vcmp.ne.s32.totalorder %v1100, 0
  %vm1267 = vcmp.ne.s32.totalorder %v1107, 0
  %vm1268 = vcmp.ne.s32.totalorder %v1114, 0
  %vm1269 = vcmp.ne.s32.totalorder %v1121, 0
  %vm1270 = vcmp.ne.s32.totalorder %v1128, 0
  %vm1271 = vcmp.ne.s32.totalorder %v1135, 0
  %vm1272 = vcmp.ne.s32.totalorder %v1142, 0
  %vm1273 = vcmp.ne.s32.totalorder %v1149, 0
  %vm1274 = vcmp.ne.s32.totalorder %v1156, 0
  %vm1275 = vcmp.ne.s32.totalorder %v1163, 0
  %vm1276 = vcmp.ne.s32.totalorder %v1170, 0
  %vm1277 = vcmp.ne.s32.totalorder %v1177, 0
  %vm1278 = vcmp.ne.s32.totalorder %v1184, 0
  %vm1279 = vcmp.ne.s32.totalorder %v1191, 0
  %vm1280 = vcmp.ne.s32.totalorder %v1198, 0
  %vm1281 = vcmp.ne.s32.totalorder %v1205, 0
  %vm1282 = vcmp.ne.s32.totalorder %v1212, 0
  %vm1283 = vcmp.ne.s32.totalorder %v1219, 0
  %vm1284 = vcmp.lt.s32.totalorder %v778, 0
  %vm1285 = vcmp.lt.s32.totalorder %v785, 0
  %vm1286 = vcmp.lt.s32.totalorder %v792, 0
  %vm1287 = vcmp.lt.s32.totalorder %v799, 0
  %vm1288 = vcmp.lt.s32.totalorder %v806, 0
  %vm1289 = vcmp.lt.s32.totalorder %v813, 0
  %vm1290 = vcmp.lt.s32.totalorder %v820, 0
  %vm1291 = vcmp.lt.s32.totalorder %v827, 0
  %vm1292 = vcmp.lt.s32.totalorder %v834, 0
  %vm1293 = vcmp.lt.s32.totalorder %v841, 0
  %vm1294 = vcmp.lt.s32.totalorder %v848, 0
  %vm1295 = vcmp.lt.s32.totalorder %v855, 0
  %vm1296 = vcmp.lt.s32.totalorder %v862, 0
  %vm1297 = vcmp.lt.s32.totalorder %v869, 0
  %vm1298 = vcmp.lt.s32.totalorder %v876, 0
  %vm1299 = vcmp.lt.s32.totalorder %v883, 0
  %vm1300 = vcmp.lt.s32.totalorder %v890, 0
  %vm1301 = vcmp.lt.s32.totalorder %v897, 0
  %vm1302 = vcmp.lt.s32.totalorder %v904, 0
  %vm1303 = vcmp.lt.s32.totalorder %v911, 0
  %vm1304 = vcmp.lt.s32.totalorder %v918, 0
  %vm1305 = vcmp.lt.s32.totalorder %v925, 0
  %vm1306 = vcmp.lt.s32.totalorder %v932, 0
  %vm1307 = vcmp.lt.s32.totalorder %v939, 0
  %vm1308 = vcmp.lt.s32.totalorder %v946, 0
  %vm1309 = vcmp.lt.s32.totalorder %v953, 0
  %vm1310 = vcmp.lt.s32.totalorder %v960, 0
  %vm1311 = vcmp.lt.s32.totalorder %v967, 0
  %vm1312 = vcmp.lt.s32.totalorder %v974, 0
  %vm1313 = vcmp.lt.s32.totalorder %v981, 0
  %vm1314 = vcmp.lt.s32.totalorder %v988, 0
  %vm1315 = vcmp.lt.s32.totalorder %v995, 0
  %vm1316 = vcmp.lt.s32.totalorder %v1002, 0
  %vm1317 = vcmp.lt.s32.totalorder %v1009, 0
  %vm1318 = vcmp.lt.s32.totalorder %v1016, 0
  %vm1319 = vcmp.lt.s32.totalorder %v1023, 0
  %vm1320 = vcmp.lt.s32.totalorder %v1030, 0
  %vm1321 = vcmp.lt.s32.totalorder %v1037, 0
  %vm1322 = vcmp.lt.s32.totalorder %v1044, 0
  %vm1323 = vcmp.lt.s32.totalorder %v1051, 0
  %vm1324 = vcmp.lt.s32.totalorder %v1058, 0
  %vm1325 = vcmp.lt.s32.totalorder %v1065, 0
  %vm1326 = vcmp.lt.s32.totalorder %v1072, 0
  %vm1327 = vcmp.lt.s32.totalorder %v1079, 0
  %vm1328 = vcmp.lt.s32.totalorder %v1086, 0
  %vm1329 = vcmp.lt.s32.totalorder %v1093, 0
  %vm1330 = vcmp.lt.s32.totalorder %v1100, 0
  %vm1331 = vcmp.lt.s32.totalorder %v1107, 0
  %vm1332 = vcmp.lt.s32.totalorder %v1114, 0
  %vm1333 = vcmp.lt.s32.totalorder %v1121, 0
  %vm1334 = vcmp.lt.s32.totalorder %v1128, 0
  %vm1335 = vcmp.lt.s32.totalorder %v1135, 0
  %vm1336 = vcmp.lt.s32.totalorder %v1142, 0
  %vm1337 = vcmp.lt.s32.totalorder %v1149, 0
  %vm1338 = vcmp.lt.s32.totalorder %v1156, 0
  %vm1339 = vcmp.lt.s32.totalorder %v1163, 0
  %vm1340 = vcmp.lt.s32.totalorder %v1170, 0
  %vm1341 = vcmp.lt.s32.totalorder %v1177, 0
  %vm1342 = vcmp.lt.s32.totalorder %v1184, 0
  %vm1343 = vcmp.lt.s32.totalorder %v1191, 0
  %vm1344 = vcmp.lt.s32.totalorder %v1198, 0
  %vm1345 = vcmp.lt.s32.totalorder %v1205, 0
  %vm1346 = vcmp.lt.s32.totalorder %v1212, 0
  %vm1347 = vcmp.lt.s32.totalorder %v1219, 0
  %vm1348 = vmand %vm1284, %vm1220
  %vm1349 = vmand %vm1285, %vm1221
  %vm1350 = vmand %vm1286, %vm1222
  %vm1351 = vmand %vm1287, %vm1223
  %vm1352 = vmand %vm1288, %vm1224
  %vm1353 = vmand %vm1289, %vm1225
  %vm1354 = vmand %vm1290, %vm1226
  %vm1355 = vmand %vm1291, %vm1227
  %vm1356 = vmand %vm1292, %vm1228
  %vm1357 = vmand %vm1293, %vm1229
  %vm1358 = vmand %vm1294, %vm1230
  %vm1359 = vmand %vm1295, %vm1231
  %vm1360 = vmand %vm1296, %vm1232
  %vm1361 = vmand %vm1297, %vm1233
  %vm1362 = vmand %vm1298, %vm1234
  %vm1363 = vmand %vm1299, %vm1235
  %vm1364 = vmand %vm1300, %vm1236
  %vm1365 = vmand %vm1301, %vm1237
  %vm1366 = vmand %vm1302, %vm1238
  %vm1367 = vmand %vm1303, %vm1239
  %vm1368 = vmand %vm1304, %vm1240
  %vm1369 = vmand %vm1305, %vm1241
  %vm1370 = vmand %vm1306, %vm1242
  %vm1371 = vmand %vm1307, %vm1243
  %vm1372 = vmand %vm1308, %vm1244
  %vm1373 = vmand %vm1309, %vm1245
  %vm1374 = vmand %vm1310, %vm1246
  %vm1375 = vmand %vm1311, %vm1247
  %vm1376 = vmand %vm1312, %vm1248
  %vm1377 = vmand %vm1313, %vm1249
  %vm1378 = vmand %vm1314, %vm1250
  %vm1379 = vmand %vm1315, %vm1251
  %vm1380 = vmand %vm1316, %vm1252
  %vm1381 = vmand %vm1317, %vm1253
  %vm1382 = vmand %vm1318, %vm1254
  %vm1383 = vmand %vm1319, %vm1255
  %vm1384 = vmand %vm1320, %vm1256
  %vm1385 = vmand %vm1321, %vm1257
  %vm1386 = vmand %vm1322, %vm1258
  %vm1387 = vmand %vm1323, %vm1259
  %vm1388 = vmand %vm1324, %vm1260
  %vm1389 = vmand %vm1325, %vm1261
  %vm1390 = vmand %vm1326, %vm1262
  %vm1391 = vmand %vm1327, %vm1263
  %vm1392 = vmand %vm1328, %vm1264
  %vm1393 = vmand %vm1329, %vm1265
  %vm1394 = vmand %vm1330, %vm1266
  %vm1395 = vmand %vm1331, %vm1267
  %vm1396 = vmand %vm1332, %vm1268
  %vm1397 = vmand %vm1333, %vm1269
  %vm1398 = vmand %vm1334, %vm1270
  %vm1399 = vmand %vm1335, %vm1271
  %vm1400 = vmand %vm1336, %vm1272
  %vm1401 = vmand %vm1337, %vm1273
  %vm1402 = vmand %vm1338, %vm1274
  %vm1403 = vmand %vm1339, %vm1275
  %vm1404 = vmand %vm1340, %vm1276
  %vm1405 = vmand %vm1341, %vm1277
  %vm1406 = vmand %vm1342, %vm1278
  %vm1407 = vmand %vm1343, %vm1279
  %vm1408 = vmand %vm1344, %vm1280
  %vm1409 = vmand %vm1345, %vm1281
  %vm1410 = vmand %vm1346, %vm1282
  %vm1411 = vmand %vm1347, %vm1283
  %v1412 = vadd.s32 %v778, 256
  %v1413 = vadd.s32 %v785, 256
  %v1414 = vadd.s32 %v792, 256
  %v1415 = vadd.s32 %v799, 256
  %v1416 = vadd.s32 %v806, 256
  %v1417 = vadd.s32 %v813, 256
  %v1418 = vadd.s32 %v820, 256
  %v1419 = vadd.s32 %v827, 256
  %v1420 = vadd.s32 %v834, 256
  %v1421 = vadd.s32 %v841, 256
  %v1422 = vadd.s32 %v848, 256
  %v1423 = vadd.s32 %v855, 256
  %v1424 = vadd.s32 %v862, 256
  %v1425 = vadd.s32 %v869, 256
  %v1426 = vadd.s32 %v876, 256
  %v1427 = vadd.s32 %v883, 256
  %v1428 = vadd.s32 %v890, 256
  %v1429 = vadd.s32 %v897, 256
  %v1430 = vadd.s32 %v904, 256
  %v1431 = vadd.s32 %v911, 256
  %v1432 = vadd.s32 %v918, 256
  %v1433 = vadd.s32 %v925, 256
  %v1434 = vadd.s32 %v932, 256
  %v1435 = vadd.s32 %v939, 256
  %v1436 = vadd.s32 %v946, 256
  %v1437 = vadd.s32 %v953, 256
  %v1438 = vadd.s32 %v960, 256
  %v1439 = vadd.s32 %v967, 256
  %v1440 = vadd.s32 %v974, 256
  %v1441 = vadd.s32 %v981, 256
  %v1442 = vadd.s32 %v988, 256
  %v1443 = vadd.s32 %v995, 256
  %v1444 = vadd.s32 %v1002, 256
  %v1445 = vadd.s32 %v1009, 256
  %v1446 = vadd.s32 %v1016, 256
  %v1447 = vadd.s32 %v1023, 256
  %v1448 = vadd.s32 %v1030, 256
  %v1449 = vadd.s32 %v1037, 256
  %v1450 = vadd.s32 %v1044, 256
  %v1451 = vadd.s32 %v1051, 256
  %v1452 = vadd.s32 %v1058, 256
  %v1453 = vadd.s32 %v1065, 256
  %v1454 = vadd.s32 %v1072, 256
  %v1455 = vadd.s32 %v1079, 256
  %v1456 = vadd.s32 %v1086, 256
  %v1457 = vadd.s32 %v1093, 256
  %v1458 = vadd.s32 %v1100, 256
  %v1459 = vadd.s32 %v1107, 256
  %v1460 = vadd.s32 %v1114, 256
  %v1461 = vadd.s32 %v1121, 256
  %v1462 = vadd.s32 %v1128, 256
  %v1463 = vadd.s32 %v1135, 256
  %v1464 = vadd.s32 %v1142, 256
  %v1465 = vadd.s32 %v1149, 256
  %v1466 = vadd.s32 %v1156, 256
  %v1467 = vadd.s32 %v1163, 256
  %v1468 = vadd.s32 %v1170, 256
  %v1469 = vadd.s32 %v1177, 256
  %v1470 = vadd.s32 %v1184, 256
  %v1471 = vadd.s32 %v1191, 256
  %v1472 = vadd.s32 %v1198, 256
  %v1473 = vadd.s32 %v1205, 256
  %v1474 = vadd.s32 %v1212, 256
  %v1475 = vadd.s32 %v1219, 256
  %v1476 = vsel %vm1348, %v1412, %v778
  %v1477 = vsel %vm1349, %v1413, %v785
  %v1478 = vsel %vm1350, %v1414, %v792
  %v1479 = vsel %vm1351, %v1415, %v799
  %v1480 = vsel %vm1352, %v1416, %v806
  %v1481 = vsel %vm1353, %v1417, %v813
  %v1482 = vsel %vm1354, %v1418, %v820
  %v1483 = vsel %vm1355, %v1419, %v827
  %v1484 = vsel %vm1356, %v1420, %v834
  %v1485 = vsel %vm1357, %v1421, %v841
  %v1486 = vsel %vm1358, %v1422, %v848
  %v1487 = vsel %vm1359, %v1423, %v855
  %v1488 = vsel %vm1360, %v1424, %v862
  %v1489 = vsel %vm1361, %v1425, %v869
  %v1490 = vsel %vm1362, %v1426, %v876
  %v1491 = vsel %vm1363, %v1427, %v883
  %v1492 = vsel %vm1364, %v1428, %v890
  %v1493 = vsel %vm1365, %v1429, %v897
  %v1494 = vsel %vm1366, %v1430, %v904
  %v1495 = vsel %vm1367, %v1431, %v911
  %v1496 = vsel %vm1368, %v1432, %v918
  %v1497 = vsel %vm1369, %v1433, %v925
  %v1498 = vsel %vm1370, %v1434, %v932
  %v1499 = vsel %vm1371, %v1435, %v939
  %v1500 = vsel %vm1372, %v1436, %v946
  %v1501 = vsel %vm1373, %v1437, %v953
  %v1502 = vsel %vm1374, %v1438, %v960
  %v1503 = vsel %vm1375, %v1439, %v967
  %v1504 = vsel %vm1376, %v1440, %v974
  %v1505 = vsel %vm1377, %v1441, %v981
  %v1506 = vsel %vm1378, %v1442, %v988
  %v1507 = vsel %vm1379, %v1443, %v995
  %v1508 = vsel %vm1380, %v1444, %v1002
  %v1509 = vsel %vm1381, %v1445, %v1009
  %v1510 = vsel %vm1382, %v1446, %v1016
  %v1511 = vsel %vm1383, %v1447, %v1023
  %v1512 = vsel %vm1384, %v1448, %v1030
  %v1513 = vsel %vm1385, %v1449, %v1037
  %v1514 = vsel %vm1386, %v1450, %v1044
  %v1515 = vsel %vm1387, %v1451, %v1051
  %v1516 = vsel %vm1388, %v1452, %v1058
  %v1517 = vsel %vm1389, %v1453, %v1065
  %v1518 = vsel %vm1390, %v1454, %v1072
  %v1519 = vsel %vm1391, %v1455, %v1079
  %v1520 = vsel %vm1392, %v1456, %v1086
  %v1521 = vsel %vm1393, %v1457, %v1093
  %v1522 = vsel %vm1394, %v1458, %v1100
  %v1523 = vsel %vm1395, %v1459, %v1107
  %v1524 = vsel %vm1396, %v1460, %v1114
  %v1525 = vsel %vm1397, %v1461, %v1121
  %v1526 = vsel %vm1398, %v1462, %v1128
  %v1527 = vsel %vm1399, %v1463, %v1135
  %v1528 = vsel %vm1400, %v1464, %v1142
  %v1529 = vsel %vm1401, %v1465, %v1149
  %v1530 = vsel %vm1402, %v1466, %v1156
  %v1531 = vsel %vm1403, %v1467, %v1163
  %v1532 = vsel %vm1404, %v1468, %v1170
  %v1533 = vsel %vm1405, %v1469, %v1177
  %v1534 = vsel %vm1406, %v1470, %v1184
  %v1535 = vsel %vm1407, %v1471, %v1191
  %v1536 = vsel %vm1408, %v1472, %v1198
  %v1537 = vsel %vm1409, %v1473, %v1205
  %v1538 = vsel %vm1410, %v1474, %v1212
  %v1539 = vsel %vm1411, %v1475, %v1219
  %vm1540 = vcmp.lt.s32.totalorder %v1476, 0
  %v1541 = vsub.s32 0, %v1476
  %v1542 = vsel %vm1540, %v1541, %v1476
  %v1543 = vshrl.u32 %v1542, 4
  %v1544 = vand.u32 %v1542, 15
  %v1545 = vsub.s32 0, %v1544
  %v1546 = vsel %vm1540, %v1545, %v1544
  %vm1547 = vcmp.lt.s32.totalorder %v1477, 0
  %v1548 = vsub.s32 0, %v1477
  %v1549 = vsel %vm1547, %v1548, %v1477
  %v1550 = vshrl.u32 %v1549, 4
  %v1551 = vand.u32 %v1549, 15
  %v1552 = vsub.s32 0, %v1551
  %v1553 = vsel %vm1547, %v1552, %v1551
  %vm1554 = vcmp.lt.s32.totalorder %v1478, 0
  %v1555 = vsub.s32 0, %v1478
  %v1556 = vsel %vm1554, %v1555, %v1478
  %v1557 = vshrl.u32 %v1556, 4
  %v1558 = vand.u32 %v1556, 15
  %v1559 = vsub.s32 0, %v1558
  %v1560 = vsel %vm1554, %v1559, %v1558
  %vm1561 = vcmp.lt.s32.totalorder %v1479, 0
  %v1562 = vsub.s32 0, %v1479
  %v1563 = vsel %vm1561, %v1562, %v1479
  %v1564 = vshrl.u32 %v1563, 4
  %v1565 = vand.u32 %v1563, 15
  %v1566 = vsub.s32 0, %v1565
  %v1567 = vsel %vm1561, %v1566, %v1565
  %vm1568 = vcmp.lt.s32.totalorder %v1480, 0
  %v1569 = vsub.s32 0, %v1480
  %v1570 = vsel %vm1568, %v1569, %v1480
  %v1571 = vshrl.u32 %v1570, 4
  %v1572 = vand.u32 %v1570, 15
  %v1573 = vsub.s32 0, %v1572
  %v1574 = vsel %vm1568, %v1573, %v1572
  %vm1575 = vcmp.lt.s32.totalorder %v1481, 0
  %v1576 = vsub.s32 0, %v1481
  %v1577 = vsel %vm1575, %v1576, %v1481
  %v1578 = vshrl.u32 %v1577, 4
  %v1579 = vand.u32 %v1577, 15
  %v1580 = vsub.s32 0, %v1579
  %v1581 = vsel %vm1575, %v1580, %v1579
  %vm1582 = vcmp.lt.s32.totalorder %v1482, 0
  %v1583 = vsub.s32 0, %v1482
  %v1584 = vsel %vm1582, %v1583, %v1482
  %v1585 = vshrl.u32 %v1584, 4
  %v1586 = vand.u32 %v1584, 15
  %v1587 = vsub.s32 0, %v1586
  %v1588 = vsel %vm1582, %v1587, %v1586
  %vm1589 = vcmp.lt.s32.totalorder %v1483, 0
  %v1590 = vsub.s32 0, %v1483
  %v1591 = vsel %vm1589, %v1590, %v1483
  %v1592 = vshrl.u32 %v1591, 4
  %v1593 = vand.u32 %v1591, 15
  %v1594 = vsub.s32 0, %v1593
  %v1595 = vsel %vm1589, %v1594, %v1593
  %vm1596 = vcmp.lt.s32.totalorder %v1484, 0
  %v1597 = vsub.s32 0, %v1484
  %v1598 = vsel %vm1596, %v1597, %v1484
  %v1599 = vshrl.u32 %v1598, 4
  %v1600 = vand.u32 %v1598, 15
  %v1601 = vsub.s32 0, %v1600
  %v1602 = vsel %vm1596, %v1601, %v1600
  %vm1603 = vcmp.lt.s32.totalorder %v1485, 0
  %v1604 = vsub.s32 0, %v1485
  %v1605 = vsel %vm1603, %v1604, %v1485
  %v1606 = vshrl.u32 %v1605, 4
  %v1607 = vand.u32 %v1605, 15
  %v1608 = vsub.s32 0, %v1607
  %v1609 = vsel %vm1603, %v1608, %v1607
  %vm1610 = vcmp.lt.s32.totalorder %v1486, 0
  %v1611 = vsub.s32 0, %v1486
  %v1612 = vsel %vm1610, %v1611, %v1486
  %v1613 = vshrl.u32 %v1612, 4
  %v1614 = vand.u32 %v1612, 15
  %v1615 = vsub.s32 0, %v1614
  %v1616 = vsel %vm1610, %v1615, %v1614
  %vm1617 = vcmp.lt.s32.totalorder %v1487, 0
  %v1618 = vsub.s32 0, %v1487
  %v1619 = vsel %vm1617, %v1618, %v1487
  %v1620 = vshrl.u32 %v1619, 4
  %v1621 = vand.u32 %v1619, 15
  %v1622 = vsub.s32 0, %v1621
  %v1623 = vsel %vm1617, %v1622, %v1621
  %vm1624 = vcmp.lt.s32.totalorder %v1488, 0
  %v1625 = vsub.s32 0, %v1488
  %v1626 = vsel %vm1624, %v1625, %v1488
  %v1627 = vshrl.u32 %v1626, 4
  %v1628 = vand.u32 %v1626, 15
  %v1629 = vsub.s32 0, %v1628
  %v1630 = vsel %vm1624, %v1629, %v1628
  %vm1631 = vcmp.lt.s32.totalorder %v1489, 0
  %v1632 = vsub.s32 0, %v1489
  %v1633 = vsel %vm1631, %v1632, %v1489
  %v1634 = vshrl.u32 %v1633, 4
  %v1635 = vand.u32 %v1633, 15
  %v1636 = vsub.s32 0, %v1635
  %v1637 = vsel %vm1631, %v1636, %v1635
  %vm1638 = vcmp.lt.s32.totalorder %v1490, 0
  %v1639 = vsub.s32 0, %v1490
  %v1640 = vsel %vm1638, %v1639, %v1490
  %v1641 = vshrl.u32 %v1640, 4
  %v1642 = vand.u32 %v1640, 15
  %v1643 = vsub.s32 0, %v1642
  %v1644 = vsel %vm1638, %v1643, %v1642
  %vm1645 = vcmp.lt.s32.totalorder %v1491, 0
  %v1646 = vsub.s32 0, %v1491
  %v1647 = vsel %vm1645, %v1646, %v1491
  %v1648 = vshrl.u32 %v1647, 4
  %v1649 = vand.u32 %v1647, 15
  %v1650 = vsub.s32 0, %v1649
  %v1651 = vsel %vm1645, %v1650, %v1649
  %vm1652 = vcmp.lt.s32.totalorder %v1492, 0
  %v1653 = vsub.s32 0, %v1492
  %v1654 = vsel %vm1652, %v1653, %v1492
  %v1655 = vshrl.u32 %v1654, 4
  %v1656 = vand.u32 %v1654, 15
  %v1657 = vsub.s32 0, %v1656
  %v1658 = vsel %vm1652, %v1657, %v1656
  %vm1659 = vcmp.lt.s32.totalorder %v1493, 0
  %v1660 = vsub.s32 0, %v1493
  %v1661 = vsel %vm1659, %v1660, %v1493
  %v1662 = vshrl.u32 %v1661, 4
  %v1663 = vand.u32 %v1661, 15
  %v1664 = vsub.s32 0, %v1663
  %v1665 = vsel %vm1659, %v1664, %v1663
  %vm1666 = vcmp.lt.s32.totalorder %v1494, 0
  %v1667 = vsub.s32 0, %v1494
  %v1668 = vsel %vm1666, %v1667, %v1494
  %v1669 = vshrl.u32 %v1668, 4
  %v1670 = vand.u32 %v1668, 15
  %v1671 = vsub.s32 0, %v1670
  %v1672 = vsel %vm1666, %v1671, %v1670
  %vm1673 = vcmp.lt.s32.totalorder %v1495, 0
  %v1674 = vsub.s32 0, %v1495
  %v1675 = vsel %vm1673, %v1674, %v1495
  %v1676 = vshrl.u32 %v1675, 4
  %v1677 = vand.u32 %v1675, 15
  %v1678 = vsub.s32 0, %v1677
  %v1679 = vsel %vm1673, %v1678, %v1677
  %vm1680 = vcmp.lt.s32.totalorder %v1496, 0
  %v1681 = vsub.s32 0, %v1496
  %v1682 = vsel %vm1680, %v1681, %v1496
  %v1683 = vshrl.u32 %v1682, 4
  %v1684 = vand.u32 %v1682, 15
  %v1685 = vsub.s32 0, %v1684
  %v1686 = vsel %vm1680, %v1685, %v1684
  %vm1687 = vcmp.lt.s32.totalorder %v1497, 0
  %v1688 = vsub.s32 0, %v1497
  %v1689 = vsel %vm1687, %v1688, %v1497
  %v1690 = vshrl.u32 %v1689, 4
  %v1691 = vand.u32 %v1689, 15
  %v1692 = vsub.s32 0, %v1691
  %v1693 = vsel %vm1687, %v1692, %v1691
  %vm1694 = vcmp.lt.s32.totalorder %v1498, 0
  %v1695 = vsub.s32 0, %v1498
  %v1696 = vsel %vm1694, %v1695, %v1498
  %v1697 = vshrl.u32 %v1696, 4
  %v1698 = vand.u32 %v1696, 15
  %v1699 = vsub.s32 0, %v1698
  %v1700 = vsel %vm1694, %v1699, %v1698
  %vm1701 = vcmp.lt.s32.totalorder %v1499, 0
  %v1702 = vsub.s32 0, %v1499
  %v1703 = vsel %vm1701, %v1702, %v1499
  %v1704 = vshrl.u32 %v1703, 4
  %v1705 = vand.u32 %v1703, 15
  %v1706 = vsub.s32 0, %v1705
  %v1707 = vsel %vm1701, %v1706, %v1705
  %vm1708 = vcmp.lt.s32.totalorder %v1500, 0
  %v1709 = vsub.s32 0, %v1500
  %v1710 = vsel %vm1708, %v1709, %v1500
  %v1711 = vshrl.u32 %v1710, 4
  %v1712 = vand.u32 %v1710, 15
  %v1713 = vsub.s32 0, %v1712
  %v1714 = vsel %vm1708, %v1713, %v1712
  %vm1715 = vcmp.lt.s32.totalorder %v1501, 0
  %v1716 = vsub.s32 0, %v1501
  %v1717 = vsel %vm1715, %v1716, %v1501
  %v1718 = vshrl.u32 %v1717, 4
  %v1719 = vand.u32 %v1717, 15
  %v1720 = vsub.s32 0, %v1719
  %v1721 = vsel %vm1715, %v1720, %v1719
  %vm1722 = vcmp.lt.s32.totalorder %v1502, 0
  %v1723 = vsub.s32 0, %v1502
  %v1724 = vsel %vm1722, %v1723, %v1502
  %v1725 = vshrl.u32 %v1724, 4
  %v1726 = vand.u32 %v1724, 15
  %v1727 = vsub.s32 0, %v1726
  %v1728 = vsel %vm1722, %v1727, %v1726
  %vm1729 = vcmp.lt.s32.totalorder %v1503, 0
  %v1730 = vsub.s32 0, %v1503
  %v1731 = vsel %vm1729, %v1730, %v1503
  %v1732 = vshrl.u32 %v1731, 4
  %v1733 = vand.u32 %v1731, 15
  %v1734 = vsub.s32 0, %v1733
  %v1735 = vsel %vm1729, %v1734, %v1733
  %vm1736 = vcmp.lt.s32.totalorder %v1504, 0
  %v1737 = vsub.s32 0, %v1504
  %v1738 = vsel %vm1736, %v1737, %v1504
  %v1739 = vshrl.u32 %v1738, 4
  %v1740 = vand.u32 %v1738, 15
  %v1741 = vsub.s32 0, %v1740
  %v1742 = vsel %vm1736, %v1741, %v1740
  %vm1743 = vcmp.lt.s32.totalorder %v1505, 0
  %v1744 = vsub.s32 0, %v1505
  %v1745 = vsel %vm1743, %v1744, %v1505
  %v1746 = vshrl.u32 %v1745, 4
  %v1747 = vand.u32 %v1745, 15
  %v1748 = vsub.s32 0, %v1747
  %v1749 = vsel %vm1743, %v1748, %v1747
  %vm1750 = vcmp.lt.s32.totalorder %v1506, 0
  %v1751 = vsub.s32 0, %v1506
  %v1752 = vsel %vm1750, %v1751, %v1506
  %v1753 = vshrl.u32 %v1752, 4
  %v1754 = vand.u32 %v1752, 15
  %v1755 = vsub.s32 0, %v1754
  %v1756 = vsel %vm1750, %v1755, %v1754
  %vm1757 = vcmp.lt.s32.totalorder %v1507, 0
  %v1758 = vsub.s32 0, %v1507
  %v1759 = vsel %vm1757, %v1758, %v1507
  %v1760 = vshrl.u32 %v1759, 4
  %v1761 = vand.u32 %v1759, 15
  %v1762 = vsub.s32 0, %v1761
  %v1763 = vsel %vm1757, %v1762, %v1761
  %vm1764 = vcmp.lt.s32.totalorder %v1508, 0
  %v1765 = vsub.s32 0, %v1508
  %v1766 = vsel %vm1764, %v1765, %v1508
  %v1767 = vshrl.u32 %v1766, 4
  %v1768 = vand.u32 %v1766, 15
  %v1769 = vsub.s32 0, %v1768
  %v1770 = vsel %vm1764, %v1769, %v1768
  %vm1771 = vcmp.lt.s32.totalorder %v1509, 0
  %v1772 = vsub.s32 0, %v1509
  %v1773 = vsel %vm1771, %v1772, %v1509
  %v1774 = vshrl.u32 %v1773, 4
  %v1775 = vand.u32 %v1773, 15
  %v1776 = vsub.s32 0, %v1775
  %v1777 = vsel %vm1771, %v1776, %v1775
  %vm1778 = vcmp.lt.s32.totalorder %v1510, 0
  %v1779 = vsub.s32 0, %v1510
  %v1780 = vsel %vm1778, %v1779, %v1510
  %v1781 = vshrl.u32 %v1780, 4
  %v1782 = vand.u32 %v1780, 15
  %v1783 = vsub.s32 0, %v1782
  %v1784 = vsel %vm1778, %v1783, %v1782
  %vm1785 = vcmp.lt.s32.totalorder %v1511, 0
  %v1786 = vsub.s32 0, %v1511
  %v1787 = vsel %vm1785, %v1786, %v1511
  %v1788 = vshrl.u32 %v1787, 4
  %v1789 = vand.u32 %v1787, 15
  %v1790 = vsub.s32 0, %v1789
  %v1791 = vsel %vm1785, %v1790, %v1789
  %vm1792 = vcmp.lt.s32.totalorder %v1512, 0
  %v1793 = vsub.s32 0, %v1512
  %v1794 = vsel %vm1792, %v1793, %v1512
  %v1795 = vshrl.u32 %v1794, 4
  %v1796 = vand.u32 %v1794, 15
  %v1797 = vsub.s32 0, %v1796
  %v1798 = vsel %vm1792, %v1797, %v1796
  %vm1799 = vcmp.lt.s32.totalorder %v1513, 0
  %v1800 = vsub.s32 0, %v1513
  %v1801 = vsel %vm1799, %v1800, %v1513
  %v1802 = vshrl.u32 %v1801, 4
  %v1803 = vand.u32 %v1801, 15
  %v1804 = vsub.s32 0, %v1803
  %v1805 = vsel %vm1799, %v1804, %v1803
  %vm1806 = vcmp.lt.s32.totalorder %v1514, 0
  %v1807 = vsub.s32 0, %v1514
  %v1808 = vsel %vm1806, %v1807, %v1514
  %v1809 = vshrl.u32 %v1808, 4
  %v1810 = vand.u32 %v1808, 15
  %v1811 = vsub.s32 0, %v1810
  %v1812 = vsel %vm1806, %v1811, %v1810
  %vm1813 = vcmp.lt.s32.totalorder %v1515, 0
  %v1814 = vsub.s32 0, %v1515
  %v1815 = vsel %vm1813, %v1814, %v1515
  %v1816 = vshrl.u32 %v1815, 4
  %v1817 = vand.u32 %v1815, 15
  %v1818 = vsub.s32 0, %v1817
  %v1819 = vsel %vm1813, %v1818, %v1817
  %vm1820 = vcmp.lt.s32.totalorder %v1516, 0
  %v1821 = vsub.s32 0, %v1516
  %v1822 = vsel %vm1820, %v1821, %v1516
  %v1823 = vshrl.u32 %v1822, 4
  %v1824 = vand.u32 %v1822, 15
  %v1825 = vsub.s32 0, %v1824
  %v1826 = vsel %vm1820, %v1825, %v1824
  %vm1827 = vcmp.lt.s32.totalorder %v1517, 0
  %v1828 = vsub.s32 0, %v1517
  %v1829 = vsel %vm1827, %v1828, %v1517
  %v1830 = vshrl.u32 %v1829, 4
  %v1831 = vand.u32 %v1829, 15
  %v1832 = vsub.s32 0, %v1831
  %v1833 = vsel %vm1827, %v1832, %v1831
  %vm1834 = vcmp.lt.s32.totalorder %v1518, 0
  %v1835 = vsub.s32 0, %v1518
  %v1836 = vsel %vm1834, %v1835, %v1518
  %v1837 = vshrl.u32 %v1836, 4
  %v1838 = vand.u32 %v1836, 15
  %v1839 = vsub.s32 0, %v1838
  %v1840 = vsel %vm1834, %v1839, %v1838
  %vm1841 = vcmp.lt.s32.totalorder %v1519, 0
  %v1842 = vsub.s32 0, %v1519
  %v1843 = vsel %vm1841, %v1842, %v1519
  %v1844 = vshrl.u32 %v1843, 4
  %v1845 = vand.u32 %v1843, 15
  %v1846 = vsub.s32 0, %v1845
  %v1847 = vsel %vm1841, %v1846, %v1845
  %vm1848 = vcmp.lt.s32.totalorder %v1520, 0
  %v1849 = vsub.s32 0, %v1520
  %v1850 = vsel %vm1848, %v1849, %v1520
  %v1851 = vshrl.u32 %v1850, 4
  %v1852 = vand.u32 %v1850, 15
  %v1853 = vsub.s32 0, %v1852
  %v1854 = vsel %vm1848, %v1853, %v1852
  %vm1855 = vcmp.lt.s32.totalorder %v1521, 0
  %v1856 = vsub.s32 0, %v1521
  %v1857 = vsel %vm1855, %v1856, %v1521
  %v1858 = vshrl.u32 %v1857, 4
  %v1859 = vand.u32 %v1857, 15
  %v1860 = vsub.s32 0, %v1859
  %v1861 = vsel %vm1855, %v1860, %v1859
  %vm1862 = vcmp.lt.s32.totalorder %v1522, 0
  %v1863 = vsub.s32 0, %v1522
  %v1864 = vsel %vm1862, %v1863, %v1522
  %v1865 = vshrl.u32 %v1864, 4
  %v1866 = vand.u32 %v1864, 15
  %v1867 = vsub.s32 0, %v1866
  %v1868 = vsel %vm1862, %v1867, %v1866
  %vm1869 = vcmp.lt.s32.totalorder %v1523, 0
  %v1870 = vsub.s32 0, %v1523
  %v1871 = vsel %vm1869, %v1870, %v1523
  %v1872 = vshrl.u32 %v1871, 4
  %v1873 = vand.u32 %v1871, 15
  %v1874 = vsub.s32 0, %v1873
  %v1875 = vsel %vm1869, %v1874, %v1873
  %vm1876 = vcmp.lt.s32.totalorder %v1524, 0
  %v1877 = vsub.s32 0, %v1524
  %v1878 = vsel %vm1876, %v1877, %v1524
  %v1879 = vshrl.u32 %v1878, 4
  %v1880 = vand.u32 %v1878, 15
  %v1881 = vsub.s32 0, %v1880
  %v1882 = vsel %vm1876, %v1881, %v1880
  %vm1883 = vcmp.lt.s32.totalorder %v1525, 0
  %v1884 = vsub.s32 0, %v1525
  %v1885 = vsel %vm1883, %v1884, %v1525
  %v1886 = vshrl.u32 %v1885, 4
  %v1887 = vand.u32 %v1885, 15
  %v1888 = vsub.s32 0, %v1887
  %v1889 = vsel %vm1883, %v1888, %v1887
  %vm1890 = vcmp.lt.s32.totalorder %v1526, 0
  %v1891 = vsub.s32 0, %v1526
  %v1892 = vsel %vm1890, %v1891, %v1526
  %v1893 = vshrl.u32 %v1892, 4
  %v1894 = vand.u32 %v1892, 15
  %v1895 = vsub.s32 0, %v1894
  %v1896 = vsel %vm1890, %v1895, %v1894
  %vm1897 = vcmp.lt.s32.totalorder %v1527, 0
  %v1898 = vsub.s32 0, %v1527
  %v1899 = vsel %vm1897, %v1898, %v1527
  %v1900 = vshrl.u32 %v1899, 4
  %v1901 = vand.u32 %v1899, 15
  %v1902 = vsub.s32 0, %v1901
  %v1903 = vsel %vm1897, %v1902, %v1901
  %vm1904 = vcmp.lt.s32.totalorder %v1528, 0
  %v1905 = vsub.s32 0, %v1528
  %v1906 = vsel %vm1904, %v1905, %v1528
  %v1907 = vshrl.u32 %v1906, 4
  %v1908 = vand.u32 %v1906, 15
  %v1909 = vsub.s32 0, %v1908
  %v1910 = vsel %vm1904, %v1909, %v1908
  %vm1911 = vcmp.lt.s32.totalorder %v1529, 0
  %v1912 = vsub.s32 0, %v1529
  %v1913 = vsel %vm1911, %v1912, %v1529
  %v1914 = vshrl.u32 %v1913, 4
  %v1915 = vand.u32 %v1913, 15
  %v1916 = vsub.s32 0, %v1915
  %v1917 = vsel %vm1911, %v1916, %v1915
  %vm1918 = vcmp.lt.s32.totalorder %v1530, 0
  %v1919 = vsub.s32 0, %v1530
  %v1920 = vsel %vm1918, %v1919, %v1530
  %v1921 = vshrl.u32 %v1920, 4
  %v1922 = vand.u32 %v1920, 15
  %v1923 = vsub.s32 0, %v1922
  %v1924 = vsel %vm1918, %v1923, %v1922
  %vm1925 = vcmp.lt.s32.totalorder %v1531, 0
  %v1926 = vsub.s32 0, %v1531
  %v1927 = vsel %vm1925, %v1926, %v1531
  %v1928 = vshrl.u32 %v1927, 4
  %v1929 = vand.u32 %v1927, 15
  %v1930 = vsub.s32 0, %v1929
  %v1931 = vsel %vm1925, %v1930, %v1929
  %vm1932 = vcmp.lt.s32.totalorder %v1532, 0
  %v1933 = vsub.s32 0, %v1532
  %v1934 = vsel %vm1932, %v1933, %v1532
  %v1935 = vshrl.u32 %v1934, 4
  %v1936 = vand.u32 %v1934, 15
  %v1937 = vsub.s32 0, %v1936
  %v1938 = vsel %vm1932, %v1937, %v1936
  %vm1939 = vcmp.lt.s32.totalorder %v1533, 0
  %v1940 = vsub.s32 0, %v1533
  %v1941 = vsel %vm1939, %v1940, %v1533
  %v1942 = vshrl.u32 %v1941, 4
  %v1943 = vand.u32 %v1941, 15
  %v1944 = vsub.s32 0, %v1943
  %v1945 = vsel %vm1939, %v1944, %v1943
  %vm1946 = vcmp.lt.s32.totalorder %v1534, 0
  %v1947 = vsub.s32 0, %v1534
  %v1948 = vsel %vm1946, %v1947, %v1534
  %v1949 = vshrl.u32 %v1948, 4
  %v1950 = vand.u32 %v1948, 15
  %v1951 = vsub.s32 0, %v1950
  %v1952 = vsel %vm1946, %v1951, %v1950
  %vm1953 = vcmp.lt.s32.totalorder %v1535, 0
  %v1954 = vsub.s32 0, %v1535
  %v1955 = vsel %vm1953, %v1954, %v1535
  %v1956 = vshrl.u32 %v1955, 4
  %v1957 = vand.u32 %v1955, 15
  %v1958 = vsub.s32 0, %v1957
  %v1959 = vsel %vm1953, %v1958, %v1957
  %vm1960 = vcmp.lt.s32.totalorder %v1536, 0
  %v1961 = vsub.s32 0, %v1536
  %v1962 = vsel %vm1960, %v1961, %v1536
  %v1963 = vshrl.u32 %v1962, 4
  %v1964 = vand.u32 %v1962, 15
  %v1965 = vsub.s32 0, %v1964
  %v1966 = vsel %vm1960, %v1965, %v1964
  %vm1967 = vcmp.lt.s32.totalorder %v1537, 0
  %v1968 = vsub.s32 0, %v1537
  %v1969 = vsel %vm1967, %v1968, %v1537
  %v1970 = vshrl.u32 %v1969, 4
  %v1971 = vand.u32 %v1969, 15
  %v1972 = vsub.s32 0, %v1971
  %v1973 = vsel %vm1967, %v1972, %v1971
  %vm1974 = vcmp.lt.s32.totalorder %v1538, 0
  %v1975 = vsub.s32 0, %v1538
  %v1976 = vsel %vm1974, %v1975, %v1538
  %v1977 = vshrl.u32 %v1976, 4
  %v1978 = vand.u32 %v1976, 15
  %v1979 = vsub.s32 0, %v1978
  %v1980 = vsel %vm1974, %v1979, %v1978
  %vm1981 = vcmp.lt.s32.totalorder %v1539, 0
  %v1982 = vsub.s32 0, %v1539
  %v1983 = vsel %vm1981, %v1982, %v1539
  %v1984 = vshrl.u32 %v1983, 4
  %v1985 = vand.u32 %v1983, 15
  %v1986 = vsub.s32 0, %v1985
  %v1987 = vsel %vm1981, %v1986, %v1985
  %vm1988 = vcmp.ne.s32.totalorder %v1546, 0
  %vm1989 = vcmp.ne.s32.totalorder %v1553, 0
  %vm1990 = vcmp.ne.s32.totalorder %v1560, 0
  %vm1991 = vcmp.ne.s32.totalorder %v1567, 0
  %vm1992 = vcmp.ne.s32.totalorder %v1574, 0
  %vm1993 = vcmp.ne.s32.totalorder %v1581, 0
  %vm1994 = vcmp.ne.s32.totalorder %v1588, 0
  %vm1995 = vcmp.ne.s32.totalorder %v1595, 0
  %vm1996 = vcmp.ne.s32.totalorder %v1602, 0
  %vm1997 = vcmp.ne.s32.totalorder %v1609, 0
  %vm1998 = vcmp.ne.s32.totalorder %v1616, 0
  %vm1999 = vcmp.ne.s32.totalorder %v1623, 0
  %vm2000 = vcmp.ne.s32.totalorder %v1630, 0
  %vm2001 = vcmp.ne.s32.totalorder %v1637, 0
  %vm2002 = vcmp.ne.s32.totalorder %v1644, 0
  %vm2003 = vcmp.ne.s32.totalorder %v1651, 0
  %vm2004 = vcmp.ne.s32.totalorder %v1658, 0
  %vm2005 = vcmp.ne.s32.totalorder %v1665, 0
  %vm2006 = vcmp.ne.s32.totalorder %v1672, 0
  %vm2007 = vcmp.ne.s32.totalorder %v1679, 0
  %vm2008 = vcmp.ne.s32.totalorder %v1686, 0
  %vm2009 = vcmp.ne.s32.totalorder %v1693, 0
  %vm2010 = vcmp.ne.s32.totalorder %v1700, 0
  %vm2011 = vcmp.ne.s32.totalorder %v1707, 0
  %vm2012 = vcmp.ne.s32.totalorder %v1714, 0
  %vm2013 = vcmp.ne.s32.totalorder %v1721, 0
  %vm2014 = vcmp.ne.s32.totalorder %v1728, 0
  %vm2015 = vcmp.ne.s32.totalorder %v1735, 0
  %vm2016 = vcmp.ne.s32.totalorder %v1742, 0
  %vm2017 = vcmp.ne.s32.totalorder %v1749, 0
  %vm2018 = vcmp.ne.s32.totalorder %v1756, 0
  %vm2019 = vcmp.ne.s32.totalorder %v1763, 0
  %vm2020 = vcmp.ne.s32.totalorder %v1770, 0
  %vm2021 = vcmp.ne.s32.totalorder %v1777, 0
  %vm2022 = vcmp.ne.s32.totalorder %v1784, 0
  %vm2023 = vcmp.ne.s32.totalorder %v1791, 0
  %vm2024 = vcmp.ne.s32.totalorder %v1798, 0
  %vm2025 = vcmp.ne.s32.totalorder %v1805, 0
  %vm2026 = vcmp.ne.s32.totalorder %v1812, 0
  %vm2027 = vcmp.ne.s32.totalorder %v1819, 0
  %vm2028 = vcmp.ne.s32.totalorder %v1826, 0
  %vm2029 = vcmp.ne.s32.totalorder %v1833, 0
  %vm2030 = vcmp.ne.s32.totalorder %v1840, 0
  %vm2031 = vcmp.ne.s32.totalorder %v1847, 0
  %vm2032 = vcmp.ne.s32.totalorder %v1854, 0
  %vm2033 = vcmp.ne.s32.totalorder %v1861, 0
  %vm2034 = vcmp.ne.s32.totalorder %v1868, 0
  %vm2035 = vcmp.ne.s32.totalorder %v1875, 0
  %vm2036 = vcmp.ne.s32.totalorder %v1882, 0
  %vm2037 = vcmp.ne.s32.totalorder %v1889, 0
  %vm2038 = vcmp.ne.s32.totalorder %v1896, 0
  %vm2039 = vcmp.ne.s32.totalorder %v1903, 0
  %vm2040 = vcmp.ne.s32.totalorder %v1910, 0
  %vm2041 = vcmp.ne.s32.totalorder %v1917, 0
  %vm2042 = vcmp.ne.s32.totalorder %v1924, 0
  %vm2043 = vcmp.ne.s32.totalorder %v1931, 0
  %vm2044 = vcmp.ne.s32.totalorder %v1938, 0
  %vm2045 = vcmp.ne.s32.totalorder %v1945, 0
  %vm2046 = vcmp.ne.s32.totalorder %v1952, 0
  %vm2047 = vcmp.ne.s32.totalorder %v1959, 0
  %vm2048 = vcmp.ne.s32.totalorder %v1966, 0
  %vm2049 = vcmp.ne.s32.totalorder %v1973, 0
  %vm2050 = vcmp.ne.s32.totalorder %v1980, 0
  %vm2051 = vcmp.ne.s32.totalorder %v1987, 0
  %vm2052 = vcmp.lt.s32.totalorder %v1546, 0
  %vm2053 = vcmp.lt.s32.totalorder %v1553, 0
  %vm2054 = vcmp.lt.s32.totalorder %v1560, 0
  %vm2055 = vcmp.lt.s32.totalorder %v1567, 0
  %vm2056 = vcmp.lt.s32.totalorder %v1574, 0
  %vm2057 = vcmp.lt.s32.totalorder %v1581, 0
  %vm2058 = vcmp.lt.s32.totalorder %v1588, 0
  %vm2059 = vcmp.lt.s32.totalorder %v1595, 0
  %vm2060 = vcmp.lt.s32.totalorder %v1602, 0
  %vm2061 = vcmp.lt.s32.totalorder %v1609, 0
  %vm2062 = vcmp.lt.s32.totalorder %v1616, 0
  %vm2063 = vcmp.lt.s32.totalorder %v1623, 0
  %vm2064 = vcmp.lt.s32.totalorder %v1630, 0
  %vm2065 = vcmp.lt.s32.totalorder %v1637, 0
  %vm2066 = vcmp.lt.s32.totalorder %v1644, 0
  %vm2067 = vcmp.lt.s32.totalorder %v1651, 0
  %vm2068 = vcmp.lt.s32.totalorder %v1658, 0
  %vm2069 = vcmp.lt.s32.totalorder %v1665, 0
  %vm2070 = vcmp.lt.s32.totalorder %v1672, 0
  %vm2071 = vcmp.lt.s32.totalorder %v1679, 0
  %vm2072 = vcmp.lt.s32.totalorder %v1686, 0
  %vm2073 = vcmp.lt.s32.totalorder %v1693, 0
  %vm2074 = vcmp.lt.s32.totalorder %v1700, 0
  %vm2075 = vcmp.lt.s32.totalorder %v1707, 0
  %vm2076 = vcmp.lt.s32.totalorder %v1714, 0
  %vm2077 = vcmp.lt.s32.totalorder %v1721, 0
  %vm2078 = vcmp.lt.s32.totalorder %v1728, 0
  %vm2079 = vcmp.lt.s32.totalorder %v1735, 0
  %vm2080 = vcmp.lt.s32.totalorder %v1742, 0
  %vm2081 = vcmp.lt.s32.totalorder %v1749, 0
  %vm2082 = vcmp.lt.s32.totalorder %v1756, 0
  %vm2083 = vcmp.lt.s32.totalorder %v1763, 0
  %vm2084 = vcmp.lt.s32.totalorder %v1770, 0
  %vm2085 = vcmp.lt.s32.totalorder %v1777, 0
  %vm2086 = vcmp.lt.s32.totalorder %v1784, 0
  %vm2087 = vcmp.lt.s32.totalorder %v1791, 0
  %vm2088 = vcmp.lt.s32.totalorder %v1798, 0
  %vm2089 = vcmp.lt.s32.totalorder %v1805, 0
  %vm2090 = vcmp.lt.s32.totalorder %v1812, 0
  %vm2091 = vcmp.lt.s32.totalorder %v1819, 0
  %vm2092 = vcmp.lt.s32.totalorder %v1826, 0
  %vm2093 = vcmp.lt.s32.totalorder %v1833, 0
  %vm2094 = vcmp.lt.s32.totalorder %v1840, 0
  %vm2095 = vcmp.lt.s32.totalorder %v1847, 0
  %vm2096 = vcmp.lt.s32.totalorder %v1854, 0
  %vm2097 = vcmp.lt.s32.totalorder %v1861, 0
  %vm2098 = vcmp.lt.s32.totalorder %v1868, 0
  %vm2099 = vcmp.lt.s32.totalorder %v1875, 0
  %vm2100 = vcmp.lt.s32.totalorder %v1882, 0
  %vm2101 = vcmp.lt.s32.totalorder %v1889, 0
  %vm2102 = vcmp.lt.s32.totalorder %v1896, 0
  %vm2103 = vcmp.lt.s32.totalorder %v1903, 0
  %vm2104 = vcmp.lt.s32.totalorder %v1910, 0
  %vm2105 = vcmp.lt.s32.totalorder %v1917, 0
  %vm2106 = vcmp.lt.s32.totalorder %v1924, 0
  %vm2107 = vcmp.lt.s32.totalorder %v1931, 0
  %vm2108 = vcmp.lt.s32.totalorder %v1938, 0
  %vm2109 = vcmp.lt.s32.totalorder %v1945, 0
  %vm2110 = vcmp.lt.s32.totalorder %v1952, 0
  %vm2111 = vcmp.lt.s32.totalorder %v1959, 0
  %vm2112 = vcmp.lt.s32.totalorder %v1966, 0
  %vm2113 = vcmp.lt.s32.totalorder %v1973, 0
  %vm2114 = vcmp.lt.s32.totalorder %v1980, 0
  %vm2115 = vcmp.lt.s32.totalorder %v1987, 0
  %vm2116 = vmand %vm2052, %vm1988
  %vm2117 = vmand %vm2053, %vm1989
  %vm2118 = vmand %vm2054, %vm1990
  %vm2119 = vmand %vm2055, %vm1991
  %vm2120 = vmand %vm2056, %vm1992
  %vm2121 = vmand %vm2057, %vm1993
  %vm2122 = vmand %vm2058, %vm1994
  %vm2123 = vmand %vm2059, %vm1995
  %vm2124 = vmand %vm2060, %vm1996
  %vm2125 = vmand %vm2061, %vm1997
  %vm2126 = vmand %vm2062, %vm1998
  %vm2127 = vmand %vm2063, %vm1999
  %vm2128 = vmand %vm2064, %vm2000
  %vm2129 = vmand %vm2065, %vm2001
  %vm2130 = vmand %vm2066, %vm2002
  %vm2131 = vmand %vm2067, %vm2003
  %vm2132 = vmand %vm2068, %vm2004
  %vm2133 = vmand %vm2069, %vm2005
  %vm2134 = vmand %vm2070, %vm2006
  %vm2135 = vmand %vm2071, %vm2007
  %vm2136 = vmand %vm2072, %vm2008
  %vm2137 = vmand %vm2073, %vm2009
  %vm2138 = vmand %vm2074, %vm2010
  %vm2139 = vmand %vm2075, %vm2011
  %vm2140 = vmand %vm2076, %vm2012
  %vm2141 = vmand %vm2077, %vm2013
  %vm2142 = vmand %vm2078, %vm2014
  %vm2143 = vmand %vm2079, %vm2015
  %vm2144 = vmand %vm2080, %vm2016
  %vm2145 = vmand %vm2081, %vm2017
  %vm2146 = vmand %vm2082, %vm2018
  %vm2147 = vmand %vm2083, %vm2019
  %vm2148 = vmand %vm2084, %vm2020
  %vm2149 = vmand %vm2085, %vm2021
  %vm2150 = vmand %vm2086, %vm2022
  %vm2151 = vmand %vm2087, %vm2023
  %vm2152 = vmand %vm2088, %vm2024
  %vm2153 = vmand %vm2089, %vm2025
  %vm2154 = vmand %vm2090, %vm2026
  %vm2155 = vmand %vm2091, %vm2027
  %vm2156 = vmand %vm2092, %vm2028
  %vm2157 = vmand %vm2093, %vm2029
  %vm2158 = vmand %vm2094, %vm2030
  %vm2159 = vmand %vm2095, %vm2031
  %vm2160 = vmand %vm2096, %vm2032
  %vm2161 = vmand %vm2097, %vm2033
  %vm2162 = vmand %vm2098, %vm2034
  %vm2163 = vmand %vm2099, %vm2035
  %vm2164 = vmand %vm2100, %vm2036
  %vm2165 = vmand %vm2101, %vm2037
  %vm2166 = vmand %vm2102, %vm2038
  %vm2167 = vmand %vm2103, %vm2039
  %vm2168 = vmand %vm2104, %vm2040
  %vm2169 = vmand %vm2105, %vm2041
  %vm2170 = vmand %vm2106, %vm2042
  %vm2171 = vmand %vm2107, %vm2043
  %vm2172 = vmand %vm2108, %vm2044
  %vm2173 = vmand %vm2109, %vm2045
  %vm2174 = vmand %vm2110, %vm2046
  %vm2175 = vmand %vm2111, %vm2047
  %vm2176 = vmand %vm2112, %vm2048
  %vm2177 = vmand %vm2113, %vm2049
  %vm2178 = vmand %vm2114, %vm2050
  %vm2179 = vmand %vm2115, %vm2051
  %v2180 = vadd.s32 %v1546, 16
  %v2181 = vadd.s32 %v1553, 16
  %v2182 = vadd.s32 %v1560, 16
  %v2183 = vadd.s32 %v1567, 16
  %v2184 = vadd.s32 %v1574, 16
  %v2185 = vadd.s32 %v1581, 16
  %v2186 = vadd.s32 %v1588, 16
  %v2187 = vadd.s32 %v1595, 16
  %v2188 = vadd.s32 %v1602, 16
  %v2189 = vadd.s32 %v1609, 16
  %v2190 = vadd.s32 %v1616, 16
  %v2191 = vadd.s32 %v1623, 16
  %v2192 = vadd.s32 %v1630, 16
  %v2193 = vadd.s32 %v1637, 16
  %v2194 = vadd.s32 %v1644, 16
  %v2195 = vadd.s32 %v1651, 16
  %v2196 = vadd.s32 %v1658, 16
  %v2197 = vadd.s32 %v1665, 16
  %v2198 = vadd.s32 %v1672, 16
  %v2199 = vadd.s32 %v1679, 16
  %v2200 = vadd.s32 %v1686, 16
  %v2201 = vadd.s32 %v1693, 16
  %v2202 = vadd.s32 %v1700, 16
  %v2203 = vadd.s32 %v1707, 16
  %v2204 = vadd.s32 %v1714, 16
  %v2205 = vadd.s32 %v1721, 16
  %v2206 = vadd.s32 %v1728, 16
  %v2207 = vadd.s32 %v1735, 16
  %v2208 = vadd.s32 %v1742, 16
  %v2209 = vadd.s32 %v1749, 16
  %v2210 = vadd.s32 %v1756, 16
  %v2211 = vadd.s32 %v1763, 16
  %v2212 = vadd.s32 %v1770, 16
  %v2213 = vadd.s32 %v1777, 16
  %v2214 = vadd.s32 %v1784, 16
  %v2215 = vadd.s32 %v1791, 16
  %v2216 = vadd.s32 %v1798, 16
  %v2217 = vadd.s32 %v1805, 16
  %v2218 = vadd.s32 %v1812, 16
  %v2219 = vadd.s32 %v1819, 16
  %v2220 = vadd.s32 %v1826, 16
  %v2221 = vadd.s32 %v1833, 16
  %v2222 = vadd.s32 %v1840, 16
  %v2223 = vadd.s32 %v1847, 16
  %v2224 = vadd.s32 %v1854, 16
  %v2225 = vadd.s32 %v1861, 16
  %v2226 = vadd.s32 %v1868, 16
  %v2227 = vadd.s32 %v1875, 16
  %v2228 = vadd.s32 %v1882, 16
  %v2229 = vadd.s32 %v1889, 16
  %v2230 = vadd.s32 %v1896, 16
  %v2231 = vadd.s32 %v1903, 16
  %v2232 = vadd.s32 %v1910, 16
  %v2233 = vadd.s32 %v1917, 16
  %v2234 = vadd.s32 %v1924, 16
  %v2235 = vadd.s32 %v1931, 16
  %v2236 = vadd.s32 %v1938, 16
  %v2237 = vadd.s32 %v1945, 16
  %v2238 = vadd.s32 %v1952, 16
  %v2239 = vadd.s32 %v1959, 16
  %v2240 = vadd.s32 %v1966, 16
  %v2241 = vadd.s32 %v1973, 16
  %v2242 = vadd.s32 %v1980, 16
  %v2243 = vadd.s32 %v1987, 16
  %v2244 = vsel %vm2116, %v2180, %v1546
  %v2245 = vsel %vm2117, %v2181, %v1553
  %v2246 = vsel %vm2118, %v2182, %v1560
  %v2247 = vsel %vm2119, %v2183, %v1567
  %v2248 = vsel %vm2120, %v2184, %v1574
  %v2249 = vsel %vm2121, %v2185, %v1581
  %v2250 = vsel %vm2122, %v2186, %v1588
  %v2251 = vsel %vm2123, %v2187, %v1595
  %v2252 = vsel %vm2124, %v2188, %v1602
  %v2253 = vsel %vm2125, %v2189, %v1609
  %v2254 = vsel %vm2126, %v2190, %v1616
  %v2255 = vsel %vm2127, %v2191, %v1623
  %v2256 = vsel %vm2128, %v2192, %v1630
  %v2257 = vsel %vm2129, %v2193, %v1637
  %v2258 = vsel %vm2130, %v2194, %v1644
  %v2259 = vsel %vm2131, %v2195, %v1651
  %v2260 = vsel %vm2132, %v2196, %v1658
  %v2261 = vsel %vm2133, %v2197, %v1665
  %v2262 = vsel %vm2134, %v2198, %v1672
  %v2263 = vsel %vm2135, %v2199, %v1679
  %v2264 = vsel %vm2136, %v2200, %v1686
  %v2265 = vsel %vm2137, %v2201, %v1693
  %v2266 = vsel %vm2138, %v2202, %v1700
  %v2267 = vsel %vm2139, %v2203, %v1707
  %v2268 = vsel %vm2140, %v2204, %v1714
  %v2269 = vsel %vm2141, %v2205, %v1721
  %v2270 = vsel %vm2142, %v2206, %v1728
  %v2271 = vsel %vm2143, %v2207, %v1735
  %v2272 = vsel %vm2144, %v2208, %v1742
  %v2273 = vsel %vm2145, %v2209, %v1749
  %v2274 = vsel %vm2146, %v2210, %v1756
  %v2275 = vsel %vm2147, %v2211, %v1763
  %v2276 = vsel %vm2148, %v2212, %v1770
  %v2277 = vsel %vm2149, %v2213, %v1777
  %v2278 = vsel %vm2150, %v2214, %v1784
  %v2279 = vsel %vm2151, %v2215, %v1791
  %v2280 = vsel %vm2152, %v2216, %v1798
  %v2281 = vsel %vm2153, %v2217, %v1805
  %v2282 = vsel %vm2154, %v2218, %v1812
  %v2283 = vsel %vm2155, %v2219, %v1819
  %v2284 = vsel %vm2156, %v2220, %v1826
  %v2285 = vsel %vm2157, %v2221, %v1833
  %v2286 = vsel %vm2158, %v2222, %v1840
  %v2287 = vsel %vm2159, %v2223, %v1847
  %v2288 = vsel %vm2160, %v2224, %v1854
  %v2289 = vsel %vm2161, %v2225, %v1861
  %v2290 = vsel %vm2162, %v2226, %v1868
  %v2291 = vsel %vm2163, %v2227, %v1875
  %v2292 = vsel %vm2164, %v2228, %v1882
  %v2293 = vsel %vm2165, %v2229, %v1889
  %v2294 = vsel %vm2166, %v2230, %v1896
  %v2295 = vsel %vm2167, %v2231, %v1903
  %v2296 = vsel %vm2168, %v2232, %v1910
  %v2297 = vsel %vm2169, %v2233, %v1917
  %v2298 = vsel %vm2170, %v2234, %v1924
  %v2299 = vsel %vm2171, %v2235, %v1931
  %v2300 = vsel %vm2172, %v2236, %v1938
  %v2301 = vsel %vm2173, %v2237, %v1945
  %v2302 = vsel %vm2174, %v2238, %v1952
  %v2303 = vsel %vm2175, %v2239, %v1959
  %v2304 = vsel %vm2176, %v2240, %v1966
  %v2305 = vsel %vm2177, %v2241, %v1973
  %v2306 = vsel %vm2178, %v2242, %v1980
  %v2307 = vsel %vm2179, %v2243, %v1987
  %vm2308 = vcmp.ge.s32.totalorder %v2244, 1
  %vm2309 = vcmp.ge.s32.totalorder %v2245, 1
  %vm2310 = vcmp.ge.s32.totalorder %v2246, 1
  %vm2311 = vcmp.ge.s32.totalorder %v2247, 1
  %vm2312 = vcmp.ge.s32.totalorder %v2248, 1
  %vm2313 = vcmp.ge.s32.totalorder %v2249, 1
  %vm2314 = vcmp.ge.s32.totalorder %v2250, 1
  %vm2315 = vcmp.ge.s32.totalorder %v2251, 1
  %vm2316 = vcmp.ge.s32.totalorder %v2252, 1
  %vm2317 = vcmp.ge.s32.totalorder %v2253, 1
  %vm2318 = vcmp.ge.s32.totalorder %v2254, 1
  %vm2319 = vcmp.ge.s32.totalorder %v2255, 1
  %vm2320 = vcmp.ge.s32.totalorder %v2256, 1
  %vm2321 = vcmp.ge.s32.totalorder %v2257, 1
  %vm2322 = vcmp.ge.s32.totalorder %v2258, 1
  %vm2323 = vcmp.ge.s32.totalorder %v2259, 1
  %vm2324 = vcmp.ge.s32.totalorder %v2260, 1
  %vm2325 = vcmp.ge.s32.totalorder %v2261, 1
  %vm2326 = vcmp.ge.s32.totalorder %v2262, 1
  %vm2327 = vcmp.ge.s32.totalorder %v2263, 1
  %vm2328 = vcmp.ge.s32.totalorder %v2264, 1
  %vm2329 = vcmp.ge.s32.totalorder %v2265, 1
  %vm2330 = vcmp.ge.s32.totalorder %v2266, 1
  %vm2331 = vcmp.ge.s32.totalorder %v2267, 1
  %vm2332 = vcmp.ge.s32.totalorder %v2268, 1
  %vm2333 = vcmp.ge.s32.totalorder %v2269, 1
  %vm2334 = vcmp.ge.s32.totalorder %v2270, 1
  %vm2335 = vcmp.ge.s32.totalorder %v2271, 1
  %vm2336 = vcmp.ge.s32.totalorder %v2272, 1
  %vm2337 = vcmp.ge.s32.totalorder %v2273, 1
  %vm2338 = vcmp.ge.s32.totalorder %v2274, 1
  %vm2339 = vcmp.ge.s32.totalorder %v2275, 1
  %vm2340 = vcmp.ge.s32.totalorder %v2276, 1
  %vm2341 = vcmp.ge.s32.totalorder %v2277, 1
  %vm2342 = vcmp.ge.s32.totalorder %v2278, 1
  %vm2343 = vcmp.ge.s32.totalorder %v2279, 1
  %vm2344 = vcmp.ge.s32.totalorder %v2280, 1
  %vm2345 = vcmp.ge.s32.totalorder %v2281, 1
  %vm2346 = vcmp.ge.s32.totalorder %v2282, 1
  %vm2347 = vcmp.ge.s32.totalorder %v2283, 1
  %vm2348 = vcmp.ge.s32.totalorder %v2284, 1
  %vm2349 = vcmp.ge.s32.totalorder %v2285, 1
  %vm2350 = vcmp.ge.s32.totalorder %v2286, 1
  %vm2351 = vcmp.ge.s32.totalorder %v2287, 1
  %vm2352 = vcmp.ge.s32.totalorder %v2288, 1
  %vm2353 = vcmp.ge.s32.totalorder %v2289, 1
  %vm2354 = vcmp.ge.s32.totalorder %v2290, 1
  %vm2355 = vcmp.ge.s32.totalorder %v2291, 1
  %vm2356 = vcmp.ge.s32.totalorder %v2292, 1
  %vm2357 = vcmp.ge.s32.totalorder %v2293, 1
  %vm2358 = vcmp.ge.s32.totalorder %v2294, 1
  %vm2359 = vcmp.ge.s32.totalorder %v2295, 1
  %vm2360 = vcmp.ge.s32.totalorder %v2296, 1
  %vm2361 = vcmp.ge.s32.totalorder %v2297, 1
  %vm2362 = vcmp.ge.s32.totalorder %v2298, 1
  %vm2363 = vcmp.ge.s32.totalorder %v2299, 1
  %vm2364 = vcmp.ge.s32.totalorder %v2300, 1
  %vm2365 = vcmp.ge.s32.totalorder %v2301, 1
  %vm2366 = vcmp.ge.s32.totalorder %v2302, 1
  %vm2367 = vcmp.ge.s32.totalorder %v2303, 1
  %vm2368 = vcmp.ge.s32.totalorder %v2304, 1
  %vm2369 = vcmp.ge.s32.totalorder %v2305, 1
  %vm2370 = vcmp.ge.s32.totalorder %v2306, 1
  %vm2371 = vcmp.ge.s32.totalorder %v2307, 1
  %vm2372 = vcmp.le.s32.totalorder %v2244, 14
  %vm2373 = vcmp.le.s32.totalorder %v2245, 14
  %vm2374 = vcmp.le.s32.totalorder %v2246, 14
  %vm2375 = vcmp.le.s32.totalorder %v2247, 14
  %vm2376 = vcmp.le.s32.totalorder %v2248, 14
  %vm2377 = vcmp.le.s32.totalorder %v2249, 14
  %vm2378 = vcmp.le.s32.totalorder %v2250, 14
  %vm2379 = vcmp.le.s32.totalorder %v2251, 14
  %vm2380 = vcmp.le.s32.totalorder %v2252, 14
  %vm2381 = vcmp.le.s32.totalorder %v2253, 14
  %vm2382 = vcmp.le.s32.totalorder %v2254, 14
  %vm2383 = vcmp.le.s32.totalorder %v2255, 14
  %vm2384 = vcmp.le.s32.totalorder %v2256, 14
  %vm2385 = vcmp.le.s32.totalorder %v2257, 14
  %vm2386 = vcmp.le.s32.totalorder %v2258, 14
  %vm2387 = vcmp.le.s32.totalorder %v2259, 14
  %vm2388 = vcmp.le.s32.totalorder %v2260, 14
  %vm2389 = vcmp.le.s32.totalorder %v2261, 14
  %vm2390 = vcmp.le.s32.totalorder %v2262, 14
  %vm2391 = vcmp.le.s32.totalorder %v2263, 14
  %vm2392 = vcmp.le.s32.totalorder %v2264, 14
  %vm2393 = vcmp.le.s32.totalorder %v2265, 14
  %vm2394 = vcmp.le.s32.totalorder %v2266, 14
  %vm2395 = vcmp.le.s32.totalorder %v2267, 14
  %vm2396 = vcmp.le.s32.totalorder %v2268, 14
  %vm2397 = vcmp.le.s32.totalorder %v2269, 14
  %vm2398 = vcmp.le.s32.totalorder %v2270, 14
  %vm2399 = vcmp.le.s32.totalorder %v2271, 14
  %vm2400 = vcmp.le.s32.totalorder %v2272, 14
  %vm2401 = vcmp.le.s32.totalorder %v2273, 14
  %vm2402 = vcmp.le.s32.totalorder %v2274, 14
  %vm2403 = vcmp.le.s32.totalorder %v2275, 14
  %vm2404 = vcmp.le.s32.totalorder %v2276, 14
  %vm2405 = vcmp.le.s32.totalorder %v2277, 14
  %vm2406 = vcmp.le.s32.totalorder %v2278, 14
  %vm2407 = vcmp.le.s32.totalorder %v2279, 14
  %vm2408 = vcmp.le.s32.totalorder %v2280, 14
  %vm2409 = vcmp.le.s32.totalorder %v2281, 14
  %vm2410 = vcmp.le.s32.totalorder %v2282, 14
  %vm2411 = vcmp.le.s32.totalorder %v2283, 14
  %vm2412 = vcmp.le.s32.totalorder %v2284, 14
  %vm2413 = vcmp.le.s32.totalorder %v2285, 14
  %vm2414 = vcmp.le.s32.totalorder %v2286, 14
  %vm2415 = vcmp.le.s32.totalorder %v2287, 14
  %vm2416 = vcmp.le.s32.totalorder %v2288, 14
  %vm2417 = vcmp.le.s32.totalorder %v2289, 14
  %vm2418 = vcmp.le.s32.totalorder %v2290, 14
  %vm2419 = vcmp.le.s32.totalorder %v2291, 14
  %vm2420 = vcmp.le.s32.totalorder %v2292, 14
  %vm2421 = vcmp.le.s32.totalorder %v2293, 14
  %vm2422 = vcmp.le.s32.totalorder %v2294, 14
  %vm2423 = vcmp.le.s32.totalorder %v2295, 14
  %vm2424 = vcmp.le.s32.totalorder %v2296, 14
  %vm2425 = vcmp.le.s32.totalorder %v2297, 14
  %vm2426 = vcmp.le.s32.totalorder %v2298, 14
  %vm2427 = vcmp.le.s32.totalorder %v2299, 14
  %vm2428 = vcmp.le.s32.totalorder %v2300, 14
  %vm2429 = vcmp.le.s32.totalorder %v2301, 14
  %vm2430 = vcmp.le.s32.totalorder %v2302, 14
  %vm2431 = vcmp.le.s32.totalorder %v2303, 14
  %vm2432 = vcmp.le.s32.totalorder %v2304, 14
  %vm2433 = vcmp.le.s32.totalorder %v2305, 14
  %vm2434 = vcmp.le.s32.totalorder %v2306, 14
  %vm2435 = vcmp.le.s32.totalorder %v2307, 14
  %vm2436 = vcmp.ge.s32.totalorder %v1476, 16
  %vm2437 = vcmp.ge.s32.totalorder %v1477, 16
  %vm2438 = vcmp.ge.s32.totalorder %v1478, 16
  %vm2439 = vcmp.ge.s32.totalorder %v1479, 16
  %vm2440 = vcmp.ge.s32.totalorder %v1480, 16
  %vm2441 = vcmp.ge.s32.totalorder %v1481, 16
  %vm2442 = vcmp.ge.s32.totalorder %v1482, 16
  %vm2443 = vcmp.ge.s32.totalorder %v1483, 16
  %vm2444 = vcmp.ge.s32.totalorder %v1484, 16
  %vm2445 = vcmp.ge.s32.totalorder %v1485, 16
  %vm2446 = vcmp.ge.s32.totalorder %v1486, 16
  %vm2447 = vcmp.ge.s32.totalorder %v1487, 16
  %vm2448 = vcmp.ge.s32.totalorder %v1488, 16
  %vm2449 = vcmp.ge.s32.totalorder %v1489, 16
  %vm2450 = vcmp.ge.s32.totalorder %v1490, 16
  %vm2451 = vcmp.ge.s32.totalorder %v1491, 16
  %vm2452 = vcmp.ge.s32.totalorder %v1492, 16
  %vm2453 = vcmp.ge.s32.totalorder %v1493, 16
  %vm2454 = vcmp.ge.s32.totalorder %v1494, 16
  %vm2455 = vcmp.ge.s32.totalorder %v1495, 16
  %vm2456 = vcmp.ge.s32.totalorder %v1496, 16
  %vm2457 = vcmp.ge.s32.totalorder %v1497, 16
  %vm2458 = vcmp.ge.s32.totalorder %v1498, 16
  %vm2459 = vcmp.ge.s32.totalorder %v1499, 16
  %vm2460 = vcmp.ge.s32.totalorder %v1500, 16
  %vm2461 = vcmp.ge.s32.totalorder %v1501, 16
  %vm2462 = vcmp.ge.s32.totalorder %v1502, 16
  %vm2463 = vcmp.ge.s32.totalorder %v1503, 16
  %vm2464 = vcmp.ge.s32.totalorder %v1504, 16
  %vm2465 = vcmp.ge.s32.totalorder %v1505, 16
  %vm2466 = vcmp.ge.s32.totalorder %v1506, 16
  %vm2467 = vcmp.ge.s32.totalorder %v1507, 16
  %vm2468 = vcmp.ge.s32.totalorder %v1508, 16
  %vm2469 = vcmp.ge.s32.totalorder %v1509, 16
  %vm2470 = vcmp.ge.s32.totalorder %v1510, 16
  %vm2471 = vcmp.ge.s32.totalorder %v1511, 16
  %vm2472 = vcmp.ge.s32.totalorder %v1512, 16
  %vm2473 = vcmp.ge.s32.totalorder %v1513, 16
  %vm2474 = vcmp.ge.s32.totalorder %v1514, 16
  %vm2475 = vcmp.ge.s32.totalorder %v1515, 16
  %vm2476 = vcmp.ge.s32.totalorder %v1516, 16
  %vm2477 = vcmp.ge.s32.totalorder %v1517, 16
  %vm2478 = vcmp.ge.s32.totalorder %v1518, 16
  %vm2479 = vcmp.ge.s32.totalorder %v1519, 16
  %vm2480 = vcmp.ge.s32.totalorder %v1520, 16
  %vm2481 = vcmp.ge.s32.totalorder %v1521, 16
  %vm2482 = vcmp.ge.s32.totalorder %v1522, 16
  %vm2483 = vcmp.ge.s32.totalorder %v1523, 16
  %vm2484 = vcmp.ge.s32.totalorder %v1524, 16
  %vm2485 = vcmp.ge.s32.totalorder %v1525, 16
  %vm2486 = vcmp.ge.s32.totalorder %v1526, 16
  %vm2487 = vcmp.ge.s32.totalorder %v1527, 16
  %vm2488 = vcmp.ge.s32.totalorder %v1528, 16
  %vm2489 = vcmp.ge.s32.totalorder %v1529, 16
  %vm2490 = vcmp.ge.s32.totalorder %v1530, 16
  %vm2491 = vcmp.ge.s32.totalorder %v1531, 16
  %vm2492 = vcmp.ge.s32.totalorder %v1532, 16
  %vm2493 = vcmp.ge.s32.totalorder %v1533, 16
  %vm2494 = vcmp.ge.s32.totalorder %v1534, 16
  %vm2495 = vcmp.ge.s32.totalorder %v1535, 16
  %vm2496 = vcmp.ge.s32.totalorder %v1536, 16
  %vm2497 = vcmp.ge.s32.totalorder %v1537, 16
  %vm2498 = vcmp.ge.s32.totalorder %v1538, 16
  %vm2499 = vcmp.ge.s32.totalorder %v1539, 16
  %vm2500 = vcmp.lt.s32.totalorder %v1476, 240
  %vm2501 = vcmp.lt.s32.totalorder %v1477, 240
  %vm2502 = vcmp.lt.s32.totalorder %v1478, 240
  %vm2503 = vcmp.lt.s32.totalorder %v1479, 240
  %vm2504 = vcmp.lt.s32.totalorder %v1480, 240
  %vm2505 = vcmp.lt.s32.totalorder %v1481, 240
  %vm2506 = vcmp.lt.s32.totalorder %v1482, 240
  %vm2507 = vcmp.lt.s32.totalorder %v1483, 240
  %vm2508 = vcmp.lt.s32.totalorder %v1484, 240
  %vm2509 = vcmp.lt.s32.totalorder %v1485, 240
  %vm2510 = vcmp.lt.s32.totalorder %v1486, 240
  %vm2511 = vcmp.lt.s32.totalorder %v1487, 240
  %vm2512 = vcmp.lt.s32.totalorder %v1488, 240
  %vm2513 = vcmp.lt.s32.totalorder %v1489, 240
  %vm2514 = vcmp.lt.s32.totalorder %v1490, 240
  %vm2515 = vcmp.lt.s32.totalorder %v1491, 240
  %vm2516 = vcmp.lt.s32.totalorder %v1492, 240
  %vm2517 = vcmp.lt.s32.totalorder %v1493, 240
  %vm2518 = vcmp.lt.s32.totalorder %v1494, 240
  %vm2519 = vcmp.lt.s32.totalorder %v1495, 240
  %vm2520 = vcmp.lt.s32.totalorder %v1496, 240
  %vm2521 = vcmp.lt.s32.totalorder %v1497, 240
  %vm2522 = vcmp.lt.s32.totalorder %v1498, 240
  %vm2523 = vcmp.lt.s32.totalorder %v1499, 240
  %vm2524 = vcmp.lt.s32.totalorder %v1500, 240
  %vm2525 = vcmp.lt.s32.totalorder %v1501, 240
  %vm2526 = vcmp.lt.s32.totalorder %v1502, 240
  %vm2527 = vcmp.lt.s32.totalorder %v1503, 240
  %vm2528 = vcmp.lt.s32.totalorder %v1504, 240
  %vm2529 = vcmp.lt.s32.totalorder %v1505, 240
  %vm2530 = vcmp.lt.s32.totalorder %v1506, 240
  %vm2531 = vcmp.lt.s32.totalorder %v1507, 240
  %vm2532 = vcmp.lt.s32.totalorder %v1508, 240
  %vm2533 = vcmp.lt.s32.totalorder %v1509, 240
  %vm2534 = vcmp.lt.s32.totalorder %v1510, 240
  %vm2535 = vcmp.lt.s32.totalorder %v1511, 240
  %vm2536 = vcmp.lt.s32.totalorder %v1512, 240
  %vm2537 = vcmp.lt.s32.totalorder %v1513, 240
  %vm2538 = vcmp.lt.s32.totalorder %v1514, 240
  %vm2539 = vcmp.lt.s32.totalorder %v1515, 240
  %vm2540 = vcmp.lt.s32.totalorder %v1516, 240
  %vm2541 = vcmp.lt.s32.totalorder %v1517, 240
  %vm2542 = vcmp.lt.s32.totalorder %v1518, 240
  %vm2543 = vcmp.lt.s32.totalorder %v1519, 240
  %vm2544 = vcmp.lt.s32.totalorder %v1520, 240
  %vm2545 = vcmp.lt.s32.totalorder %v1521, 240
  %vm2546 = vcmp.lt.s32.totalorder %v1522, 240
  %vm2547 = vcmp.lt.s32.totalorder %v1523, 240
  %vm2548 = vcmp.lt.s32.totalorder %v1524, 240
  %vm2549 = vcmp.lt.s32.totalorder %v1525, 240
  %vm2550 = vcmp.lt.s32.totalorder %v1526, 240
  %vm2551 = vcmp.lt.s32.totalorder %v1527, 240
  %vm2552 = vcmp.lt.s32.totalorder %v1528, 240
  %vm2553 = vcmp.lt.s32.totalorder %v1529, 240
  %vm2554 = vcmp.lt.s32.totalorder %v1530, 240
  %vm2555 = vcmp.lt.s32.totalorder %v1531, 240
  %vm2556 = vcmp.lt.s32.totalorder %v1532, 240
  %vm2557 = vcmp.lt.s32.totalorder %v1533, 240
  %vm2558 = vcmp.lt.s32.totalorder %v1534, 240
  %vm2559 = vcmp.lt.s32.totalorder %v1535, 240
  %vm2560 = vcmp.lt.s32.totalorder %v1536, 240
  %vm2561 = vcmp.lt.s32.totalorder %v1537, 240
  %vm2562 = vcmp.lt.s32.totalorder %v1538, 240
  %vm2563 = vcmp.lt.s32.totalorder %v1539, 240
  %v2564 = vrot.slane %v643, 7
  %v2565 = vrot.slane %v644, 7
  %v2566 = vrot.slane %v645, 7
  %v2567 = vrot.slane %v646, 7
  %v2568 = vrot.slane %v647, 7
  %v2569 = vrot.slane %v648, 7
  %v2570 = vrot.slane %v649, 7
  %v2571 = vrot.slane %v650, 7
  %v2572 = vrot.slane %v651, 7
  %v2573 = vrot.slane %v652, 7
  %v2574 = vrot.slane %v653, 7
  %v2575 = vrot.slane %v654, 7
  %v2576 = vrot.slane %v655, 7
  %v2577 = vrot.slane %v656, 7
  %v2578 = vrot.slane %v657, 7
  %v2579 = vrot.slane %v658, 7
  %v2580 = vrot.slane %v659, 7
  %v2581 = vrot.slane %v660, 7
  %v2582 = vrot.slane %v661, 7
  %v2583 = vrot.slane %v662, 7
  %v2584 = vrot.slane %v663, 7
  %v2585 = vrot.slane %v664, 7
  %v2586 = vrot.slane %v665, 7
  %v2587 = vrot.slane %v666, 7
  %v2588 = vrot.slane %v667, 7
  %v2589 = vrot.slane %v668, 7
  %v2590 = vrot.slane %v669, 7
  %v2591 = vrot.slane %v670, 7
  %v2592 = vrot.slane %v671, 7
  %v2593 = vrot.slane %v672, 7
  %v2594 = vrot.slane %v673, 7
  %v2595 = vrot.slane %v674, 7
  %v2596 = vrot.slane %v675, 7
  %v2597 = vrot.slane %v676, 7
  %v2598 = vrot.slane %v677, 7
  %v2599 = vrot.slane %v678, 7
  %v2600 = vrot.slane %v679, 7
  %v2601 = vrot.slane %v680, 7
  %v2602 = vrot.slane %v681, 7
  %v2603 = vrot.slane %v682, 7
  %v2604 = vrot.slane %v683, 7
  %v2605 = vrot.slane %v684, 7
  %v2606 = vrot.slane %v685, 7
  %v2607 = vrot.slane %v686, 7
  %v2608 = vrot.slane %v687, 7
  %v2609 = vrot.slane %v688, 7
  %v2610 = vrot.slane %v689, 7
  %v2611 = vrot.slane %v690, 7
  %v2612 = vrot.slane %v691, 7
  %v2613 = vrot.slane %v692, 7
  %v2614 = vrot.slane %v693, 7
  %v2615 = vrot.slane %v694, 7
  %v2616 = vrot.slane %v695, 7
  %v2617 = vrot.slane %v696, 7
  %v2618 = vrot.slane %v697, 7
  %v2619 = vrot.slane %v698, 7
  %v2620 = vrot.slane %v699, 7
  %v2621 = vrot.slane %v700, 7
  %v2622 = vrot.slane %v701, 7
  %v2623 = vrot.slane %v702, 7
  %v2624 = vrot.slane %v703, 7
  %v2625 = vrot.slane %v704, 7
  %v2626 = vrot.slane %v705, 7
  %v2627 = vrot.slane %v706, 7
  %vm2628 = vcmp.lt.s32.totalorder %v708, 1
  %v2629 = vsel %vm2628, %v2626, %v2627
  %v2630 = vsel %vm2628, %v2625, %v2626
  %v2631 = vsel %vm2628, %v2624, %v2625
  %v2632 = vsel %vm2628, %v2623, %v2624
  %v2633 = vsel %vm2628, %v2622, %v2623
  %v2634 = vsel %vm2628, %v2621, %v2622
  %v2635 = vsel %vm2628, %v2620, %v2621
  %v2636 = vsel %vm2628, %v2619, %v2620
  %v2637 = vsel %vm2628, %v2618, %v2619
  %v2638 = vsel %vm2628, %v2617, %v2618
  %v2639 = vsel %vm2628, %v2616, %v2617
  %v2640 = vsel %vm2628, %v2615, %v2616
  %v2641 = vsel %vm2628, %v2614, %v2615
  %v2642 = vsel %vm2628, %v2613, %v2614
  %v2643 = vsel %vm2628, %v2612, %v2613
  %v2644 = vsel %vm2628, %v2611, %v2612
  %v2645 = vsel %vm2628, %v2610, %v2611
  %v2646 = vsel %vm2628, %v2609, %v2610
  %v2647 = vsel %vm2628, %v2608, %v2609
  %v2648 = vsel %vm2628, %v2607, %v2608
  %v2649 = vsel %vm2628, %v2606, %v2607
  %v2650 = vsel %vm2628, %v2605, %v2606
  %v2651 = vsel %vm2628, %v2604, %v2605
  %v2652 = vsel %vm2628, %v2603, %v2604
  %v2653 = vsel %vm2628, %v2602, %v2603
  %v2654 = vsel %vm2628, %v2601, %v2602
  %v2655 = vsel %vm2628, %v2600, %v2601
  %v2656 = vsel %vm2628, %v2599, %v2600
  %v2657 = vsel %vm2628, %v2598, %v2599
  %v2658 = vsel %vm2628, %v2597, %v2598
  %v2659 = vsel %vm2628, %v2596, %v2597
  %v2660 = vsel %vm2628, %v2595, %v2596
  %v2661 = vsel %vm2628, %v2594, %v2595
  %v2662 = vsel %vm2628, %v2593, %v2594
  %v2663 = vsel %vm2628, %v2592, %v2593
  %v2664 = vsel %vm2628, %v2591, %v2592
  %v2665 = vsel %vm2628, %v2590, %v2591
  %v2666 = vsel %vm2628, %v2589, %v2590
  %v2667 = vsel %vm2628, %v2588, %v2589
  %v2668 = vsel %vm2628, %v2587, %v2588
  %v2669 = vsel %vm2628, %v2586, %v2587
  %v2670 = vsel %vm2628, %v2585, %v2586
  %v2671 = vsel %vm2628, %v2584, %v2585
  %v2672 = vsel %vm2628, %v2583, %v2584
  %v2673 = vsel %vm2628, %v2582, %v2583
  %v2674 = vsel %vm2628, %v2581, %v2582
  %v2675 = vsel %vm2628, %v2580, %v2581
  %v2676 = vsel %vm2628, %v2579, %v2580
  %v2677 = vsel %vm2628, %v2578, %v2579
  %v2678 = vsel %vm2628, %v2577, %v2578
  %v2679 = vsel %vm2628, %v2576, %v2577
  %v2680 = vsel %vm2628, %v2575, %v2576
  %v2681 = vsel %vm2628, %v2574, %v2575
  %v2682 = vsel %vm2628, %v2573, %v2574
  %v2683 = vsel %vm2628, %v2572, %v2573
  %v2684 = vsel %vm2628, %v2571, %v2572
  %v2685 = vsel %vm2628, %v2570, %v2571
  %v2686 = vsel %vm2628, %v2569, %v2570
  %v2687 = vsel %vm2628, %v2568, %v2569
  %v2688 = vsel %vm2628, %v2567, %v2568
  %v2689 = vsel %vm2628, %v2566, %v2567
  %v2690 = vsel %vm2628, %v2565, %v2566
  %v2691 = vsel %vm2628, %v2564, %v2565
  %v2692 = vsel %vm2628, %v2627, %v2564
  %v2693 = vsel %vm2308, 1, 0
  %v2694 = vsel %vm2309, 1, 0
  %v2695 = vsel %vm2310, 1, 0
  %v2696 = vsel %vm2311, 1, 0
  %v2697 = vsel %vm2312, 1, 0
  %v2698 = vsel %vm2313, 1, 0
  %v2699 = vsel %vm2314, 1, 0
  %v2700 = vsel %vm2315, 1, 0
  %v2701 = vsel %vm2316, 1, 0
  %v2702 = vsel %vm2317, 1, 0
  %v2703 = vsel %vm2318, 1, 0
  %v2704 = vsel %vm2319, 1, 0
  %v2705 = vsel %vm2320, 1, 0
  %v2706 = vsel %vm2321, 1, 0
  %v2707 = vsel %vm2322, 1, 0
  %v2708 = vsel %vm2323, 1, 0
  %v2709 = vsel %vm2324, 1, 0
  %v2710 = vsel %vm2325, 1, 0
  %v2711 = vsel %vm2326, 1, 0
  %v2712 = vsel %vm2327, 1, 0
  %v2713 = vsel %vm2328, 1, 0
  %v2714 = vsel %vm2329, 1, 0
  %v2715 = vsel %vm2330, 1, 0
  %v2716 = vsel %vm2331, 1, 0
  %v2717 = vsel %vm2332, 1, 0
  %v2718 = vsel %vm2333, 1, 0
  %v2719 = vsel %vm2334, 1, 0
  %v2720 = vsel %vm2335, 1, 0
  %v2721 = vsel %vm2336, 1, 0
  %v2722 = vsel %vm2337, 1, 0
  %v2723 = vsel %vm2338, 1, 0
  %v2724 = vsel %vm2339, 1, 0
  %v2725 = vsel %vm2340, 1, 0
  %v2726 = vsel %vm2341, 1, 0
  %v2727 = vsel %vm2342, 1, 0
  %v2728 = vsel %vm2343, 1, 0
  %v2729 = vsel %vm2344, 1, 0
  %v2730 = vsel %vm2345, 1, 0
  %v2731 = vsel %vm2346, 1, 0
  %v2732 = vsel %vm2347, 1, 0
  %v2733 = vsel %vm2348, 1, 0
  %v2734 = vsel %vm2349, 1, 0
  %v2735 = vsel %vm2350, 1, 0
  %v2736 = vsel %vm2351, 1, 0
  %v2737 = vsel %vm2352, 1, 0
  %v2738 = vsel %vm2353, 1, 0
  %v2739 = vsel %vm2354, 1, 0
  %v2740 = vsel %vm2355, 1, 0
  %v2741 = vsel %vm2356, 1, 0
  %v2742 = vsel %vm2357, 1, 0
  %v2743 = vsel %vm2358, 1, 0
  %v2744 = vsel %vm2359, 1, 0
  %v2745 = vsel %vm2360, 1, 0
  %v2746 = vsel %vm2361, 1, 0
  %v2747 = vsel %vm2362, 1, 0
  %v2748 = vsel %vm2363, 1, 0
  %v2749 = vsel %vm2364, 1, 0
  %v2750 = vsel %vm2365, 1, 0
  %v2751 = vsel %vm2366, 1, 0
  %v2752 = vsel %vm2367, 1, 0
  %v2753 = vsel %vm2368, 1, 0
  %v2754 = vsel %vm2369, 1, 0
  %v2755 = vsel %vm2370, 1, 0
  %v2756 = vsel %vm2371, 1, 0
  %vm2757 = vcmp.eq.s32.totalorder %v2693, 1
  %vm2758 = vcmp.eq.s32.totalorder %v2694, 1
  %vm2759 = vcmp.eq.s32.totalorder %v2695, 1
  %vm2760 = vcmp.eq.s32.totalorder %v2696, 1
  %vm2761 = vcmp.eq.s32.totalorder %v2697, 1
  %vm2762 = vcmp.eq.s32.totalorder %v2698, 1
  %vm2763 = vcmp.eq.s32.totalorder %v2699, 1
  %vm2764 = vcmp.eq.s32.totalorder %v2700, 1
  %vm2765 = vcmp.eq.s32.totalorder %v2701, 1
  %vm2766 = vcmp.eq.s32.totalorder %v2702, 1
  %vm2767 = vcmp.eq.s32.totalorder %v2703, 1
  %vm2768 = vcmp.eq.s32.totalorder %v2704, 1
  %vm2769 = vcmp.eq.s32.totalorder %v2705, 1
  %vm2770 = vcmp.eq.s32.totalorder %v2706, 1
  %vm2771 = vcmp.eq.s32.totalorder %v2707, 1
  %vm2772 = vcmp.eq.s32.totalorder %v2708, 1
  %vm2773 = vcmp.eq.s32.totalorder %v2709, 1
  %vm2774 = vcmp.eq.s32.totalorder %v2710, 1
  %vm2775 = vcmp.eq.s32.totalorder %v2711, 1
  %vm2776 = vcmp.eq.s32.totalorder %v2712, 1
  %vm2777 = vcmp.eq.s32.totalorder %v2713, 1
  %vm2778 = vcmp.eq.s32.totalorder %v2714, 1
  %vm2779 = vcmp.eq.s32.totalorder %v2715, 1
  %vm2780 = vcmp.eq.s32.totalorder %v2716, 1
  %vm2781 = vcmp.eq.s32.totalorder %v2717, 1
  %vm2782 = vcmp.eq.s32.totalorder %v2718, 1
  %vm2783 = vcmp.eq.s32.totalorder %v2719, 1
  %vm2784 = vcmp.eq.s32.totalorder %v2720, 1
  %vm2785 = vcmp.eq.s32.totalorder %v2721, 1
  %vm2786 = vcmp.eq.s32.totalorder %v2722, 1
  %vm2787 = vcmp.eq.s32.totalorder %v2723, 1
  %vm2788 = vcmp.eq.s32.totalorder %v2724, 1
  %vm2789 = vcmp.eq.s32.totalorder %v2725, 1
  %vm2790 = vcmp.eq.s32.totalorder %v2726, 1
  %vm2791 = vcmp.eq.s32.totalorder %v2727, 1
  %vm2792 = vcmp.eq.s32.totalorder %v2728, 1
  %vm2793 = vcmp.eq.s32.totalorder %v2729, 1
  %vm2794 = vcmp.eq.s32.totalorder %v2730, 1
  %vm2795 = vcmp.eq.s32.totalorder %v2731, 1
  %vm2796 = vcmp.eq.s32.totalorder %v2732, 1
  %vm2797 = vcmp.eq.s32.totalorder %v2733, 1
  %vm2798 = vcmp.eq.s32.totalorder %v2734, 1
  %vm2799 = vcmp.eq.s32.totalorder %v2735, 1
  %vm2800 = vcmp.eq.s32.totalorder %v2736, 1
  %vm2801 = vcmp.eq.s32.totalorder %v2737, 1
  %vm2802 = vcmp.eq.s32.totalorder %v2738, 1
  %vm2803 = vcmp.eq.s32.totalorder %v2739, 1
  %vm2804 = vcmp.eq.s32.totalorder %v2740, 1
  %vm2805 = vcmp.eq.s32.totalorder %v2741, 1
  %vm2806 = vcmp.eq.s32.totalorder %v2742, 1
  %vm2807 = vcmp.eq.s32.totalorder %v2743, 1
  %vm2808 = vcmp.eq.s32.totalorder %v2744, 1
  %vm2809 = vcmp.eq.s32.totalorder %v2745, 1
  %vm2810 = vcmp.eq.s32.totalorder %v2746, 1
  %vm2811 = vcmp.eq.s32.totalorder %v2747, 1
  %vm2812 = vcmp.eq.s32.totalorder %v2748, 1
  %vm2813 = vcmp.eq.s32.totalorder %v2749, 1
  %vm2814 = vcmp.eq.s32.totalorder %v2750, 1
  %vm2815 = vcmp.eq.s32.totalorder %v2751, 1
  %vm2816 = vcmp.eq.s32.totalorder %v2752, 1
  %vm2817 = vcmp.eq.s32.totalorder %v2753, 1
  %vm2818 = vcmp.eq.s32.totalorder %v2754, 1
  %vm2819 = vcmp.eq.s32.totalorder %v2755, 1
  %vm2820 = vcmp.eq.s32.totalorder %v2756, 1
  %v2821 = vsel %vm2757, %v2692, 0.0
  %v2822 = vsel %vm2758, %v2691, 0.0
  %v2823 = vsel %vm2759, %v2690, 0.0
  %v2824 = vsel %vm2760, %v2689, 0.0
  %v2825 = vsel %vm2761, %v2688, 0.0
  %v2826 = vsel %vm2762, %v2687, 0.0
  %v2827 = vsel %vm2763, %v2686, 0.0
  %v2828 = vsel %vm2764, %v2685, 0.0
  %v2829 = vsel %vm2765, %v2684, 0.0
  %v2830 = vsel %vm2766, %v2683, 0.0
  %v2831 = vsel %vm2767, %v2682, 0.0
  %v2832 = vsel %vm2768, %v2681, 0.0
  %v2833 = vsel %vm2769, %v2680, 0.0
  %v2834 = vsel %vm2770, %v2679, 0.0
  %v2835 = vsel %vm2771, %v2678, 0.0
  %v2836 = vsel %vm2772, %v2677, 0.0
  %v2837 = vsel %vm2773, %v2676, 0.0
  %v2838 = vsel %vm2774, %v2675, 0.0
  %v2839 = vsel %vm2775, %v2674, 0.0
  %v2840 = vsel %vm2776, %v2673, 0.0
  %v2841 = vsel %vm2777, %v2672, 0.0
  %v2842 = vsel %vm2778, %v2671, 0.0
  %v2843 = vsel %vm2779, %v2670, 0.0
  %v2844 = vsel %vm2780, %v2669, 0.0
  %v2845 = vsel %vm2781, %v2668, 0.0
  %v2846 = vsel %vm2782, %v2667, 0.0
  %v2847 = vsel %vm2783, %v2666, 0.0
  %v2848 = vsel %vm2784, %v2665, 0.0
  %v2849 = vsel %vm2785, %v2664, 0.0
  %v2850 = vsel %vm2786, %v2663, 0.0
  %v2851 = vsel %vm2787, %v2662, 0.0
  %v2852 = vsel %vm2788, %v2661, 0.0
  %v2853 = vsel %vm2789, %v2660, 0.0
  %v2854 = vsel %vm2790, %v2659, 0.0
  %v2855 = vsel %vm2791, %v2658, 0.0
  %v2856 = vsel %vm2792, %v2657, 0.0
  %v2857 = vsel %vm2793, %v2656, 0.0
  %v2858 = vsel %vm2794, %v2655, 0.0
  %v2859 = vsel %vm2795, %v2654, 0.0
  %v2860 = vsel %vm2796, %v2653, 0.0
  %v2861 = vsel %vm2797, %v2652, 0.0
  %v2862 = vsel %vm2798, %v2651, 0.0
  %v2863 = vsel %vm2799, %v2650, 0.0
  %v2864 = vsel %vm2800, %v2649, 0.0
  %v2865 = vsel %vm2801, %v2648, 0.0
  %v2866 = vsel %vm2802, %v2647, 0.0
  %v2867 = vsel %vm2803, %v2646, 0.0
  %v2868 = vsel %vm2804, %v2645, 0.0
  %v2869 = vsel %vm2805, %v2644, 0.0
  %v2870 = vsel %vm2806, %v2643, 0.0
  %v2871 = vsel %vm2807, %v2642, 0.0
  %v2872 = vsel %vm2808, %v2641, 0.0
  %v2873 = vsel %vm2809, %v2640, 0.0
  %v2874 = vsel %vm2810, %v2639, 0.0
  %v2875 = vsel %vm2811, %v2638, 0.0
  %v2876 = vsel %vm2812, %v2637, 0.0
  %v2877 = vsel %vm2813, %v2636, 0.0
  %v2878 = vsel %vm2814, %v2635, 0.0
  %v2879 = vsel %vm2815, %v2634, 0.0
  %v2880 = vsel %vm2816, %v2633, 0.0
  %v2881 = vsel %vm2817, %v2632, 0.0
  %v2882 = vsel %vm2818, %v2631, 0.0
  %v2883 = vsel %vm2819, %v2630, 0.0
  %v2884 = vsel %vm2820, %v2629, 0.0
  %v2885 = vrot.slane %v643, 1
  %v2886 = vrot.slane %v644, 1
  %v2887 = vrot.slane %v645, 1
  %v2888 = vrot.slane %v646, 1
  %v2889 = vrot.slane %v647, 1
  %v2890 = vrot.slane %v648, 1
  %v2891 = vrot.slane %v649, 1
  %v2892 = vrot.slane %v650, 1
  %v2893 = vrot.slane %v651, 1
  %v2894 = vrot.slane %v652, 1
  %v2895 = vrot.slane %v653, 1
  %v2896 = vrot.slane %v654, 1
  %v2897 = vrot.slane %v655, 1
  %v2898 = vrot.slane %v656, 1
  %v2899 = vrot.slane %v657, 1
  %v2900 = vrot.slane %v658, 1
  %v2901 = vrot.slane %v659, 1
  %v2902 = vrot.slane %v660, 1
  %v2903 = vrot.slane %v661, 1
  %v2904 = vrot.slane %v662, 1
  %v2905 = vrot.slane %v663, 1
  %v2906 = vrot.slane %v664, 1
  %v2907 = vrot.slane %v665, 1
  %v2908 = vrot.slane %v666, 1
  %v2909 = vrot.slane %v667, 1
  %v2910 = vrot.slane %v668, 1
  %v2911 = vrot.slane %v669, 1
  %v2912 = vrot.slane %v670, 1
  %v2913 = vrot.slane %v671, 1
  %v2914 = vrot.slane %v672, 1
  %v2915 = vrot.slane %v673, 1
  %v2916 = vrot.slane %v674, 1
  %v2917 = vrot.slane %v675, 1
  %v2918 = vrot.slane %v676, 1
  %v2919 = vrot.slane %v677, 1
  %v2920 = vrot.slane %v678, 1
  %v2921 = vrot.slane %v679, 1
  %v2922 = vrot.slane %v680, 1
  %v2923 = vrot.slane %v681, 1
  %v2924 = vrot.slane %v682, 1
  %v2925 = vrot.slane %v683, 1
  %v2926 = vrot.slane %v684, 1
  %v2927 = vrot.slane %v685, 1
  %v2928 = vrot.slane %v686, 1
  %v2929 = vrot.slane %v687, 1
  %v2930 = vrot.slane %v688, 1
  %v2931 = vrot.slane %v689, 1
  %v2932 = vrot.slane %v690, 1
  %v2933 = vrot.slane %v691, 1
  %v2934 = vrot.slane %v692, 1
  %v2935 = vrot.slane %v693, 1
  %v2936 = vrot.slane %v694, 1
  %v2937 = vrot.slane %v695, 1
  %v2938 = vrot.slane %v696, 1
  %v2939 = vrot.slane %v697, 1
  %v2940 = vrot.slane %v698, 1
  %v2941 = vrot.slane %v699, 1
  %v2942 = vrot.slane %v700, 1
  %v2943 = vrot.slane %v701, 1
  %v2944 = vrot.slane %v702, 1
  %v2945 = vrot.slane %v703, 1
  %v2946 = vrot.slane %v704, 1
  %v2947 = vrot.slane %v705, 1
  %v2948 = vrot.slane %v706, 1
  %vm2949 = vcmp.lt.s32.totalorder %v708, 7
  %v2950 = vsel %vm2949, %v2947, %v2948
  %v2951 = vsel %vm2949, %v2946, %v2947
  %v2952 = vsel %vm2949, %v2945, %v2946
  %v2953 = vsel %vm2949, %v2944, %v2945
  %v2954 = vsel %vm2949, %v2943, %v2944
  %v2955 = vsel %vm2949, %v2942, %v2943
  %v2956 = vsel %vm2949, %v2941, %v2942
  %v2957 = vsel %vm2949, %v2940, %v2941
  %v2958 = vsel %vm2949, %v2939, %v2940
  %v2959 = vsel %vm2949, %v2938, %v2939
  %v2960 = vsel %vm2949, %v2937, %v2938
  %v2961 = vsel %vm2949, %v2936, %v2937
  %v2962 = vsel %vm2949, %v2935, %v2936
  %v2963 = vsel %vm2949, %v2934, %v2935
  %v2964 = vsel %vm2949, %v2933, %v2934
  %v2965 = vsel %vm2949, %v2932, %v2933
  %v2966 = vsel %vm2949, %v2931, %v2932
  %v2967 = vsel %vm2949, %v2930, %v2931
  %v2968 = vsel %vm2949, %v2929, %v2930
  %v2969 = vsel %vm2949, %v2928, %v2929
  %v2970 = vsel %vm2949, %v2927, %v2928
  %v2971 = vsel %vm2949, %v2926, %v2927
  %v2972 = vsel %vm2949, %v2925, %v2926
  %v2973 = vsel %vm2949, %v2924, %v2925
  %v2974 = vsel %vm2949, %v2923, %v2924
  %v2975 = vsel %vm2949, %v2922, %v2923
  %v2976 = vsel %vm2949, %v2921, %v2922
  %v2977 = vsel %vm2949, %v2920, %v2921
  %v2978 = vsel %vm2949, %v2919, %v2920
  %v2979 = vsel %vm2949, %v2918, %v2919
  %v2980 = vsel %vm2949, %v2917, %v2918
  %v2981 = vsel %vm2949, %v2916, %v2917
  %v2982 = vsel %vm2949, %v2915, %v2916
  %v2983 = vsel %vm2949, %v2914, %v2915
  %v2984 = vsel %vm2949, %v2913, %v2914
  %v2985 = vsel %vm2949, %v2912, %v2913
  %v2986 = vsel %vm2949, %v2911, %v2912
  %v2987 = vsel %vm2949, %v2910, %v2911
  %v2988 = vsel %vm2949, %v2909, %v2910
  %v2989 = vsel %vm2949, %v2908, %v2909
  %v2990 = vsel %vm2949, %v2907, %v2908
  %v2991 = vsel %vm2949, %v2906, %v2907
  %v2992 = vsel %vm2949, %v2905, %v2906
  %v2993 = vsel %vm2949, %v2904, %v2905
  %v2994 = vsel %vm2949, %v2903, %v2904
  %v2995 = vsel %vm2949, %v2902, %v2903
  %v2996 = vsel %vm2949, %v2901, %v2902
  %v2997 = vsel %vm2949, %v2900, %v2901
  %v2998 = vsel %vm2949, %v2899, %v2900
  %v2999 = vsel %vm2949, %v2898, %v2899
  %v3000 = vsel %vm2949, %v2897, %v2898
  %v3001 = vsel %vm2949, %v2896, %v2897
  %v3002 = vsel %vm2949, %v2895, %v2896
  %v3003 = vsel %vm2949, %v2894, %v2895
  %v3004 = vsel %vm2949, %v2893, %v2894
  %v3005 = vsel %vm2949, %v2892, %v2893
  %v3006 = vsel %vm2949, %v2891, %v2892
  %v3007 = vsel %vm2949, %v2890, %v2891
  %v3008 = vsel %vm2949, %v2889, %v2890
  %v3009 = vsel %vm2949, %v2888, %v2889
  %v3010 = vsel %vm2949, %v2887, %v2888
  %v3011 = vsel %vm2949, %v2886, %v2887
  %v3012 = vsel %vm2949, %v2885, %v2886
  %v3013 = vsel %vm2949, %v2948, %v2885
  %v3014 = vsel %vm2372, 1, 0
  %v3015 = vsel %vm2373, 1, 0
  %v3016 = vsel %vm2374, 1, 0
  %v3017 = vsel %vm2375, 1, 0
  %v3018 = vsel %vm2376, 1, 0
  %v3019 = vsel %vm2377, 1, 0
  %v3020 = vsel %vm2378, 1, 0
  %v3021 = vsel %vm2379, 1, 0
  %v3022 = vsel %vm2380, 1, 0
  %v3023 = vsel %vm2381, 1, 0
  %v3024 = vsel %vm2382, 1, 0
  %v3025 = vsel %vm2383, 1, 0
  %v3026 = vsel %vm2384, 1, 0
  %v3027 = vsel %vm2385, 1, 0
  %v3028 = vsel %vm2386, 1, 0
  %v3029 = vsel %vm2387, 1, 0
  %v3030 = vsel %vm2388, 1, 0
  %v3031 = vsel %vm2389, 1, 0
  %v3032 = vsel %vm2390, 1, 0
  %v3033 = vsel %vm2391, 1, 0
  %v3034 = vsel %vm2392, 1, 0
  %v3035 = vsel %vm2393, 1, 0
  %v3036 = vsel %vm2394, 1, 0
  %v3037 = vsel %vm2395, 1, 0
  %v3038 = vsel %vm2396, 1, 0
  %v3039 = vsel %vm2397, 1, 0
  %v3040 = vsel %vm2398, 1, 0
  %v3041 = vsel %vm2399, 1, 0
  %v3042 = vsel %vm2400, 1, 0
  %v3043 = vsel %vm2401, 1, 0
  %v3044 = vsel %vm2402, 1, 0
  %v3045 = vsel %vm2403, 1, 0
  %v3046 = vsel %vm2404, 1, 0
  %v3047 = vsel %vm2405, 1, 0
  %v3048 = vsel %vm2406, 1, 0
  %v3049 = vsel %vm2407, 1, 0
  %v3050 = vsel %vm2408, 1, 0
  %v3051 = vsel %vm2409, 1, 0
  %v3052 = vsel %vm2410, 1, 0
  %v3053 = vsel %vm2411, 1, 0
  %v3054 = vsel %vm2412, 1, 0
  %v3055 = vsel %vm2413, 1, 0
  %v3056 = vsel %vm2414, 1, 0
  %v3057 = vsel %vm2415, 1, 0
  %v3058 = vsel %vm2416, 1, 0
  %v3059 = vsel %vm2417, 1, 0
  %v3060 = vsel %vm2418, 1, 0
  %v3061 = vsel %vm2419, 1, 0
  %v3062 = vsel %vm2420, 1, 0
  %v3063 = vsel %vm2421, 1, 0
  %v3064 = vsel %vm2422, 1, 0
  %v3065 = vsel %vm2423, 1, 0
  %v3066 = vsel %vm2424, 1, 0
  %v3067 = vsel %vm2425, 1, 0
  %v3068 = vsel %vm2426, 1, 0
  %v3069 = vsel %vm2427, 1, 0
  %v3070 = vsel %vm2428, 1, 0
  %v3071 = vsel %vm2429, 1, 0
  %v3072 = vsel %vm2430, 1, 0
  %v3073 = vsel %vm2431, 1, 0
  %v3074 = vsel %vm2432, 1, 0
  %v3075 = vsel %vm2433, 1, 0
  %v3076 = vsel %vm2434, 1, 0
  %v3077 = vsel %vm2435, 1, 0
  %vm3078 = vcmp.eq.s32.totalorder %v3014, 1
  %vm3079 = vcmp.eq.s32.totalorder %v3015, 1
  %vm3080 = vcmp.eq.s32.totalorder %v3016, 1
  %vm3081 = vcmp.eq.s32.totalorder %v3017, 1
  %vm3082 = vcmp.eq.s32.totalorder %v3018, 1
  %vm3083 = vcmp.eq.s32.totalorder %v3019, 1
  %vm3084 = vcmp.eq.s32.totalorder %v3020, 1
  %vm3085 = vcmp.eq.s32.totalorder %v3021, 1
  %vm3086 = vcmp.eq.s32.totalorder %v3022, 1
  %vm3087 = vcmp.eq.s32.totalorder %v3023, 1
  %vm3088 = vcmp.eq.s32.totalorder %v3024, 1
  %vm3089 = vcmp.eq.s32.totalorder %v3025, 1
  %vm3090 = vcmp.eq.s32.totalorder %v3026, 1
  %vm3091 = vcmp.eq.s32.totalorder %v3027, 1
  %vm3092 = vcmp.eq.s32.totalorder %v3028, 1
  %vm3093 = vcmp.eq.s32.totalorder %v3029, 1
  %vm3094 = vcmp.eq.s32.totalorder %v3030, 1
  %vm3095 = vcmp.eq.s32.totalorder %v3031, 1
  %vm3096 = vcmp.eq.s32.totalorder %v3032, 1
  %vm3097 = vcmp.eq.s32.totalorder %v3033, 1
  %vm3098 = vcmp.eq.s32.totalorder %v3034, 1
  %vm3099 = vcmp.eq.s32.totalorder %v3035, 1
  %vm3100 = vcmp.eq.s32.totalorder %v3036, 1
  %vm3101 = vcmp.eq.s32.totalorder %v3037, 1
  %vm3102 = vcmp.eq.s32.totalorder %v3038, 1
  %vm3103 = vcmp.eq.s32.totalorder %v3039, 1
  %vm3104 = vcmp.eq.s32.totalorder %v3040, 1
  %vm3105 = vcmp.eq.s32.totalorder %v3041, 1
  %vm3106 = vcmp.eq.s32.totalorder %v3042, 1
  %vm3107 = vcmp.eq.s32.totalorder %v3043, 1
  %vm3108 = vcmp.eq.s32.totalorder %v3044, 1
  %vm3109 = vcmp.eq.s32.totalorder %v3045, 1
  %vm3110 = vcmp.eq.s32.totalorder %v3046, 1
  %vm3111 = vcmp.eq.s32.totalorder %v3047, 1
  %vm3112 = vcmp.eq.s32.totalorder %v3048, 1
  %vm3113 = vcmp.eq.s32.totalorder %v3049, 1
  %vm3114 = vcmp.eq.s32.totalorder %v3050, 1
  %vm3115 = vcmp.eq.s32.totalorder %v3051, 1
  %vm3116 = vcmp.eq.s32.totalorder %v3052, 1
  %vm3117 = vcmp.eq.s32.totalorder %v3053, 1
  %vm3118 = vcmp.eq.s32.totalorder %v3054, 1
  %vm3119 = vcmp.eq.s32.totalorder %v3055, 1
  %vm3120 = vcmp.eq.s32.totalorder %v3056, 1
  %vm3121 = vcmp.eq.s32.totalorder %v3057, 1
  %vm3122 = vcmp.eq.s32.totalorder %v3058, 1
  %vm3123 = vcmp.eq.s32.totalorder %v3059, 1
  %vm3124 = vcmp.eq.s32.totalorder %v3060, 1
  %vm3125 = vcmp.eq.s32.totalorder %v3061, 1
  %vm3126 = vcmp.eq.s32.totalorder %v3062, 1
  %vm3127 = vcmp.eq.s32.totalorder %v3063, 1
  %vm3128 = vcmp.eq.s32.totalorder %v3064, 1
  %vm3129 = vcmp.eq.s32.totalorder %v3065, 1
  %vm3130 = vcmp.eq.s32.totalorder %v3066, 1
  %vm3131 = vcmp.eq.s32.totalorder %v3067, 1
  %vm3132 = vcmp.eq.s32.totalorder %v3068, 1
  %vm3133 = vcmp.eq.s32.totalorder %v3069, 1
  %vm3134 = vcmp.eq.s32.totalorder %v3070, 1
  %vm3135 = vcmp.eq.s32.totalorder %v3071, 1
  %vm3136 = vcmp.eq.s32.totalorder %v3072, 1
  %vm3137 = vcmp.eq.s32.totalorder %v3073, 1
  %vm3138 = vcmp.eq.s32.totalorder %v3074, 1
  %vm3139 = vcmp.eq.s32.totalorder %v3075, 1
  %vm3140 = vcmp.eq.s32.totalorder %v3076, 1
  %vm3141 = vcmp.eq.s32.totalorder %v3077, 1
  %v3142 = vsel %vm3078, %v3012, 0.0
  %v3143 = vsel %vm3079, %v3011, 0.0
  %v3144 = vsel %vm3080, %v3010, 0.0
  %v3145 = vsel %vm3081, %v3009, 0.0
  %v3146 = vsel %vm3082, %v3008, 0.0
  %v3147 = vsel %vm3083, %v3007, 0.0
  %v3148 = vsel %vm3084, %v3006, 0.0
  %v3149 = vsel %vm3085, %v3005, 0.0
  %v3150 = vsel %vm3086, %v3004, 0.0
  %v3151 = vsel %vm3087, %v3003, 0.0
  %v3152 = vsel %vm3088, %v3002, 0.0
  %v3153 = vsel %vm3089, %v3001, 0.0
  %v3154 = vsel %vm3090, %v3000, 0.0
  %v3155 = vsel %vm3091, %v2999, 0.0
  %v3156 = vsel %vm3092, %v2998, 0.0
  %v3157 = vsel %vm3093, %v2997, 0.0
  %v3158 = vsel %vm3094, %v2996, 0.0
  %v3159 = vsel %vm3095, %v2995, 0.0
  %v3160 = vsel %vm3096, %v2994, 0.0
  %v3161 = vsel %vm3097, %v2993, 0.0
  %v3162 = vsel %vm3098, %v2992, 0.0
  %v3163 = vsel %vm3099, %v2991, 0.0
  %v3164 = vsel %vm3100, %v2990, 0.0
  %v3165 = vsel %vm3101, %v2989, 0.0
  %v3166 = vsel %vm3102, %v2988, 0.0
  %v3167 = vsel %vm3103, %v2987, 0.0
  %v3168 = vsel %vm3104, %v2986, 0.0
  %v3169 = vsel %vm3105, %v2985, 0.0
  %v3170 = vsel %vm3106, %v2984, 0.0
  %v3171 = vsel %vm3107, %v2983, 0.0
  %v3172 = vsel %vm3108, %v2982, 0.0
  %v3173 = vsel %vm3109, %v2981, 0.0
  %v3174 = vsel %vm3110, %v2980, 0.0
  %v3175 = vsel %vm3111, %v2979, 0.0
  %v3176 = vsel %vm3112, %v2978, 0.0
  %v3177 = vsel %vm3113, %v2977, 0.0
  %v3178 = vsel %vm3114, %v2976, 0.0
  %v3179 = vsel %vm3115, %v2975, 0.0
  %v3180 = vsel %vm3116, %v2974, 0.0
  %v3181 = vsel %vm3117, %v2973, 0.0
  %v3182 = vsel %vm3118, %v2972, 0.0
  %v3183 = vsel %vm3119, %v2971, 0.0
  %v3184 = vsel %vm3120, %v2970, 0.0
  %v3185 = vsel %vm3121, %v2969, 0.0
  %v3186 = vsel %vm3122, %v2968, 0.0
  %v3187 = vsel %vm3123, %v2967, 0.0
  %v3188 = vsel %vm3124, %v2966, 0.0
  %v3189 = vsel %vm3125, %v2965, 0.0
  %v3190 = vsel %vm3126, %v2964, 0.0
  %v3191 = vsel %vm3127, %v2963, 0.0
  %v3192 = vsel %vm3128, %v2962, 0.0
  %v3193 = vsel %vm3129, %v2961, 0.0
  %v3194 = vsel %vm3130, %v2960, 0.0
  %v3195 = vsel %vm3131, %v2959, 0.0
  %v3196 = vsel %vm3132, %v2958, 0.0
  %v3197 = vsel %vm3133, %v2957, 0.0
  %v3198 = vsel %vm3134, %v2956, 0.0
  %v3199 = vsel %vm3135, %v2955, 0.0
  %v3200 = vsel %vm3136, %v2954, 0.0
  %v3201 = vsel %vm3137, %v2953, 0.0
  %v3202 = vsel %vm3138, %v2952, 0.0
  %v3203 = vsel %vm3139, %v2951, 0.0
  %v3204 = vsel %vm3140, %v2950, 0.0
  %v3205 = vsel %vm3141, %v3013, 0.0
  %v3206 = vsel %vm2436, 1, 0
  %v3207 = vsel %vm2437, 1, 0
  %v3208 = vsel %vm2438, 1, 0
  %v3209 = vsel %vm2439, 1, 0
  %v3210 = vsel %vm2440, 1, 0
  %v3211 = vsel %vm2441, 1, 0
  %v3212 = vsel %vm2442, 1, 0
  %v3213 = vsel %vm2443, 1, 0
  %v3214 = vsel %vm2444, 1, 0
  %v3215 = vsel %vm2445, 1, 0
  %v3216 = vsel %vm2446, 1, 0
  %v3217 = vsel %vm2447, 1, 0
  %v3218 = vsel %vm2448, 1, 0
  %v3219 = vsel %vm2449, 1, 0
  %v3220 = vsel %vm2450, 1, 0
  %v3221 = vsel %vm2451, 1, 0
  %v3222 = vsel %vm2452, 1, 0
  %v3223 = vsel %vm2453, 1, 0
  %v3224 = vsel %vm2454, 1, 0
  %v3225 = vsel %vm2455, 1, 0
  %v3226 = vsel %vm2456, 1, 0
  %v3227 = vsel %vm2457, 1, 0
  %v3228 = vsel %vm2458, 1, 0
  %v3229 = vsel %vm2459, 1, 0
  %v3230 = vsel %vm2460, 1, 0
  %v3231 = vsel %vm2461, 1, 0
  %v3232 = vsel %vm2462, 1, 0
  %v3233 = vsel %vm2463, 1, 0
  %v3234 = vsel %vm2464, 1, 0
  %v3235 = vsel %vm2465, 1, 0
  %v3236 = vsel %vm2466, 1, 0
  %v3237 = vsel %vm2467, 1, 0
  %v3238 = vsel %vm2468, 1, 0
  %v3239 = vsel %vm2469, 1, 0
  %v3240 = vsel %vm2470, 1, 0
  %v3241 = vsel %vm2471, 1, 0
  %v3242 = vsel %vm2472, 1, 0
  %v3243 = vsel %vm2473, 1, 0
  %v3244 = vsel %vm2474, 1, 0
  %v3245 = vsel %vm2475, 1, 0
  %v3246 = vsel %vm2476, 1, 0
  %v3247 = vsel %vm2477, 1, 0
  %v3248 = vsel %vm2478, 1, 0
  %v3249 = vsel %vm2479, 1, 0
  %v3250 = vsel %vm2480, 1, 0
  %v3251 = vsel %vm2481, 1, 0
  %v3252 = vsel %vm2482, 1, 0
  %v3253 = vsel %vm2483, 1, 0
  %v3254 = vsel %vm2484, 1, 0
  %v3255 = vsel %vm2485, 1, 0
  %v3256 = vsel %vm2486, 1, 0
  %v3257 = vsel %vm2487, 1, 0
  %v3258 = vsel %vm2488, 1, 0
  %v3259 = vsel %vm2489, 1, 0
  %v3260 = vsel %vm2490, 1, 0
  %v3261 = vsel %vm2491, 1, 0
  %v3262 = vsel %vm2492, 1, 0
  %v3263 = vsel %vm2493, 1, 0
  %v3264 = vsel %vm2494, 1, 0
  %v3265 = vsel %vm2495, 1, 0
  %v3266 = vsel %vm2496, 1, 0
  %v3267 = vsel %vm2497, 1, 0
  %v3268 = vsel %vm2498, 1, 0
  %v3269 = vsel %vm2499, 1, 0
  %vm3270 = vcmp.eq.s32.totalorder %v3206, 1
  %vm3271 = vcmp.eq.s32.totalorder %v3207, 1
  %vm3272 = vcmp.eq.s32.totalorder %v3208, 1
  %vm3273 = vcmp.eq.s32.totalorder %v3209, 1
  %vm3274 = vcmp.eq.s32.totalorder %v3210, 1
  %vm3275 = vcmp.eq.s32.totalorder %v3211, 1
  %vm3276 = vcmp.eq.s32.totalorder %v3212, 1
  %vm3277 = vcmp.eq.s32.totalorder %v3213, 1
  %vm3278 = vcmp.eq.s32.totalorder %v3214, 1
  %vm3279 = vcmp.eq.s32.totalorder %v3215, 1
  %vm3280 = vcmp.eq.s32.totalorder %v3216, 1
  %vm3281 = vcmp.eq.s32.totalorder %v3217, 1
  %vm3282 = vcmp.eq.s32.totalorder %v3218, 1
  %vm3283 = vcmp.eq.s32.totalorder %v3219, 1
  %vm3284 = vcmp.eq.s32.totalorder %v3220, 1
  %vm3285 = vcmp.eq.s32.totalorder %v3221, 1
  %vm3286 = vcmp.eq.s32.totalorder %v3222, 1
  %vm3287 = vcmp.eq.s32.totalorder %v3223, 1
  %vm3288 = vcmp.eq.s32.totalorder %v3224, 1
  %vm3289 = vcmp.eq.s32.totalorder %v3225, 1
  %vm3290 = vcmp.eq.s32.totalorder %v3226, 1
  %vm3291 = vcmp.eq.s32.totalorder %v3227, 1
  %vm3292 = vcmp.eq.s32.totalorder %v3228, 1
  %vm3293 = vcmp.eq.s32.totalorder %v3229, 1
  %vm3294 = vcmp.eq.s32.totalorder %v3230, 1
  %vm3295 = vcmp.eq.s32.totalorder %v3231, 1
  %vm3296 = vcmp.eq.s32.totalorder %v3232, 1
  %vm3297 = vcmp.eq.s32.totalorder %v3233, 1
  %vm3298 = vcmp.eq.s32.totalorder %v3234, 1
  %vm3299 = vcmp.eq.s32.totalorder %v3235, 1
  %vm3300 = vcmp.eq.s32.totalorder %v3236, 1
  %vm3301 = vcmp.eq.s32.totalorder %v3237, 1
  %vm3302 = vcmp.eq.s32.totalorder %v3238, 1
  %vm3303 = vcmp.eq.s32.totalorder %v3239, 1
  %vm3304 = vcmp.eq.s32.totalorder %v3240, 1
  %vm3305 = vcmp.eq.s32.totalorder %v3241, 1
  %vm3306 = vcmp.eq.s32.totalorder %v3242, 1
  %vm3307 = vcmp.eq.s32.totalorder %v3243, 1
  %vm3308 = vcmp.eq.s32.totalorder %v3244, 1
  %vm3309 = vcmp.eq.s32.totalorder %v3245, 1
  %vm3310 = vcmp.eq.s32.totalorder %v3246, 1
  %vm3311 = vcmp.eq.s32.totalorder %v3247, 1
  %vm3312 = vcmp.eq.s32.totalorder %v3248, 1
  %vm3313 = vcmp.eq.s32.totalorder %v3249, 1
  %vm3314 = vcmp.eq.s32.totalorder %v3250, 1
  %vm3315 = vcmp.eq.s32.totalorder %v3251, 1
  %vm3316 = vcmp.eq.s32.totalorder %v3252, 1
  %vm3317 = vcmp.eq.s32.totalorder %v3253, 1
  %vm3318 = vcmp.eq.s32.totalorder %v3254, 1
  %vm3319 = vcmp.eq.s32.totalorder %v3255, 1
  %vm3320 = vcmp.eq.s32.totalorder %v3256, 1
  %vm3321 = vcmp.eq.s32.totalorder %v3257, 1
  %vm3322 = vcmp.eq.s32.totalorder %v3258, 1
  %vm3323 = vcmp.eq.s32.totalorder %v3259, 1
  %vm3324 = vcmp.eq.s32.totalorder %v3260, 1
  %vm3325 = vcmp.eq.s32.totalorder %v3261, 1
  %vm3326 = vcmp.eq.s32.totalorder %v3262, 1
  %vm3327 = vcmp.eq.s32.totalorder %v3263, 1
  %vm3328 = vcmp.eq.s32.totalorder %v3264, 1
  %vm3329 = vcmp.eq.s32.totalorder %v3265, 1
  %vm3330 = vcmp.eq.s32.totalorder %v3266, 1
  %vm3331 = vcmp.eq.s32.totalorder %v3267, 1
  %vm3332 = vcmp.eq.s32.totalorder %v3268, 1
  %vm3333 = vcmp.eq.s32.totalorder %v3269, 1
  %v3334 = vsel %vm3270, %v2883, 0.0
  %v3335 = vsel %vm3270, %v705, 0.0
  %v3336 = vsel %vm3270, %v3204, 0.0
  %v3337 = vsel %vm3271, %v2884, 0.0
  %v3338 = vsel %vm3271, %v706, 0.0
  %v3339 = vsel %vm3271, %v3205, 0.0
  %v3340 = vsel %vm3272, %v2821, 0.0
  %v3341 = vsel %vm3272, %v643, 0.0
  %v3342 = vsel %vm3272, %v3142, 0.0
  %v3343 = vsel %vm3273, %v2822, 0.0
  %v3344 = vsel %vm3273, %v644, 0.0
  %v3345 = vsel %vm3273, %v3143, 0.0
  %v3346 = vsel %vm3274, %v2823, 0.0
  %v3347 = vsel %vm3274, %v645, 0.0
  %v3348 = vsel %vm3274, %v3144, 0.0
  %v3349 = vsel %vm3275, %v2824, 0.0
  %v3350 = vsel %vm3275, %v646, 0.0
  %v3351 = vsel %vm3275, %v3145, 0.0
  %v3352 = vsel %vm3276, %v2825, 0.0
  %v3353 = vsel %vm3276, %v647, 0.0
  %v3354 = vsel %vm3276, %v3146, 0.0
  %v3355 = vsel %vm3277, %v2826, 0.0
  %v3356 = vsel %vm3277, %v648, 0.0
  %v3357 = vsel %vm3277, %v3147, 0.0
  %v3358 = vsel %vm3278, %v2827, 0.0
  %v3359 = vsel %vm3278, %v649, 0.0
  %v3360 = vsel %vm3278, %v3148, 0.0
  %v3361 = vsel %vm3279, %v2828, 0.0
  %v3362 = vsel %vm3279, %v650, 0.0
  %v3363 = vsel %vm3279, %v3149, 0.0
  %v3364 = vsel %vm3280, %v2829, 0.0
  %v3365 = vsel %vm3280, %v651, 0.0
  %v3366 = vsel %vm3280, %v3150, 0.0
  %v3367 = vsel %vm3281, %v2830, 0.0
  %v3368 = vsel %vm3281, %v652, 0.0
  %v3369 = vsel %vm3281, %v3151, 0.0
  %v3370 = vsel %vm3282, %v2831, 0.0
  %v3371 = vsel %vm3282, %v653, 0.0
  %v3372 = vsel %vm3282, %v3152, 0.0
  %v3373 = vsel %vm3283, %v2832, 0.0
  %v3374 = vsel %vm3283, %v654, 0.0
  %v3375 = vsel %vm3283, %v3153, 0.0
  %v3376 = vsel %vm3284, %v2833, 0.0
  %v3377 = vsel %vm3284, %v655, 0.0
  %v3378 = vsel %vm3284, %v3154, 0.0
  %v3379 = vsel %vm3285, %v2834, 0.0
  %v3380 = vsel %vm3285, %v656, 0.0
  %v3381 = vsel %vm3285, %v3155, 0.0
  %v3382 = vsel %vm3286, %v2835, 0.0
  %v3383 = vsel %vm3286, %v657, 0.0
  %v3384 = vsel %vm3286, %v3156, 0.0
  %v3385 = vsel %vm3287, %v2836, 0.0
  %v3386 = vsel %vm3287, %v658, 0.0
  %v3387 = vsel %vm3287, %v3157, 0.0
  %v3388 = vsel %vm3288, %v2837, 0.0
  %v3389 = vsel %vm3288, %v659, 0.0
  %v3390 = vsel %vm3288, %v3158, 0.0
  %v3391 = vsel %vm3289, %v2838, 0.0
  %v3392 = vsel %vm3289, %v660, 0.0
  %v3393 = vsel %vm3289, %v3159, 0.0
  %v3394 = vsel %vm3290, %v2839, 0.0
  %v3395 = vsel %vm3290, %v661, 0.0
  %v3396 = vsel %vm3290, %v3160, 0.0
  %v3397 = vsel %vm3291, %v2840, 0.0
  %v3398 = vsel %vm3291, %v662, 0.0
  %v3399 = vsel %vm3291, %v3161, 0.0
  %v3400 = vsel %vm3292, %v2841, 0.0
  %v3401 = vsel %vm3292, %v663, 0.0
  %v3402 = vsel %vm3292, %v3162, 0.0
  %v3403 = vsel %vm3293, %v2842, 0.0
  %v3404 = vsel %vm3293, %v664, 0.0
  %v3405 = vsel %vm3293, %v3163, 0.0
  %v3406 = vsel %vm3294, %v2843, 0.0
  %v3407 = vsel %vm3294, %v665, 0.0
  %v3408 = vsel %vm3294, %v3164, 0.0
  %v3409 = vsel %vm3295, %v2844, 0.0
  %v3410 = vsel %vm3295, %v666, 0.0
  %v3411 = vsel %vm3295, %v3165, 0.0
  %v3412 = vsel %vm3296, %v2845, 0.0
  %v3413 = vsel %vm3296, %v667, 0.0
  %v3414 = vsel %vm3296, %v3166, 0.0
  %v3415 = vsel %vm3297, %v2846, 0.0
  %v3416 = vsel %vm3297, %v668, 0.0
  %v3417 = vsel %vm3297, %v3167, 0.0
  %v3418 = vsel %vm3298, %v2847, 0.0
  %v3419 = vsel %vm3298, %v669, 0.0
  %v3420 = vsel %vm3298, %v3168, 0.0
  %v3421 = vsel %vm3299, %v2848, 0.0
  %v3422 = vsel %vm3299, %v670, 0.0
  %v3423 = vsel %vm3299, %v3169, 0.0
  %v3424 = vsel %vm3300, %v2849, 0.0
  %v3425 = vsel %vm3300, %v671, 0.0
  %v3426 = vsel %vm3300, %v3170, 0.0
  %v3427 = vsel %vm3301, %v2850, 0.0
  %v3428 = vsel %vm3301, %v672, 0.0
  %v3429 = vsel %vm3301, %v3171, 0.0
  %v3430 = vsel %vm3302, %v2851, 0.0
  %v3431 = vsel %vm3302, %v673, 0.0
  %v3432 = vsel %vm3302, %v3172, 0.0
  %v3433 = vsel %vm3303, %v2852, 0.0
  %v3434 = vsel %vm3303, %v674, 0.0
  %v3435 = vsel %vm3303, %v3173, 0.0
  %v3436 = vsel %vm3304, %v2853, 0.0
  %v3437 = vsel %vm3304, %v675, 0.0
  %v3438 = vsel %vm3304, %v3174, 0.0
  %v3439 = vsel %vm3305, %v2854, 0.0
  %v3440 = vsel %vm3305, %v676, 0.0
  %v3441 = vsel %vm3305, %v3175, 0.0
  %v3442 = vsel %vm3306, %v2855, 0.0
  %v3443 = vsel %vm3306, %v677, 0.0
  %v3444 = vsel %vm3306, %v3176, 0.0
  %v3445 = vsel %vm3307, %v2856, 0.0
  %v3446 = vsel %vm3307, %v678, 0.0
  %v3447 = vsel %vm3307, %v3177, 0.0
  %v3448 = vsel %vm3308, %v2857, 0.0
  %v3449 = vsel %vm3308, %v679, 0.0
  %v3450 = vsel %vm3308, %v3178, 0.0
  %v3451 = vsel %vm3309, %v2858, 0.0
  %v3452 = vsel %vm3309, %v680, 0.0
  %v3453 = vsel %vm3309, %v3179, 0.0
  %v3454 = vsel %vm3310, %v2859, 0.0
  %v3455 = vsel %vm3310, %v681, 0.0
  %v3456 = vsel %vm3310, %v3180, 0.0
  %v3457 = vsel %vm3311, %v2860, 0.0
  %v3458 = vsel %vm3311, %v682, 0.0
  %v3459 = vsel %vm3311, %v3181, 0.0
  %v3460 = vsel %vm3312, %v2861, 0.0
  %v3461 = vsel %vm3312, %v683, 0.0
  %v3462 = vsel %vm3312, %v3182, 0.0
  %v3463 = vsel %vm3313, %v2862, 0.0
  %v3464 = vsel %vm3313, %v684, 0.0
  %v3465 = vsel %vm3313, %v3183, 0.0
  %v3466 = vsel %vm3314, %v2863, 0.0
  %v3467 = vsel %vm3314, %v685, 0.0
  %v3468 = vsel %vm3314, %v3184, 0.0
  %v3469 = vsel %vm3315, %v2864, 0.0
  %v3470 = vsel %vm3315, %v686, 0.0
  %v3471 = vsel %vm3315, %v3185, 0.0
  %v3472 = vsel %vm3316, %v2865, 0.0
  %v3473 = vsel %vm3316, %v687, 0.0
  %v3474 = vsel %vm3316, %v3186, 0.0
  %v3475 = vsel %vm3317, %v2866, 0.0
  %v3476 = vsel %vm3317, %v688, 0.0
  %v3477 = vsel %vm3317, %v3187, 0.0
  %v3478 = vsel %vm3318, %v2867, 0.0
  %v3479 = vsel %vm3318, %v689, 0.0
  %v3480 = vsel %vm3318, %v3188, 0.0
  %v3481 = vsel %vm3319, %v2868, 0.0
  %v3482 = vsel %vm3319, %v690, 0.0
  %v3483 = vsel %vm3319, %v3189, 0.0
  %v3484 = vsel %vm3320, %v2869, 0.0
  %v3485 = vsel %vm3320, %v691, 0.0
  %v3486 = vsel %vm3320, %v3190, 0.0
  %v3487 = vsel %vm3321, %v2870, 0.0
  %v3488 = vsel %vm3321, %v692, 0.0
  %v3489 = vsel %vm3321, %v3191, 0.0
  %v3490 = vsel %vm3322, %v2871, 0.0
  %v3491 = vsel %vm3322, %v693, 0.0
  %v3492 = vsel %vm3322, %v3192, 0.0
  %v3493 = vsel %vm3323, %v2872, 0.0
  %v3494 = vsel %vm3323, %v694, 0.0
  %v3495 = vsel %vm3323, %v3193, 0.0
  %v3496 = vsel %vm3324, %v2873, 0.0
  %v3497 = vsel %vm3324, %v695, 0.0
  %v3498 = vsel %vm3324, %v3194, 0.0
  %v3499 = vsel %vm3325, %v2874, 0.0
  %v3500 = vsel %vm3325, %v696, 0.0
  %v3501 = vsel %vm3325, %v3195, 0.0
  %v3502 = vsel %vm3326, %v2875, 0.0
  %v3503 = vsel %vm3326, %v697, 0.0
  %v3504 = vsel %vm3326, %v3196, 0.0
  %v3505 = vsel %vm3327, %v2876, 0.0
  %v3506 = vsel %vm3327, %v698, 0.0
  %v3507 = vsel %vm3327, %v3197, 0.0
  %v3508 = vsel %vm3328, %v2877, 0.0
  %v3509 = vsel %vm3328, %v699, 0.0
  %v3510 = vsel %vm3328, %v3198, 0.0
  %v3511 = vsel %vm3329, %v2878, 0.0
  %v3512 = vsel %vm3329, %v700, 0.0
  %v3513 = vsel %vm3329, %v3199, 0.0
  %v3514 = vsel %vm3330, %v2879, 0.0
  %v3515 = vsel %vm3330, %v701, 0.0
  %v3516 = vsel %vm3330, %v3200, 0.0
  %v3517 = vsel %vm3331, %v2880, 0.0
  %v3518 = vsel %vm3331, %v702, 0.0
  %v3519 = vsel %vm3331, %v3201, 0.0
  %v3520 = vsel %vm3332, %v2881, 0.0
  %v3521 = vsel %vm3332, %v703, 0.0
  %v3522 = vsel %vm3332, %v3202, 0.0
  %v3523 = vsel %vm3333, %v2882, 0.0
  %v3524 = vsel %vm3333, %v704, 0.0
  %v3525 = vsel %vm3333, %v3203, 0.0
  %v3526 = vsel %vm2500, 1, 0
  %v3527 = vsel %vm2501, 1, 0
  %v3528 = vsel %vm2502, 1, 0
  %v3529 = vsel %vm2503, 1, 0
  %v3530 = vsel %vm2504, 1, 0
  %v3531 = vsel %vm2505, 1, 0
  %v3532 = vsel %vm2506, 1, 0
  %v3533 = vsel %vm2507, 1, 0
  %v3534 = vsel %vm2508, 1, 0
  %v3535 = vsel %vm2509, 1, 0
  %v3536 = vsel %vm2510, 1, 0
  %v3537 = vsel %vm2511, 1, 0
  %v3538 = vsel %vm2512, 1, 0
  %v3539 = vsel %vm2513, 1, 0
  %v3540 = vsel %vm2514, 1, 0
  %v3541 = vsel %vm2515, 1, 0
  %v3542 = vsel %vm2516, 1, 0
  %v3543 = vsel %vm2517, 1, 0
  %v3544 = vsel %vm2518, 1, 0
  %v3545 = vsel %vm2519, 1, 0
  %v3546 = vsel %vm2520, 1, 0
  %v3547 = vsel %vm2521, 1, 0
  %v3548 = vsel %vm2522, 1, 0
  %v3549 = vsel %vm2523, 1, 0
  %v3550 = vsel %vm2524, 1, 0
  %v3551 = vsel %vm2525, 1, 0
  %v3552 = vsel %vm2526, 1, 0
  %v3553 = vsel %vm2527, 1, 0
  %v3554 = vsel %vm2528, 1, 0
  %v3555 = vsel %vm2529, 1, 0
  %v3556 = vsel %vm2530, 1, 0
  %v3557 = vsel %vm2531, 1, 0
  %v3558 = vsel %vm2532, 1, 0
  %v3559 = vsel %vm2533, 1, 0
  %v3560 = vsel %vm2534, 1, 0
  %v3561 = vsel %vm2535, 1, 0
  %v3562 = vsel %vm2536, 1, 0
  %v3563 = vsel %vm2537, 1, 0
  %v3564 = vsel %vm2538, 1, 0
  %v3565 = vsel %vm2539, 1, 0
  %v3566 = vsel %vm2540, 1, 0
  %v3567 = vsel %vm2541, 1, 0
  %v3568 = vsel %vm2542, 1, 0
  %v3569 = vsel %vm2543, 1, 0
  %v3570 = vsel %vm2544, 1, 0
  %v3571 = vsel %vm2545, 1, 0
  %v3572 = vsel %vm2546, 1, 0
  %v3573 = vsel %vm2547, 1, 0
  %v3574 = vsel %vm2548, 1, 0
  %v3575 = vsel %vm2549, 1, 0
  %v3576 = vsel %vm2550, 1, 0
  %v3577 = vsel %vm2551, 1, 0
  %v3578 = vsel %vm2552, 1, 0
  %v3579 = vsel %vm2553, 1, 0
  %v3580 = vsel %vm2554, 1, 0
  %v3581 = vsel %vm2555, 1, 0
  %v3582 = vsel %vm2556, 1, 0
  %v3583 = vsel %vm2557, 1, 0
  %v3584 = vsel %vm2558, 1, 0
  %v3585 = vsel %vm2559, 1, 0
  %v3586 = vsel %vm2560, 1, 0
  %v3587 = vsel %vm2561, 1, 0
  %v3588 = vsel %vm2562, 1, 0
  %v3589 = vsel %vm2563, 1, 0
  %vm3590 = vcmp.eq.s32.totalorder %v3526, 1
  %vm3591 = vcmp.eq.s32.totalorder %v3527, 1
  %vm3592 = vcmp.eq.s32.totalorder %v3528, 1
  %vm3593 = vcmp.eq.s32.totalorder %v3529, 1
  %vm3594 = vcmp.eq.s32.totalorder %v3530, 1
  %vm3595 = vcmp.eq.s32.totalorder %v3531, 1
  %vm3596 = vcmp.eq.s32.totalorder %v3532, 1
  %vm3597 = vcmp.eq.s32.totalorder %v3533, 1
  %vm3598 = vcmp.eq.s32.totalorder %v3534, 1
  %vm3599 = vcmp.eq.s32.totalorder %v3535, 1
  %vm3600 = vcmp.eq.s32.totalorder %v3536, 1
  %vm3601 = vcmp.eq.s32.totalorder %v3537, 1
  %vm3602 = vcmp.eq.s32.totalorder %v3538, 1
  %vm3603 = vcmp.eq.s32.totalorder %v3539, 1
  %vm3604 = vcmp.eq.s32.totalorder %v3540, 1
  %vm3605 = vcmp.eq.s32.totalorder %v3541, 1
  %vm3606 = vcmp.eq.s32.totalorder %v3542, 1
  %vm3607 = vcmp.eq.s32.totalorder %v3543, 1
  %vm3608 = vcmp.eq.s32.totalorder %v3544, 1
  %vm3609 = vcmp.eq.s32.totalorder %v3545, 1
  %vm3610 = vcmp.eq.s32.totalorder %v3546, 1
  %vm3611 = vcmp.eq.s32.totalorder %v3547, 1
  %vm3612 = vcmp.eq.s32.totalorder %v3548, 1
  %vm3613 = vcmp.eq.s32.totalorder %v3549, 1
  %vm3614 = vcmp.eq.s32.totalorder %v3550, 1
  %vm3615 = vcmp.eq.s32.totalorder %v3551, 1
  %vm3616 = vcmp.eq.s32.totalorder %v3552, 1
  %vm3617 = vcmp.eq.s32.totalorder %v3553, 1
  %vm3618 = vcmp.eq.s32.totalorder %v3554, 1
  %vm3619 = vcmp.eq.s32.totalorder %v3555, 1
  %vm3620 = vcmp.eq.s32.totalorder %v3556, 1
  %vm3621 = vcmp.eq.s32.totalorder %v3557, 1
  %vm3622 = vcmp.eq.s32.totalorder %v3558, 1
  %vm3623 = vcmp.eq.s32.totalorder %v3559, 1
  %vm3624 = vcmp.eq.s32.totalorder %v3560, 1
  %vm3625 = vcmp.eq.s32.totalorder %v3561, 1
  %vm3626 = vcmp.eq.s32.totalorder %v3562, 1
  %vm3627 = vcmp.eq.s32.totalorder %v3563, 1
  %vm3628 = vcmp.eq.s32.totalorder %v3564, 1
  %vm3629 = vcmp.eq.s32.totalorder %v3565, 1
  %vm3630 = vcmp.eq.s32.totalorder %v3566, 1
  %vm3631 = vcmp.eq.s32.totalorder %v3567, 1
  %vm3632 = vcmp.eq.s32.totalorder %v3568, 1
  %vm3633 = vcmp.eq.s32.totalorder %v3569, 1
  %vm3634 = vcmp.eq.s32.totalorder %v3570, 1
  %vm3635 = vcmp.eq.s32.totalorder %v3571, 1
  %vm3636 = vcmp.eq.s32.totalorder %v3572, 1
  %vm3637 = vcmp.eq.s32.totalorder %v3573, 1
  %vm3638 = vcmp.eq.s32.totalorder %v3574, 1
  %vm3639 = vcmp.eq.s32.totalorder %v3575, 1
  %vm3640 = vcmp.eq.s32.totalorder %v3576, 1
  %vm3641 = vcmp.eq.s32.totalorder %v3577, 1
  %vm3642 = vcmp.eq.s32.totalorder %v3578, 1
  %vm3643 = vcmp.eq.s32.totalorder %v3579, 1
  %vm3644 = vcmp.eq.s32.totalorder %v3580, 1
  %vm3645 = vcmp.eq.s32.totalorder %v3581, 1
  %vm3646 = vcmp.eq.s32.totalorder %v3582, 1
  %vm3647 = vcmp.eq.s32.totalorder %v3583, 1
  %vm3648 = vcmp.eq.s32.totalorder %v3584, 1
  %vm3649 = vcmp.eq.s32.totalorder %v3585, 1
  %vm3650 = vcmp.eq.s32.totalorder %v3586, 1
  %vm3651 = vcmp.eq.s32.totalorder %v3587, 1
  %vm3652 = vcmp.eq.s32.totalorder %v3588, 1
  %vm3653 = vcmp.eq.s32.totalorder %v3589, 1
  %v3654 = vsel %vm3590, %v2823, 0.0
  %v3655 = vsel %vm3590, %v645, 0.0
  %v3656 = vsel %vm3590, %v3144, 0.0
  %v3657 = vsel %vm3591, %v2824, 0.0
  %v3658 = vsel %vm3591, %v646, 0.0
  %v3659 = vsel %vm3591, %v3145, 0.0
  %v3660 = vsel %vm3592, %v2825, 0.0
  %v3661 = vsel %vm3592, %v647, 0.0
  %v3662 = vsel %vm3592, %v3146, 0.0
  %v3663 = vsel %vm3593, %v2826, 0.0
  %v3664 = vsel %vm3593, %v648, 0.0
  %v3665 = vsel %vm3593, %v3147, 0.0
  %v3666 = vsel %vm3594, %v2827, 0.0
  %v3667 = vsel %vm3594, %v649, 0.0
  %v3668 = vsel %vm3594, %v3148, 0.0
  %v3669 = vsel %vm3595, %v2828, 0.0
  %v3670 = vsel %vm3595, %v650, 0.0
  %v3671 = vsel %vm3595, %v3149, 0.0
  %v3672 = vsel %vm3596, %v2829, 0.0
  %v3673 = vsel %vm3596, %v651, 0.0
  %v3674 = vsel %vm3596, %v3150, 0.0
  %v3675 = vsel %vm3597, %v2830, 0.0
  %v3676 = vsel %vm3597, %v652, 0.0
  %v3677 = vsel %vm3597, %v3151, 0.0
  %v3678 = vsel %vm3598, %v2831, 0.0
  %v3679 = vsel %vm3598, %v653, 0.0
  %v3680 = vsel %vm3598, %v3152, 0.0
  %v3681 = vsel %vm3599, %v2832, 0.0
  %v3682 = vsel %vm3599, %v654, 0.0
  %v3683 = vsel %vm3599, %v3153, 0.0
  %v3684 = vsel %vm3600, %v2833, 0.0
  %v3685 = vsel %vm3600, %v655, 0.0
  %v3686 = vsel %vm3600, %v3154, 0.0
  %v3687 = vsel %vm3601, %v2834, 0.0
  %v3688 = vsel %vm3601, %v656, 0.0
  %v3689 = vsel %vm3601, %v3155, 0.0
  %v3690 = vsel %vm3602, %v2835, 0.0
  %v3691 = vsel %vm3602, %v657, 0.0
  %v3692 = vsel %vm3602, %v3156, 0.0
  %v3693 = vsel %vm3603, %v2836, 0.0
  %v3694 = vsel %vm3603, %v658, 0.0
  %v3695 = vsel %vm3603, %v3157, 0.0
  %v3696 = vsel %vm3604, %v2837, 0.0
  %v3697 = vsel %vm3604, %v659, 0.0
  %v3698 = vsel %vm3604, %v3158, 0.0
  %v3699 = vsel %vm3605, %v2838, 0.0
  %v3700 = vsel %vm3605, %v660, 0.0
  %v3701 = vsel %vm3605, %v3159, 0.0
  %v3702 = vsel %vm3606, %v2839, 0.0
  %v3703 = vsel %vm3606, %v661, 0.0
  %v3704 = vsel %vm3606, %v3160, 0.0
  %v3705 = vsel %vm3607, %v2840, 0.0
  %v3706 = vsel %vm3607, %v662, 0.0
  %v3707 = vsel %vm3607, %v3161, 0.0
  %v3708 = vsel %vm3608, %v2841, 0.0
  %v3709 = vsel %vm3608, %v663, 0.0
  %v3710 = vsel %vm3608, %v3162, 0.0
  %v3711 = vsel %vm3609, %v2842, 0.0
  %v3712 = vsel %vm3609, %v664, 0.0
  %v3713 = vsel %vm3609, %v3163, 0.0
  %v3714 = vsel %vm3610, %v2843, 0.0
  %v3715 = vsel %vm3610, %v665, 0.0
  %v3716 = vsel %vm3610, %v3164, 0.0
  %v3717 = vsel %vm3611, %v2844, 0.0
  %v3718 = vsel %vm3611, %v666, 0.0
  %v3719 = vsel %vm3611, %v3165, 0.0
  %v3720 = vsel %vm3612, %v2845, 0.0
  %v3721 = vsel %vm3612, %v667, 0.0
  %v3722 = vsel %vm3612, %v3166, 0.0
  %v3723 = vsel %vm3613, %v2846, 0.0
  %v3724 = vsel %vm3613, %v668, 0.0
  %v3725 = vsel %vm3613, %v3167, 0.0
  %v3726 = vsel %vm3614, %v2847, 0.0
  %v3727 = vsel %vm3614, %v669, 0.0
  %v3728 = vsel %vm3614, %v3168, 0.0
  %v3729 = vsel %vm3615, %v2848, 0.0
  %v3730 = vsel %vm3615, %v670, 0.0
  %v3731 = vsel %vm3615, %v3169, 0.0
  %v3732 = vsel %vm3616, %v2849, 0.0
  %v3733 = vsel %vm3616, %v671, 0.0
  %v3734 = vsel %vm3616, %v3170, 0.0
  %v3735 = vsel %vm3617, %v2850, 0.0
  %v3736 = vsel %vm3617, %v672, 0.0
  %v3737 = vsel %vm3617, %v3171, 0.0
  %v3738 = vsel %vm3618, %v2851, 0.0
  %v3739 = vsel %vm3618, %v673, 0.0
  %v3740 = vsel %vm3618, %v3172, 0.0
  %v3741 = vsel %vm3619, %v2852, 0.0
  %v3742 = vsel %vm3619, %v674, 0.0
  %v3743 = vsel %vm3619, %v3173, 0.0
  %v3744 = vsel %vm3620, %v2853, 0.0
  %v3745 = vsel %vm3620, %v675, 0.0
  %v3746 = vsel %vm3620, %v3174, 0.0
  %v3747 = vsel %vm3621, %v2854, 0.0
  %v3748 = vsel %vm3621, %v676, 0.0
  %v3749 = vsel %vm3621, %v3175, 0.0
  %v3750 = vsel %vm3622, %v2855, 0.0
  %v3751 = vsel %vm3622, %v677, 0.0
  %v3752 = vsel %vm3622, %v3176, 0.0
  %v3753 = vsel %vm3623, %v2856, 0.0
  %v3754 = vsel %vm3623, %v678, 0.0
  %v3755 = vsel %vm3623, %v3177, 0.0
  %v3756 = vsel %vm3624, %v2857, 0.0
  %v3757 = vsel %vm3624, %v679, 0.0
  %v3758 = vsel %vm3624, %v3178, 0.0
  %v3759 = vsel %vm3625, %v2858, 0.0
  %v3760 = vsel %vm3625, %v680, 0.0
  %v3761 = vsel %vm3625, %v3179, 0.0
  %v3762 = vsel %vm3626, %v2859, 0.0
  %v3763 = vsel %vm3626, %v681, 0.0
  %v3764 = vsel %vm3626, %v3180, 0.0
  %v3765 = vsel %vm3627, %v2860, 0.0
  %v3766 = vsel %vm3627, %v682, 0.0
  %v3767 = vsel %vm3627, %v3181, 0.0
  %v3768 = vsel %vm3628, %v2861, 0.0
  %v3769 = vsel %vm3628, %v683, 0.0
  %v3770 = vsel %vm3628, %v3182, 0.0
  %v3771 = vsel %vm3629, %v2862, 0.0
  %v3772 = vsel %vm3629, %v684, 0.0
  %v3773 = vsel %vm3629, %v3183, 0.0
  %v3774 = vsel %vm3630, %v2863, 0.0
  %v3775 = vsel %vm3630, %v685, 0.0
  %v3776 = vsel %vm3630, %v3184, 0.0
  %v3777 = vsel %vm3631, %v2864, 0.0
  %v3778 = vsel %vm3631, %v686, 0.0
  %v3779 = vsel %vm3631, %v3185, 0.0
  %v3780 = vsel %vm3632, %v2865, 0.0
  %v3781 = vsel %vm3632, %v687, 0.0
  %v3782 = vsel %vm3632, %v3186, 0.0
  %v3783 = vsel %vm3633, %v2866, 0.0
  %v3784 = vsel %vm3633, %v688, 0.0
  %v3785 = vsel %vm3633, %v3187, 0.0
  %v3786 = vsel %vm3634, %v2867, 0.0
  %v3787 = vsel %vm3634, %v689, 0.0
  %v3788 = vsel %vm3634, %v3188, 0.0
  %v3789 = vsel %vm3635, %v2868, 0.0
  %v3790 = vsel %vm3635, %v690, 0.0
  %v3791 = vsel %vm3635, %v3189, 0.0
  %v3792 = vsel %vm3636, %v2869, 0.0
  %v3793 = vsel %vm3636, %v691, 0.0
  %v3794 = vsel %vm3636, %v3190, 0.0
  %v3795 = vsel %vm3637, %v2870, 0.0
  %v3796 = vsel %vm3637, %v692, 0.0
  %v3797 = vsel %vm3637, %v3191, 0.0
  %v3798 = vsel %vm3638, %v2871, 0.0
  %v3799 = vsel %vm3638, %v693, 0.0
  %v3800 = vsel %vm3638, %v3192, 0.0
  %v3801 = vsel %vm3639, %v2872, 0.0
  %v3802 = vsel %vm3639, %v694, 0.0
  %v3803 = vsel %vm3639, %v3193, 0.0
  %v3804 = vsel %vm3640, %v2873, 0.0
  %v3805 = vsel %vm3640, %v695, 0.0
  %v3806 = vsel %vm3640, %v3194, 0.0
  %v3807 = vsel %vm3641, %v2874, 0.0
  %v3808 = vsel %vm3641, %v696, 0.0
  %v3809 = vsel %vm3641, %v3195, 0.0
  %v3810 = vsel %vm3642, %v2875, 0.0
  %v3811 = vsel %vm3642, %v697, 0.0
  %v3812 = vsel %vm3642, %v3196, 0.0
  %v3813 = vsel %vm3643, %v2876, 0.0
  %v3814 = vsel %vm3643, %v698, 0.0
  %v3815 = vsel %vm3643, %v3197, 0.0
  %v3816 = vsel %vm3644, %v2877, 0.0
  %v3817 = vsel %vm3644, %v699, 0.0
  %v3818 = vsel %vm3644, %v3198, 0.0
  %v3819 = vsel %vm3645, %v2878, 0.0
  %v3820 = vsel %vm3645, %v700, 0.0
  %v3821 = vsel %vm3645, %v3199, 0.0
  %v3822 = vsel %vm3646, %v2879, 0.0
  %v3823 = vsel %vm3646, %v701, 0.0
  %v3824 = vsel %vm3646, %v3200, 0.0
  %v3825 = vsel %vm3647, %v2880, 0.0
  %v3826 = vsel %vm3647, %v702, 0.0
  %v3827 = vsel %vm3647, %v3201, 0.0
  %v3828 = vsel %vm3648, %v2881, 0.0
  %v3829 = vsel %vm3648, %v703, 0.0
  %v3830 = vsel %vm3648, %v3202, 0.0
  %v3831 = vsel %vm3649, %v2882, 0.0
  %v3832 = vsel %vm3649, %v704, 0.0
  %v3833 = vsel %vm3649, %v3203, 0.0
  %v3834 = vsel %vm3650, %v2883, 0.0
  %v3835 = vsel %vm3650, %v705, 0.0
  %v3836 = vsel %vm3650, %v3204, 0.0
  %v3837 = vsel %vm3651, %v2884, 0.0
  %v3838 = vsel %vm3651, %v706, 0.0
  %v3839 = vsel %vm3651, %v3205, 0.0
  %v3840 = vsel %vm3652, %v2821, 0.0
  %v3841 = vsel %vm3652, %v643, 0.0
  %v3842 = vsel %vm3652, %v3142, 0.0
  %v3843 = vsel %vm3653, %v2822, 0.0
  %v3844 = vsel %vm3653, %v644, 0.0
  %v3845 = vsel %vm3653, %v3143, 0.0
  %v3846 = vpack.c.bf16 %v3337, %v3334
  %v3847 = vpack.c.bf16 %v3338, %v3335
  %v3848 = vpack.c.bf16 %v3339, %v3336
  %v3849 = vpack.c.bf16 %v3343, %v3340
  %v3850 = vpack.c.bf16 %v3344, %v3341
  %v3851 = vpack.c.bf16 %v3345, %v3342
  %v3852 = vpack.c.bf16 %v3349, %v3346
  %v3853 = vpack.c.bf16 %v3350, %v3347
  %v3854 = vpack.c.bf16 %v3351, %v3348
  %v3855 = vpack.c.bf16 %v3355, %v3352
  %v3856 = vpack.c.bf16 %v3356, %v3353
  %v3857 = vpack.c.bf16 %v3357, %v3354
  %v3858 = vpack.c.bf16 %v3361, %v3358
  %v3859 = vpack.c.bf16 %v3362, %v3359
  %v3860 = vpack.c.bf16 %v3363, %v3360
  %v3861 = vpack.c.bf16 %v3367, %v3364
  %v3862 = vpack.c.bf16 %v3368, %v3365
  %v3863 = vpack.c.bf16 %v3369, %v3366
  %v3864 = vpack.c.bf16 %v3373, %v3370
  %v3865 = vpack.c.bf16 %v3374, %v3371
  %v3866 = vpack.c.bf16 %v3375, %v3372
  %v3867 = vpack.c.bf16 %v3379, %v3376
  %v3868 = vpack.c.bf16 %v3380, %v3377
  %v3869 = vpack.c.bf16 %v3381, %v3378
  %v3870 = vpack.c.bf16 %v3385, %v3382
  %v3871 = vpack.c.bf16 %v3386, %v3383
  %v3872 = vpack.c.bf16 %v3387, %v3384
  %v3873 = vpack.c.bf16 %v3391, %v3388
  %v3874 = vpack.c.bf16 %v3392, %v3389
  %v3875 = vpack.c.bf16 %v3393, %v3390
  %v3876 = vpack.c.bf16 %v3397, %v3394
  %v3877 = vpack.c.bf16 %v3398, %v3395
  %v3878 = vpack.c.bf16 %v3399, %v3396
  %v3879 = vpack.c.bf16 %v3403, %v3400
  %v3880 = vpack.c.bf16 %v3404, %v3401
  %v3881 = vpack.c.bf16 %v3405, %v3402
  %v3882 = vpack.c.bf16 %v3409, %v3406
  %v3883 = vpack.c.bf16 %v3410, %v3407
  %v3884 = vpack.c.bf16 %v3411, %v3408
  %v3885 = vpack.c.bf16 %v3415, %v3412
  %v3886 = vpack.c.bf16 %v3416, %v3413
  %v3887 = vpack.c.bf16 %v3417, %v3414
  %v3888 = vpack.c.bf16 %v3421, %v3418
  %v3889 = vpack.c.bf16 %v3422, %v3419
  %v3890 = vpack.c.bf16 %v3423, %v3420
  %v3891 = vpack.c.bf16 %v3427, %v3424
  %v3892 = vpack.c.bf16 %v3428, %v3425
  %v3893 = vpack.c.bf16 %v3429, %v3426
  %v3894 = vpack.c.bf16 %v3433, %v3430
  %v3895 = vpack.c.bf16 %v3434, %v3431
  %v3896 = vpack.c.bf16 %v3435, %v3432
  %v3897 = vpack.c.bf16 %v3439, %v3436
  %v3898 = vpack.c.bf16 %v3440, %v3437
  %v3899 = vpack.c.bf16 %v3441, %v3438
  %v3900 = vpack.c.bf16 %v3445, %v3442
  %v3901 = vpack.c.bf16 %v3446, %v3443
  %v3902 = vpack.c.bf16 %v3447, %v3444
  %v3903 = vpack.c.bf16 %v3451, %v3448
  %v3904 = vpack.c.bf16 %v3452, %v3449
  %v3905 = vpack.c.bf16 %v3453, %v3450
  %v3906 = vpack.c.bf16 %v3457, %v3454
  %v3907 = vpack.c.bf16 %v3458, %v3455
  %v3908 = vpack.c.bf16 %v3459, %v3456
  %v3909 = vpack.c.bf16 %v3463, %v3460
  %v3910 = vpack.c.bf16 %v3464, %v3461
  %v3911 = vpack.c.bf16 %v3465, %v3462
  %v3912 = vpack.c.bf16 %v3469, %v3466
  %v3913 = vpack.c.bf16 %v3470, %v3467
  %v3914 = vpack.c.bf16 %v3471, %v3468
  %v3915 = vpack.c.bf16 %v3475, %v3472
  %v3916 = vpack.c.bf16 %v3476, %v3473
  %v3917 = vpack.c.bf16 %v3477, %v3474
  %v3918 = vpack.c.bf16 %v3481, %v3478
  %v3919 = vpack.c.bf16 %v3482, %v3479
  %v3920 = vpack.c.bf16 %v3483, %v3480
  %v3921 = vpack.c.bf16 %v3487, %v3484
  %v3922 = vpack.c.bf16 %v3488, %v3485
  %v3923 = vpack.c.bf16 %v3489, %v3486
  %v3924 = vpack.c.bf16 %v3493, %v3490
  %v3925 = vpack.c.bf16 %v3494, %v3491
  %v3926 = vpack.c.bf16 %v3495, %v3492
  %v3927 = vpack.c.bf16 %v3499, %v3496
  %v3928 = vpack.c.bf16 %v3500, %v3497
  %v3929 = vpack.c.bf16 %v3501, %v3498
  %v3930 = vpack.c.bf16 %v3505, %v3502
  %v3931 = vpack.c.bf16 %v3506, %v3503
  %v3932 = vpack.c.bf16 %v3507, %v3504
  %v3933 = vpack.c.bf16 %v3511, %v3508
  %v3934 = vpack.c.bf16 %v3512, %v3509
  %v3935 = vpack.c.bf16 %v3513, %v3510
  %v3936 = vpack.c.bf16 %v3517, %v3514
  %v3937 = vpack.c.bf16 %v3518, %v3515
  %v3938 = vpack.c.bf16 %v3519, %v3516
  %v3939 = vpack.c.bf16 %v3523, %v3520
  %v3940 = vpack.c.bf16 %v3524, %v3521
  %v3941 = vpack.c.bf16 %v3525, %v3522
  %v3942 = vld [vmem:[%s3] sm:$0xf]
  %v3943 = vld [vmem:[%s3 + $0x4] sm:$0xf]
  %v3944 = vld [vmem:[%s3 + $0x8] sm:$0xf]
  %v3945 = vld [vmem:[%s3 + $0xc] sm:$0xf]
  %v3946 = vld [vmem:[%s3 + $0x10] sm:$0xf]
  %v3947 = vld [vmem:[%s3 + $0x14] sm:$0xf]
  %v3948 = vld [vmem:[%s3 + $0x18] sm:$0xf]
  %v3949 = vld [vmem:[%s3 + $0x1c] sm:$0xf]
  %v3950 = vld [vmem:[%s3 + $0x20] sm:$0xf]
  %v3951 = vld [vmem:[%s3 + $0x24] sm:$0xf]
  %v3952 = vld [vmem:[%s3 + $0x28] sm:$0xf]
  %v3953 = vld [vmem:[%s3 + $0x2c] sm:$0xf]
  %v3954 = vld [vmem:[%s3 + $0x30] sm:$0xf]
  %v3955 = vld [vmem:[%s3 + $0x34] sm:$0xf]
  %v3956 = vld [vmem:[%s3 + $0x38] sm:$0xf]
  %v3957 = vld [vmem:[%s3 + $0x3c] sm:$0xf]
  %v3958 = vld [vmem:[%s3 + $0x40] sm:$0xf]
  %v3959 = vld [vmem:[%s3 + $0x44] sm:$0xf]
  %v3960 = vld [vmem:[%s3 + $0x48] sm:$0xf]
  %v3961 = vld [vmem:[%s3 + $0x4c] sm:$0xf]
  %v3962 = vld [vmem:[%s3 + $0x50] sm:$0xf]
  %v3963 = vld [vmem:[%s3 + $0x54] sm:$0xf]
  %v3964 = vld [vmem:[%s3 + $0x58] sm:$0xf]
  %v3965 = vld [vmem:[%s3 + $0x5c] sm:$0xf]
  %v3966 = vld [vmem:[%s3 + $0x60] sm:$0xf]
  %v3967 = vld [vmem:[%s3 + $0x64] sm:$0xf]
  %v3968 = vld [vmem:[%s3 + $0x68] sm:$0xf]
  %v3969 = vld [vmem:[%s3 + $0x6c] sm:$0xf]
  %v3970 = vld [vmem:[%s3 + $0x70] sm:$0xf]
  %v3971 = vld [vmem:[%s3 + $0x74] sm:$0xf]
  %v3972 = vld [vmem:[%s3 + $0x78] sm:$0xf]
  %v3973 = vld [vmem:[%s3 + $0x7c] sm:$0xf]
  %v3974 = vld [vmem:[%s3 + $0x80] sm:$0xf]
  %v3975 = vld [vmem:[%s3 + $0x84] sm:$0xf]
  %v3976 = vld [vmem:[%s3 + $0x88] sm:$0xf]
  %v3977 = vld [vmem:[%s3 + $0x8c] sm:$0xf]
  %v3978 = vld [vmem:[%s3 + $0x90] sm:$0xf]
  %v3979 = vld [vmem:[%s3 + $0x94] sm:$0xf]
  %v3980 = vld [vmem:[%s3 + $0x98] sm:$0xf]
  %v3981 = vld [vmem:[%s3 + $0x9c] sm:$0xf]
  %v3982 = vld [vmem:[%s3 + $0xa0] sm:$0xf]
  %v3983 = vld [vmem:[%s3 + $0xa4] sm:$0xf]
  %v3984 = vld [vmem:[%s3 + $0xa8] sm:$0xf]
  %v3985 = vld [vmem:[%s3 + $0xac] sm:$0xf]
  %v3986 = vld [vmem:[%s3 + $0xb0] sm:$0xf]
  %v3987 = vld [vmem:[%s3 + $0xb4] sm:$0xf]
  %v3988 = vld [vmem:[%s3 + $0xb8] sm:$0xf]
  %v3989 = vld [vmem:[%s3 + $0xbc] sm:$0xf]
  %v3990 = vpack.c.bf16 %v2822, %v2821
  %v3991 = vpack.c.bf16 %v644, %v643
  %v3992 = vpack.c.bf16 %v3143, %v3142
  %v3993 = vpack.c.bf16 %v2824, %v2823
  %v3994 = vpack.c.bf16 %v646, %v645
  %v3995 = vpack.c.bf16 %v3145, %v3144
  %v3996 = vpack.c.bf16 %v2826, %v2825
  %v3997 = vpack.c.bf16 %v648, %v647
  %v3998 = vpack.c.bf16 %v3147, %v3146
  %v3999 = vpack.c.bf16 %v2828, %v2827
  %v4000 = vpack.c.bf16 %v650, %v649
  %v4001 = vpack.c.bf16 %v3149, %v3148
  %v4002 = vpack.c.bf16 %v2830, %v2829
  %v4003 = vpack.c.bf16 %v652, %v651
  %v4004 = vpack.c.bf16 %v3151, %v3150
  %v4005 = vpack.c.bf16 %v2832, %v2831
  %v4006 = vpack.c.bf16 %v654, %v653
  %v4007 = vpack.c.bf16 %v3153, %v3152
  %v4008 = vpack.c.bf16 %v2834, %v2833
  %v4009 = vpack.c.bf16 %v656, %v655
  %v4010 = vpack.c.bf16 %v3155, %v3154
  %v4011 = vpack.c.bf16 %v2836, %v2835
  %v4012 = vpack.c.bf16 %v658, %v657
  %v4013 = vpack.c.bf16 %v3157, %v3156
  %v4014 = vpack.c.bf16 %v2838, %v2837
  %v4015 = vpack.c.bf16 %v660, %v659
  %v4016 = vpack.c.bf16 %v3159, %v3158
  %v4017 = vpack.c.bf16 %v2840, %v2839
  %v4018 = vpack.c.bf16 %v662, %v661
  %v4019 = vpack.c.bf16 %v3161, %v3160
  %v4020 = vpack.c.bf16 %v2842, %v2841
  %v4021 = vpack.c.bf16 %v664, %v663
  %v4022 = vpack.c.bf16 %v3163, %v3162
  %v4023 = vpack.c.bf16 %v2844, %v2843
  %v4024 = vpack.c.bf16 %v666, %v665
  %v4025 = vpack.c.bf16 %v3165, %v3164
  %v4026 = vpack.c.bf16 %v2846, %v2845
  %v4027 = vpack.c.bf16 %v668, %v667
  %v4028 = vpack.c.bf16 %v3167, %v3166
  %v4029 = vpack.c.bf16 %v2848, %v2847
  %v4030 = vpack.c.bf16 %v670, %v669
  %v4031 = vpack.c.bf16 %v3169, %v3168
  %v4032 = vpack.c.bf16 %v2850, %v2849
  %v4033 = vpack.c.bf16 %v672, %v671
  %v4034 = vpack.c.bf16 %v3171, %v3170
  %v4035 = vpack.c.bf16 %v2852, %v2851
  %v4036 = vpack.c.bf16 %v674, %v673
  %v4037 = vpack.c.bf16 %v3173, %v3172
  %v4038 = vpack.c.bf16 %v2854, %v2853
  %v4039 = vpack.c.bf16 %v676, %v675
  %v4040 = vpack.c.bf16 %v3175, %v3174
  %v4041 = vpack.c.bf16 %v2856, %v2855
  %v4042 = vpack.c.bf16 %v678, %v677
  %v4043 = vpack.c.bf16 %v3177, %v3176
  %v4044 = vpack.c.bf16 %v2858, %v2857
  %v4045 = vpack.c.bf16 %v680, %v679
  %v4046 = vpack.c.bf16 %v3179, %v3178
  %v4047 = vpack.c.bf16 %v2860, %v2859
  %v4048 = vpack.c.bf16 %v682, %v681
  %v4049 = vpack.c.bf16 %v3181, %v3180
  %v4050 = vpack.c.bf16 %v2862, %v2861
  %v4051 = vpack.c.bf16 %v684, %v683
  %v4052 = vpack.c.bf16 %v3183, %v3182
  %v4053 = vpack.c.bf16 %v2864, %v2863
  %v4054 = vpack.c.bf16 %v686, %v685
  %v4055 = vpack.c.bf16 %v3185, %v3184
  %v4056 = vpack.c.bf16 %v2866, %v2865
  %v4057 = vpack.c.bf16 %v688, %v687
  %v4058 = vpack.c.bf16 %v3187, %v3186
  %v4059 = vpack.c.bf16 %v2868, %v2867
  %v4060 = vpack.c.bf16 %v690, %v689
  %v4061 = vpack.c.bf16 %v3189, %v3188
  %v4062 = vpack.c.bf16 %v2870, %v2869
  %v4063 = vpack.c.bf16 %v692, %v691
  %v4064 = vpack.c.bf16 %v3191, %v3190
  %v4065 = vpack.c.bf16 %v2872, %v2871
  %v4066 = vpack.c.bf16 %v694, %v693
  %v4067 = vpack.c.bf16 %v3193, %v3192
  %v4068 = vpack.c.bf16 %v2874, %v2873
  %v4069 = vpack.c.bf16 %v696, %v695
  %v4070 = vpack.c.bf16 %v3195, %v3194
  %v4071 = vpack.c.bf16 %v2876, %v2875
  %v4072 = vpack.c.bf16 %v698, %v697
  %v4073 = vpack.c.bf16 %v3197, %v3196
  %v4074 = vpack.c.bf16 %v2878, %v2877
  %v4075 = vpack.c.bf16 %v700, %v699
  %v4076 = vpack.c.bf16 %v3199, %v3198
  %v4077 = vpack.c.bf16 %v2880, %v2879
  %v4078 = vpack.c.bf16 %v702, %v701
  %v4079 = vpack.c.bf16 %v3201, %v3200
  %v4080 = vpack.c.bf16 %v2882, %v2881
  %v4081 = vpack.c.bf16 %v704, %v703
  %v4082 = vpack.c.bf16 %v3203, %v3202
  %v4083 = vpack.c.bf16 %v2884, %v2883
  %v4084 = vpack.c.bf16 %v706, %v705
  %v4085 = vpack.c.bf16 %v3205, %v3204
  %s4086 = scalar_lea.vmem %s3, 192
  %v4087 = vld [vmem:[%s4086] sm:$0xf]
  %v4088 = vld [vmem:[%s4086 + $0x4] sm:$0xf]
  %v4089 = vld [vmem:[%s4086 + $0x8] sm:$0xf]
  %v4090 = vld [vmem:[%s4086 + $0xc] sm:$0xf]
  %v4091 = vld [vmem:[%s4086 + $0x10] sm:$0xf]
  %v4092 = vld [vmem:[%s4086 + $0x14] sm:$0xf]
  %v4093 = vld [vmem:[%s4086 + $0x18] sm:$0xf]
  %v4094 = vld [vmem:[%s4086 + $0x1c] sm:$0xf]
  %v4095 = vld [vmem:[%s4086 + $0x20] sm:$0xf]
  %v4096 = vld [vmem:[%s4086 + $0x24] sm:$0xf]
  %v4097 = vld [vmem:[%s4086 + $0x28] sm:$0xf]
  %v4098 = vld [vmem:[%s4086 + $0x2c] sm:$0xf]
  %v4099 = vld [vmem:[%s4086 + $0x30] sm:$0xf]
  %v4100 = vld [vmem:[%s4086 + $0x34] sm:$0xf]
  %v4101 = vld [vmem:[%s4086 + $0x38] sm:$0xf]
  %v4102 = vld [vmem:[%s4086 + $0x3c] sm:$0xf]
  %v4103 = vld [vmem:[%s4086 + $0x40] sm:$0xf]
  %v4104 = vld [vmem:[%s4086 + $0x44] sm:$0xf]
  %v4105 = vld [vmem:[%s4086 + $0x48] sm:$0xf]
  %v4106 = vld [vmem:[%s4086 + $0x4c] sm:$0xf]
  %v4107 = vld [vmem:[%s4086 + $0x50] sm:$0xf]
  %v4108 = vld [vmem:[%s4086 + $0x54] sm:$0xf]
  %v4109 = vld [vmem:[%s4086 + $0x58] sm:$0xf]
  %v4110 = vld [vmem:[%s4086 + $0x5c] sm:$0xf]
  %v4111 = vld [vmem:[%s4086 + $0x60] sm:$0xf]
  %v4112 = vld [vmem:[%s4086 + $0x64] sm:$0xf]
  %v4113 = vld [vmem:[%s4086 + $0x68] sm:$0xf]
  %v4114 = vld [vmem:[%s4086 + $0x6c] sm:$0xf]
  %v4115 = vld [vmem:[%s4086 + $0x70] sm:$0xf]
  %v4116 = vld [vmem:[%s4086 + $0x74] sm:$0xf]
  %v4117 = vld [vmem:[%s4086 + $0x78] sm:$0xf]
  %v4118 = vld [vmem:[%s4086 + $0x7c] sm:$0xf]
  %v4119 = vld [vmem:[%s4086 + $0x80] sm:$0xf]
  %v4120 = vld [vmem:[%s4086 + $0x84] sm:$0xf]
  %v4121 = vld [vmem:[%s4086 + $0x88] sm:$0xf]
  %v4122 = vld [vmem:[%s4086 + $0x8c] sm:$0xf]
  %v4123 = vld [vmem:[%s4086 + $0x90] sm:$0xf]
  %v4124 = vld [vmem:[%s4086 + $0x94] sm:$0xf]
  %v4125 = vld [vmem:[%s4086 + $0x98] sm:$0xf]
  %v4126 = vld [vmem:[%s4086 + $0x9c] sm:$0xf]
  %v4127 = vld [vmem:[%s4086 + $0xa0] sm:$0xf]
  %v4128 = vld [vmem:[%s4086 + $0xa4] sm:$0xf]
  %v4129 = vld [vmem:[%s4086 + $0xa8] sm:$0xf]
  %v4130 = vld [vmem:[%s4086 + $0xac] sm:$0xf]
  %v4131 = vld [vmem:[%s4086 + $0xb0] sm:$0xf]
  %v4132 = vld [vmem:[%s4086 + $0xb4] sm:$0xf]
  %v4133 = vld [vmem:[%s4086 + $0xb8] sm:$0xf]
  %v4134 = vld [vmem:[%s4086 + $0xbc] sm:$0xf]
  %v4183 = vunpack.c.l.b16 %v4087
  %v4184 = vunpack.c.l.b16 %v4088
  %v4185 = vunpack.c.l.b16 %v4089
  %v4186 = vunpack.c.l.b16 %v4090
  %v4187 = vunpack.c.l.b16 %v4091
  %v4188 = vunpack.c.l.b16 %v4092
  %v4189 = vunpack.c.l.b16 %v4093
  %v4190 = vunpack.c.l.b16 %v4094
  %v4191 = vunpack.c.l.b16 %v4095
  %v4192 = vunpack.c.l.b16 %v4096
  %v4193 = vunpack.c.l.b16 %v4097
  %v4194 = vunpack.c.l.b16 %v4098
  %v4195 = vunpack.c.l.b16 %v4099
  %v4196 = vunpack.c.l.b16 %v4100
  %v4197 = vunpack.c.l.b16 %v4101
  %v4198 = vunpack.c.l.b16 %v4102
  %v4199 = vunpack.c.l.b16 %v4103
  %v4200 = vunpack.c.l.b16 %v4104
  %v4201 = vunpack.c.l.b16 %v4105
  %v4202 = vunpack.c.l.b16 %v4106
  %v4203 = vunpack.c.l.b16 %v4107
  %v4204 = vunpack.c.l.b16 %v4108
  %v4205 = vunpack.c.l.b16 %v4109
  %v4206 = vunpack.c.l.b16 %v4110
  %v4207 = vunpack.c.l.b16 %v4111
  %v4208 = vunpack.c.l.b16 %v4112
  %v4209 = vunpack.c.l.b16 %v4113
  %v4210 = vunpack.c.l.b16 %v4114
  %v4211 = vunpack.c.l.b16 %v4115
  %v4212 = vunpack.c.l.b16 %v4116
  %v4213 = vunpack.c.l.b16 %v4117
  %v4214 = vunpack.c.l.b16 %v4118
  %v4215 = vunpack.c.l.b16 %v4119
  %v4216 = vunpack.c.l.b16 %v4120
  %v4217 = vunpack.c.l.b16 %v4121
  %v4218 = vunpack.c.l.b16 %v4122
  %v4219 = vunpack.c.l.b16 %v4123
  %v4220 = vunpack.c.l.b16 %v4124
  %v4221 = vunpack.c.l.b16 %v4125
  %v4222 = vunpack.c.l.b16 %v4126
  %v4223 = vunpack.c.l.b16 %v4127
  %v4224 = vunpack.c.l.b16 %v4128
  %v4225 = vunpack.c.l.b16 %v4129
  %v4226 = vunpack.c.l.b16 %v4130
  %v4227 = vunpack.c.l.b16 %v4131
  %v4228 = vunpack.c.l.b16 %v4132
  %v4229 = vunpack.c.l.b16 %v4133
  %v4230 = vunpack.c.l.b16 %v4134
  %v4231 = vpack.c.b16 %v4184, %v4183
  %v4232 = vpack.c.b16 %v4186, %v4185
  %v4233 = vpack.c.b16 %v4188, %v4187
  %v4234 = vpack.c.b16 %v4190, %v4189
  %v4235 = vpack.c.b16 %v4192, %v4191
  %v4236 = vpack.c.b16 %v4194, %v4193
  %v4237 = vpack.c.b16 %v4196, %v4195
  %v4238 = vpack.c.b16 %v4198, %v4197
  %v4239 = vpack.c.b16 %v4200, %v4199
  %v4240 = vpack.c.b16 %v4202, %v4201
  %v4241 = vpack.c.b16 %v4204, %v4203
  %v4242 = vpack.c.b16 %v4206, %v4205
  %v4243 = vpack.c.b16 %v4208, %v4207
  %v4244 = vpack.c.b16 %v4210, %v4209
  %v4245 = vpack.c.b16 %v4212, %v4211
  %v4246 = vpack.c.b16 %v4214, %v4213
  %v4247 = vpack.c.b16 %v4216, %v4215
  %v4248 = vpack.c.b16 %v4218, %v4217
  %v4249 = vpack.c.b16 %v4220, %v4219
  %v4250 = vpack.c.b16 %v4222, %v4221
  %v4251 = vpack.c.b16 %v4224, %v4223
  %v4252 = vpack.c.b16 %v4226, %v4225
  %v4253 = vpack.c.b16 %v4228, %v4227
  %v4254 = vpack.c.b16 %v4230, %v4229
  %4279 = vmatprep.subr.bf16.mxu0 0
  %4280 = vmatpush1.bf16.msra.mxu0 %v4231
  %4281 = vmatprep.subr.bf16.mxu0 0
  %4282 = vmatpush1.bf16.msra.mxu0 %v4232
  %4283 = vmatprep.subr.bf16.mxu0 0
  %4284 = vmatpush1.bf16.msra.mxu0 %v4233
  %4285 = vmatprep.subr.bf16.mxu0 0
  %4286 = vmatpush1.bf16.msra.mxu0 %v4234
  %4287 = vmatprep.subr.bf16.mxu0 0
  %4288 = vmatpush1.bf16.msra.mxu0 %v4235
  %4289 = vmatprep.subr.bf16.mxu0 0
  %4290 = vmatpush1.bf16.msra.mxu0 %v4236
  %4291 = vmatprep.subr.bf16.mxu0 0
  %4292 = vmatpush1.bf16.msra.mxu0 %v4237
  %4293 = vmatprep.subr.bf16.mxu0 0
  %4294 = vmatpush1.bf16.msra.mxu0 %v4238
  %4295 = vmatprep.subr.bf16.mxu0 0
  %4296 = vmatpush1.bf16.msra.mxu0 %v4239
  %4297 = vmatprep.subr.bf16.mxu0 0
  %4298 = vmatpush1.bf16.msra.mxu0 %v4240
  %4299 = vmatprep.subr.bf16.mxu0 0
  %4300 = vmatpush1.bf16.msra.mxu0 %v4241
  %4301 = vmatprep.subr.bf16.mxu0 0
  %4302 = vmatpush1.bf16.msra.mxu0 %v4242
  %4303 = vmatprep.subr.bf16.mxu0 0
  %4304 = vmatpush1.bf16.msra.mxu0 %v4243
  %4305 = vmatprep.subr.bf16.mxu0 0
  %4306 = vmatpush1.bf16.msra.mxu0 %v4244
  %4307 = vmatprep.subr.bf16.mxu0 0
  %4308 = vmatpush1.bf16.msra.mxu0 %v4245
  %4309 = vmatprep.subr.bf16.mxu0 0
  %4310 = vmatpush1.bf16.msra.mxu0 %v4246
  %4311 = vmatprep.mubr.bf16.mxu0 %v3991
  %4312 = vmatmul.mubr.bf16.gmra.mrb[0].mxu0 %v3990
  %v4313 = vpop.f32.mrb[0].mxu0
  %v4314 = vadd.f32 0.0, %v4313
  %v4315 = vpop.f32.mrb[0].mxu0
  %v4316 = vpop.f32.mrb[0].mxu0
  %v4317 = vadd.f32 0.0, %v4316
  %v4318 = vpop.f32.mrb[0].mxu0
  %4319 = vmatprep.mubr.bf16.mxu0 %v3994
  %4320 = vmatmul.mubr.bf16.gmra.mrb[0].mxu0 %v3993
  %v4321 = vpop.f32.mrb[0].mxu0
  %v4322 = vadd.f32 0.0, %v4321
  %v4323 = vpop.f32.mrb[0].mxu0
  %v4324 = vpop.f32.mrb[0].mxu0
  %v4325 = vadd.f32 0.0, %v4324
  %v4326 = vpop.f32.mrb[0].mxu0
  %4327 = vmatprep.mubr.bf16.mxu0 %v3997
  %4328 = vmatmul.mubr.bf16.gmra.mrb[0].mxu0 %v3996
  %v4329 = vpop.f32.mrb[0].mxu0
  %v4330 = vadd.f32 0.0, %v4329
  %v4331 = vpop.f32.mrb[0].mxu0
  %v4332 = vpop.f32.mrb[0].mxu0
  %v4333 = vadd.f32 0.0, %v4332
  %v4334 = vpop.f32.mrb[0].mxu0
  %4335 = vmatprep.mubr.bf16.mxu0 %v4000
  %4336 = vmatmul.mubr.bf16.gmra.mrb[0].mxu0 %v3999
  %v4337 = vpop.f32.mrb[0].mxu0
  %v4338 = vadd.f32 0.0, %v4337
  %v4339 = vpop.f32.mrb[0].mxu0
  %v4340 = vpop.f32.mrb[0].mxu0
  %v4341 = vadd.f32 0.0, %v4340
  %v4342 = vpop.f32.mrb[0].mxu0
  %4343 = vmatprep.mubr.bf16.mxu0 %v4003
  %4344 = vmatmul.mubr.bf16.gmra.mrb[0].mxu0 %v4002
  %v4345 = vpop.f32.mrb[0].mxu0
  %v4346 = vadd.f32 0.0, %v4345
  %v4347 = vpop.f32.mrb[0].mxu0
  %v4348 = vpop.f32.mrb[0].mxu0
  %v4349 = vadd.f32 0.0, %v4348
  %v4350 = vpop.f32.mrb[0].mxu0
  %4351 = vmatprep.mubr.bf16.mxu0 %v4006
  %4352 = vmatmul.mubr.bf16.gmra.mrb[0].mxu0 %v4005
  %v4353 = vpop.f32.mrb[0].mxu0
  %v4354 = vadd.f32 0.0, %v4353
  %v4355 = vpop.f32.mrb[0].mxu0
  %v4356 = vpop.f32.mrb[0].mxu0
  %v4357 = vadd.f32 0.0, %v4356
  %v4358 = vpop.f32.mrb[0].mxu0
  %4359 = vmatprep.mubr.bf16.mxu0 %v4009
  %4360 = vmatmul.mubr.bf16.gmra.mrb[0].mxu0 %v4008
  %v4361 = vpop.f32.mrb[0].mxu0
  %v4362 = vadd.f32 0.0, %v4361
  %v4363 = vpop.f32.mrb[0].mxu0
  %v4364 = vpop.f32.mrb[0].mxu0
  %v4365 = vadd.f32 0.0, %v4364
  %v4366 = vpop.f32.mrb[0].mxu0
  %4367 = vmatprep.mubr.bf16.mxu0 %v4012
  %4368 = vmatmul.mubr.bf16.gmra.mrb[0].mxu0 %v4011
  %v4369 = vpop.f32.mrb[0].mxu0
  %v4370 = vadd.f32 0.0, %v4369
  %v4371 = vpop.f32.mrb[0].mxu0
  %v4372 = vpop.f32.mrb[0].mxu0
  %v4373 = vadd.f32 0.0, %v4372
  %v4374 = vpop.f32.mrb[0].mxu0
  %4375 = vmatprep.mubr.bf16.mxu0 %v4015
  %4376 = vmatmul.mubr.bf16.gmra.mrb[0].mxu0 %v4014
  %v4377 = vpop.f32.mrb[0].mxu0
  %v4378 = vadd.f32 0.0, %v4377
  %v4379 = vpop.f32.mrb[0].mxu0
  %v4380 = vpop.f32.mrb[0].mxu0
  %v4381 = vadd.f32 0.0, %v4380
  %v4382 = vpop.f32.mrb[0].mxu0
  %4383 = vmatprep.mubr.bf16.mxu0 %v4018
  %4384 = vmatmul.mubr.bf16.gmra.mrb[0].mxu0 %v4017
  %v4385 = vpop.f32.mrb[0].mxu0
  %v4386 = vadd.f32 0.0, %v4385
  %v4387 = vpop.f32.mrb[0].mxu0
  %v4388 = vpop.f32.mrb[0].mxu0
  %v4389 = vadd.f32 0.0, %v4388
  %v4390 = vpop.f32.mrb[0].mxu0
  %4391 = vmatprep.mubr.bf16.mxu0 %v4021
  %4392 = vmatmul.mubr.bf16.gmra.mrb[0].mxu0 %v4020
  %v4393 = vpop.f32.mrb[0].mxu0
  %v4394 = vadd.f32 0.0, %v4393
  %v4395 = vpop.f32.mrb[0].mxu0
  %v4396 = vpop.f32.mrb[0].mxu0
  %v4397 = vadd.f32 0.0, %v4396
  %v4398 = vpop.f32.mrb[0].mxu0
  %4399 = vmatprep.mubr.bf16.mxu0 %v4024
  %4400 = vmatmul.mubr.bf16.gmra.mrb[0].mxu0 %v4023
  %v4401 = vpop.f32.mrb[0].mxu0
  %v4402 = vadd.f32 0.0, %v4401
  %v4403 = vpop.f32.mrb[0].mxu0
  %v4404 = vpop.f32.mrb[0].mxu0
  %v4405 = vadd.f32 0.0, %v4404
  %v4406 = vpop.f32.mrb[0].mxu0
  %4407 = vmatprep.mubr.bf16.mxu0 %v4027
  %4408 = vmatmul.mubr.bf16.gmra.mrb[0].mxu0 %v4026
  %v4409 = vpop.f32.mrb[0].mxu0
  %v4410 = vadd.f32 0.0, %v4409
  %v4411 = vpop.f32.mrb[0].mxu0
  %v4412 = vpop.f32.mrb[0].mxu0
  %v4413 = vadd.f32 0.0, %v4412
  %v4414 = vpop.f32.mrb[0].mxu0
  %4415 = vmatprep.mubr.bf16.mxu0 %v4030
  %4416 = vmatmul.mubr.bf16.gmra.mrb[0].mxu0 %v4029
  %v4417 = vpop.f32.mrb[0].mxu0
  %v4418 = vadd.f32 0.0, %v4417
  %v4419 = vpop.f32.mrb[0].mxu0
  %v4420 = vpop.f32.mrb[0].mxu0
  %v4421 = vadd.f32 0.0, %v4420
  %v4422 = vpop.f32.mrb[0].mxu0
  %4423 = vmatprep.mubr.bf16.mxu0 %v4033
  %4424 = vmatmul.mubr.bf16.gmra.mrb[0].mxu0 %v4032
  %v4425 = vpop.f32.mrb[0].mxu0
  %v4426 = vadd.f32 0.0, %v4425
  %v4427 = vpop.f32.mrb[0].mxu0
  %v4428 = vpop.f32.mrb[0].mxu0
  %v4429 = vadd.f32 0.0, %v4428
  %v4430 = vpop.f32.mrb[0].mxu0
  %4431 = vmatprep.mubr.bf16.mxu0 %v4036
  %4432 = vmatmul.mubr.bf16.gmra.mrb[0].mxu0 %v4035
  %v4433 = vpop.f32.mrb[0].mxu0
  %v4434 = vadd.f32 0.0, %v4433
  %v4435 = vpop.f32.mrb[0].mxu0
  %v4436 = vpop.f32.mrb[0].mxu0
  %v4437 = vadd.f32 0.0, %v4436
  %v4438 = vpop.f32.mrb[0].mxu0
  %4439 = vmatprep.mubr.bf16.mxu0 %v4039
  %4440 = vmatmul.mubr.bf16.gmra.mrb[0].mxu0 %v4038
  %v4441 = vpop.f32.mrb[0].mxu0
  %v4442 = vadd.f32 0.0, %v4441
  %v4443 = vpop.f32.mrb[0].mxu0
  %v4444 = vpop.f32.mrb[0].mxu0
  %v4445 = vadd.f32 0.0, %v4444
  %v4446 = vpop.f32.mrb[0].mxu0
  %4447 = vmatprep.mubr.bf16.mxu0 %v4042
  %4448 = vmatmul.mubr.bf16.gmra.mrb[0].mxu0 %v4041
  %v4449 = vpop.f32.mrb[0].mxu0
  %v4450 = vadd.f32 0.0, %v4449
  %v4451 = vpop.f32.mrb[0].mxu0
  %v4452 = vpop.f32.mrb[0].mxu0
  %v4453 = vadd.f32 0.0, %v4452
  %v4454 = vpop.f32.mrb[0].mxu0
  %4455 = vmatprep.mubr.bf16.mxu0 %v4045
  %4456 = vmatmul.mubr.bf16.gmra.mrb[0].mxu0 %v4044
  %v4457 = vpop.f32.mrb[0].mxu0
  %v4458 = vadd.f32 0.0, %v4457
  %v4459 = vpop.f32.mrb[0].mxu0
  %v4460 = vpop.f32.mrb[0].mxu0
  %v4461 = vadd.f32 0.0, %v4460
  %v4462 = vpop.f32.mrb[0].mxu0
  %4463 = vmatprep.mubr.bf16.mxu0 %v4048
  %4464 = vmatmul.mubr.bf16.gmra.mrb[0].mxu0 %v4047
  %v4465 = vpop.f32.mrb[0].mxu0
  %v4466 = vadd.f32 0.0, %v4465
  %v4467 = vpop.f32.mrb[0].mxu0
  %v4468 = vpop.f32.mrb[0].mxu0
  %v4469 = vadd.f32 0.0, %v4468
  %v4470 = vpop.f32.mrb[0].mxu0
  %4471 = vmatprep.mubr.bf16.mxu0 %v4051
  %4472 = vmatmul.mubr.bf16.gmra.mrb[0].mxu0 %v4050
  %v4473 = vpop.f32.mrb[0].mxu0
  %v4474 = vadd.f32 0.0, %v4473
  %v4475 = vpop.f32.mrb[0].mxu0
  %v4476 = vpop.f32.mrb[0].mxu0
  %v4477 = vadd.f32 0.0, %v4476
  %v4478 = vpop.f32.mrb[0].mxu0
  %4479 = vmatprep.mubr.bf16.mxu0 %v4054
  %4480 = vmatmul.mubr.bf16.gmra.mrb[0].mxu0 %v4053
  %v4481 = vpop.f32.mrb[0].mxu0
  %v4482 = vadd.f32 0.0, %v4481
  %v4483 = vpop.f32.mrb[0].mxu0
  %v4484 = vpop.f32.mrb[0].mxu0
  %v4485 = vadd.f32 0.0, %v4484
  %v4486 = vpop.f32.mrb[0].mxu0
  %4487 = vmatprep.mubr.bf16.mxu0 %v4057
  %4488 = vmatmul.mubr.bf16.gmra.mrb[0].mxu0 %v4056
  %v4489 = vpop.f32.mrb[0].mxu0
  %v4490 = vadd.f32 0.0, %v4489
  %v4491 = vpop.f32.mrb[0].mxu0
  %v4492 = vpop.f32.mrb[0].mxu0
  %v4493 = vadd.f32 0.0, %v4492
  %v4494 = vpop.f32.mrb[0].mxu0
  %4495 = vmatprep.mubr.bf16.mxu0 %v4060
  %4496 = vmatmul.mubr.bf16.gmra.mrb[0].mxu0 %v4059
  %v4497 = vpop.f32.mrb[0].mxu0
  %v4498 = vadd.f32 0.0, %v4497
  %v4499 = vpop.f32.mrb[0].mxu0
  %v4500 = vpop.f32.mrb[0].mxu0
  %v4501 = vadd.f32 0.0, %v4500
  %v4502 = vpop.f32.mrb[0].mxu0
  %4503 = vmatprep.mubr.bf16.mxu0 %v4063
  %4504 = vmatmul.mubr.bf16.gmra.mrb[0].mxu0 %v4062
  %v4505 = vpop.f32.mrb[0].mxu0
  %v4506 = vadd.f32 0.0, %v4505
  %v4507 = vpop.f32.mrb[0].mxu0
  %v4508 = vpop.f32.mrb[0].mxu0
  %v4509 = vadd.f32 0.0, %v4508
  %v4510 = vpop.f32.mrb[0].mxu0
  %4511 = vmatprep.mubr.bf16.mxu0 %v4066
  %4512 = vmatmul.mubr.bf16.gmra.mrb[0].mxu0 %v4065
  %v4513 = vpop.f32.mrb[0].mxu0
  %v4514 = vadd.f32 0.0, %v4513
  %v4515 = vpop.f32.mrb[0].mxu0
  %v4516 = vpop.f32.mrb[0].mxu0
  %v4517 = vadd.f32 0.0, %v4516
  %v4518 = vpop.f32.mrb[0].mxu0
  %4519 = vmatprep.mubr.bf16.mxu0 %v4069
  %4520 = vmatmul.mubr.bf16.gmra.mrb[0].mxu0 %v4068
  %v4521 = vpop.f32.mrb[0].mxu0
  %v4522 = vadd.f32 0.0, %v4521
  %v4523 = vpop.f32.mrb[0].mxu0
  %v4524 = vpop.f32.mrb[0].mxu0
  %v4525 = vadd.f32 0.0, %v4524
  %v4526 = vpop.f32.mrb[0].mxu0
  %4527 = vmatprep.mubr.bf16.mxu0 %v4072
  %4528 = vmatmul.mubr.bf16.gmra.mrb[0].mxu0 %v4071
  %v4529 = vpop.f32.mrb[0].mxu0
  %v4530 = vadd.f32 0.0, %v4529
  %v4531 = vpop.f32.mrb[0].mxu0
  %v4532 = vpop.f32.mrb[0].mxu0
  %v4533 = vadd.f32 0.0, %v4532
  %v4534 = vpop.f32.mrb[0].mxu0
  %4535 = vmatprep.mubr.bf16.mxu0 %v4075
  %4536 = vmatmul.mubr.bf16.gmra.mrb[0].mxu0 %v4074
  %v4537 = vpop.f32.mrb[0].mxu0
  %v4538 = vadd.f32 0.0, %v4537
  %v4539 = vpop.f32.mrb[0].mxu0
  %v4540 = vpop.f32.mrb[0].mxu0
  %v4541 = vadd.f32 0.0, %v4540
  %v4542 = vpop.f32.mrb[0].mxu0
  %4543 = vmatprep.mubr.bf16.mxu0 %v4078
  %4544 = vmatmul.mubr.bf16.gmra.mrb[0].mxu0 %v4077
  %v4545 = vpop.f32.mrb[0].mxu0
  %v4546 = vadd.f32 0.0, %v4545
  %v4547 = vpop.f32.mrb[0].mxu0
  %v4548 = vpop.f32.mrb[0].mxu0
  %v4549 = vadd.f32 0.0, %v4548
  %v4550 = vpop.f32.mrb[0].mxu0
  %4551 = vmatprep.mubr.bf16.mxu0 %v4081
  %4552 = vmatmul.mubr.bf16.gmra.mrb[0].mxu0 %v4080
  %v4553 = vpop.f32.mrb[0].mxu0
  %v4554 = vadd.f32 0.0, %v4553
  %v4555 = vpop.f32.mrb[0].mxu0
  %v4556 = vpop.f32.mrb[0].mxu0
  %v4557 = vadd.f32 0.0, %v4556
  %v4558 = vpop.f32.mrb[0].mxu0
  %4559 = vmatprep.mubr.bf16.mxu0 %v4084
  %4560 = vmatmul.mubr.bf16.gmra.mrb[0].mxu0 %v4083
  %v4561 = vpop.f32.mrb[0].mxu0
  %v4562 = vadd.f32 0.0, %v4561
  %v4563 = vpop.f32.mrb[0].mxu0
  %v4564 = vpop.f32.mrb[0].mxu0
  %v4565 = vadd.f32 0.0, %v4564
  %v4566 = vpop.f32.mrb[0].mxu0
  %4567 = vdwg.mxu0
  %4568 = vmatprep.subr.bf16.mxu0 0
  %4569 = vmatpush1.bf16.msra.mxu0 %v4247
  %4570 = vmatprep.subr.bf16.mxu0 0
  %4571 = vmatpush1.bf16.msra.mxu0 %v4248
  %4572 = vmatprep.subr.bf16.mxu0 0
  %4573 = vmatpush1.bf16.msra.mxu0 %v4249
  %4574 = vmatprep.subr.bf16.mxu0 0
  %4575 = vmatpush1.bf16.msra.mxu0 %v4250
  %4576 = vmatprep.subr.bf16.mxu0 0
  %4577 = vmatpush1.bf16.msra.mxu0 %v4251
  %4578 = vmatprep.subr.bf16.mxu0 0
  %4579 = vmatpush1.bf16.msra.mxu0 %v4252
  %4580 = vmatprep.subr.bf16.mxu0 0
  %4581 = vmatpush1.bf16.msra.mxu0 %v4253
  %4582 = vmatprep.subr.bf16.mxu0 0
  %4583 = vmatpush1.bf16.msra.mxu0 %v4254
  %4584 = vmatprep.subr.bf16.mxu0 0
  %4585 = vmatpush1.bf16.msra.mxu0 0
  %4586 = vmatprep.subr.bf16.mxu0 0
  %4587 = vmatpush1.bf16.msra.mxu0 0
  %4588 = vmatprep.subr.bf16.mxu0 0
  %4589 = vmatpush1.bf16.msra.mxu0 0
  %4590 = vmatprep.subr.bf16.mxu0 0
  %4591 = vmatpush1.bf16.msra.mxu0 0
  %4592 = vmatprep.subr.bf16.mxu0 0
  %4593 = vmatpush1.bf16.msra.mxu0 0
  %4594 = vmatprep.subr.bf16.mxu0 0
  %4595 = vmatpush1.bf16.msra.mxu0 0
  %4596 = vmatprep.subr.bf16.mxu0 0
  %4597 = vmatpush1.bf16.msra.mxu0 0
  %4598 = vmatprep.subr.bf16.mxu0 0
  %4599 = vmatpush1.bf16.msra.mxu0 0
  %4600 = vmatprep.mubr.bf16.mxu0 0
  %4601 = vmatmul.mubr.bf16.gmra.mrb[0].mxu0 %v3992
  %v4602 = vpop.f32.mrb[0].mxu0
  %v4603 = vadd.f32 %v4314, %v4602
  %v4604 = vpop.f32.mrb[0].mxu0
  %v4605 = vpop.f32.mrb[0].mxu0
  %v4606 = vadd.f32 %v4317, %v4605
  %v4607 = vpop.f32.mrb[0].mxu0
  %4608 = vmatprep.mubr.bf16.mxu0 0
  %4609 = vmatmul.mubr.bf16.gmra.mrb[0].mxu0 %v3995
  %v4610 = vpop.f32.mrb[0].mxu0
  %v4611 = vadd.f32 %v4322, %v4610
  %v4612 = vpop.f32.mrb[0].mxu0
  %v4613 = vpop.f32.mrb[0].mxu0
  %v4614 = vadd.f32 %v4325, %v4613
  %v4615 = vpop.f32.mrb[0].mxu0
  %4616 = vmatprep.mubr.bf16.mxu0 0
  %4617 = vmatmul.mubr.bf16.gmra.mrb[0].mxu0 %v3998
  %v4618 = vpop.f32.mrb[0].mxu0
  %v4619 = vadd.f32 %v4330, %v4618
  %v4620 = vpop.f32.mrb[0].mxu0
  %v4621 = vpop.f32.mrb[0].mxu0
  %v4622 = vadd.f32 %v4333, %v4621
  %v4623 = vpop.f32.mrb[0].mxu0
  %4624 = vmatprep.mubr.bf16.mxu0 0
  %4625 = vmatmul.mubr.bf16.gmra.mrb[0].mxu0 %v4001
  %v4626 = vpop.f32.mrb[0].mxu0
  %v4627 = vadd.f32 %v4338, %v4626
  %v4628 = vpop.f32.mrb[0].mxu0
  %v4629 = vpop.f32.mrb[0].mxu0
  %v4630 = vadd.f32 %v4341, %v4629
  %v4631 = vpop.f32.mrb[0].mxu0
  %4632 = vmatprep.mubr.bf16.mxu0 0
  %4633 = vmatmul.mubr.bf16.gmra.mrb[0].mxu0 %v4004
  %v4634 = vpop.f32.mrb[0].mxu0
  %v4635 = vadd.f32 %v4346, %v4634
  %v4636 = vpop.f32.mrb[0].mxu0
  %v4637 = vpop.f32.mrb[0].mxu0
  %v4638 = vadd.f32 %v4349, %v4637
  %v4639 = vpop.f32.mrb[0].mxu0
  %4640 = vmatprep.mubr.bf16.mxu0 0
  %4641 = vmatmul.mubr.bf16.gmra.mrb[0].mxu0 %v4007
  %v4642 = vpop.f32.mrb[0].mxu0
  %v4643 = vadd.f32 %v4354, %v4642
  %v4644 = vpop.f32.mrb[0].mxu0
  %v4645 = vpop.f32.mrb[0].mxu0
  %v4646 = vadd.f32 %v4357, %v4645
  %v4647 = vpop.f32.mrb[0].mxu0
  %4648 = vmatprep.mubr.bf16.mxu0 0
  %4649 = vmatmul.mubr.bf16.gmra.mrb[0].mxu0 %v4010
  %v4650 = vpop.f32.mrb[0].mxu0
  %v4651 = vadd.f32 %v4362, %v4650
  %v4652 = vpop.f32.mrb[0].mxu0
  %v4653 = vpop.f32.mrb[0].mxu0
  %v4654 = vadd.f32 %v4365, %v4653
  %v4655 = vpop.f32.mrb[0].mxu0
  %4656 = vmatprep.mubr.bf16.mxu0 0
  %4657 = vmatmul.mubr.bf16.gmra.mrb[0].mxu0 %v4013
  %v4658 = vpop.f32.mrb[0].mxu0
  %v4659 = vadd.f32 %v4370, %v4658
  %v4660 = vpop.f32.mrb[0].mxu0
  %v4661 = vpop.f32.mrb[0].mxu0
  %v4662 = vadd.f32 %v4373, %v4661
  %v4663 = vpop.f32.mrb[0].mxu0
  %4664 = vmatprep.mubr.bf16.mxu0 0
  %4665 = vmatmul.mubr.bf16.gmra.mrb[0].mxu0 %v4016
  %v4666 = vpop.f32.mrb[0].mxu0
  %v4667 = vadd.f32 %v4378, %v4666
  %v4668 = vpop.f32.mrb[0].mxu0
  %v4669 = vpop.f32.mrb[0].mxu0
  %v4670 = vadd.f32 %v4381, %v4669
  %v4671 = vpop.f32.mrb[0].mxu0
  %4672 = vmatprep.mubr.bf16.mxu0 0
  %4673 = vmatmul.mubr.bf16.gmra.mrb[0].mxu0 %v4019
  %v4674 = vpop.f32.mrb[0].mxu0
  %v4675 = vadd.f32 %v4386, %v4674
  %v4676 = vpop.f32.mrb[0].mxu0
  %v4677 = vpop.f32.mrb[0].mxu0
  %v4678 = vadd.f32 %v4389, %v4677
  %v4679 = vpop.f32.mrb[0].mxu0
  %4680 = vmatprep.mubr.bf16.mxu0 0
  %4681 = vmatmul.mubr.bf16.gmra.mrb[0].mxu0 %v4022
  %v4682 = vpop.f32.mrb[0].mxu0
  %v4683 = vadd.f32 %v4394, %v4682
  %v4684 = vpop.f32.mrb[0].mxu0
  %v4685 = vpop.f32.mrb[0].mxu0
  %v4686 = vadd.f32 %v4397, %v4685
  %v4687 = vpop.f32.mrb[0].mxu0
  %4688 = vmatprep.mubr.bf16.mxu0 0
  %4689 = vmatmul.mubr.bf16.gmra.mrb[0].mxu0 %v4025
  %v4690 = vpop.f32.mrb[0].mxu0
  %v4691 = vadd.f32 %v4402, %v4690
  %v4692 = vpop.f32.mrb[0].mxu0
  %v4693 = vpop.f32.mrb[0].mxu0
  %v4694 = vadd.f32 %v4405, %v4693
  %v4695 = vpop.f32.mrb[0].mxu0
  %4696 = vmatprep.mubr.bf16.mxu0 0
  %4697 = vmatmul.mubr.bf16.gmra.mrb[0].mxu0 %v4028
  %v4698 = vpop.f32.mrb[0].mxu0
  %v4699 = vadd.f32 %v4410, %v4698
  %v4700 = vpop.f32.mrb[0].mxu0
  %v4701 = vpop.f32.mrb[0].mxu0
  %v4702 = vadd.f32 %v4413, %v4701
  %v4703 = vpop.f32.mrb[0].mxu0
  %4704 = vmatprep.mubr.bf16.mxu0 0
  %4705 = vmatmul.mubr.bf16.gmra.mrb[0].mxu0 %v4031
  %v4706 = vpop.f32.mrb[0].mxu0
  %v4707 = vadd.f32 %v4418, %v4706
  %v4708 = vpop.f32.mrb[0].mxu0
  %v4709 = vpop.f32.mrb[0].mxu0
  %v4710 = vadd.f32 %v4421, %v4709
  %v4711 = vpop.f32.mrb[0].mxu0
  %4712 = vmatprep.mubr.bf16.mxu0 0
  %4713 = vmatmul.mubr.bf16.gmra.mrb[0].mxu0 %v4034
  %v4714 = vpop.f32.mrb[0].mxu0
  %v4715 = vadd.f32 %v4426, %v4714
  %v4716 = vpop.f32.mrb[0].mxu0
  %v4717 = vpop.f32.mrb[0].mxu0
  %v4718 = vadd.f32 %v4429, %v4717
  %v4719 = vpop.f32.mrb[0].mxu0
  %4720 = vmatprep.mubr.bf16.mxu0 0
  %4721 = vmatmul.mubr.bf16.gmra.mrb[0].mxu0 %v4037
  %v4722 = vpop.f32.mrb[0].mxu0
  %v4723 = vadd.f32 %v4434, %v4722
  %v4724 = vpop.f32.mrb[0].mxu0
  %v4725 = vpop.f32.mrb[0].mxu0
  %v4726 = vadd.f32 %v4437, %v4725
  %v4727 = vpop.f32.mrb[0].mxu0
  %4728 = vmatprep.mubr.bf16.mxu0 0
  %4729 = vmatmul.mubr.bf16.gmra.mrb[0].mxu0 %v4040
  %v4730 = vpop.f32.mrb[0].mxu0
  %v4731 = vadd.f32 %v4442, %v4730
  %v4732 = vpop.f32.mrb[0].mxu0
  %v4733 = vpop.f32.mrb[0].mxu0
  %v4734 = vadd.f32 %v4445, %v4733
  %v4735 = vpop.f32.mrb[0].mxu0
  %4736 = vmatprep.mubr.bf16.mxu0 0
  %4737 = vmatmul.mubr.bf16.gmra.mrb[0].mxu0 %v4043
  %v4738 = vpop.f32.mrb[0].mxu0
  %v4739 = vadd.f32 %v4450, %v4738
  %v4740 = vpop.f32.mrb[0].mxu0
  %v4741 = vpop.f32.mrb[0].mxu0
  %v4742 = vadd.f32 %v4453, %v4741
  %v4743 = vpop.f32.mrb[0].mxu0
  %4744 = vmatprep.mubr.bf16.mxu0 0
  %4745 = vmatmul.mubr.bf16.gmra.mrb[0].mxu0 %v4046
  %v4746 = vpop.f32.mrb[0].mxu0
  %v4747 = vadd.f32 %v4458, %v4746
  %v4748 = vpop.f32.mrb[0].mxu0
  %v4749 = vpop.f32.mrb[0].mxu0
  %v4750 = vadd.f32 %v4461, %v4749
  %v4751 = vpop.f32.mrb[0].mxu0
  %4752 = vmatprep.mubr.bf16.mxu0 0
  %4753 = vmatmul.mubr.bf16.gmra.mrb[0].mxu0 %v4049
  %v4754 = vpop.f32.mrb[0].mxu0
  %v4755 = vadd.f32 %v4466, %v4754
  %v4756 = vpop.f32.mrb[0].mxu0
  %v4757 = vpop.f32.mrb[0].mxu0
  %v4758 = vadd.f32 %v4469, %v4757
  %v4759 = vpop.f32.mrb[0].mxu0
  %4760 = vmatprep.mubr.bf16.mxu0 0
  %4761 = vmatmul.mubr.bf16.gmra.mrb[0].mxu0 %v4052
  %v4762 = vpop.f32.mrb[0].mxu0
  %v4763 = vadd.f32 %v4474, %v4762
  %v4764 = vpop.f32.mrb[0].mxu0
  %v4765 = vpop.f32.mrb[0].mxu0
  %v4766 = vadd.f32 %v4477, %v4765
  %v4767 = vpop.f32.mrb[0].mxu0
  %4768 = vmatprep.mubr.bf16.mxu0 0
  %4769 = vmatmul.mubr.bf16.gmra.mrb[0].mxu0 %v4055
  %v4770 = vpop.f32.mrb[0].mxu0
  %v4771 = vadd.f32 %v4482, %v4770
  %v4772 = vpop.f32.mrb[0].mxu0
  %v4773 = vpop.f32.mrb[0].mxu0
  %v4774 = vadd.f32 %v4485, %v4773
  %v4775 = vpop.f32.mrb[0].mxu0
  %4776 = vmatprep.mubr.bf16.mxu0 0
  %4777 = vmatmul.mubr.bf16.gmra.mrb[0].mxu0 %v4058
  %v4778 = vpop.f32.mrb[0].mxu0
  %v4779 = vadd.f32 %v4490, %v4778
  %v4780 = vpop.f32.mrb[0].mxu0
  %v4781 = vpop.f32.mrb[0].mxu0
  %v4782 = vadd.f32 %v4493, %v4781
  %v4783 = vpop.f32.mrb[0].mxu0
  %4784 = vmatprep.mubr.bf16.mxu0 0
  %4785 = vmatmul.mubr.bf16.gmra.mrb[0].mxu0 %v4061
  %v4786 = vpop.f32.mrb[0].mxu0
  %v4787 = vadd.f32 %v4498, %v4786
  %v4788 = vpop.f32.mrb[0].mxu0
  %v4789 = vpop.f32.mrb[0].mxu0
  %v4790 = vadd.f32 %v4501, %v4789
  %v4791 = vpop.f32.mrb[0].mxu0
  %4792 = vmatprep.mubr.bf16.mxu0 0
  %4793 = vmatmul.mubr.bf16.gmra.mrb[0].mxu0 %v4064
  %v4794 = vpop.f32.mrb[0].mxu0
  %v4795 = vadd.f32 %v4506, %v4794
  %v4796 = vpop.f32.mrb[0].mxu0
  %v4797 = vpop.f32.mrb[0].mxu0
  %v4798 = vadd.f32 %v4509, %v4797
  %v4799 = vpop.f32.mrb[0].mxu0
  %4800 = vmatprep.mubr.bf16.mxu0 0
  %4801 = vmatmul.mubr.bf16.gmra.mrb[0].mxu0 %v4067
  %v4802 = vpop.f32.mrb[0].mxu0
  %v4803 = vadd.f32 %v4514, %v4802
  %v4804 = vpop.f32.mrb[0].mxu0
  %v4805 = vpop.f32.mrb[0].mxu0
  %v4806 = vadd.f32 %v4517, %v4805
  %v4807 = vpop.f32.mrb[0].mxu0
  %4808 = vmatprep.mubr.bf16.mxu0 0
  %4809 = vmatmul.mubr.bf16.gmra.mrb[0].mxu0 %v4070
  %v4810 = vpop.f32.mrb[0].mxu0
  %v4811 = vadd.f32 %v4522, %v4810
  %v4812 = vpop.f32.mrb[0].mxu0
  %v4813 = vpop.f32.mrb[0].mxu0
  %v4814 = vadd.f32 %v4525, %v4813
  %v4815 = vpop.f32.mrb[0].mxu0
  %4816 = vmatprep.mubr.bf16.mxu0 0
  %4817 = vmatmul.mubr.bf16.gmra.mrb[0].mxu0 %v4073
  %v4818 = vpop.f32.mrb[0].mxu0
  %v4819 = vadd.f32 %v4530, %v4818
  %v4820 = vpop.f32.mrb[0].mxu0
  %v4821 = vpop.f32.mrb[0].mxu0
  %v4822 = vadd.f32 %v4533, %v4821
  %v4823 = vpop.f32.mrb[0].mxu0
  %4824 = vmatprep.mubr.bf16.mxu0 0
  %4825 = vmatmul.mubr.bf16.gmra.mrb[0].mxu0 %v4076
  %v4826 = vpop.f32.mrb[0].mxu0
  %v4827 = vadd.f32 %v4538, %v4826
  %v4828 = vpop.f32.mrb[0].mxu0
  %v4829 = vpop.f32.mrb[0].mxu0
  %v4830 = vadd.f32 %v4541, %v4829
  %v4831 = vpop.f32.mrb[0].mxu0
  %4832 = vmatprep.mubr.bf16.mxu0 0
  %4833 = vmatmul.mubr.bf16.gmra.mrb[0].mxu0 %v4079
  %v4834 = vpop.f32.mrb[0].mxu0
  %v4835 = vadd.f32 %v4546, %v4834
  %v4836 = vpop.f32.mrb[0].mxu0
  %v4837 = vpop.f32.mrb[0].mxu0
  %v4838 = vadd.f32 %v4549, %v4837
  %v4839 = vpop.f32.mrb[0].mxu0
  %4840 = vmatprep.mubr.bf16.mxu0 0
  %4841 = vmatmul.mubr.bf16.gmra.mrb[0].mxu0 %v4082
  %v4842 = vpop.f32.mrb[0].mxu0
  %v4843 = vadd.f32 %v4554, %v4842
  %v4844 = vpop.f32.mrb[0].mxu0
  %v4845 = vpop.f32.mrb[0].mxu0
  %v4846 = vadd.f32 %v4557, %v4845
  %v4847 = vpop.f32.mrb[0].mxu0
  %4848 = vmatprep.mubr.bf16.mxu0 0
  %4849 = vmatmul.mubr.bf16.gmra.mrb[0].mxu0 %v4085
  %v4850 = vpop.f32.mrb[0].mxu0
  %v4851 = vadd.f32 %v4562, %v4850
  %v4852 = vpop.f32.mrb[0].mxu0
  %v4853 = vpop.f32.mrb[0].mxu0
  %v4854 = vadd.f32 %v4565, %v4853
  %v4855 = vpop.f32.mrb[0].mxu0
  %4856 = vdwg.mxu0
  %v4905 = vunpack.c.l.b16 %v3942
  %v4906 = vunpack.c.l.b16 %v3943
  %v4907 = vunpack.c.l.b16 %v3944
  %v4908 = vunpack.c.l.b16 %v3945
  %v4909 = vunpack.c.l.b16 %v3946
  %v4910 = vunpack.c.l.b16 %v3947
  %v4911 = vunpack.c.l.b16 %v3948
  %v4912 = vunpack.c.l.b16 %v3949
  %v4913 = vunpack.c.l.b16 %v3950
  %v4914 = vunpack.c.l.b16 %v3951
  %v4915 = vunpack.c.l.b16 %v3952
  %v4916 = vunpack.c.l.b16 %v3953
  %v4917 = vunpack.c.l.b16 %v3954
  %v4918 = vunpack.c.l.b16 %v3955
  %v4919 = vunpack.c.l.b16 %v3956
  %v4920 = vunpack.c.l.b16 %v3957
  %v4921 = vunpack.c.l.b16 %v3958
  %v4922 = vunpack.c.l.b16 %v3959
  %v4923 = vunpack.c.l.b16 %v3960
  %v4924 = vunpack.c.l.b16 %v3961
  %v4925 = vunpack.c.l.b16 %v3962
  %v4926 = vunpack.c.l.b16 %v3963
  %v4927 = vunpack.c.l.b16 %v3964
  %v4928 = vunpack.c.l.b16 %v3965
  %v4929 = vunpack.c.l.b16 %v3966
  %v4930 = vunpack.c.l.b16 %v3967
  %v4931 = vunpack.c.l.b16 %v3968
  %v4932 = vunpack.c.l.b16 %v3969
  %v4933 = vunpack.c.l.b16 %v3970
  %v4934 = vunpack.c.l.b16 %v3971
  %v4935 = vunpack.c.l.b16 %v3972
  %v4936 = vunpack.c.l.b16 %v3973
  %v4937 = vunpack.c.l.b16 %v3974
  %v4938 = vunpack.c.l.b16 %v3975
  %v4939 = vunpack.c.l.b16 %v3976
  %v4940 = vunpack.c.l.b16 %v3977
  %v4941 = vunpack.c.l.b16 %v3978
  %v4942 = vunpack.c.l.b16 %v3979
  %v4943 = vunpack.c.l.b16 %v3980
  %v4944 = vunpack.c.l.b16 %v3981
  %v4945 = vunpack.c.l.b16 %v3982
  %v4946 = vunpack.c.l.b16 %v3983
  %v4947 = vunpack.c.l.b16 %v3984
  %v4948 = vunpack.c.l.b16 %v3985
  %v4949 = vunpack.c.l.b16 %v3986
  %v4950 = vunpack.c.l.b16 %v3987
  %v4951 = vunpack.c.l.b16 %v3988
  %v4952 = vunpack.c.l.b16 %v3989
  %v4953 = vpack.c.b16 %v4906, %v4905
  %v4954 = vpack.c.b16 %v4908, %v4907
  %v4955 = vpack.c.b16 %v4910, %v4909
  %v4956 = vpack.c.b16 %v4912, %v4911
  %v4957 = vpack.c.b16 %v4914, %v4913
  %v4958 = vpack.c.b16 %v4916, %v4915
  %v4959 = vpack.c.b16 %v4918, %v4917
  %v4960 = vpack.c.b16 %v4920, %v4919
  %v4961 = vpack.c.b16 %v4922, %v4921
  %v4962 = vpack.c.b16 %v4924, %v4923
  %v4963 = vpack.c.b16 %v4926, %v4925
  %v4964 = vpack.c.b16 %v4928, %v4927
  %v4965 = vpack.c.b16 %v4930, %v4929
  %v4966 = vpack.c.b16 %v4932, %v4931
  %v4967 = vpack.c.b16 %v4934, %v4933
  %v4968 = vpack.c.b16 %v4936, %v4935
  %v4969 = vpack.c.b16 %v4938, %v4937
  %v4970 = vpack.c.b16 %v4940, %v4939
  %v4971 = vpack.c.b16 %v4942, %v4941
  %v4972 = vpack.c.b16 %v4944, %v4943
  %v4973 = vpack.c.b16 %v4946, %v4945
  %v4974 = vpack.c.b16 %v4948, %v4947
  %v4975 = vpack.c.b16 %v4950, %v4949
  %v4976 = vpack.c.b16 %v4952, %v4951
  %5001 = vmatprep.subr.bf16.mxu0 0
  %5002 = vmatpush1.bf16.msra.mxu0 %v4953
  %5003 = vmatprep.subr.bf16.mxu0 0
  %5004 = vmatpush1.bf16.msra.mxu0 %v4954
  %5005 = vmatprep.subr.bf16.mxu0 0
  %5006 = vmatpush1.bf16.msra.mxu0 %v4955
  %5007 = vmatprep.subr.bf16.mxu0 0
  %5008 = vmatpush1.bf16.msra.mxu0 %v4956
  %5009 = vmatprep.subr.bf16.mxu0 0
  %5010 = vmatpush1.bf16.msra.mxu0 %v4957
  %5011 = vmatprep.subr.bf16.mxu0 0
  %5012 = vmatpush1.bf16.msra.mxu0 %v4958
  %5013 = vmatprep.subr.bf16.mxu0 0
  %5014 = vmatpush1.bf16.msra.mxu0 %v4959
  %5015 = vmatprep.subr.bf16.mxu0 0
  %5016 = vmatpush1.bf16.msra.mxu0 %v4960
  %5017 = vmatprep.subr.bf16.mxu0 0
  %5018 = vmatpush1.bf16.msra.mxu0 %v4961
  %5019 = vmatprep.subr.bf16.mxu0 0
  %5020 = vmatpush1.bf16.msra.mxu0 %v4962
  %5021 = vmatprep.subr.bf16.mxu0 0
  %5022 = vmatpush1.bf16.msra.mxu0 %v4963
  %5023 = vmatprep.subr.bf16.mxu0 0
  %5024 = vmatpush1.bf16.msra.mxu0 %v4964
  %5025 = vmatprep.subr.bf16.mxu0 0
  %5026 = vmatpush1.bf16.msra.mxu0 %v4965
  %5027 = vmatprep.subr.bf16.mxu0 0
  %5028 = vmatpush1.bf16.msra.mxu0 %v4966
  %5029 = vmatprep.subr.bf16.mxu0 0
  %5030 = vmatpush1.bf16.msra.mxu0 %v4967
  %5031 = vmatprep.subr.bf16.mxu0 0
  %5032 = vmatpush1.bf16.msra.mxu0 %v4968
  %5033 = vmatprep.mubr.bf16.mxu0 %v3847
  %5034 = vmatmul.mubr.bf16.gmra.mrb[0].mxu0 %v3846
  %v5035 = vpop.f32.mrb[0].mxu0
  %v5036 = vadd.f32 %v4603, %v5035
  %v5037 = vpop.f32.mrb[0].mxu0
  %v5038 = vpop.f32.mrb[0].mxu0
  %v5039 = vadd.f32 %v4606, %v5038
  %v5040 = vpop.f32.mrb[0].mxu0
  %5041 = vmatprep.mubr.bf16.mxu0 %v3850
  %5042 = vmatmul.mubr.bf16.gmra.mrb[0].mxu0 %v3849
  %v5043 = vpop.f32.mrb[0].mxu0
  %v5044 = vadd.f32 %v4611, %v5043
  %v5045 = vpop.f32.mrb[0].mxu0
  %v5046 = vpop.f32.mrb[0].mxu0
  %v5047 = vadd.f32 %v4614, %v5046
  %v5048 = vpop.f32.mrb[0].mxu0
  %5049 = vmatprep.mubr.bf16.mxu0 %v3853
  %5050 = vmatmul.mubr.bf16.gmra.mrb[0].mxu0 %v3852
  %v5051 = vpop.f32.mrb[0].mxu0
  %v5052 = vadd.f32 %v4619, %v5051
  %v5053 = vpop.f32.mrb[0].mxu0
  %v5054 = vpop.f32.mrb[0].mxu0
  %v5055 = vadd.f32 %v4622, %v5054
  %v5056 = vpop.f32.mrb[0].mxu0
  %5057 = vmatprep.mubr.bf16.mxu0 %v3856
  %5058 = vmatmul.mubr.bf16.gmra.mrb[0].mxu0 %v3855
  %v5059 = vpop.f32.mrb[0].mxu0
  %v5060 = vadd.f32 %v4627, %v5059
  %v5061 = vpop.f32.mrb[0].mxu0
  %v5062 = vpop.f32.mrb[0].mxu0
  %v5063 = vadd.f32 %v4630, %v5062
  %v5064 = vpop.f32.mrb[0].mxu0
  %5065 = vmatprep.mubr.bf16.mxu0 %v3859
  %5066 = vmatmul.mubr.bf16.gmra.mrb[0].mxu0 %v3858
  %v5067 = vpop.f32.mrb[0].mxu0
  %v5068 = vadd.f32 %v4635, %v5067
  %v5069 = vpop.f32.mrb[0].mxu0
  %v5070 = vpop.f32.mrb[0].mxu0
  %v5071 = vadd.f32 %v4638, %v5070
  %v5072 = vpop.f32.mrb[0].mxu0
  %5073 = vmatprep.mubr.bf16.mxu0 %v3862
  %5074 = vmatmul.mubr.bf16.gmra.mrb[0].mxu0 %v3861
  %v5075 = vpop.f32.mrb[0].mxu0
  %v5076 = vadd.f32 %v4643, %v5075
  %v5077 = vpop.f32.mrb[0].mxu0
  %v5078 = vpop.f32.mrb[0].mxu0
  %v5079 = vadd.f32 %v4646, %v5078
  %v5080 = vpop.f32.mrb[0].mxu0
  %5081 = vmatprep.mubr.bf16.mxu0 %v3865
  %5082 = vmatmul.mubr.bf16.gmra.mrb[0].mxu0 %v3864
  %v5083 = vpop.f32.mrb[0].mxu0
  %v5084 = vadd.f32 %v4651, %v5083
  %v5085 = vpop.f32.mrb[0].mxu0
  %v5086 = vpop.f32.mrb[0].mxu0
  %v5087 = vadd.f32 %v4654, %v5086
  %v5088 = vpop.f32.mrb[0].mxu0
  %5089 = vmatprep.mubr.bf16.mxu0 %v3868
  %5090 = vmatmul.mubr.bf16.gmra.mrb[0].mxu0 %v3867
  %v5091 = vpop.f32.mrb[0].mxu0
  %v5092 = vadd.f32 %v4659, %v5091
  %v5093 = vpop.f32.mrb[0].mxu0
  %v5094 = vpop.f32.mrb[0].mxu0
  %v5095 = vadd.f32 %v4662, %v5094
  %v5096 = vpop.f32.mrb[0].mxu0
  %5097 = vmatprep.mubr.bf16.mxu0 %v3871
  %5098 = vmatmul.mubr.bf16.gmra.mrb[0].mxu0 %v3870
  %v5099 = vpop.f32.mrb[0].mxu0
  %v5100 = vadd.f32 %v4667, %v5099
  %v5101 = vpop.f32.mrb[0].mxu0
  %v5102 = vpop.f32.mrb[0].mxu0
  %v5103 = vadd.f32 %v4670, %v5102
  %v5104 = vpop.f32.mrb[0].mxu0
  %5105 = vmatprep.mubr.bf16.mxu0 %v3874
  %5106 = vmatmul.mubr.bf16.gmra.mrb[0].mxu0 %v3873
  %v5107 = vpop.f32.mrb[0].mxu0
  %v5108 = vadd.f32 %v4675, %v5107
  %v5109 = vpop.f32.mrb[0].mxu0
  %v5110 = vpop.f32.mrb[0].mxu0
  %v5111 = vadd.f32 %v4678, %v5110
  %v5112 = vpop.f32.mrb[0].mxu0
  %5113 = vmatprep.mubr.bf16.mxu0 %v3877
  %5114 = vmatmul.mubr.bf16.gmra.mrb[0].mxu0 %v3876
  %v5115 = vpop.f32.mrb[0].mxu0
  %v5116 = vadd.f32 %v4683, %v5115
  %v5117 = vpop.f32.mrb[0].mxu0
  %v5118 = vpop.f32.mrb[0].mxu0
  %v5119 = vadd.f32 %v4686, %v5118
  %v5120 = vpop.f32.mrb[0].mxu0
  %5121 = vmatprep.mubr.bf16.mxu0 %v3880
  %5122 = vmatmul.mubr.bf16.gmra.mrb[0].mxu0 %v3879
  %v5123 = vpop.f32.mrb[0].mxu0
  %v5124 = vadd.f32 %v4691, %v5123
  %v5125 = vpop.f32.mrb[0].mxu0
  %v5126 = vpop.f32.mrb[0].mxu0
  %v5127 = vadd.f32 %v4694, %v5126
  %v5128 = vpop.f32.mrb[0].mxu0
  %5129 = vmatprep.mubr.bf16.mxu0 %v3883
  %5130 = vmatmul.mubr.bf16.gmra.mrb[0].mxu0 %v3882
  %v5131 = vpop.f32.mrb[0].mxu0
  %v5132 = vadd.f32 %v4699, %v5131
  %v5133 = vpop.f32.mrb[0].mxu0
  %v5134 = vpop.f32.mrb[0].mxu0
  %v5135 = vadd.f32 %v4702, %v5134
  %v5136 = vpop.f32.mrb[0].mxu0
  %5137 = vmatprep.mubr.bf16.mxu0 %v3886
  %5138 = vmatmul.mubr.bf16.gmra.mrb[0].mxu0 %v3885
  %v5139 = vpop.f32.mrb[0].mxu0
  %v5140 = vadd.f32 %v4707, %v5139
  %v5141 = vpop.f32.mrb[0].mxu0
  %v5142 = vpop.f32.mrb[0].mxu0
  %v5143 = vadd.f32 %v4710, %v5142
  %v5144 = vpop.f32.mrb[0].mxu0
  %5145 = vmatprep.mubr.bf16.mxu0 %v3889
  %5146 = vmatmul.mubr.bf16.gmra.mrb[0].mxu0 %v3888
  %v5147 = vpop.f32.mrb[0].mxu0
  %v5148 = vadd.f32 %v4715, %v5147
  %v5149 = vpop.f32.mrb[0].mxu0
  %v5150 = vpop.f32.mrb[0].mxu0
  %v5151 = vadd.f32 %v4718, %v5150
  %v5152 = vpop.f32.mrb[0].mxu0
  %5153 = vmatprep.mubr.bf16.mxu0 %v3892
  %5154 = vmatmul.mubr.bf16.gmra.mrb[0].mxu0 %v3891
  %v5155 = vpop.f32.mrb[0].mxu0
  %v5156 = vadd.f32 %v4723, %v5155
  %v5157 = vpop.f32.mrb[0].mxu0
  %v5158 = vpop.f32.mrb[0].mxu0
  %v5159 = vadd.f32 %v4726, %v5158
  %v5160 = vpop.f32.mrb[0].mxu0
  %5161 = vmatprep.mubr.bf16.mxu0 %v3895
  %5162 = vmatmul.mubr.bf16.gmra.mrb[0].mxu0 %v3894
  %v5163 = vpop.f32.mrb[0].mxu0
  %v5164 = vadd.f32 %v4731, %v5163
  %v5165 = vpop.f32.mrb[0].mxu0
  %v5166 = vpop.f32.mrb[0].mxu0
  %v5167 = vadd.f32 %v4734, %v5166
  %v5168 = vpop.f32.mrb[0].mxu0
  %5169 = vmatprep.mubr.bf16.mxu0 %v3898
  %5170 = vmatmul.mubr.bf16.gmra.mrb[0].mxu0 %v3897
  %v5171 = vpop.f32.mrb[0].mxu0
  %v5172 = vadd.f32 %v4739, %v5171
  %v5173 = vpop.f32.mrb[0].mxu0
  %v5174 = vpop.f32.mrb[0].mxu0
  %v5175 = vadd.f32 %v4742, %v5174
  %v5176 = vpop.f32.mrb[0].mxu0
  %5177 = vmatprep.mubr.bf16.mxu0 %v3901
  %5178 = vmatmul.mubr.bf16.gmra.mrb[0].mxu0 %v3900
  %v5179 = vpop.f32.mrb[0].mxu0
  %v5180 = vadd.f32 %v4747, %v5179
  %v5181 = vpop.f32.mrb[0].mxu0
  %v5182 = vpop.f32.mrb[0].mxu0
  %v5183 = vadd.f32 %v4750, %v5182
  %v5184 = vpop.f32.mrb[0].mxu0
  %5185 = vmatprep.mubr.bf16.mxu0 %v3904
  %5186 = vmatmul.mubr.bf16.gmra.mrb[0].mxu0 %v3903
  %v5187 = vpop.f32.mrb[0].mxu0
  %v5188 = vadd.f32 %v4755, %v5187
  %v5189 = vpop.f32.mrb[0].mxu0
  %v5190 = vpop.f32.mrb[0].mxu0
  %v5191 = vadd.f32 %v4758, %v5190
  %v5192 = vpop.f32.mrb[0].mxu0
  %5193 = vmatprep.mubr.bf16.mxu0 %v3907
  %5194 = vmatmul.mubr.bf16.gmra.mrb[0].mxu0 %v3906
  %v5195 = vpop.f32.mrb[0].mxu0
  %v5196 = vadd.f32 %v4763, %v5195
  %v5197 = vpop.f32.mrb[0].mxu0
  %v5198 = vpop.f32.mrb[0].mxu0
  %v5199 = vadd.f32 %v4766, %v5198
  %v5200 = vpop.f32.mrb[0].mxu0
  %5201 = vmatprep.mubr.bf16.mxu0 %v3910
  %5202 = vmatmul.mubr.bf16.gmra.mrb[0].mxu0 %v3909
  %v5203 = vpop.f32.mrb[0].mxu0
  %v5204 = vadd.f32 %v4771, %v5203
  %v5205 = vpop.f32.mrb[0].mxu0
  %v5206 = vpop.f32.mrb[0].mxu0
  %v5207 = vadd.f32 %v4774, %v5206
  %v5208 = vpop.f32.mrb[0].mxu0
  %5209 = vmatprep.mubr.bf16.mxu0 %v3913
  %5210 = vmatmul.mubr.bf16.gmra.mrb[0].mxu0 %v3912
  %v5211 = vpop.f32.mrb[0].mxu0
  %v5212 = vadd.f32 %v4779, %v5211
  %v5213 = vpop.f32.mrb[0].mxu0
  %v5214 = vpop.f32.mrb[0].mxu0
  %v5215 = vadd.f32 %v4782, %v5214
  %v5216 = vpop.f32.mrb[0].mxu0
  %5217 = vmatprep.mubr.bf16.mxu0 %v3916
  %5218 = vmatmul.mubr.bf16.gmra.mrb[0].mxu0 %v3915
  %v5219 = vpop.f32.mrb[0].mxu0
  %v5220 = vadd.f32 %v4787, %v5219
  %v5221 = vpop.f32.mrb[0].mxu0
  %v5222 = vpop.f32.mrb[0].mxu0
  %v5223 = vadd.f32 %v4790, %v5222
  %v5224 = vpop.f32.mrb[0].mxu0
  %5225 = vmatprep.mubr.bf16.mxu0 %v3919
  %5226 = vmatmul.mubr.bf16.gmra.mrb[0].mxu0 %v3918
  %v5227 = vpop.f32.mrb[0].mxu0
  %v5228 = vadd.f32 %v4795, %v5227
  %v5229 = vpop.f32.mrb[0].mxu0
  %v5230 = vpop.f32.mrb[0].mxu0
  %v5231 = vadd.f32 %v4798, %v5230
  %v5232 = vpop.f32.mrb[0].mxu0
  %5233 = vmatprep.mubr.bf16.mxu0 %v3922
  %5234 = vmatmul.mubr.bf16.gmra.mrb[0].mxu0 %v3921
  %v5235 = vpop.f32.mrb[0].mxu0
  %v5236 = vadd.f32 %v4803, %v5235
  %v5237 = vpop.f32.mrb[0].mxu0
  %v5238 = vpop.f32.mrb[0].mxu0
  %v5239 = vadd.f32 %v4806, %v5238
  %v5240 = vpop.f32.mrb[0].mxu0
  %5241 = vmatprep.mubr.bf16.mxu0 %v3925
  %5242 = vmatmul.mubr.bf16.gmra.mrb[0].mxu0 %v3924
  %v5243 = vpop.f32.mrb[0].mxu0
  %v5244 = vadd.f32 %v4811, %v5243
  %v5245 = vpop.f32.mrb[0].mxu0
  %v5246 = vpop.f32.mrb[0].mxu0
  %v5247 = vadd.f32 %v4814, %v5246
  %v5248 = vpop.f32.mrb[0].mxu0
  %5249 = vmatprep.mubr.bf16.mxu0 %v3928
  %5250 = vmatmul.mubr.bf16.gmra.mrb[0].mxu0 %v3927
  %v5251 = vpop.f32.mrb[0].mxu0
  %v5252 = vadd.f32 %v4819, %v5251
  %v5253 = vpop.f32.mrb[0].mxu0
  %v5254 = vpop.f32.mrb[0].mxu0
  %v5255 = vadd.f32 %v4822, %v5254
  %v5256 = vpop.f32.mrb[0].mxu0
  %5257 = vmatprep.mubr.bf16.mxu0 %v3931
  %5258 = vmatmul.mubr.bf16.gmra.mrb[0].mxu0 %v3930
  %v5259 = vpop.f32.mrb[0].mxu0
  %v5260 = vadd.f32 %v4827, %v5259
  %v5261 = vpop.f32.mrb[0].mxu0
  %v5262 = vpop.f32.mrb[0].mxu0
  %v5263 = vadd.f32 %v4830, %v5262
  %v5264 = vpop.f32.mrb[0].mxu0
  %5265 = vmatprep.mubr.bf16.mxu0 %v3934
  %5266 = vmatmul.mubr.bf16.gmra.mrb[0].mxu0 %v3933
  %v5267 = vpop.f32.mrb[0].mxu0
  %v5268 = vadd.f32 %v4835, %v5267
  %v5269 = vpop.f32.mrb[0].mxu0
  %v5270 = vpop.f32.mrb[0].mxu0
  %v5271 = vadd.f32 %v4838, %v5270
  %v5272 = vpop.f32.mrb[0].mxu0
  %5273 = vmatprep.mubr.bf16.mxu0 %v3937
  %5274 = vmatmul.mubr.bf16.gmra.mrb[0].mxu0 %v3936
  %v5275 = vpop.f32.mrb[0].mxu0
  %v5276 = vadd.f32 %v4843, %v5275
  %v5277 = vpop.f32.mrb[0].mxu0
  %v5278 = vpop.f32.mrb[0].mxu0
  %v5279 = vadd.f32 %v4846, %v5278
  %v5280 = vpop.f32.mrb[0].mxu0
  %5281 = vmatprep.mubr.bf16.mxu0 %v3940
  %5282 = vmatmul.mubr.bf16.gmra.mrb[0].mxu0 %v3939
  %v5283 = vpop.f32.mrb[0].mxu0
  %v5284 = vadd.f32 %v4851, %v5283
  %v5285 = vpop.f32.mrb[0].mxu0
  %v5286 = vpop.f32.mrb[0].mxu0
  %v5287 = vadd.f32 %v4854, %v5286
  %v5288 = vpop.f32.mrb[0].mxu0
  %5289 = vdwg.mxu0
  %5290 = vmatprep.subr.bf16.mxu0 0
  %5291 = vmatpush1.bf16.msra.mxu0 %v4969
  %5292 = vmatprep.subr.bf16.mxu0 0
  %5293 = vmatpush1.bf16.msra.mxu0 %v4970
  %5294 = vmatprep.subr.bf16.mxu0 0
  %5295 = vmatpush1.bf16.msra.mxu0 %v4971
  %5296 = vmatprep.subr.bf16.mxu0 0
  %5297 = vmatpush1.bf16.msra.mxu0 %v4972
  %5298 = vmatprep.subr.bf16.mxu0 0
  %5299 = vmatpush1.bf16.msra.mxu0 %v4973
  %5300 = vmatprep.subr.bf16.mxu0 0
  %5301 = vmatpush1.bf16.msra.mxu0 %v4974
  %5302 = vmatprep.subr.bf16.mxu0 0
  %5303 = vmatpush1.bf16.msra.mxu0 %v4975
  %5304 = vmatprep.subr.bf16.mxu0 0
  %5305 = vmatpush1.bf16.msra.mxu0 %v4976
  %5306 = vmatprep.subr.bf16.mxu0 0
  %5307 = vmatpush1.bf16.msra.mxu0 0
  %5308 = vmatprep.subr.bf16.mxu0 0
  %5309 = vmatpush1.bf16.msra.mxu0 0
  %5310 = vmatprep.subr.bf16.mxu0 0
  %5311 = vmatpush1.bf16.msra.mxu0 0
  %5312 = vmatprep.subr.bf16.mxu0 0
  %5313 = vmatpush1.bf16.msra.mxu0 0
  %5314 = vmatprep.subr.bf16.mxu0 0
  %5315 = vmatpush1.bf16.msra.mxu0 0
  %5316 = vmatprep.subr.bf16.mxu0 0
  %5317 = vmatpush1.bf16.msra.mxu0 0
  %5318 = vmatprep.subr.bf16.mxu0 0
  %5319 = vmatpush1.bf16.msra.mxu0 0
  %5320 = vmatprep.subr.bf16.mxu0 0
  %5321 = vmatpush1.bf16.msra.mxu0 0
  %5322 = vmatprep.mubr.bf16.mxu0 0
  %5323 = vmatmul.mubr.bf16.gmra.mrb[0].mxu0 %v3848
  %v5324 = vpop.f32.mrb[0].mxu0
  %v5325 = vadd.f32 %v5036, %v5324
  %v5326 = vpop.f32.mrb[0].mxu0
  %v5327 = vpop.f32.mrb[0].mxu0
  %v5328 = vadd.f32 %v5039, %v5327
  %v5329 = vpop.f32.mrb[0].mxu0
  %5330 = vmatprep.mubr.bf16.mxu0 0
  %5331 = vmatmul.mubr.bf16.gmra.mrb[0].mxu0 %v3851
  %v5332 = vpop.f32.mrb[0].mxu0
  %v5333 = vadd.f32 %v5044, %v5332
  %v5334 = vpop.f32.mrb[0].mxu0
  %v5335 = vpop.f32.mrb[0].mxu0
  %v5336 = vadd.f32 %v5047, %v5335
  %v5337 = vpop.f32.mrb[0].mxu0
  %5338 = vmatprep.mubr.bf16.mxu0 0
  %5339 = vmatmul.mubr.bf16.gmra.mrb[0].mxu0 %v3854
  %v5340 = vpop.f32.mrb[0].mxu0
  %v5341 = vadd.f32 %v5052, %v5340
  %v5342 = vpop.f32.mrb[0].mxu0
  %v5343 = vpop.f32.mrb[0].mxu0
  %v5344 = vadd.f32 %v5055, %v5343
  %v5345 = vpop.f32.mrb[0].mxu0
  %5346 = vmatprep.mubr.bf16.mxu0 0
  %5347 = vmatmul.mubr.bf16.gmra.mrb[0].mxu0 %v3857
  %v5348 = vpop.f32.mrb[0].mxu0
  %v5349 = vadd.f32 %v5060, %v5348
  %v5350 = vpop.f32.mrb[0].mxu0
  %v5351 = vpop.f32.mrb[0].mxu0
  %v5352 = vadd.f32 %v5063, %v5351
  %v5353 = vpop.f32.mrb[0].mxu0
  %5354 = vmatprep.mubr.bf16.mxu0 0
  %5355 = vmatmul.mubr.bf16.gmra.mrb[0].mxu0 %v3860
  %v5356 = vpop.f32.mrb[0].mxu0
  %v5357 = vadd.f32 %v5068, %v5356
  %v5358 = vpop.f32.mrb[0].mxu0
  %v5359 = vpop.f32.mrb[0].mxu0
  %v5360 = vadd.f32 %v5071, %v5359
  %v5361 = vpop.f32.mrb[0].mxu0
  %5362 = vmatprep.mubr.bf16.mxu0 0
  %5363 = vmatmul.mubr.bf16.gmra.mrb[0].mxu0 %v3863
  %v5364 = vpop.f32.mrb[0].mxu0
  %v5365 = vadd.f32 %v5076, %v5364
  %v5366 = vpop.f32.mrb[0].mxu0
  %v5367 = vpop.f32.mrb[0].mxu0
  %v5368 = vadd.f32 %v5079, %v5367
  %v5369 = vpop.f32.mrb[0].mxu0
  %5370 = vmatprep.mubr.bf16.mxu0 0
  %5371 = vmatmul.mubr.bf16.gmra.mrb[0].mxu0 %v3866
  %v5372 = vpop.f32.mrb[0].mxu0
  %v5373 = vadd.f32 %v5084, %v5372
  %v5374 = vpop.f32.mrb[0].mxu0
  %v5375 = vpop.f32.mrb[0].mxu0
  %v5376 = vadd.f32 %v5087, %v5375
  %v5377 = vpop.f32.mrb[0].mxu0
  %5378 = vmatprep.mubr.bf16.mxu0 0
  %5379 = vmatmul.mubr.bf16.gmra.mrb[0].mxu0 %v3869
  %v5380 = vpop.f32.mrb[0].mxu0
  %v5381 = vadd.f32 %v5092, %v5380
  %v5382 = vpop.f32.mrb[0].mxu0
  %v5383 = vpop.f32.mrb[0].mxu0
  %v5384 = vadd.f32 %v5095, %v5383
  %v5385 = vpop.f32.mrb[0].mxu0
  %5386 = vmatprep.mubr.bf16.mxu0 0
  %5387 = vmatmul.mubr.bf16.gmra.mrb[0].mxu0 %v3872
  %v5388 = vpop.f32.mrb[0].mxu0
  %v5389 = vadd.f32 %v5100, %v5388
  %v5390 = vpop.f32.mrb[0].mxu0
  %v5391 = vpop.f32.mrb[0].mxu0
  %v5392 = vadd.f32 %v5103, %v5391
  %v5393 = vpop.f32.mrb[0].mxu0
  %5394 = vmatprep.mubr.bf16.mxu0 0
  %5395 = vmatmul.mubr.bf16.gmra.mrb[0].mxu0 %v3875
  %v5396 = vpop.f32.mrb[0].mxu0
  %v5397 = vadd.f32 %v5108, %v5396
  %v5398 = vpop.f32.mrb[0].mxu0
  %v5399 = vpop.f32.mrb[0].mxu0
  %v5400 = vadd.f32 %v5111, %v5399
  %v5401 = vpop.f32.mrb[0].mxu0
  %5402 = vmatprep.mubr.bf16.mxu0 0
  %5403 = vmatmul.mubr.bf16.gmra.mrb[0].mxu0 %v3878
  %v5404 = vpop.f32.mrb[0].mxu0
  %v5405 = vadd.f32 %v5116, %v5404
  %v5406 = vpop.f32.mrb[0].mxu0
  %v5407 = vpop.f32.mrb[0].mxu0
  %v5408 = vadd.f32 %v5119, %v5407
  %v5409 = vpop.f32.mrb[0].mxu0
  %5410 = vmatprep.mubr.bf16.mxu0 0
  %5411 = vmatmul.mubr.bf16.gmra.mrb[0].mxu0 %v3881
  %v5412 = vpop.f32.mrb[0].mxu0
  %v5413 = vadd.f32 %v5124, %v5412
  %v5414 = vpop.f32.mrb[0].mxu0
  %v5415 = vpop.f32.mrb[0].mxu0
  %v5416 = vadd.f32 %v5127, %v5415
  %v5417 = vpop.f32.mrb[0].mxu0
  %5418 = vmatprep.mubr.bf16.mxu0 0
  %5419 = vmatmul.mubr.bf16.gmra.mrb[0].mxu0 %v3884
  %v5420 = vpop.f32.mrb[0].mxu0
  %v5421 = vadd.f32 %v5132, %v5420
  %v5422 = vpop.f32.mrb[0].mxu0
  %v5423 = vpop.f32.mrb[0].mxu0
  %v5424 = vadd.f32 %v5135, %v5423
  %v5425 = vpop.f32.mrb[0].mxu0
  %5426 = vmatprep.mubr.bf16.mxu0 0
  %5427 = vmatmul.mubr.bf16.gmra.mrb[0].mxu0 %v3887
  %v5428 = vpop.f32.mrb[0].mxu0
  %v5429 = vadd.f32 %v5140, %v5428
  %v5430 = vpop.f32.mrb[0].mxu0
  %v5431 = vpop.f32.mrb[0].mxu0
  %v5432 = vadd.f32 %v5143, %v5431
  %v5433 = vpop.f32.mrb[0].mxu0
  %5434 = vmatprep.mubr.bf16.mxu0 0
  %5435 = vmatmul.mubr.bf16.gmra.mrb[0].mxu0 %v3890
  %v5436 = vpop.f32.mrb[0].mxu0
  %v5437 = vadd.f32 %v5148, %v5436
  %v5438 = vpop.f32.mrb[0].mxu0
  %v5439 = vpop.f32.mrb[0].mxu0
  %v5440 = vadd.f32 %v5151, %v5439
  %v5441 = vpop.f32.mrb[0].mxu0
  %5442 = vmatprep.mubr.bf16.mxu0 0
  %5443 = vmatmul.mubr.bf16.gmra.mrb[0].mxu0 %v3893
  %v5444 = vpop.f32.mrb[0].mxu0
  %v5445 = vadd.f32 %v5156, %v5444
  %v5446 = vpop.f32.mrb[0].mxu0
  %v5447 = vpop.f32.mrb[0].mxu0
  %v5448 = vadd.f32 %v5159, %v5447
  %v5449 = vpop.f32.mrb[0].mxu0
  %5450 = vmatprep.mubr.bf16.mxu0 0
  %5451 = vmatmul.mubr.bf16.gmra.mrb[0].mxu0 %v3896
  %v5452 = vpop.f32.mrb[0].mxu0
  %v5453 = vadd.f32 %v5164, %v5452
  %v5454 = vpop.f32.mrb[0].mxu0
  %v5455 = vpop.f32.mrb[0].mxu0
  %v5456 = vadd.f32 %v5167, %v5455
  %v5457 = vpop.f32.mrb[0].mxu0
  %5458 = vmatprep.mubr.bf16.mxu0 0
  %5459 = vmatmul.mubr.bf16.gmra.mrb[0].mxu0 %v3899
  %v5460 = vpop.f32.mrb[0].mxu0
  %v5461 = vadd.f32 %v5172, %v5460
  %v5462 = vpop.f32.mrb[0].mxu0
  %v5463 = vpop.f32.mrb[0].mxu0
  %v5464 = vadd.f32 %v5175, %v5463
  %v5465 = vpop.f32.mrb[0].mxu0
  %5466 = vmatprep.mubr.bf16.mxu0 0
  %5467 = vmatmul.mubr.bf16.gmra.mrb[0].mxu0 %v3902
  %v5468 = vpop.f32.mrb[0].mxu0
  %v5469 = vadd.f32 %v5180, %v5468
  %v5470 = vpop.f32.mrb[0].mxu0
  %v5471 = vpop.f32.mrb[0].mxu0
  %v5472 = vadd.f32 %v5183, %v5471
  %v5473 = vpop.f32.mrb[0].mxu0
  %5474 = vmatprep.mubr.bf16.mxu0 0
  %5475 = vmatmul.mubr.bf16.gmra.mrb[0].mxu0 %v3905
  %v5476 = vpop.f32.mrb[0].mxu0
  %v5477 = vadd.f32 %v5188, %v5476
  %v5478 = vpop.f32.mrb[0].mxu0
  %v5479 = vpop.f32.mrb[0].mxu0
  %v5480 = vadd.f32 %v5191, %v5479
  %v5481 = vpop.f32.mrb[0].mxu0
  %5482 = vmatprep.mubr.bf16.mxu0 0
  %5483 = vmatmul.mubr.bf16.gmra.mrb[0].mxu0 %v3908
  %v5484 = vpop.f32.mrb[0].mxu0
  %v5485 = vadd.f32 %v5196, %v5484
  %v5486 = vpop.f32.mrb[0].mxu0
  %v5487 = vpop.f32.mrb[0].mxu0
  %v5488 = vadd.f32 %v5199, %v5487
  %v5489 = vpop.f32.mrb[0].mxu0
  %5490 = vmatprep.mubr.bf16.mxu0 0
  %5491 = vmatmul.mubr.bf16.gmra.mrb[0].mxu0 %v3911
  %v5492 = vpop.f32.mrb[0].mxu0
  %v5493 = vadd.f32 %v5204, %v5492
  %v5494 = vpop.f32.mrb[0].mxu0
  %v5495 = vpop.f32.mrb[0].mxu0
  %v5496 = vadd.f32 %v5207, %v5495
  %v5497 = vpop.f32.mrb[0].mxu0
  %5498 = vmatprep.mubr.bf16.mxu0 0
  %5499 = vmatmul.mubr.bf16.gmra.mrb[0].mxu0 %v3914
  %v5500 = vpop.f32.mrb[0].mxu0
  %v5501 = vadd.f32 %v5212, %v5500
  %v5502 = vpop.f32.mrb[0].mxu0
  %v5503 = vpop.f32.mrb[0].mxu0
  %v5504 = vadd.f32 %v5215, %v5503
  %v5505 = vpop.f32.mrb[0].mxu0
  %5506 = vmatprep.mubr.bf16.mxu0 0
  %5507 = vmatmul.mubr.bf16.gmra.mrb[0].mxu0 %v3917
  %v5508 = vpop.f32.mrb[0].mxu0
  %v5509 = vadd.f32 %v5220, %v5508
  %v5510 = vpop.f32.mrb[0].mxu0
  %v5511 = vpop.f32.mrb[0].mxu0
  %v5512 = vadd.f32 %v5223, %v5511
  %v5513 = vpop.f32.mrb[0].mxu0
  %5514 = vmatprep.mubr.bf16.mxu0 0
  %5515 = vmatmul.mubr.bf16.gmra.mrb[0].mxu0 %v3920
  %v5516 = vpop.f32.mrb[0].mxu0
  %v5517 = vadd.f32 %v5228, %v5516
  %v5518 = vpop.f32.mrb[0].mxu0
  %v5519 = vpop.f32.mrb[0].mxu0
  %v5520 = vadd.f32 %v5231, %v5519
  %v5521 = vpop.f32.mrb[0].mxu0
  %5522 = vmatprep.mubr.bf16.mxu0 0
  %5523 = vmatmul.mubr.bf16.gmra.mrb[0].mxu0 %v3923
  %v5524 = vpop.f32.mrb[0].mxu0
  %v5525 = vadd.f32 %v5236, %v5524
  %v5526 = vpop.f32.mrb[0].mxu0
  %v5527 = vpop.f32.mrb[0].mxu0
  %v5528 = vadd.f32 %v5239, %v5527
  %v5529 = vpop.f32.mrb[0].mxu0
  %5530 = vmatprep.mubr.bf16.mxu0 0
  %5531 = vmatmul.mubr.bf16.gmra.mrb[0].mxu0 %v3926
  %v5532 = vpop.f32.mrb[0].mxu0
  %v5533 = vadd.f32 %v5244, %v5532
  %v5534 = vpop.f32.mrb[0].mxu0
  %v5535 = vpop.f32.mrb[0].mxu0
  %v5536 = vadd.f32 %v5247, %v5535
  %v5537 = vpop.f32.mrb[0].mxu0
  %5538 = vmatprep.mubr.bf16.mxu0 0
  %5539 = vmatmul.mubr.bf16.gmra.mrb[0].mxu0 %v3929
  %v5540 = vpop.f32.mrb[0].mxu0
  %v5541 = vadd.f32 %v5252, %v5540
  %v5542 = vpop.f32.mrb[0].mxu0
  %v5543 = vpop.f32.mrb[0].mxu0
  %v5544 = vadd.f32 %v5255, %v5543
  %v5545 = vpop.f32.mrb[0].mxu0
  %5546 = vmatprep.mubr.bf16.mxu0 0
  %5547 = vmatmul.mubr.bf16.gmra.mrb[0].mxu0 %v3932
  %v5548 = vpop.f32.mrb[0].mxu0
  %v5549 = vadd.f32 %v5260, %v5548
  %v5550 = vpop.f32.mrb[0].mxu0
  %v5551 = vpop.f32.mrb[0].mxu0
  %v5552 = vadd.f32 %v5263, %v5551
  %v5553 = vpop.f32.mrb[0].mxu0
  %5554 = vmatprep.mubr.bf16.mxu0 0
  %5555 = vmatmul.mubr.bf16.gmra.mrb[0].mxu0 %v3935
  %v5556 = vpop.f32.mrb[0].mxu0
  %v5557 = vadd.f32 %v5268, %v5556
  %v5558 = vpop.f32.mrb[0].mxu0
  %v5559 = vpop.f32.mrb[0].mxu0
  %v5560 = vadd.f32 %v5271, %v5559
  %v5561 = vpop.f32.mrb[0].mxu0
  %5562 = vmatprep.mubr.bf16.mxu0 0
  %5563 = vmatmul.mubr.bf16.gmra.mrb[0].mxu0 %v3938
  %v5564 = vpop.f32.mrb[0].mxu0
  %v5565 = vadd.f32 %v5276, %v5564
  %v5566 = vpop.f32.mrb[0].mxu0
  %v5567 = vpop.f32.mrb[0].mxu0
  %v5568 = vadd.f32 %v5279, %v5567
  %v5569 = vpop.f32.mrb[0].mxu0
  %5570 = vmatprep.mubr.bf16.mxu0 0
  %5571 = vmatmul.mubr.bf16.gmra.mrb[0].mxu0 %v3941
  %v5572 = vpop.f32.mrb[0].mxu0
  %v5573 = vadd.f32 %v5284, %v5572
  %v5574 = vpop.f32.mrb[0].mxu0
  %v5575 = vpop.f32.mrb[0].mxu0
  %v5576 = vadd.f32 %v5287, %v5575
  %v5577 = vpop.f32.mrb[0].mxu0
  %5578 = vdwg.mxu0
  %v5579 = vpack.c.bf16 %v3657, %v3654
  %v5580 = vpack.c.bf16 %v3658, %v3655
  %v5581 = vpack.c.bf16 %v3659, %v3656
  %v5582 = vpack.c.bf16 %v3663, %v3660
  %v5583 = vpack.c.bf16 %v3664, %v3661
  %v5584 = vpack.c.bf16 %v3665, %v3662
  %v5585 = vpack.c.bf16 %v3669, %v3666
  %v5586 = vpack.c.bf16 %v3670, %v3667
  %v5587 = vpack.c.bf16 %v3671, %v3668
  %v5588 = vpack.c.bf16 %v3675, %v3672
  %v5589 = vpack.c.bf16 %v3676, %v3673
  %v5590 = vpack.c.bf16 %v3677, %v3674
  %v5591 = vpack.c.bf16 %v3681, %v3678
  %v5592 = vpack.c.bf16 %v3682, %v3679
  %v5593 = vpack.c.bf16 %v3683, %v3680
  %v5594 = vpack.c.bf16 %v3687, %v3684
  %v5595 = vpack.c.bf16 %v3688, %v3685
  %v5596 = vpack.c.bf16 %v3689, %v3686
  %v5597 = vpack.c.bf16 %v3693, %v3690
  %v5598 = vpack.c.bf16 %v3694, %v3691
  %v5599 = vpack.c.bf16 %v3695, %v3692
  %v5600 = vpack.c.bf16 %v3699, %v3696
  %v5601 = vpack.c.bf16 %v3700, %v3697
  %v5602 = vpack.c.bf16 %v3701, %v3698
  %v5603 = vpack.c.bf16 %v3705, %v3702
  %v5604 = vpack.c.bf16 %v3706, %v3703
  %v5605 = vpack.c.bf16 %v3707, %v3704
  %v5606 = vpack.c.bf16 %v3711, %v3708
  %v5607 = vpack.c.bf16 %v3712, %v3709
  %v5608 = vpack.c.bf16 %v3713, %v3710
  %v5609 = vpack.c.bf16 %v3717, %v3714
  %v5610 = vpack.c.bf16 %v3718, %v3715
  %v5611 = vpack.c.bf16 %v3719, %v3716
  %v5612 = vpack.c.bf16 %v3723, %v3720
  %v5613 = vpack.c.bf16 %v3724, %v3721
  %v5614 = vpack.c.bf16 %v3725, %v3722
  %v5615 = vpack.c.bf16 %v3729, %v3726
  %v5616 = vpack.c.bf16 %v3730, %v3727
  %v5617 = vpack.c.bf16 %v3731, %v3728
  %v5618 = vpack.c.bf16 %v3735, %v3732
  %v5619 = vpack.c.bf16 %v3736, %v3733
  %v5620 = vpack.c.bf16 %v3737, %v3734
  %v5621 = vpack.c.bf16 %v3741, %v3738
  %v5622 = vpack.c.bf16 %v3742, %v3739
  %v5623 = vpack.c.bf16 %v3743, %v3740
  %v5624 = vpack.c.bf16 %v3747, %v3744
  %v5625 = vpack.c.bf16 %v3748, %v3745
  %v5626 = vpack.c.bf16 %v3749, %v3746
  %v5627 = vpack.c.bf16 %v3753, %v3750
  %v5628 = vpack.c.bf16 %v3754, %v3751
  %v5629 = vpack.c.bf16 %v3755, %v3752
  %v5630 = vpack.c.bf16 %v3759, %v3756
  %v5631 = vpack.c.bf16 %v3760, %v3757
  %v5632 = vpack.c.bf16 %v3761, %v3758
  %v5633 = vpack.c.bf16 %v3765, %v3762
  %v5634 = vpack.c.bf16 %v3766, %v3763
  %v5635 = vpack.c.bf16 %v3767, %v3764
  %v5636 = vpack.c.bf16 %v3771, %v3768
  %v5637 = vpack.c.bf16 %v3772, %v3769
  %v5638 = vpack.c.bf16 %v3773, %v3770
  %v5639 = vpack.c.bf16 %v3777, %v3774
  %v5640 = vpack.c.bf16 %v3778, %v3775
  %v5641 = vpack.c.bf16 %v3779, %v3776
  %v5642 = vpack.c.bf16 %v3783, %v3780
  %v5643 = vpack.c.bf16 %v3784, %v3781
  %v5644 = vpack.c.bf16 %v3785, %v3782
  %v5645 = vpack.c.bf16 %v3789, %v3786
  %v5646 = vpack.c.bf16 %v3790, %v3787
  %v5647 = vpack.c.bf16 %v3791, %v3788
  %v5648 = vpack.c.bf16 %v3795, %v3792
  %v5649 = vpack.c.bf16 %v3796, %v3793
  %v5650 = vpack.c.bf16 %v3797, %v3794
  %v5651 = vpack.c.bf16 %v3801, %v3798
  %v5652 = vpack.c.bf16 %v3802, %v3799
  %v5653 = vpack.c.bf16 %v3803, %v3800
  %v5654 = vpack.c.bf16 %v3807, %v3804
  %v5655 = vpack.c.bf16 %v3808, %v3805
  %v5656 = vpack.c.bf16 %v3809, %v3806
  %v5657 = vpack.c.bf16 %v3813, %v3810
  %v5658 = vpack.c.bf16 %v3814, %v3811
  %v5659 = vpack.c.bf16 %v3815, %v3812
  %v5660 = vpack.c.bf16 %v3819, %v3816
  %v5661 = vpack.c.bf16 %v3820, %v3817
  %v5662 = vpack.c.bf16 %v3821, %v3818
  %v5663 = vpack.c.bf16 %v3825, %v3822
  %v5664 = vpack.c.bf16 %v3826, %v3823
  %v5665 = vpack.c.bf16 %v3827, %v3824
  %v5666 = vpack.c.bf16 %v3831, %v3828
  %v5667 = vpack.c.bf16 %v3832, %v3829
  %v5668 = vpack.c.bf16 %v3833, %v3830
  %v5669 = vpack.c.bf16 %v3837, %v3834
  %v5670 = vpack.c.bf16 %v3838, %v3835
  %v5671 = vpack.c.bf16 %v3839, %v3836
  %v5672 = vpack.c.bf16 %v3843, %v3840
  %v5673 = vpack.c.bf16 %v3844, %v3841
  %v5674 = vpack.c.bf16 %v3845, %v3842
  %s5675 = scalar_lea.vmem %s3, 384
  %v5676 = vld [vmem:[%s5675] sm:$0xf]
  %v5677 = vld [vmem:[%s5675 + $0x4] sm:$0xf]
  %v5678 = vld [vmem:[%s5675 + $0x8] sm:$0xf]
  %v5679 = vld [vmem:[%s5675 + $0xc] sm:$0xf]
  %v5680 = vld [vmem:[%s5675 + $0x10] sm:$0xf]
  %v5681 = vld [vmem:[%s5675 + $0x14] sm:$0xf]
  %v5682 = vld [vmem:[%s5675 + $0x18] sm:$0xf]
  %v5683 = vld [vmem:[%s5675 + $0x1c] sm:$0xf]
  %v5684 = vld [vmem:[%s5675 + $0x20] sm:$0xf]
  %v5685 = vld [vmem:[%s5675 + $0x24] sm:$0xf]
  %v5686 = vld [vmem:[%s5675 + $0x28] sm:$0xf]
  %v5687 = vld [vmem:[%s5675 + $0x2c] sm:$0xf]
  %v5688 = vld [vmem:[%s5675 + $0x30] sm:$0xf]
  %v5689 = vld [vmem:[%s5675 + $0x34] sm:$0xf]
  %v5690 = vld [vmem:[%s5675 + $0x38] sm:$0xf]
  %v5691 = vld [vmem:[%s5675 + $0x3c] sm:$0xf]
  %v5692 = vld [vmem:[%s5675 + $0x40] sm:$0xf]
  %v5693 = vld [vmem:[%s5675 + $0x44] sm:$0xf]
  %v5694 = vld [vmem:[%s5675 + $0x48] sm:$0xf]
  %v5695 = vld [vmem:[%s5675 + $0x4c] sm:$0xf]
  %v5696 = vld [vmem:[%s5675 + $0x50] sm:$0xf]
  %v5697 = vld [vmem:[%s5675 + $0x54] sm:$0xf]
  %v5698 = vld [vmem:[%s5675 + $0x58] sm:$0xf]
  %v5699 = vld [vmem:[%s5675 + $0x5c] sm:$0xf]
  %v5700 = vld [vmem:[%s5675 + $0x60] sm:$0xf]
  %v5701 = vld [vmem:[%s5675 + $0x64] sm:$0xf]
  %v5702 = vld [vmem:[%s5675 + $0x68] sm:$0xf]
  %v5703 = vld [vmem:[%s5675 + $0x6c] sm:$0xf]
  %v5704 = vld [vmem:[%s5675 + $0x70] sm:$0xf]
  %v5705 = vld [vmem:[%s5675 + $0x74] sm:$0xf]
  %v5706 = vld [vmem:[%s5675 + $0x78] sm:$0xf]
  %v5707 = vld [vmem:[%s5675 + $0x7c] sm:$0xf]
  %v5708 = vld [vmem:[%s5675 + $0x80] sm:$0xf]
  %v5709 = vld [vmem:[%s5675 + $0x84] sm:$0xf]
  %v5710 = vld [vmem:[%s5675 + $0x88] sm:$0xf]
  %v5711 = vld [vmem:[%s5675 + $0x8c] sm:$0xf]
  %v5712 = vld [vmem:[%s5675 + $0x90] sm:$0xf]
  %v5713 = vld [vmem:[%s5675 + $0x94] sm:$0xf]
  %v5714 = vld [vmem:[%s5675 + $0x98] sm:$0xf]
  %v5715 = vld [vmem:[%s5675 + $0x9c] sm:$0xf]
  %v5716 = vld [vmem:[%s5675 + $0xa0] sm:$0xf]
  %v5717 = vld [vmem:[%s5675 + $0xa4] sm:$0xf]
  %v5718 = vld [vmem:[%s5675 + $0xa8] sm:$0xf]
  %v5719 = vld [vmem:[%s5675 + $0xac] sm:$0xf]
  %v5720 = vld [vmem:[%s5675 + $0xb0] sm:$0xf]
  %v5721 = vld [vmem:[%s5675 + $0xb4] sm:$0xf]
  %v5722 = vld [vmem:[%s5675 + $0xb8] sm:$0xf]
  %v5723 = vld [vmem:[%s5675 + $0xbc] sm:$0xf]
  %v5772 = vunpack.c.l.b16 %v5676
  %v5773 = vunpack.c.l.b16 %v5677
  %v5774 = vunpack.c.l.b16 %v5678
  %v5775 = vunpack.c.l.b16 %v5679
  %v5776 = vunpack.c.l.b16 %v5680
  %v5777 = vunpack.c.l.b16 %v5681
  %v5778 = vunpack.c.l.b16 %v5682
  %v5779 = vunpack.c.l.b16 %v5683
  %v5780 = vunpack.c.l.b16 %v5684
  %v5781 = vunpack.c.l.b16 %v5685
  %v5782 = vunpack.c.l.b16 %v5686
  %v5783 = vunpack.c.l.b16 %v5687
  %v5784 = vunpack.c.l.b16 %v5688
  %v5785 = vunpack.c.l.b16 %v5689
  %v5786 = vunpack.c.l.b16 %v5690
  %v5787 = vunpack.c.l.b16 %v5691
  %v5788 = vunpack.c.l.b16 %v5692
  %v5789 = vunpack.c.l.b16 %v5693
  %v5790 = vunpack.c.l.b16 %v5694
  %v5791 = vunpack.c.l.b16 %v5695
  %v5792 = vunpack.c.l.b16 %v5696
  %v5793 = vunpack.c.l.b16 %v5697
  %v5794 = vunpack.c.l.b16 %v5698
  %v5795 = vunpack.c.l.b16 %v5699
  %v5796 = vunpack.c.l.b16 %v5700
  %v5797 = vunpack.c.l.b16 %v5701
  %v5798 = vunpack.c.l.b16 %v5702
  %v5799 = vunpack.c.l.b16 %v5703
  %v5800 = vunpack.c.l.b16 %v5704
  %v5801 = vunpack.c.l.b16 %v5705
  %v5802 = vunpack.c.l.b16 %v5706
  %v5803 = vunpack.c.l.b16 %v5707
  %v5804 = vunpack.c.l.b16 %v5708
  %v5805 = vunpack.c.l.b16 %v5709
  %v5806 = vunpack.c.l.b16 %v5710
  %v5807 = vunpack.c.l.b16 %v5711
  %v5808 = vunpack.c.l.b16 %v5712
  %v5809 = vunpack.c.l.b16 %v5713
  %v5810 = vunpack.c.l.b16 %v5714
  %v5811 = vunpack.c.l.b16 %v5715
  %v5812 = vunpack.c.l.b16 %v5716
  %v5813 = vunpack.c.l.b16 %v5717
  %v5814 = vunpack.c.l.b16 %v5718
  %v5815 = vunpack.c.l.b16 %v5719
  %v5816 = vunpack.c.l.b16 %v5720
  %v5817 = vunpack.c.l.b16 %v5721
  %v5818 = vunpack.c.l.b16 %v5722
  %v5819 = vunpack.c.l.b16 %v5723
  %v5820 = vpack.c.b16 %v5773, %v5772
  %v5821 = vpack.c.b16 %v5775, %v5774
  %v5822 = vpack.c.b16 %v5777, %v5776
  %v5823 = vpack.c.b16 %v5779, %v5778
  %v5824 = vpack.c.b16 %v5781, %v5780
  %v5825 = vpack.c.b16 %v5783, %v5782
  %v5826 = vpack.c.b16 %v5785, %v5784
  %v5827 = vpack.c.b16 %v5787, %v5786
  %v5828 = vpack.c.b16 %v5789, %v5788
  %v5829 = vpack.c.b16 %v5791, %v5790
  %v5830 = vpack.c.b16 %v5793, %v5792
  %v5831 = vpack.c.b16 %v5795, %v5794
  %v5832 = vpack.c.b16 %v5797, %v5796
  %v5833 = vpack.c.b16 %v5799, %v5798
  %v5834 = vpack.c.b16 %v5801, %v5800
  %v5835 = vpack.c.b16 %v5803, %v5802
  %v5836 = vpack.c.b16 %v5805, %v5804
  %v5837 = vpack.c.b16 %v5807, %v5806
  %v5838 = vpack.c.b16 %v5809, %v5808
  %v5839 = vpack.c.b16 %v5811, %v5810
  %v5840 = vpack.c.b16 %v5813, %v5812
  %v5841 = vpack.c.b16 %v5815, %v5814
  %v5842 = vpack.c.b16 %v5817, %v5816
  %v5843 = vpack.c.b16 %v5819, %v5818
  %5868 = vmatprep.subr.bf16.mxu0 0
  %5869 = vmatpush1.bf16.msra.mxu0 %v5820
  %5870 = vmatprep.subr.bf16.mxu0 0
  %5871 = vmatpush1.bf16.msra.mxu0 %v5821
  %5872 = vmatprep.subr.bf16.mxu0 0
  %5873 = vmatpush1.bf16.msra.mxu0 %v5822
  %5874 = vmatprep.subr.bf16.mxu0 0
  %5875 = vmatpush1.bf16.msra.mxu0 %v5823
  %5876 = vmatprep.subr.bf16.mxu0 0
  %5877 = vmatpush1.bf16.msra.mxu0 %v5824
  %5878 = vmatprep.subr.bf16.mxu0 0
  %5879 = vmatpush1.bf16.msra.mxu0 %v5825
  %5880 = vmatprep.subr.bf16.mxu0 0
  %5881 = vmatpush1.bf16.msra.mxu0 %v5826
  %5882 = vmatprep.subr.bf16.mxu0 0
  %5883 = vmatpush1.bf16.msra.mxu0 %v5827
  %5884 = vmatprep.subr.bf16.mxu0 0
  %5885 = vmatpush1.bf16.msra.mxu0 %v5828
  %5886 = vmatprep.subr.bf16.mxu0 0
  %5887 = vmatpush1.bf16.msra.mxu0 %v5829
  %5888 = vmatprep.subr.bf16.mxu0 0
  %5889 = vmatpush1.bf16.msra.mxu0 %v5830
  %5890 = vmatprep.subr.bf16.mxu0 0
  %5891 = vmatpush1.bf16.msra.mxu0 %v5831
  %5892 = vmatprep.subr.bf16.mxu0 0
  %5893 = vmatpush1.bf16.msra.mxu0 %v5832
  %5894 = vmatprep.subr.bf16.mxu0 0
  %5895 = vmatpush1.bf16.msra.mxu0 %v5833
  %5896 = vmatprep.subr.bf16.mxu0 0
  %5897 = vmatpush1.bf16.msra.mxu0 %v5834
  %5898 = vmatprep.subr.bf16.mxu0 0
  %5899 = vmatpush1.bf16.msra.mxu0 %v5835
  %5900 = vmatprep.mubr.bf16.mxu0 %v5580
  %5901 = vmatmul.mubr.bf16.gmra.mrb[0].mxu0 %v5579
  %v5902 = vpop.f32.mrb[0].mxu0
  %v5903 = vadd.f32 0.0, %v5902
  %v5904 = vpop.f32.mrb[0].mxu0
  %v5905 = vpop.f32.mrb[0].mxu0
  %v5906 = vadd.f32 0.0, %v5905
  %v5907 = vpop.f32.mrb[0].mxu0
  %5908 = vmatprep.mubr.bf16.mxu0 %v5583
  %5909 = vmatmul.mubr.bf16.gmra.mrb[0].mxu0 %v5582
  %v5910 = vpop.f32.mrb[0].mxu0
  %v5911 = vadd.f32 0.0, %v5910
  %v5912 = vpop.f32.mrb[0].mxu0
  %v5913 = vpop.f32.mrb[0].mxu0
  %v5914 = vadd.f32 0.0, %v5913
  %v5915 = vpop.f32.mrb[0].mxu0
  %5916 = vmatprep.mubr.bf16.mxu0 %v5586
  %5917 = vmatmul.mubr.bf16.gmra.mrb[0].mxu0 %v5585
  %v5918 = vpop.f32.mrb[0].mxu0
  %v5919 = vadd.f32 0.0, %v5918
  %v5920 = vpop.f32.mrb[0].mxu0
  %v5921 = vpop.f32.mrb[0].mxu0
  %v5922 = vadd.f32 0.0, %v5921
  %v5923 = vpop.f32.mrb[0].mxu0
  %5924 = vmatprep.mubr.bf16.mxu0 %v5589
  %5925 = vmatmul.mubr.bf16.gmra.mrb[0].mxu0 %v5588
  %v5926 = vpop.f32.mrb[0].mxu0
  %v5927 = vadd.f32 0.0, %v5926
  %v5928 = vpop.f32.mrb[0].mxu0
  %v5929 = vpop.f32.mrb[0].mxu0
  %v5930 = vadd.f32 0.0, %v5929
  %v5931 = vpop.f32.mrb[0].mxu0
  %5932 = vmatprep.mubr.bf16.mxu0 %v5592
  %5933 = vmatmul.mubr.bf16.gmra.mrb[0].mxu0 %v5591
  %v5934 = vpop.f32.mrb[0].mxu0
  %v5935 = vadd.f32 0.0, %v5934
  %v5936 = vpop.f32.mrb[0].mxu0
  %v5937 = vpop.f32.mrb[0].mxu0
  %v5938 = vadd.f32 0.0, %v5937
  %v5939 = vpop.f32.mrb[0].mxu0
  %5940 = vmatprep.mubr.bf16.mxu0 %v5595
  %5941 = vmatmul.mubr.bf16.gmra.mrb[0].mxu0 %v5594
  %v5942 = vpop.f32.mrb[0].mxu0
  %v5943 = vadd.f32 0.0, %v5942
  %v5944 = vpop.f32.mrb[0].mxu0
  %v5945 = vpop.f32.mrb[0].mxu0
  %v5946 = vadd.f32 0.0, %v5945
  %v5947 = vpop.f32.mrb[0].mxu0
  %5948 = vmatprep.mubr.bf16.mxu0 %v5598
  %5949 = vmatmul.mubr.bf16.gmra.mrb[0].mxu0 %v5597
  %v5950 = vpop.f32.mrb[0].mxu0
  %v5951 = vadd.f32 0.0, %v5950
  %v5952 = vpop.f32.mrb[0].mxu0
  %v5953 = vpop.f32.mrb[0].mxu0
  %v5954 = vadd.f32 0.0, %v5953
  %v5955 = vpop.f32.mrb[0].mxu0
  %5956 = vmatprep.mubr.bf16.mxu0 %v5601
  %5957 = vmatmul.mubr.bf16.gmra.mrb[0].mxu0 %v5600
  %v5958 = vpop.f32.mrb[0].mxu0
  %v5959 = vadd.f32 0.0, %v5958
  %v5960 = vpop.f32.mrb[0].mxu0
  %v5961 = vpop.f32.mrb[0].mxu0
  %v5962 = vadd.f32 0.0, %v5961
  %v5963 = vpop.f32.mrb[0].mxu0
  %5964 = vmatprep.mubr.bf16.mxu0 %v5604
  %5965 = vmatmul.mubr.bf16.gmra.mrb[0].mxu0 %v5603
  %v5966 = vpop.f32.mrb[0].mxu0
  %v5967 = vadd.f32 0.0, %v5966
  %v5968 = vpop.f32.mrb[0].mxu0
  %v5969 = vpop.f32.mrb[0].mxu0
  %v5970 = vadd.f32 0.0, %v5969
  %v5971 = vpop.f32.mrb[0].mxu0
  %5972 = vmatprep.mubr.bf16.mxu0 %v5607
  %5973 = vmatmul.mubr.bf16.gmra.mrb[0].mxu0 %v5606
  %v5974 = vpop.f32.mrb[0].mxu0
  %v5975 = vadd.f32 0.0, %v5974
  %v5976 = vpop.f32.mrb[0].mxu0
  %v5977 = vpop.f32.mrb[0].mxu0
  %v5978 = vadd.f32 0.0, %v5977
  %v5979 = vpop.f32.mrb[0].mxu0
  %5980 = vmatprep.mubr.bf16.mxu0 %v5610
  %5981 = vmatmul.mubr.bf16.gmra.mrb[0].mxu0 %v5609
  %v5982 = vpop.f32.mrb[0].mxu0
  %v5983 = vadd.f32 0.0, %v5982
  %v5984 = vpop.f32.mrb[0].mxu0
  %v5985 = vpop.f32.mrb[0].mxu0
  %v5986 = vadd.f32 0.0, %v5985
  %v5987 = vpop.f32.mrb[0].mxu0
  %5988 = vmatprep.mubr.bf16.mxu0 %v5613
  %5989 = vmatmul.mubr.bf16.gmra.mrb[0].mxu0 %v5612
  %v5990 = vpop.f32.mrb[0].mxu0
  %v5991 = vadd.f32 0.0, %v5990
  %v5992 = vpop.f32.mrb[0].mxu0
  %v5993 = vpop.f32.mrb[0].mxu0
  %v5994 = vadd.f32 0.0, %v5993
  %v5995 = vpop.f32.mrb[0].mxu0
  %5996 = vmatprep.mubr.bf16.mxu0 %v5616
  %5997 = vmatmul.mubr.bf16.gmra.mrb[0].mxu0 %v5615
  %v5998 = vpop.f32.mrb[0].mxu0
  %v5999 = vadd.f32 0.0, %v5998
  %v6000 = vpop.f32.mrb[0].mxu0
  %v6001 = vpop.f32.mrb[0].mxu0
  %v6002 = vadd.f32 0.0, %v6001
  %v6003 = vpop.f32.mrb[0].mxu0
  %6004 = vmatprep.mubr.bf16.mxu0 %v5619
  %6005 = vmatmul.mubr.bf16.gmra.mrb[0].mxu0 %v5618
  %v6006 = vpop.f32.mrb[0].mxu0
  %v6007 = vadd.f32 0.0, %v6006
  %v6008 = vpop.f32.mrb[0].mxu0
  %v6009 = vpop.f32.mrb[0].mxu0
  %v6010 = vadd.f32 0.0, %v6009
  %v6011 = vpop.f32.mrb[0].mxu0
  %6012 = vmatprep.mubr.bf16.mxu0 %v5622
  %6013 = vmatmul.mubr.bf16.gmra.mrb[0].mxu0 %v5621
  %v6014 = vpop.f32.mrb[0].mxu0
  %v6015 = vadd.f32 0.0, %v6014
  %v6016 = vpop.f32.mrb[0].mxu0
  %v6017 = vpop.f32.mrb[0].mxu0
  %v6018 = vadd.f32 0.0, %v6017
  %v6019 = vpop.f32.mrb[0].mxu0
  %6020 = vmatprep.mubr.bf16.mxu0 %v5625
  %6021 = vmatmul.mubr.bf16.gmra.mrb[0].mxu0 %v5624
  %v6022 = vpop.f32.mrb[0].mxu0
  %v6023 = vadd.f32 0.0, %v6022
  %v6024 = vpop.f32.mrb[0].mxu0
  %v6025 = vpop.f32.mrb[0].mxu0
  %v6026 = vadd.f32 0.0, %v6025
  %v6027 = vpop.f32.mrb[0].mxu0
  %6028 = vmatprep.mubr.bf16.mxu0 %v5628
  %6029 = vmatmul.mubr.bf16.gmra.mrb[0].mxu0 %v5627
  %v6030 = vpop.f32.mrb[0].mxu0
  %v6031 = vadd.f32 0.0, %v6030
  %v6032 = vpop.f32.mrb[0].mxu0
  %v6033 = vpop.f32.mrb[0].mxu0
  %v6034 = vadd.f32 0.0, %v6033
  %v6035 = vpop.f32.mrb[0].mxu0
  %6036 = vmatprep.mubr.bf16.mxu0 %v5631
  %6037 = vmatmul.mubr.bf16.gmra.mrb[0].mxu0 %v5630
  %v6038 = vpop.f32.mrb[0].mxu0
  %v6039 = vadd.f32 0.0, %v6038
  %v6040 = vpop.f32.mrb[0].mxu0
  %v6041 = vpop.f32.mrb[0].mxu0
  %v6042 = vadd.f32 0.0, %v6041
  %v6043 = vpop.f32.mrb[0].mxu0
  %6044 = vmatprep.mubr.bf16.mxu0 %v5634
  %6045 = vmatmul.mubr.bf16.gmra.mrb[0].mxu0 %v5633
  %v6046 = vpop.f32.mrb[0].mxu0
  %v6047 = vadd.f32 0.0, %v6046
  %v6048 = vpop.f32.mrb[0].mxu0
  %v6049 = vpop.f32.mrb[0].mxu0
  %v6050 = vadd.f32 0.0, %v6049
  %v6051 = vpop.f32.mrb[0].mxu0
  %6052 = vmatprep.mubr.bf16.mxu0 %v5637
  %6053 = vmatmul.mubr.bf16.gmra.mrb[0].mxu0 %v5636
  %v6054 = vpop.f32.mrb[0].mxu0
  %v6055 = vadd.f32 0.0, %v6054
  %v6056 = vpop.f32.mrb[0].mxu0
  %v6057 = vpop.f32.mrb[0].mxu0
  %v6058 = vadd.f32 0.0, %v6057
  %v6059 = vpop.f32.mrb[0].mxu0
  %6060 = vmatprep.mubr.bf16.mxu0 %v5640
  %6061 = vmatmul.mubr.bf16.gmra.mrb[0].mxu0 %v5639
  %v6062 = vpop.f32.mrb[0].mxu0
  %v6063 = vadd.f32 0.0, %v6062
  %v6064 = vpop.f32.mrb[0].mxu0
  %v6065 = vpop.f32.mrb[0].mxu0
  %v6066 = vadd.f32 0.0, %v6065
  %v6067 = vpop.f32.mrb[0].mxu0
  %6068 = vmatprep.mubr.bf16.mxu0 %v5643
  %6069 = vmatmul.mubr.bf16.gmra.mrb[0].mxu0 %v5642
  %v6070 = vpop.f32.mrb[0].mxu0
  %v6071 = vadd.f32 0.0, %v6070
  %v6072 = vpop.f32.mrb[0].mxu0
  %v6073 = vpop.f32.mrb[0].mxu0
  %v6074 = vadd.f32 0.0, %v6073
  %v6075 = vpop.f32.mrb[0].mxu0
  %6076 = vmatprep.mubr.bf16.mxu0 %v5646
  %6077 = vmatmul.mubr.bf16.gmra.mrb[0].mxu0 %v5645
  %v6078 = vpop.f32.mrb[0].mxu0
  %v6079 = vadd.f32 0.0, %v6078
  %v6080 = vpop.f32.mrb[0].mxu0
  %v6081 = vpop.f32.mrb[0].mxu0
  %v6082 = vadd.f32 0.0, %v6081
  %v6083 = vpop.f32.mrb[0].mxu0
  %6084 = vmatprep.mubr.bf16.mxu0 %v5649
  %6085 = vmatmul.mubr.bf16.gmra.mrb[0].mxu0 %v5648
  %v6086 = vpop.f32.mrb[0].mxu0
  %v6087 = vadd.f32 0.0, %v6086
  %v6088 = vpop.f32.mrb[0].mxu0
  %v6089 = vpop.f32.mrb[0].mxu0
  %v6090 = vadd.f32 0.0, %v6089
  %v6091 = vpop.f32.mrb[0].mxu0
  %6092 = vmatprep.mubr.bf16.mxu0 %v5652
  %6093 = vmatmul.mubr.bf16.gmra.mrb[0].mxu0 %v5651
  %v6094 = vpop.f32.mrb[0].mxu0
  %v6095 = vadd.f32 0.0, %v6094
  %v6096 = vpop.f32.mrb[0].mxu0
  %v6097 = vpop.f32.mrb[0].mxu0
  %v6098 = vadd.f32 0.0, %v6097
  %v6099 = vpop.f32.mrb[0].mxu0
  %6100 = vmatprep.mubr.bf16.mxu0 %v5655
  %6101 = vmatmul.mubr.bf16.gmra.mrb[0].mxu0 %v5654
  %v6102 = vpop.f32.mrb[0].mxu0
  %v6103 = vadd.f32 0.0, %v6102
  %v6104 = vpop.f32.mrb[0].mxu0
  %v6105 = vpop.f32.mrb[0].mxu0
  %v6106 = vadd.f32 0.0, %v6105
  %v6107 = vpop.f32.mrb[0].mxu0
  %6108 = vmatprep.mubr.bf16.mxu0 %v5658
  %6109 = vmatmul.mubr.bf16.gmra.mrb[0].mxu0 %v5657
  %v6110 = vpop.f32.mrb[0].mxu0
  %v6111 = vadd.f32 0.0, %v6110
  %v6112 = vpop.f32.mrb[0].mxu0
  %v6113 = vpop.f32.mrb[0].mxu0
  %v6114 = vadd.f32 0.0, %v6113
  %v6115 = vpop.f32.mrb[0].mxu0
  %6116 = vmatprep.mubr.bf16.mxu0 %v5661
  %6117 = vmatmul.mubr.bf16.gmra.mrb[0].mxu0 %v5660
  %v6118 = vpop.f32.mrb[0].mxu0
  %v6119 = vadd.f32 0.0, %v6118
  %v6120 = vpop.f32.mrb[0].mxu0
  %v6121 = vpop.f32.mrb[0].mxu0
  %v6122 = vadd.f32 0.0, %v6121
  %v6123 = vpop.f32.mrb[0].mxu0
  %6124 = vmatprep.mubr.bf16.mxu0 %v5664
  %6125 = vmatmul.mubr.bf16.gmra.mrb[0].mxu0 %v5663
  %v6126 = vpop.f32.mrb[0].mxu0
  %v6127 = vadd.f32 0.0, %v6126
  %v6128 = vpop.f32.mrb[0].mxu0
  %v6129 = vpop.f32.mrb[0].mxu0
  %v6130 = vadd.f32 0.0, %v6129
  %v6131 = vpop.f32.mrb[0].mxu0
  %6132 = vmatprep.mubr.bf16.mxu0 %v5667
  %6133 = vmatmul.mubr.bf16.gmra.mrb[0].mxu0 %v5666
  %v6134 = vpop.f32.mrb[0].mxu0
  %v6135 = vadd.f32 0.0, %v6134
  %v6136 = vpop.f32.mrb[0].mxu0
  %v6137 = vpop.f32.mrb[0].mxu0
  %v6138 = vadd.f32 0.0, %v6137
  %v6139 = vpop.f32.mrb[0].mxu0
  %6140 = vmatprep.mubr.bf16.mxu0 %v5670
  %6141 = vmatmul.mubr.bf16.gmra.mrb[0].mxu0 %v5669
  %v6142 = vpop.f32.mrb[0].mxu0
  %v6143 = vadd.f32 0.0, %v6142
  %v6144 = vpop.f32.mrb[0].mxu0
  %v6145 = vpop.f32.mrb[0].mxu0
  %v6146 = vadd.f32 0.0, %v6145
  %v6147 = vpop.f32.mrb[0].mxu0
  %6148 = vmatprep.mubr.bf16.mxu0 %v5673
  %6149 = vmatmul.mubr.bf16.gmra.mrb[0].mxu0 %v5672
  %v6150 = vpop.f32.mrb[0].mxu0
  %v6151 = vadd.f32 0.0, %v6150
  %v6152 = vpop.f32.mrb[0].mxu0
  %v6153 = vpop.f32.mrb[0].mxu0
  %v6154 = vadd.f32 0.0, %v6153
  %v6155 = vpop.f32.mrb[0].mxu0
  %6156 = vdwg.mxu0
  %6157 = vmatprep.subr.bf16.mxu0 0
  %6158 = vmatpush1.bf16.msra.mxu0 %v5836
  %6159 = vmatprep.subr.bf16.mxu0 0
  %6160 = vmatpush1.bf16.msra.mxu0 %v5837
  %6161 = vmatprep.subr.bf16.mxu0 0
  %6162 = vmatpush1.bf16.msra.mxu0 %v5838
  %6163 = vmatprep.subr.bf16.mxu0 0
  %6164 = vmatpush1.bf16.msra.mxu0 %v5839
  %6165 = vmatprep.subr.bf16.mxu0 0
  %6166 = vmatpush1.bf16.msra.mxu0 %v5840
  %6167 = vmatprep.subr.bf16.mxu0 0
  %6168 = vmatpush1.bf16.msra.mxu0 %v5841
  %6169 = vmatprep.subr.bf16.mxu0 0
  %6170 = vmatpush1.bf16.msra.mxu0 %v5842
  %6171 = vmatprep.subr.bf16.mxu0 0
  %6172 = vmatpush1.bf16.msra.mxu0 %v5843
  %6173 = vmatprep.subr.bf16.mxu0 0
  %6174 = vmatpush1.bf16.msra.mxu0 0
  %6175 = vmatprep.subr.bf16.mxu0 0
  %6176 = vmatpush1.bf16.msra.mxu0 0
  %6177 = vmatprep.subr.bf16.mxu0 0
  %6178 = vmatpush1.bf16.msra.mxu0 0
  %6179 = vmatprep.subr.bf16.mxu0 0
  %6180 = vmatpush1.bf16.msra.mxu0 0
  %6181 = vmatprep.subr.bf16.mxu0 0
  %6182 = vmatpush1.bf16.msra.mxu0 0
  %6183 = vmatprep.subr.bf16.mxu0 0
  %6184 = vmatpush1.bf16.msra.mxu0 0
  %6185 = vmatprep.subr.bf16.mxu0 0
  %6186 = vmatpush1.bf16.msra.mxu0 0
  %6187 = vmatprep.subr.bf16.mxu0 0
  %6188 = vmatpush1.bf16.msra.mxu0 0
  %6189 = vmatprep.mubr.bf16.mxu0 0
  %6190 = vmatmul.mubr.bf16.gmra.mrb[0].mxu0 %v5581
  %v6191 = vpop.f32.mrb[0].mxu0
  %v6192 = vadd.f32 %v5903, %v6191
  %v6193 = vpop.f32.mrb[0].mxu0
  %v6194 = vpop.f32.mrb[0].mxu0
  %v6195 = vadd.f32 %v5906, %v6194
  %v6196 = vpop.f32.mrb[0].mxu0
  %6197 = vmatprep.mubr.bf16.mxu0 0
  %6198 = vmatmul.mubr.bf16.gmra.mrb[0].mxu0 %v5584
  %v6199 = vpop.f32.mrb[0].mxu0
  %v6200 = vadd.f32 %v5911, %v6199
  %v6201 = vpop.f32.mrb[0].mxu0
  %v6202 = vpop.f32.mrb[0].mxu0
  %v6203 = vadd.f32 %v5914, %v6202
  %v6204 = vpop.f32.mrb[0].mxu0
  %6205 = vmatprep.mubr.bf16.mxu0 0
  %6206 = vmatmul.mubr.bf16.gmra.mrb[0].mxu0 %v5587
  %v6207 = vpop.f32.mrb[0].mxu0
  %v6208 = vadd.f32 %v5919, %v6207
  %v6209 = vpop.f32.mrb[0].mxu0
  %v6210 = vpop.f32.mrb[0].mxu0
  %v6211 = vadd.f32 %v5922, %v6210
  %v6212 = vpop.f32.mrb[0].mxu0
  %6213 = vmatprep.mubr.bf16.mxu0 0
  %6214 = vmatmul.mubr.bf16.gmra.mrb[0].mxu0 %v5590
  %v6215 = vpop.f32.mrb[0].mxu0
  %v6216 = vadd.f32 %v5927, %v6215
  %v6217 = vpop.f32.mrb[0].mxu0
  %v6218 = vpop.f32.mrb[0].mxu0
  %v6219 = vadd.f32 %v5930, %v6218
  %v6220 = vpop.f32.mrb[0].mxu0
  %6221 = vmatprep.mubr.bf16.mxu0 0
  %6222 = vmatmul.mubr.bf16.gmra.mrb[0].mxu0 %v5593
  %v6223 = vpop.f32.mrb[0].mxu0
  %v6224 = vadd.f32 %v5935, %v6223
  %v6225 = vpop.f32.mrb[0].mxu0
  %v6226 = vpop.f32.mrb[0].mxu0
  %v6227 = vadd.f32 %v5938, %v6226
  %v6228 = vpop.f32.mrb[0].mxu0
  %6229 = vmatprep.mubr.bf16.mxu0 0
  %6230 = vmatmul.mubr.bf16.gmra.mrb[0].mxu0 %v5596
  %v6231 = vpop.f32.mrb[0].mxu0
  %v6232 = vadd.f32 %v5943, %v6231
  %v6233 = vpop.f32.mrb[0].mxu0
  %v6234 = vpop.f32.mrb[0].mxu0
  %v6235 = vadd.f32 %v5946, %v6234
  %v6236 = vpop.f32.mrb[0].mxu0
  %6237 = vmatprep.mubr.bf16.mxu0 0
  %6238 = vmatmul.mubr.bf16.gmra.mrb[0].mxu0 %v5599
  %v6239 = vpop.f32.mrb[0].mxu0
  %v6240 = vadd.f32 %v5951, %v6239
  %v6241 = vpop.f32.mrb[0].mxu0
  %v6242 = vpop.f32.mrb[0].mxu0
  %v6243 = vadd.f32 %v5954, %v6242
  %v6244 = vpop.f32.mrb[0].mxu0
  %6245 = vmatprep.mubr.bf16.mxu0 0
  %6246 = vmatmul.mubr.bf16.gmra.mrb[0].mxu0 %v5602
  %v6247 = vpop.f32.mrb[0].mxu0
  %v6248 = vadd.f32 %v5959, %v6247
  %v6249 = vpop.f32.mrb[0].mxu0
  %v6250 = vpop.f32.mrb[0].mxu0
  %v6251 = vadd.f32 %v5962, %v6250
  %v6252 = vpop.f32.mrb[0].mxu0
  %6253 = vmatprep.mubr.bf16.mxu0 0
  %6254 = vmatmul.mubr.bf16.gmra.mrb[0].mxu0 %v5605
  %v6255 = vpop.f32.mrb[0].mxu0
  %v6256 = vadd.f32 %v5967, %v6255
  %v6257 = vpop.f32.mrb[0].mxu0
  %v6258 = vpop.f32.mrb[0].mxu0
  %v6259 = vadd.f32 %v5970, %v6258
  %v6260 = vpop.f32.mrb[0].mxu0
  %6261 = vmatprep.mubr.bf16.mxu0 0
  %6262 = vmatmul.mubr.bf16.gmra.mrb[0].mxu0 %v5608
  %v6263 = vpop.f32.mrb[0].mxu0
  %v6264 = vadd.f32 %v5975, %v6263
  %v6265 = vpop.f32.mrb[0].mxu0
  %v6266 = vpop.f32.mrb[0].mxu0
  %v6267 = vadd.f32 %v5978, %v6266
  %v6268 = vpop.f32.mrb[0].mxu0
  %6269 = vmatprep.mubr.bf16.mxu0 0
  %6270 = vmatmul.mubr.bf16.gmra.mrb[0].mxu0 %v5611
  %v6271 = vpop.f32.mrb[0].mxu0
  %v6272 = vadd.f32 %v5983, %v6271
  %v6273 = vpop.f32.mrb[0].mxu0
  %v6274 = vpop.f32.mrb[0].mxu0
  %v6275 = vadd.f32 %v5986, %v6274
  %v6276 = vpop.f32.mrb[0].mxu0
  %6277 = vmatprep.mubr.bf16.mxu0 0
  %6278 = vmatmul.mubr.bf16.gmra.mrb[0].mxu0 %v5614
  %v6279 = vpop.f32.mrb[0].mxu0
  %v6280 = vadd.f32 %v5991, %v6279
  %v6281 = vpop.f32.mrb[0].mxu0
  %v6282 = vpop.f32.mrb[0].mxu0
  %v6283 = vadd.f32 %v5994, %v6282
  %v6284 = vpop.f32.mrb[0].mxu0
  %6285 = vmatprep.mubr.bf16.mxu0 0
  %6286 = vmatmul.mubr.bf16.gmra.mrb[0].mxu0 %v5617
  %v6287 = vpop.f32.mrb[0].mxu0
  %v6288 = vadd.f32 %v5999, %v6287
  %v6289 = vpop.f32.mrb[0].mxu0
  %v6290 = vpop.f32.mrb[0].mxu0
  %v6291 = vadd.f32 %v6002, %v6290
  %v6292 = vpop.f32.mrb[0].mxu0
  %6293 = vmatprep.mubr.bf16.mxu0 0
  %6294 = vmatmul.mubr.bf16.gmra.mrb[0].mxu0 %v5620
  %v6295 = vpop.f32.mrb[0].mxu0
  %v6296 = vadd.f32 %v6007, %v6295
  %v6297 = vpop.f32.mrb[0].mxu0
  %v6298 = vpop.f32.mrb[0].mxu0
  %v6299 = vadd.f32 %v6010, %v6298
  %v6300 = vpop.f32.mrb[0].mxu0
  %6301 = vmatprep.mubr.bf16.mxu0 0
  %6302 = vmatmul.mubr.bf16.gmra.mrb[0].mxu0 %v5623
  %v6303 = vpop.f32.mrb[0].mxu0
  %v6304 = vadd.f32 %v6015, %v6303
  %v6305 = vpop.f32.mrb[0].mxu0
  %v6306 = vpop.f32.mrb[0].mxu0
  %v6307 = vadd.f32 %v6018, %v6306
  %v6308 = vpop.f32.mrb[0].mxu0
  %6309 = vmatprep.mubr.bf16.mxu0 0
  %6310 = vmatmul.mubr.bf16.gmra.mrb[0].mxu0 %v5626
  %v6311 = vpop.f32.mrb[0].mxu0
  %v6312 = vadd.f32 %v6023, %v6311
  %v6313 = vpop.f32.mrb[0].mxu0
  %v6314 = vpop.f32.mrb[0].mxu0
  %v6315 = vadd.f32 %v6026, %v6314
  %v6316 = vpop.f32.mrb[0].mxu0
  %6317 = vmatprep.mubr.bf16.mxu0 0
  %6318 = vmatmul.mubr.bf16.gmra.mrb[0].mxu0 %v5629
  %v6319 = vpop.f32.mrb[0].mxu0
  %v6320 = vadd.f32 %v6031, %v6319
  %v6321 = vpop.f32.mrb[0].mxu0
  %v6322 = vpop.f32.mrb[0].mxu0
  %v6323 = vadd.f32 %v6034, %v6322
  %v6324 = vpop.f32.mrb[0].mxu0
  %6325 = vmatprep.mubr.bf16.mxu0 0
  %6326 = vmatmul.mubr.bf16.gmra.mrb[0].mxu0 %v5632
  %v6327 = vpop.f32.mrb[0].mxu0
  %v6328 = vadd.f32 %v6039, %v6327
  %v6329 = vpop.f32.mrb[0].mxu0
  %v6330 = vpop.f32.mrb[0].mxu0
  %v6331 = vadd.f32 %v6042, %v6330
  %v6332 = vpop.f32.mrb[0].mxu0
  %6333 = vmatprep.mubr.bf16.mxu0 0
  %6334 = vmatmul.mubr.bf16.gmra.mrb[0].mxu0 %v5635
  %v6335 = vpop.f32.mrb[0].mxu0
  %v6336 = vadd.f32 %v6047, %v6335
  %v6337 = vpop.f32.mrb[0].mxu0
  %v6338 = vpop.f32.mrb[0].mxu0
  %v6339 = vadd.f32 %v6050, %v6338
  %v6340 = vpop.f32.mrb[0].mxu0
  %6341 = vmatprep.mubr.bf16.mxu0 0
  %6342 = vmatmul.mubr.bf16.gmra.mrb[0].mxu0 %v5638
  %v6343 = vpop.f32.mrb[0].mxu0
  %v6344 = vadd.f32 %v6055, %v6343
  %v6345 = vpop.f32.mrb[0].mxu0
  %v6346 = vpop.f32.mrb[0].mxu0
  %v6347 = vadd.f32 %v6058, %v6346
  %v6348 = vpop.f32.mrb[0].mxu0
  %6349 = vmatprep.mubr.bf16.mxu0 0
  %6350 = vmatmul.mubr.bf16.gmra.mrb[0].mxu0 %v5641
  %v6351 = vpop.f32.mrb[0].mxu0
  %v6352 = vadd.f32 %v6063, %v6351
  %v6353 = vpop.f32.mrb[0].mxu0
  %v6354 = vpop.f32.mrb[0].mxu0
  %v6355 = vadd.f32 %v6066, %v6354
  %v6356 = vpop.f32.mrb[0].mxu0
  %6357 = vmatprep.mubr.bf16.mxu0 0
  %6358 = vmatmul.mubr.bf16.gmra.mrb[0].mxu0 %v5644
  %v6359 = vpop.f32.mrb[0].mxu0
  %v6360 = vadd.f32 %v6071, %v6359
  %v6361 = vpop.f32.mrb[0].mxu0
  %v6362 = vpop.f32.mrb[0].mxu0
  %v6363 = vadd.f32 %v6074, %v6362
  %v6364 = vpop.f32.mrb[0].mxu0
  %6365 = vmatprep.mubr.bf16.mxu0 0
  %6366 = vmatmul.mubr.bf16.gmra.mrb[0].mxu0 %v5647
  %v6367 = vpop.f32.mrb[0].mxu0
  %v6368 = vadd.f32 %v6079, %v6367
  %v6369 = vpop.f32.mrb[0].mxu0
  %v6370 = vpop.f32.mrb[0].mxu0
  %v6371 = vadd.f32 %v6082, %v6370
  %v6372 = vpop.f32.mrb[0].mxu0
  %6373 = vmatprep.mubr.bf16.mxu0 0
  %6374 = vmatmul.mubr.bf16.gmra.mrb[0].mxu0 %v5650
  %v6375 = vpop.f32.mrb[0].mxu0
  %v6376 = vadd.f32 %v6087, %v6375
  %v6377 = vpop.f32.mrb[0].mxu0
  %v6378 = vpop.f32.mrb[0].mxu0
  %v6379 = vadd.f32 %v6090, %v6378
  %v6380 = vpop.f32.mrb[0].mxu0
  %6381 = vmatprep.mubr.bf16.mxu0 0
  %6382 = vmatmul.mubr.bf16.gmra.mrb[0].mxu0 %v5653
  %v6383 = vpop.f32.mrb[0].mxu0
  %v6384 = vadd.f32 %v6095, %v6383
  %v6385 = vpop.f32.mrb[0].mxu0
  %v6386 = vpop.f32.mrb[0].mxu0
  %v6387 = vadd.f32 %v6098, %v6386
  %v6388 = vpop.f32.mrb[0].mxu0
  %6389 = vmatprep.mubr.bf16.mxu0 0
  %6390 = vmatmul.mubr.bf16.gmra.mrb[0].mxu0 %v5656
  %v6391 = vpop.f32.mrb[0].mxu0
  %v6392 = vadd.f32 %v6103, %v6391
  %v6393 = vpop.f32.mrb[0].mxu0
  %v6394 = vpop.f32.mrb[0].mxu0
  %v6395 = vadd.f32 %v6106, %v6394
  %v6396 = vpop.f32.mrb[0].mxu0
  %6397 = vmatprep.mubr.bf16.mxu0 0
  %6398 = vmatmul.mubr.bf16.gmra.mrb[0].mxu0 %v5659
  %v6399 = vpop.f32.mrb[0].mxu0
  %v6400 = vadd.f32 %v6111, %v6399
  %v6401 = vpop.f32.mrb[0].mxu0
  %v6402 = vpop.f32.mrb[0].mxu0
  %v6403 = vadd.f32 %v6114, %v6402
  %v6404 = vpop.f32.mrb[0].mxu0
  %6405 = vmatprep.mubr.bf16.mxu0 0
  %6406 = vmatmul.mubr.bf16.gmra.mrb[0].mxu0 %v5662
  %v6407 = vpop.f32.mrb[0].mxu0
  %v6408 = vadd.f32 %v6119, %v6407
  %v6409 = vpop.f32.mrb[0].mxu0
  %v6410 = vpop.f32.mrb[0].mxu0
  %v6411 = vadd.f32 %v6122, %v6410
  %v6412 = vpop.f32.mrb[0].mxu0
  %6413 = vmatprep.mubr.bf16.mxu0 0
  %6414 = vmatmul.mubr.bf16.gmra.mrb[0].mxu0 %v5665
  %v6415 = vpop.f32.mrb[0].mxu0
  %v6416 = vadd.f32 %v6127, %v6415
  %v6417 = vpop.f32.mrb[0].mxu0
  %v6418 = vpop.f32.mrb[0].mxu0
  %v6419 = vadd.f32 %v6130, %v6418
  %v6420 = vpop.f32.mrb[0].mxu0
  %6421 = vmatprep.mubr.bf16.mxu0 0
  %6422 = vmatmul.mubr.bf16.gmra.mrb[0].mxu0 %v5668
  %v6423 = vpop.f32.mrb[0].mxu0
  %v6424 = vadd.f32 %v6135, %v6423
  %v6425 = vpop.f32.mrb[0].mxu0
  %v6426 = vpop.f32.mrb[0].mxu0
  %v6427 = vadd.f32 %v6138, %v6426
  %v6428 = vpop.f32.mrb[0].mxu0
  %6429 = vmatprep.mubr.bf16.mxu0 0
  %6430 = vmatmul.mubr.bf16.gmra.mrb[0].mxu0 %v5671
  %v6431 = vpop.f32.mrb[0].mxu0
  %v6432 = vadd.f32 %v6143, %v6431
  %v6433 = vpop.f32.mrb[0].mxu0
  %v6434 = vpop.f32.mrb[0].mxu0
  %v6435 = vadd.f32 %v6146, %v6434
  %v6436 = vpop.f32.mrb[0].mxu0
  %6437 = vmatprep.mubr.bf16.mxu0 0
  %6438 = vmatmul.mubr.bf16.gmra.mrb[0].mxu0 %v5674
  %v6439 = vpop.f32.mrb[0].mxu0
  %v6440 = vadd.f32 %v6151, %v6439
  %v6441 = vpop.f32.mrb[0].mxu0
  %v6442 = vpop.f32.mrb[0].mxu0
  %v6443 = vadd.f32 %v6154, %v6442
  %v6444 = vpop.f32.mrb[0].mxu0
  %6445 = vdwg.mxu0
  %v6446 = vadd.f32 %v5325, %v6192
  %v6447 = vadd.f32 %v5328, %v6195
  %v6448 = vadd.f32 %v5333, %v6200
  %v6449 = vadd.f32 %v5336, %v6203
  %v6450 = vadd.f32 %v5341, %v6208
  %v6451 = vadd.f32 %v5344, %v6211
  %v6452 = vadd.f32 %v5349, %v6216
  %v6453 = vadd.f32 %v5352, %v6219
  %v6454 = vadd.f32 %v5357, %v6224
  %v6455 = vadd.f32 %v5360, %v6227
  %v6456 = vadd.f32 %v5365, %v6232
  %v6457 = vadd.f32 %v5368, %v6235
  %v6458 = vadd.f32 %v5373, %v6240
  %v6459 = vadd.f32 %v5376, %v6243
  %v6460 = vadd.f32 %v5381, %v6248
  %v6461 = vadd.f32 %v5384, %v6251
  %v6462 = vadd.f32 %v5389, %v6256
  %v6463 = vadd.f32 %v5392, %v6259
  %v6464 = vadd.f32 %v5397, %v6264
  %v6465 = vadd.f32 %v5400, %v6267
  %v6466 = vadd.f32 %v5405, %v6272
  %v6467 = vadd.f32 %v5408, %v6275
  %v6468 = vadd.f32 %v5413, %v6280
  %v6469 = vadd.f32 %v5416, %v6283
  %v6470 = vadd.f32 %v5421, %v6288
  %v6471 = vadd.f32 %v5424, %v6291
  %v6472 = vadd.f32 %v5429, %v6296
  %v6473 = vadd.f32 %v5432, %v6299
  %v6474 = vadd.f32 %v5437, %v6304
  %v6475 = vadd.f32 %v5440, %v6307
  %v6476 = vadd.f32 %v5445, %v6312
  %v6477 = vadd.f32 %v5448, %v6315
  %v6478 = vadd.f32 %v5453, %v6320
  %v6479 = vadd.f32 %v5456, %v6323
  %v6480 = vadd.f32 %v5461, %v6328
  %v6481 = vadd.f32 %v5464, %v6331
  %v6482 = vadd.f32 %v5469, %v6336
  %v6483 = vadd.f32 %v5472, %v6339
  %v6484 = vadd.f32 %v5477, %v6344
  %v6485 = vadd.f32 %v5480, %v6347
  %v6486 = vadd.f32 %v5485, %v6352
  %v6487 = vadd.f32 %v5488, %v6355
  %v6488 = vadd.f32 %v5493, %v6360
  %v6489 = vadd.f32 %v5496, %v6363
  %v6490 = vadd.f32 %v5501, %v6368
  %v6491 = vadd.f32 %v5504, %v6371
  %v6492 = vadd.f32 %v5509, %v6376
  %v6493 = vadd.f32 %v5512, %v6379
  %v6494 = vadd.f32 %v5517, %v6384
  %v6495 = vadd.f32 %v5520, %v6387
  %v6496 = vadd.f32 %v5525, %v6392
  %v6497 = vadd.f32 %v5528, %v6395
  %v6498 = vadd.f32 %v5533, %v6400
  %v6499 = vadd.f32 %v5536, %v6403
  %v6500 = vadd.f32 %v5541, %v6408
  %v6501 = vadd.f32 %v5544, %v6411
  %v6502 = vadd.f32 %v5549, %v6416
  %v6503 = vadd.f32 %v5552, %v6419
  %v6504 = vadd.f32 %v5557, %v6424
  %v6505 = vadd.f32 %v5560, %v6427
  %v6506 = vadd.f32 %v5565, %v6432
  %v6507 = vadd.f32 %v5568, %v6435
  %v6508 = vadd.f32 %v5573, %v6440
  %v6509 = vadd.f32 %v5576, %v6443
  %v6510 = vld [vmem:[%s4] sm:$0x1]
  %v6512 = vlaneseq
  %v6513 = vshrl.u32 %v6512, 7
  %v6514 = vsub.s32 0, %v6513
  %v6515 = vrot.slane %v6510, %v6514
  %v6517 = vadd.f32 %v6446, %v6515
  %v6518 = vadd.f32 %v6447, %v6515
  %v6519 = vadd.f32 %v6448, %v6515
  %v6520 = vadd.f32 %v6449, %v6515
  %v6521 = vadd.f32 %v6450, %v6515
  %v6522 = vadd.f32 %v6451, %v6515
  %v6523 = vadd.f32 %v6452, %v6515
  %v6524 = vadd.f32 %v6453, %v6515
  %v6525 = vadd.f32 %v6454, %v6515
  %v6526 = vadd.f32 %v6455, %v6515
  %v6527 = vadd.f32 %v6456, %v6515
  %v6528 = vadd.f32 %v6457, %v6515
  %v6529 = vadd.f32 %v6458, %v6515
  %v6530 = vadd.f32 %v6459, %v6515
  %v6531 = vadd.f32 %v6460, %v6515
  %v6532 = vadd.f32 %v6461, %v6515
  %v6533 = vadd.f32 %v6462, %v6515
  %v6534 = vadd.f32 %v6463, %v6515
  %v6535 = vadd.f32 %v6464, %v6515
  %v6536 = vadd.f32 %v6465, %v6515
  %v6537 = vadd.f32 %v6466, %v6515
  %v6538 = vadd.f32 %v6467, %v6515
  %v6539 = vadd.f32 %v6468, %v6515
  %v6540 = vadd.f32 %v6469, %v6515
  %v6541 = vadd.f32 %v6470, %v6515
  %v6542 = vadd.f32 %v6471, %v6515
  %v6543 = vadd.f32 %v6472, %v6515
  %v6544 = vadd.f32 %v6473, %v6515
  %v6545 = vadd.f32 %v6474, %v6515
  %v6546 = vadd.f32 %v6475, %v6515
  %v6547 = vadd.f32 %v6476, %v6515
  %v6548 = vadd.f32 %v6477, %v6515
  %v6549 = vadd.f32 %v6478, %v6515
  %v6550 = vadd.f32 %v6479, %v6515
  %v6551 = vadd.f32 %v6480, %v6515
  %v6552 = vadd.f32 %v6481, %v6515
  %v6553 = vadd.f32 %v6482, %v6515
  %v6554 = vadd.f32 %v6483, %v6515
  %v6555 = vadd.f32 %v6484, %v6515
  %v6556 = vadd.f32 %v6485, %v6515
  %v6557 = vadd.f32 %v6486, %v6515
  %v6558 = vadd.f32 %v6487, %v6515
  %v6559 = vadd.f32 %v6488, %v6515
  %v6560 = vadd.f32 %v6489, %v6515
  %v6561 = vadd.f32 %v6490, %v6515
  %v6562 = vadd.f32 %v6491, %v6515
  %v6563 = vadd.f32 %v6492, %v6515
  %v6564 = vadd.f32 %v6493, %v6515
  %v6565 = vadd.f32 %v6494, %v6515
  %v6566 = vadd.f32 %v6495, %v6515
  %v6567 = vadd.f32 %v6496, %v6515
  %v6568 = vadd.f32 %v6497, %v6515
  %v6569 = vadd.f32 %v6498, %v6515
  %v6570 = vadd.f32 %v6499, %v6515
  %v6571 = vadd.f32 %v6500, %v6515
  %v6572 = vadd.f32 %v6501, %v6515
  %v6573 = vadd.f32 %v6502, %v6515
  %v6574 = vadd.f32 %v6503, %v6515
  %v6575 = vadd.f32 %v6504, %v6515
  %v6576 = vadd.f32 %v6505, %v6515
  %v6577 = vadd.f32 %v6506, %v6515
  %v6578 = vadd.f32 %v6507, %v6515
  %v6579 = vadd.f32 %v6508, %v6515
  %v6580 = vadd.f32 %v6509, %v6515
  %v6581 = vmax.f32 %v6517, 0.0
  %v6582 = vmax.f32 %v6518, 0.0
  %v6583 = vmax.f32 %v6519, 0.0
  %v6584 = vmax.f32 %v6520, 0.0
  %v6585 = vmax.f32 %v6521, 0.0
  %v6586 = vmax.f32 %v6522, 0.0
  %v6587 = vmax.f32 %v6523, 0.0
  %v6588 = vmax.f32 %v6524, 0.0
  %v6589 = vmax.f32 %v6525, 0.0
  %v6590 = vmax.f32 %v6526, 0.0
  %v6591 = vmax.f32 %v6527, 0.0
  %v6592 = vmax.f32 %v6528, 0.0
  %v6593 = vmax.f32 %v6529, 0.0
  %v6594 = vmax.f32 %v6530, 0.0
  %v6595 = vmax.f32 %v6531, 0.0
  %v6596 = vmax.f32 %v6532, 0.0
  %v6597 = vmax.f32 %v6533, 0.0
  %v6598 = vmax.f32 %v6534, 0.0
  %v6599 = vmax.f32 %v6535, 0.0
  %v6600 = vmax.f32 %v6536, 0.0
  %v6601 = vmax.f32 %v6537, 0.0
  %v6602 = vmax.f32 %v6538, 0.0
  %v6603 = vmax.f32 %v6539, 0.0
  %v6604 = vmax.f32 %v6540, 0.0
  %v6605 = vmax.f32 %v6541, 0.0
  %v6606 = vmax.f32 %v6542, 0.0
  %v6607 = vmax.f32 %v6543, 0.0
  %v6608 = vmax.f32 %v6544, 0.0
  %v6609 = vmax.f32 %v6545, 0.0
  %v6610 = vmax.f32 %v6546, 0.0
  %v6611 = vmax.f32 %v6547, 0.0
  %v6612 = vmax.f32 %v6548, 0.0
  %v6613 = vmax.f32 %v6549, 0.0
  %v6614 = vmax.f32 %v6550, 0.0
  %v6615 = vmax.f32 %v6551, 0.0
  %v6616 = vmax.f32 %v6552, 0.0
  %v6617 = vmax.f32 %v6553, 0.0
  %v6618 = vmax.f32 %v6554, 0.0
  %v6619 = vmax.f32 %v6555, 0.0
  %v6620 = vmax.f32 %v6556, 0.0
  %v6621 = vmax.f32 %v6557, 0.0
  %v6622 = vmax.f32 %v6558, 0.0
  %v6623 = vmax.f32 %v6559, 0.0
  %v6624 = vmax.f32 %v6560, 0.0
  %v6625 = vmax.f32 %v6561, 0.0
  %v6626 = vmax.f32 %v6562, 0.0
  %v6627 = vmax.f32 %v6563, 0.0
  %v6628 = vmax.f32 %v6564, 0.0
  %v6629 = vmax.f32 %v6565, 0.0
  %v6630 = vmax.f32 %v6566, 0.0
  %v6631 = vmax.f32 %v6567, 0.0
  %v6632 = vmax.f32 %v6568, 0.0
  %v6633 = vmax.f32 %v6569, 0.0
  %v6634 = vmax.f32 %v6570, 0.0
  %v6635 = vmax.f32 %v6571, 0.0
  %v6636 = vmax.f32 %v6572, 0.0
  %v6637 = vmax.f32 %v6573, 0.0
  %v6638 = vmax.f32 %v6574, 0.0
  %v6639 = vmax.f32 %v6575, 0.0
  %v6640 = vmax.f32 %v6576, 0.0
  %v6641 = vmax.f32 %v6577, 0.0
  %v6642 = vmax.f32 %v6578, 0.0
  %v6643 = vmax.f32 %v6579, 0.0
  %v6644 = vmax.f32 %v6580, 0.0
  %v6645 = vpack.c.bf16 %v6582, %v6581
  %v6646 = vpack.c.bf16 %v6584, %v6583
  %v6647 = vpack.c.bf16 %v6586, %v6585
  %v6648 = vpack.c.bf16 %v6588, %v6587
  %v6649 = vpack.c.bf16 %v6590, %v6589
  %v6650 = vpack.c.bf16 %v6592, %v6591
  %v6651 = vpack.c.bf16 %v6594, %v6593
  %v6652 = vpack.c.bf16 %v6596, %v6595
  %v6653 = vpack.c.bf16 %v6598, %v6597
  %v6654 = vpack.c.bf16 %v6600, %v6599
  %v6655 = vpack.c.bf16 %v6602, %v6601
  %v6656 = vpack.c.bf16 %v6604, %v6603
  %v6657 = vpack.c.bf16 %v6606, %v6605
  %v6658 = vpack.c.bf16 %v6608, %v6607
  %v6659 = vpack.c.bf16 %v6610, %v6609
  %v6660 = vpack.c.bf16 %v6612, %v6611
  %v6661 = vpack.c.bf16 %v6614, %v6613
  %v6662 = vpack.c.bf16 %v6616, %v6615
  %v6663 = vpack.c.bf16 %v6618, %v6617
  %v6664 = vpack.c.bf16 %v6620, %v6619
  %v6665 = vpack.c.bf16 %v6622, %v6621
  %v6666 = vpack.c.bf16 %v6624, %v6623
  %v6667 = vpack.c.bf16 %v6626, %v6625
  %v6668 = vpack.c.bf16 %v6628, %v6627
  %v6669 = vpack.c.bf16 %v6630, %v6629
  %v6670 = vpack.c.bf16 %v6632, %v6631
  %v6671 = vpack.c.bf16 %v6634, %v6633
  %v6672 = vpack.c.bf16 %v6636, %v6635
  %v6673 = vpack.c.bf16 %v6638, %v6637
  %v6674 = vpack.c.bf16 %v6640, %v6639
  %v6675 = vpack.c.bf16 %v6642, %v6641
  %v6676 = vpack.c.bf16 %v6644, %v6643
  %v6677 = vld [vmem:[%s5] sm:$0xf]
  %v6678 = vld [vmem:[%s5 + $0x4] sm:$0xf]
  %v6679 = vld [vmem:[%s5 + $0x8] sm:$0xf]
  %v6680 = vld [vmem:[%s5 + $0xc] sm:$0xf]
  %v6681 = vld [vmem:[%s5 + $0x10] sm:$0xf]
  %v6682 = vld [vmem:[%s5 + $0x14] sm:$0xf]
  %v6683 = vld [vmem:[%s5 + $0x18] sm:$0xf]
  %v6684 = vld [vmem:[%s5 + $0x1c] sm:$0xf]
  %v6685 = vld [vmem:[%s5 + $0x20] sm:$0xf]
  %v6686 = vld [vmem:[%s5 + $0x24] sm:$0xf]
  %v6687 = vld [vmem:[%s5 + $0x28] sm:$0xf]
  %v6688 = vld [vmem:[%s5 + $0x2c] sm:$0xf]
  %v6689 = vld [vmem:[%s5 + $0x30] sm:$0xf]
  %v6690 = vld [vmem:[%s5 + $0x34] sm:$0xf]
  %v6691 = vld [vmem:[%s5 + $0x38] sm:$0xf]
  %v6692 = vld [vmem:[%s5 + $0x3c] sm:$0xf]
  %v6693 = vld [vmem:[%s5 + $0x40] sm:$0xf]
  %v6694 = vld [vmem:[%s5 + $0x44] sm:$0xf]
  %v6695 = vld [vmem:[%s5 + $0x48] sm:$0xf]
  %v6696 = vld [vmem:[%s5 + $0x4c] sm:$0xf]
  %v6697 = vld [vmem:[%s5 + $0x50] sm:$0xf]
  %v6698 = vld [vmem:[%s5 + $0x54] sm:$0xf]
  %v6699 = vld [vmem:[%s5 + $0x58] sm:$0xf]
  %v6700 = vld [vmem:[%s5 + $0x5c] sm:$0xf]
  %v6701 = vld [vmem:[%s5 + $0x60] sm:$0xf]
  %v6702 = vld [vmem:[%s5 + $0x64] sm:$0xf]
  %v6703 = vld [vmem:[%s5 + $0x68] sm:$0xf]
  %v6704 = vld [vmem:[%s5 + $0x6c] sm:$0xf]
  %v6705 = vld [vmem:[%s5 + $0x70] sm:$0xf]
  %v6706 = vld [vmem:[%s5 + $0x74] sm:$0xf]
  %v6707 = vld [vmem:[%s5 + $0x78] sm:$0xf]
  %v6708 = vld [vmem:[%s5 + $0x7c] sm:$0xf]
  %v6709 = vld [vmem:[%s6] sm:$0x1]
  %v6711 = vlaneseq
  %v6712 = vshrl.u32 %v6711, 7
  %v6713 = vsub.s32 0, %v6712
  %v6714 = vrot.slane %v6709, %v6713
  %v6748 = vunpack.c.l.b16 %v6677
  %v6749 = vunpack.c.l.b16 %v6678
  %v6750 = vunpack.c.l.b16 %v6679
  %v6751 = vunpack.c.l.b16 %v6680
  %v6752 = vunpack.c.l.b16 %v6681
  %v6753 = vunpack.c.l.b16 %v6682
  %v6754 = vunpack.c.l.b16 %v6683
  %v6755 = vunpack.c.l.b16 %v6684
  %v6756 = vunpack.c.l.b16 %v6685
  %v6757 = vunpack.c.l.b16 %v6686
  %v6758 = vunpack.c.l.b16 %v6687
  %v6759 = vunpack.c.l.b16 %v6688
  %v6760 = vunpack.c.l.b16 %v6689
  %v6761 = vunpack.c.l.b16 %v6690
  %v6762 = vunpack.c.l.b16 %v6691
  %v6763 = vunpack.c.l.b16 %v6692
  %v6764 = vunpack.c.l.b16 %v6693
  %v6765 = vunpack.c.l.b16 %v6694
  %v6766 = vunpack.c.l.b16 %v6695
  %v6767 = vunpack.c.l.b16 %v6696
  %v6768 = vunpack.c.l.b16 %v6697
  %v6769 = vunpack.c.l.b16 %v6698
  %v6770 = vunpack.c.l.b16 %v6699
  %v6771 = vunpack.c.l.b16 %v6700
  %v6772 = vunpack.c.l.b16 %v6701
  %v6773 = vunpack.c.l.b16 %v6702
  %v6774 = vunpack.c.l.b16 %v6703
  %v6775 = vunpack.c.l.b16 %v6704
  %v6776 = vunpack.c.l.b16 %v6705
  %v6777 = vunpack.c.l.b16 %v6706
  %v6778 = vunpack.c.l.b16 %v6707
  %v6779 = vunpack.c.l.b16 %v6708
  %v6780 = vpack.c.b16 %v6749, %v6748
  %v6781 = vpack.c.b16 %v6751, %v6750
  %v6782 = vpack.c.b16 %v6753, %v6752
  %v6783 = vpack.c.b16 %v6755, %v6754
  %v6784 = vpack.c.b16 %v6757, %v6756
  %v6785 = vpack.c.b16 %v6759, %v6758
  %v6786 = vpack.c.b16 %v6761, %v6760
  %v6787 = vpack.c.b16 %v6763, %v6762
  %v6788 = vpack.c.b16 %v6765, %v6764
  %v6789 = vpack.c.b16 %v6767, %v6766
  %v6790 = vpack.c.b16 %v6769, %v6768
  %v6791 = vpack.c.b16 %v6771, %v6770
  %v6792 = vpack.c.b16 %v6773, %v6772
  %v6793 = vpack.c.b16 %v6775, %v6774
  %v6794 = vpack.c.b16 %v6777, %v6776
  %v6795 = vpack.c.b16 %v6779, %v6778
  %6812 = vmatprep.subr.bf16.mxu0 0
  %6813 = vmatpush1.bf16.msra.mxu0 %v6780
  %6814 = vmatprep.subr.bf16.mxu0 0
  %6815 = vmatpush1.bf16.msra.mxu0 %v6781
  %6816 = vmatprep.subr.bf16.mxu0 0
  %6817 = vmatpush1.bf16.msra.mxu0 %v6782
  %6818 = vmatprep.subr.bf16.mxu0 0
  %6819 = vmatpush1.bf16.msra.mxu0 %v6783
  %6820 = vmatprep.subr.bf16.mxu0 0
  %6821 = vmatpush1.bf16.msra.mxu0 %v6784
  %6822 = vmatprep.subr.bf16.mxu0 0
  %6823 = vmatpush1.bf16.msra.mxu0 %v6785
  %6824 = vmatprep.subr.bf16.mxu0 0
  %6825 = vmatpush1.bf16.msra.mxu0 %v6786
  %6826 = vmatprep.subr.bf16.mxu0 0
  %6827 = vmatpush1.bf16.msra.mxu0 %v6787
  %6828 = vmatprep.subr.bf16.mxu0 0
  %6829 = vmatpush1.bf16.msra.mxu0 %v6788
  %6830 = vmatprep.subr.bf16.mxu0 0
  %6831 = vmatpush1.bf16.msra.mxu0 %v6789
  %6832 = vmatprep.subr.bf16.mxu0 0
  %6833 = vmatpush1.bf16.msra.mxu0 %v6790
  %6834 = vmatprep.subr.bf16.mxu0 0
  %6835 = vmatpush1.bf16.msra.mxu0 %v6791
  %6836 = vmatprep.subr.bf16.mxu0 0
  %6837 = vmatpush1.bf16.msra.mxu0 %v6792
  %6838 = vmatprep.subr.bf16.mxu0 0
  %6839 = vmatpush1.bf16.msra.mxu0 %v6793
  %6840 = vmatprep.subr.bf16.mxu0 0
  %6841 = vmatpush1.bf16.msra.mxu0 %v6794
  %6842 = vmatprep.subr.bf16.mxu0 0
  %6843 = vmatpush1.bf16.msra.mxu0 %v6795
  %6844 = vmatprep.mubr.bf16.mxu0 %v242
  %6845 = vmatmul.mubr.bf16.gmra.mrb[0].mxu0 %v6645
  %v6846 = vpop.f32.mrb[0].mxu0
  %v6847 = vadd.f32 %v6714, %v6846
  %v6848 = vpop.f32.mrb[0].mxu0
  %v6849 = vpop.f32.mrb[0].mxu0
  %v6850 = vadd.f32 %v6714, %v6849
  %v6851 = vpop.f32.mrb[0].mxu0
  %6852 = vmatprep.mubr.bf16.mxu0 %v243
  %6853 = vmatmul.mubr.bf16.gmra.mrb[0].mxu0 %v6646
  %v6854 = vpop.f32.mrb[0].mxu0
  %v6855 = vadd.f32 %v6714, %v6854
  %v6856 = vpop.f32.mrb[0].mxu0
  %v6857 = vpop.f32.mrb[0].mxu0
  %v6858 = vadd.f32 %v6714, %v6857
  %v6859 = vpop.f32.mrb[0].mxu0
  %6860 = vmatprep.mubr.bf16.mxu0 %v244
  %6861 = vmatmul.mubr.bf16.gmra.mrb[0].mxu0 %v6647
  %v6862 = vpop.f32.mrb[0].mxu0
  %v6863 = vadd.f32 %v6714, %v6862
  %v6864 = vpop.f32.mrb[0].mxu0
  %v6865 = vpop.f32.mrb[0].mxu0
  %v6866 = vadd.f32 %v6714, %v6865
  %v6867 = vpop.f32.mrb[0].mxu0
  %6868 = vmatprep.mubr.bf16.mxu0 %v245
  %6869 = vmatmul.mubr.bf16.gmra.mrb[0].mxu0 %v6648
  %v6870 = vpop.f32.mrb[0].mxu0
  %v6871 = vadd.f32 %v6714, %v6870
  %v6872 = vpop.f32.mrb[0].mxu0
  %v6873 = vpop.f32.mrb[0].mxu0
  %v6874 = vadd.f32 %v6714, %v6873
  %v6875 = vpop.f32.mrb[0].mxu0
  %6876 = vmatprep.mubr.bf16.mxu0 %v246
  %6877 = vmatmul.mubr.bf16.gmra.mrb[0].mxu0 %v6649
  %v6878 = vpop.f32.mrb[0].mxu0
  %v6879 = vadd.f32 %v6714, %v6878
  %v6880 = vpop.f32.mrb[0].mxu0
  %v6881 = vpop.f32.mrb[0].mxu0
  %v6882 = vadd.f32 %v6714, %v6881
  %v6883 = vpop.f32.mrb[0].mxu0
  %6884 = vmatprep.mubr.bf16.mxu0 %v247
  %6885 = vmatmul.mubr.bf16.gmra.mrb[0].mxu0 %v6650
  %v6886 = vpop.f32.mrb[0].mxu0
  %v6887 = vadd.f32 %v6714, %v6886
  %v6888 = vpop.f32.mrb[0].mxu0
  %v6889 = vpop.f32.mrb[0].mxu0
  %v6890 = vadd.f32 %v6714, %v6889
  %v6891 = vpop.f32.mrb[0].mxu0
  %6892 = vmatprep.mubr.bf16.mxu0 %v248
  %6893 = vmatmul.mubr.bf16.gmra.mrb[0].mxu0 %v6651
  %v6894 = vpop.f32.mrb[0].mxu0
  %v6895 = vadd.f32 %v6714, %v6894
  %v6896 = vpop.f32.mrb[0].mxu0
  %v6897 = vpop.f32.mrb[0].mxu0
  %v6898 = vadd.f32 %v6714, %v6897
  %v6899 = vpop.f32.mrb[0].mxu0
  %6900 = vmatprep.mubr.bf16.mxu0 %v249
  %6901 = vmatmul.mubr.bf16.gmra.mrb[0].mxu0 %v6652
  %v6902 = vpop.f32.mrb[0].mxu0
  %v6903 = vadd.f32 %v6714, %v6902
  %v6904 = vpop.f32.mrb[0].mxu0
  %v6905 = vpop.f32.mrb[0].mxu0
  %v6906 = vadd.f32 %v6714, %v6905
  %v6907 = vpop.f32.mrb[0].mxu0
  %6908 = vmatprep.mubr.bf16.mxu0 %v250
  %6909 = vmatmul.mubr.bf16.gmra.mrb[0].mxu0 %v6653
  %v6910 = vpop.f32.mrb[0].mxu0
  %v6911 = vadd.f32 %v6714, %v6910
  %v6912 = vpop.f32.mrb[0].mxu0
  %v6913 = vpop.f32.mrb[0].mxu0
  %v6914 = vadd.f32 %v6714, %v6913
  %v6915 = vpop.f32.mrb[0].mxu0
  %6916 = vmatprep.mubr.bf16.mxu0 %v251
  %6917 = vmatmul.mubr.bf16.gmra.mrb[0].mxu0 %v6654
  %v6918 = vpop.f32.mrb[0].mxu0
  %v6919 = vadd.f32 %v6714, %v6918
  %v6920 = vpop.f32.mrb[0].mxu0
  %v6921 = vpop.f32.mrb[0].mxu0
  %v6922 = vadd.f32 %v6714, %v6921
  %v6923 = vpop.f32.mrb[0].mxu0
  %6924 = vmatprep.mubr.bf16.mxu0 %v252
  %6925 = vmatmul.mubr.bf16.gmra.mrb[0].mxu0 %v6655
  %v6926 = vpop.f32.mrb[0].mxu0
  %v6927 = vadd.f32 %v6714, %v6926
  %v6928 = vpop.f32.mrb[0].mxu0
  %v6929 = vpop.f32.mrb[0].mxu0
  %v6930 = vadd.f32 %v6714, %v6929
  %v6931 = vpop.f32.mrb[0].mxu0
  %6932 = vmatprep.mubr.bf16.mxu0 %v253
  %6933 = vmatmul.mubr.bf16.gmra.mrb[0].mxu0 %v6656
  %v6934 = vpop.f32.mrb[0].mxu0
  %v6935 = vadd.f32 %v6714, %v6934
  %v6936 = vpop.f32.mrb[0].mxu0
  %v6937 = vpop.f32.mrb[0].mxu0
  %v6938 = vadd.f32 %v6714, %v6937
  %v6939 = vpop.f32.mrb[0].mxu0
  %6940 = vmatprep.mubr.bf16.mxu0 %v254
  %6941 = vmatmul.mubr.bf16.gmra.mrb[0].mxu0 %v6657
  %v6942 = vpop.f32.mrb[0].mxu0
  %v6943 = vadd.f32 %v6714, %v6942
  %v6944 = vpop.f32.mrb[0].mxu0
  %v6945 = vpop.f32.mrb[0].mxu0
  %v6946 = vadd.f32 %v6714, %v6945
  %v6947 = vpop.f32.mrb[0].mxu0
  %6948 = vmatprep.mubr.bf16.mxu0 %v255
  %6949 = vmatmul.mubr.bf16.gmra.mrb[0].mxu0 %v6658
  %v6950 = vpop.f32.mrb[0].mxu0
  %v6951 = vadd.f32 %v6714, %v6950
  %v6952 = vpop.f32.mrb[0].mxu0
  %v6953 = vpop.f32.mrb[0].mxu0
  %v6954 = vadd.f32 %v6714, %v6953
  %v6955 = vpop.f32.mrb[0].mxu0
  %6956 = vmatprep.mubr.bf16.mxu0 %v256
  %6957 = vmatmul.mubr.bf16.gmra.mrb[0].mxu0 %v6659
  %v6958 = vpop.f32.mrb[0].mxu0
  %v6959 = vadd.f32 %v6714, %v6958
  %v6960 = vpop.f32.mrb[0].mxu0
  %v6961 = vpop.f32.mrb[0].mxu0
  %v6962 = vadd.f32 %v6714, %v6961
  %v6963 = vpop.f32.mrb[0].mxu0
  %6964 = vmatprep.mubr.bf16.mxu0 %v257
  %6965 = vmatmul.mubr.bf16.gmra.mrb[0].mxu0 %v6660
  %v6966 = vpop.f32.mrb[0].mxu0
  %v6967 = vadd.f32 %v6714, %v6966
  %v6968 = vpop.f32.mrb[0].mxu0
  %v6969 = vpop.f32.mrb[0].mxu0
  %v6970 = vadd.f32 %v6714, %v6969
  %v6971 = vpop.f32.mrb[0].mxu0
  %6972 = vmatprep.mubr.bf16.mxu0 %v258
  %6973 = vmatmul.mubr.bf16.gmra.mrb[0].mxu0 %v6661
  %v6974 = vpop.f32.mrb[0].mxu0
  %v6975 = vadd.f32 %v6714, %v6974
  %v6976 = vpop.f32.mrb[0].mxu0
  %v6977 = vpop.f32.mrb[0].mxu0
  %v6978 = vadd.f32 %v6714, %v6977
  %v6979 = vpop.f32.mrb[0].mxu0
  %6980 = vmatprep.mubr.bf16.mxu0 %v259
  %6981 = vmatmul.mubr.bf16.gmra.mrb[0].mxu0 %v6662
  %v6982 = vpop.f32.mrb[0].mxu0
  %v6983 = vadd.f32 %v6714, %v6982
  %v6984 = vpop.f32.mrb[0].mxu0
  %v6985 = vpop.f32.mrb[0].mxu0
  %v6986 = vadd.f32 %v6714, %v6985
  %v6987 = vpop.f32.mrb[0].mxu0
  %6988 = vmatprep.mubr.bf16.mxu0 %v260
  %6989 = vmatmul.mubr.bf16.gmra.mrb[0].mxu0 %v6663
  %v6990 = vpop.f32.mrb[0].mxu0
  %v6991 = vadd.f32 %v6714, %v6990
  %v6992 = vpop.f32.mrb[0].mxu0
  %v6993 = vpop.f32.mrb[0].mxu0
  %v6994 = vadd.f32 %v6714, %v6993
  %v6995 = vpop.f32.mrb[0].mxu0
  %6996 = vmatprep.mubr.bf16.mxu0 %v261
  %6997 = vmatmul.mubr.bf16.gmra.mrb[0].mxu0 %v6664
  %v6998 = vpop.f32.mrb[0].mxu0
  %v6999 = vadd.f32 %v6714, %v6998
  %v7000 = vpop.f32.mrb[0].mxu0
  %v7001 = vpop.f32.mrb[0].mxu0
  %v7002 = vadd.f32 %v6714, %v7001
  %v7003 = vpop.f32.mrb[0].mxu0
  %7004 = vmatprep.mubr.bf16.mxu0 %v262
  %7005 = vmatmul.mubr.bf16.gmra.mrb[0].mxu0 %v6665
  %v7006 = vpop.f32.mrb[0].mxu0
  %v7007 = vadd.f32 %v6714, %v7006
  %v7008 = vpop.f32.mrb[0].mxu0
  %v7009 = vpop.f32.mrb[0].mxu0
  %v7010 = vadd.f32 %v6714, %v7009
  %v7011 = vpop.f32.mrb[0].mxu0
  %7012 = vmatprep.mubr.bf16.mxu0 %v263
  %7013 = vmatmul.mubr.bf16.gmra.mrb[0].mxu0 %v6666
  %v7014 = vpop.f32.mrb[0].mxu0
  %v7015 = vadd.f32 %v6714, %v7014
  %v7016 = vpop.f32.mrb[0].mxu0
  %v7017 = vpop.f32.mrb[0].mxu0
  %v7018 = vadd.f32 %v6714, %v7017
  %v7019 = vpop.f32.mrb[0].mxu0
  %7020 = vmatprep.mubr.bf16.mxu0 %v264
  %7021 = vmatmul.mubr.bf16.gmra.mrb[0].mxu0 %v6667
  %v7022 = vpop.f32.mrb[0].mxu0
  %v7023 = vadd.f32 %v6714, %v7022
  %v7024 = vpop.f32.mrb[0].mxu0
  %v7025 = vpop.f32.mrb[0].mxu0
  %v7026 = vadd.f32 %v6714, %v7025
  %v7027 = vpop.f32.mrb[0].mxu0
  %7028 = vmatprep.mubr.bf16.mxu0 %v265
  %7029 = vmatmul.mubr.bf16.gmra.mrb[0].mxu0 %v6668
  %v7030 = vpop.f32.mrb[0].mxu0
  %v7031 = vadd.f32 %v6714, %v7030
  %v7032 = vpop.f32.mrb[0].mxu0
  %v7033 = vpop.f32.mrb[0].mxu0
  %v7034 = vadd.f32 %v6714, %v7033
  %v7035 = vpop.f32.mrb[0].mxu0
  %7036 = vmatprep.mubr.bf16.mxu0 %v266
  %7037 = vmatmul.mubr.bf16.gmra.mrb[0].mxu0 %v6669
  %v7038 = vpop.f32.mrb[0].mxu0
  %v7039 = vadd.f32 %v6714, %v7038
  %v7040 = vpop.f32.mrb[0].mxu0
  %v7041 = vpop.f32.mrb[0].mxu0
  %v7042 = vadd.f32 %v6714, %v7041
  %v7043 = vpop.f32.mrb[0].mxu0
  %7044 = vmatprep.mubr.bf16.mxu0 %v267
  %7045 = vmatmul.mubr.bf16.gmra.mrb[0].mxu0 %v6670
  %v7046 = vpop.f32.mrb[0].mxu0
  %v7047 = vadd.f32 %v6714, %v7046
  %v7048 = vpop.f32.mrb[0].mxu0
  %v7049 = vpop.f32.mrb[0].mxu0
  %v7050 = vadd.f32 %v6714, %v7049
  %v7051 = vpop.f32.mrb[0].mxu0
  %7052 = vmatprep.mubr.bf16.mxu0 %v268
  %7053 = vmatmul.mubr.bf16.gmra.mrb[0].mxu0 %v6671
  %v7054 = vpop.f32.mrb[0].mxu0
  %v7055 = vadd.f32 %v6714, %v7054
  %v7056 = vpop.f32.mrb[0].mxu0
  %v7057 = vpop.f32.mrb[0].mxu0
  %v7058 = vadd.f32 %v6714, %v7057
  %v7059 = vpop.f32.mrb[0].mxu0
  %7060 = vmatprep.mubr.bf16.mxu0 %v269
  %7061 = vmatmul.mubr.bf16.gmra.mrb[0].mxu0 %v6672
  %v7062 = vpop.f32.mrb[0].mxu0
  %v7063 = vadd.f32 %v6714, %v7062
  %v7064 = vpop.f32.mrb[0].mxu0
  %v7065 = vpop.f32.mrb[0].mxu0
  %v7066 = vadd.f32 %v6714, %v7065
  %v7067 = vpop.f32.mrb[0].mxu0
  %7068 = vmatprep.mubr.bf16.mxu0 %v270
  %7069 = vmatmul.mubr.bf16.gmra.mrb[0].mxu0 %v6673
  %v7070 = vpop.f32.mrb[0].mxu0
  %v7071 = vadd.f32 %v6714, %v7070
  %v7072 = vpop.f32.mrb[0].mxu0
  %v7073 = vpop.f32.mrb[0].mxu0
  %v7074 = vadd.f32 %v6714, %v7073
  %v7075 = vpop.f32.mrb[0].mxu0
  %7076 = vmatprep.mubr.bf16.mxu0 %v271
  %7077 = vmatmul.mubr.bf16.gmra.mrb[0].mxu0 %v6674
  %v7078 = vpop.f32.mrb[0].mxu0
  %v7079 = vadd.f32 %v6714, %v7078
  %v7080 = vpop.f32.mrb[0].mxu0
  %v7081 = vpop.f32.mrb[0].mxu0
  %v7082 = vadd.f32 %v6714, %v7081
  %v7083 = vpop.f32.mrb[0].mxu0
  %7084 = vmatprep.mubr.bf16.mxu0 %v272
  %7085 = vmatmul.mubr.bf16.gmra.mrb[0].mxu0 %v6675
  %v7086 = vpop.f32.mrb[0].mxu0
  %v7087 = vadd.f32 %v6714, %v7086
  %v7088 = vpop.f32.mrb[0].mxu0
  %v7089 = vpop.f32.mrb[0].mxu0
  %v7090 = vadd.f32 %v6714, %v7089
  %v7091 = vpop.f32.mrb[0].mxu0
  %7092 = vmatprep.mubr.bf16.mxu0 %v273
  %7093 = vmatmul.mubr.bf16.gmra.mrb[0].mxu0 %v6676
  %v7094 = vpop.f32.mrb[0].mxu0
  %v7095 = vadd.f32 %v6714, %v7094
  %v7096 = vpop.f32.mrb[0].mxu0
  %v7097 = vpop.f32.mrb[0].mxu0
  %v7098 = vadd.f32 %v6714, %v7097
  %v7099 = vpop.f32.mrb[0].mxu0
  %7100 = vdwg.mxu0
  %v7101 = vmax.f32 %v6847, 0.0
  %v7102 = vmax.f32 %v6850, 0.0
  %v7103 = vmax.f32 %v6855, 0.0
  %v7104 = vmax.f32 %v6858, 0.0
  %v7105 = vmax.f32 %v6863, 0.0
  %v7106 = vmax.f32 %v6866, 0.0
  %v7107 = vmax.f32 %v6871, 0.0
  %v7108 = vmax.f32 %v6874, 0.0
  %v7109 = vmax.f32 %v6879, 0.0
  %v7110 = vmax.f32 %v6882, 0.0
  %v7111 = vmax.f32 %v6887, 0.0
  %v7112 = vmax.f32 %v6890, 0.0
  %v7113 = vmax.f32 %v6895, 0.0
  %v7114 = vmax.f32 %v6898, 0.0
  %v7115 = vmax.f32 %v6903, 0.0
  %v7116 = vmax.f32 %v6906, 0.0
  %v7117 = vmax.f32 %v6911, 0.0
  %v7118 = vmax.f32 %v6914, 0.0
  %v7119 = vmax.f32 %v6919, 0.0
  %v7120 = vmax.f32 %v6922, 0.0
  %v7121 = vmax.f32 %v6927, 0.0
  %v7122 = vmax.f32 %v6930, 0.0
  %v7123 = vmax.f32 %v6935, 0.0
  %v7124 = vmax.f32 %v6938, 0.0
  %v7125 = vmax.f32 %v6943, 0.0
  %v7126 = vmax.f32 %v6946, 0.0
  %v7127 = vmax.f32 %v6951, 0.0
  %v7128 = vmax.f32 %v6954, 0.0
  %v7129 = vmax.f32 %v6959, 0.0
  %v7130 = vmax.f32 %v6962, 0.0
  %v7131 = vmax.f32 %v6967, 0.0
  %v7132 = vmax.f32 %v6970, 0.0
  %v7133 = vmax.f32 %v6975, 0.0
  %v7134 = vmax.f32 %v6978, 0.0
  %v7135 = vmax.f32 %v6983, 0.0
  %v7136 = vmax.f32 %v6986, 0.0
  %v7137 = vmax.f32 %v6991, 0.0
  %v7138 = vmax.f32 %v6994, 0.0
  %v7139 = vmax.f32 %v6999, 0.0
  %v7140 = vmax.f32 %v7002, 0.0
  %v7141 = vmax.f32 %v7007, 0.0
  %v7142 = vmax.f32 %v7010, 0.0
  %v7143 = vmax.f32 %v7015, 0.0
  %v7144 = vmax.f32 %v7018, 0.0
  %v7145 = vmax.f32 %v7023, 0.0
  %v7146 = vmax.f32 %v7026, 0.0
  %v7147 = vmax.f32 %v7031, 0.0
  %v7148 = vmax.f32 %v7034, 0.0
  %v7149 = vmax.f32 %v7039, 0.0
  %v7150 = vmax.f32 %v7042, 0.0
  %v7151 = vmax.f32 %v7047, 0.0
  %v7152 = vmax.f32 %v7050, 0.0
  %v7153 = vmax.f32 %v7055, 0.0
  %v7154 = vmax.f32 %v7058, 0.0
  %v7155 = vmax.f32 %v7063, 0.0
  %v7156 = vmax.f32 %v7066, 0.0
  %v7157 = vmax.f32 %v7071, 0.0
  %v7158 = vmax.f32 %v7074, 0.0
  %v7159 = vmax.f32 %v7079, 0.0
  %v7160 = vmax.f32 %v7082, 0.0
  %v7161 = vmax.f32 %v7087, 0.0
  %v7162 = vmax.f32 %v7090, 0.0
  %v7163 = vmax.f32 %v7095, 0.0
  %v7164 = vmax.f32 %v7098, 0.0
  %v7165 = vpack.c.bf16 %v7102, %v7101
  %v7166 = vpack.c.bf16 %v7104, %v7103
  %v7167 = vpack.c.bf16 %v7106, %v7105
  %v7168 = vpack.c.bf16 %v7108, %v7107
  %v7169 = vpack.c.bf16 %v7110, %v7109
  %v7170 = vpack.c.bf16 %v7112, %v7111
  %v7171 = vpack.c.bf16 %v7114, %v7113
  %v7172 = vpack.c.bf16 %v7116, %v7115
  %v7173 = vpack.c.bf16 %v7118, %v7117
  %v7174 = vpack.c.bf16 %v7120, %v7119
  %v7175 = vpack.c.bf16 %v7122, %v7121
  %v7176 = vpack.c.bf16 %v7124, %v7123
  %v7177 = vpack.c.bf16 %v7126, %v7125
  %v7178 = vpack.c.bf16 %v7128, %v7127
  %v7179 = vpack.c.bf16 %v7130, %v7129
  %v7180 = vpack.c.bf16 %v7132, %v7131
  %v7181 = vpack.c.bf16 %v7134, %v7133
  %v7182 = vpack.c.bf16 %v7136, %v7135
  %v7183 = vpack.c.bf16 %v7138, %v7137
  %v7184 = vpack.c.bf16 %v7140, %v7139
  %v7185 = vpack.c.bf16 %v7142, %v7141
  %v7186 = vpack.c.bf16 %v7144, %v7143
  %v7187 = vpack.c.bf16 %v7146, %v7145
  %v7188 = vpack.c.bf16 %v7148, %v7147
  %v7189 = vpack.c.bf16 %v7150, %v7149
  %v7190 = vpack.c.bf16 %v7152, %v7151
  %v7191 = vpack.c.bf16 %v7154, %v7153
  %v7192 = vpack.c.bf16 %v7156, %v7155
  %v7193 = vpack.c.bf16 %v7158, %v7157
  %v7194 = vpack.c.bf16 %v7160, %v7159
  %v7195 = vpack.c.bf16 %v7162, %v7161
  %v7196 = vpack.c.bf16 %v7164, %v7163
  %v7229 = vunpack.c.l.b16 %v7165
  %v7230 = vunpack.c.h.b16 %v7165
  %v7231 = vunpack.c.l.b16 %v7166
  %v7232 = vunpack.c.h.b16 %v7166
  %v7233 = vunpack.c.l.b16 %v7167
  %v7234 = vunpack.c.h.b16 %v7167
  %v7235 = vunpack.c.l.b16 %v7168
  %v7236 = vunpack.c.h.b16 %v7168
  %v7237 = vunpack.c.l.b16 %v7169
  %v7238 = vunpack.c.h.b16 %v7169
  %v7239 = vunpack.c.l.b16 %v7170
  %v7240 = vunpack.c.h.b16 %v7170
  %v7241 = vunpack.c.l.b16 %v7171
  %v7242 = vunpack.c.h.b16 %v7171
  %v7243 = vunpack.c.l.b16 %v7172
  %v7244 = vunpack.c.h.b16 %v7172
  %v7245 = vunpack.c.l.b16 %v7173
  %v7246 = vunpack.c.h.b16 %v7173
  %v7247 = vunpack.c.l.b16 %v7174
  %v7248 = vunpack.c.h.b16 %v7174
  %v7249 = vunpack.c.l.b16 %v7175
  %v7250 = vunpack.c.h.b16 %v7175
  %v7251 = vunpack.c.l.b16 %v7176
  %v7252 = vunpack.c.h.b16 %v7176
  %v7253 = vunpack.c.l.b16 %v7177
  %v7254 = vunpack.c.h.b16 %v7177
  %v7255 = vunpack.c.l.b16 %v7178
  %v7256 = vunpack.c.h.b16 %v7178
  %v7257 = vunpack.c.l.b16 %v7179
  %v7258 = vunpack.c.h.b16 %v7179
  %v7259 = vunpack.c.l.b16 %v7180
  %v7260 = vunpack.c.h.b16 %v7180
  %v7261 = vunpack.c.l.b16 %v7181
  %v7262 = vunpack.c.h.b16 %v7181
  %v7263 = vunpack.c.l.b16 %v7182
  %v7264 = vunpack.c.h.b16 %v7182
  %v7265 = vunpack.c.l.b16 %v7183
  %v7266 = vunpack.c.h.b16 %v7183
  %v7267 = vunpack.c.l.b16 %v7184
  %v7268 = vunpack.c.h.b16 %v7184
  %v7269 = vunpack.c.l.b16 %v7185
  %v7270 = vunpack.c.h.b16 %v7185
  %v7271 = vunpack.c.l.b16 %v7186
  %v7272 = vunpack.c.h.b16 %v7186
  %v7273 = vunpack.c.l.b16 %v7187
  %v7274 = vunpack.c.h.b16 %v7187
  %v7275 = vunpack.c.l.b16 %v7188
  %v7276 = vunpack.c.h.b16 %v7188
  %v7277 = vunpack.c.l.b16 %v7189
  %v7278 = vunpack.c.h.b16 %v7189
  %v7279 = vunpack.c.l.b16 %v7190
  %v7280 = vunpack.c.h.b16 %v7190
  %v7281 = vunpack.c.l.b16 %v7191
  %v7282 = vunpack.c.h.b16 %v7191
  %v7283 = vunpack.c.l.b16 %v7192
  %v7284 = vunpack.c.h.b16 %v7192
  %v7285 = vunpack.c.l.b16 %v7193
  %v7286 = vunpack.c.h.b16 %v7193
  %v7287 = vunpack.c.l.b16 %v7194
  %v7288 = vunpack.c.h.b16 %v7194
  %v7289 = vunpack.c.l.b16 %v7195
  %v7290 = vunpack.c.h.b16 %v7195
  %v7291 = vunpack.c.l.b16 %v7196
  %v7292 = vunpack.c.h.b16 %v7196
  %v7293 = vpack.c.b16 %v7229, %v7229
  %v7294 = vpack.c.b16 %v7230, %v7230
  %v7295 = vpack.c.b16 %v7231, %v7231
  %v7296 = vpack.c.b16 %v7232, %v7232
  %v7297 = vpack.c.b16 %v7233, %v7233
  %v7298 = vpack.c.b16 %v7234, %v7234
  %v7299 = vpack.c.b16 %v7235, %v7235
  %v7300 = vpack.c.b16 %v7236, %v7236
  %v7301 = vpack.c.b16 %v7237, %v7237
  %v7302 = vpack.c.b16 %v7238, %v7238
  %v7303 = vpack.c.b16 %v7239, %v7239
  %v7304 = vpack.c.b16 %v7240, %v7240
  %v7305 = vpack.c.b16 %v7241, %v7241
  %v7306 = vpack.c.b16 %v7242, %v7242
  %v7307 = vpack.c.b16 %v7243, %v7243
  %v7308 = vpack.c.b16 %v7244, %v7244
  %v7309 = vpack.c.b16 %v7245, %v7245
  %v7310 = vpack.c.b16 %v7246, %v7246
  %v7311 = vpack.c.b16 %v7247, %v7247
  %v7312 = vpack.c.b16 %v7248, %v7248
  %v7313 = vpack.c.b16 %v7249, %v7249
  %v7314 = vpack.c.b16 %v7250, %v7250
  %v7315 = vpack.c.b16 %v7251, %v7251
  %v7316 = vpack.c.b16 %v7252, %v7252
  %v7317 = vpack.c.b16 %v7253, %v7253
  %v7318 = vpack.c.b16 %v7254, %v7254
  %v7319 = vpack.c.b16 %v7255, %v7255
  %v7320 = vpack.c.b16 %v7256, %v7256
  %v7321 = vpack.c.b16 %v7257, %v7257
  %v7322 = vpack.c.b16 %v7258, %v7258
  %v7323 = vpack.c.b16 %v7259, %v7259
  %v7324 = vpack.c.b16 %v7260, %v7260
  %v7325 = vpack.c.b16 %v7261, %v7261
  %v7326 = vpack.c.b16 %v7262, %v7262
  %v7327 = vpack.c.b16 %v7263, %v7263
  %v7328 = vpack.c.b16 %v7264, %v7264
  %v7329 = vpack.c.b16 %v7265, %v7265
  %v7330 = vpack.c.b16 %v7266, %v7266
  %v7331 = vpack.c.b16 %v7267, %v7267
  %v7332 = vpack.c.b16 %v7268, %v7268
  %v7333 = vpack.c.b16 %v7269, %v7269
  %v7334 = vpack.c.b16 %v7270, %v7270
  %v7335 = vpack.c.b16 %v7271, %v7271
  %v7336 = vpack.c.b16 %v7272, %v7272
  %v7337 = vpack.c.b16 %v7273, %v7273
  %v7338 = vpack.c.b16 %v7274, %v7274
  %v7339 = vpack.c.b16 %v7275, %v7275
  %v7340 = vpack.c.b16 %v7276, %v7276
  %v7341 = vpack.c.b16 %v7277, %v7277
  %v7342 = vpack.c.b16 %v7278, %v7278
  %v7343 = vpack.c.b16 %v7279, %v7279
  %v7344 = vpack.c.b16 %v7280, %v7280
  %v7345 = vpack.c.b16 %v7281, %v7281
  %v7346 = vpack.c.b16 %v7282, %v7282
  %v7347 = vpack.c.b16 %v7283, %v7283
  %v7348 = vpack.c.b16 %v7284, %v7284
  %v7349 = vpack.c.b16 %v7285, %v7285
  %v7350 = vpack.c.b16 %v7286, %v7286
  %v7351 = vpack.c.b16 %v7287, %v7287
  %v7352 = vpack.c.b16 %v7288, %v7288
  %v7353 = vpack.c.b16 %v7289, %v7289
  %v7354 = vpack.c.b16 %v7290, %v7290
  %v7355 = vpack.c.b16 %v7291, %v7291
  %v7356 = vpack.c.b16 %v7292, %v7292
  %7421 = vst [vmem:[%s7] sm:$0xf] %v7293
  %7422 = vst [vmem:[%s7 + $0x4] sm:$0xf] %v7294
  %7423 = vst [vmem:[%s7 + $0x8] sm:$0xf] %v7295
  %7424 = vst [vmem:[%s7 + $0xc] sm:$0xf] %v7296
  %7425 = vst [vmem:[%s7 + $0x10] sm:$0xf] %v7297
  %7426 = vst [vmem:[%s7 + $0x14] sm:$0xf] %v7298
  %7427 = vst [vmem:[%s7 + $0x18] sm:$0xf] %v7299
  %7428 = vst [vmem:[%s7 + $0x1c] sm:$0xf] %v7300
  %7429 = vst [vmem:[%s7 + $0x20] sm:$0xf] %v7301
  %7430 = vst [vmem:[%s7 + $0x24] sm:$0xf] %v7302
  %7431 = vst [vmem:[%s7 + $0x28] sm:$0xf] %v7303
  %7432 = vst [vmem:[%s7 + $0x2c] sm:$0xf] %v7304
  %7433 = vst [vmem:[%s7 + $0x30] sm:$0xf] %v7305
  %7434 = vst [vmem:[%s7 + $0x34] sm:$0xf] %v7306
  %7435 = vst [vmem:[%s7 + $0x38] sm:$0xf] %v7307
  %7436 = vst [vmem:[%s7 + $0x3c] sm:$0xf] %v7308
  %7437 = vst [vmem:[%s7 + $0x40] sm:$0xf] %v7309
  %7438 = vst [vmem:[%s7 + $0x44] sm:$0xf] %v7310
  %7439 = vst [vmem:[%s7 + $0x48] sm:$0xf] %v7311
  %7440 = vst [vmem:[%s7 + $0x4c] sm:$0xf] %v7312
  %7441 = vst [vmem:[%s7 + $0x50] sm:$0xf] %v7313
  %7442 = vst [vmem:[%s7 + $0x54] sm:$0xf] %v7314
  %7443 = vst [vmem:[%s7 + $0x58] sm:$0xf] %v7315
  %7444 = vst [vmem:[%s7 + $0x5c] sm:$0xf] %v7316
  %7445 = vst [vmem:[%s7 + $0x60] sm:$0xf] %v7317
  %7446 = vst [vmem:[%s7 + $0x64] sm:$0xf] %v7318
  %7447 = vst [vmem:[%s7 + $0x68] sm:$0xf] %v7319
  %7448 = vst [vmem:[%s7 + $0x6c] sm:$0xf] %v7320
  %7449 = vst [vmem:[%s7 + $0x70] sm:$0xf] %v7321
  %7450 = vst [vmem:[%s7 + $0x74] sm:$0xf] %v7322
  %7451 = vst [vmem:[%s7 + $0x78] sm:$0xf] %v7323
  %7452 = vst [vmem:[%s7 + $0x7c] sm:$0xf] %v7324
  %7453 = vst [vmem:[%s7 + $0x80] sm:$0xf] %v7325
  %7454 = vst [vmem:[%s7 + $0x84] sm:$0xf] %v7326
  %7455 = vst [vmem:[%s7 + $0x88] sm:$0xf] %v7327
  %7456 = vst [vmem:[%s7 + $0x8c] sm:$0xf] %v7328
  %7457 = vst [vmem:[%s7 + $0x90] sm:$0xf] %v7329
  %7458 = vst [vmem:[%s7 + $0x94] sm:$0xf] %v7330
  %7459 = vst [vmem:[%s7 + $0x98] sm:$0xf] %v7331
  %7460 = vst [vmem:[%s7 + $0x9c] sm:$0xf] %v7332
  %7461 = vst [vmem:[%s7 + $0xa0] sm:$0xf] %v7333
  %7462 = vst [vmem:[%s7 + $0xa4] sm:$0xf] %v7334
  %7463 = vst [vmem:[%s7 + $0xa8] sm:$0xf] %v7335
  %7464 = vst [vmem:[%s7 + $0xac] sm:$0xf] %v7336
  %7465 = vst [vmem:[%s7 + $0xb0] sm:$0xf] %v7337
  %7466 = vst [vmem:[%s7 + $0xb4] sm:$0xf] %v7338
  %7467 = vst [vmem:[%s7 + $0xb8] sm:$0xf] %v7339
  %7468 = vst [vmem:[%s7 + $0xbc] sm:$0xf] %v7340
  %7469 = vst [vmem:[%s7 + $0xc0] sm:$0xf] %v7341
  %7470 = vst [vmem:[%s7 + $0xc4] sm:$0xf] %v7342
  %7471 = vst [vmem:[%s7 + $0xc8] sm:$0xf] %v7343
  %7472 = vst [vmem:[%s7 + $0xcc] sm:$0xf] %v7344
  %7473 = vst [vmem:[%s7 + $0xd0] sm:$0xf] %v7345
  %7474 = vst [vmem:[%s7 + $0xd4] sm:$0xf] %v7346
  %7475 = vst [vmem:[%s7 + $0xd8] sm:$0xf] %v7347
  %7476 = vst [vmem:[%s7 + $0xdc] sm:$0xf] %v7348
  %7477 = vst [vmem:[%s7 + $0xe0] sm:$0xf] %v7349
  %7478 = vst [vmem:[%s7 + $0xe4] sm:$0xf] %v7350
  %7479 = vst [vmem:[%s7 + $0xe8] sm:$0xf] %v7351
  %7480 = vst [vmem:[%s7 + $0xec] sm:$0xf] %v7352
  %7481 = vst [vmem:[%s7 + $0xf0] sm:$0xf] %v7353
  %7482 = vst [vmem:[%s7 + $0xf4] sm:$0xf] %v7354
  %7483 = vst [vmem:[%s7 + $0xf8] sm:$0xf] %v7355
  %7484 = vst [vmem:[%s7 + $0xfc] sm:$0xf] %v7356
  // Predicated region
  $region30: #{_forward.1} parent=0 // pred_check
    _
  $region31: #{_forward.1} parent=0 // pred_check_branch
    %7486 = sbr.rel (0) target = $region33
  $region32: #{_forward.1} parent=0 // pred_region
    _
  $region33: #{_forward.1} parent=0 // pred_fallthru
    _
  // Predicated region
  $region34: #{_forward.1} parent=0 // pred_check
    _
  $region35: #{_forward.1} parent=0 // pred_check_branch
    %7488 = sbr.rel (0) target = $region37
  $region36: #{_forward.1} parent=0 // pred_region
    _
  $region37: #{_forward.1} parent=0 // pred_fallthru
    _

</llo_original>
